<compile_context>
chip_gen: v7x
topology: tpu7x:2x2x1
jax: 0.10.0
libtpu: 0.0.40
codegen_flags: <defaults>
</compile_context>

<pallas_src>
import functools
import math

import jax
import jax.numpy as jnp
from jax.experimental import pallas as pl
from jax.experimental.pallas import tpu as pltpu

# ---------------- model hyper-params (small, consistent with the module) ------------
N_EMBED     = 32          # n_embed (model dim)
N_LAYER     = 2           # n_layer (encoder depth)
VOCAB_SIZE  = 100         # stand-in for 30522
MAX_SEQ_LEN = 8           # stand-in for 74
BATCH       = 2

NUM_HEADS   = 8           # x-transformers default
DIM_HEAD    = 64          # x-transformers default
INNER_DIM   = NUM_HEADS * DIM_HEAD          # 512
FF_MULT     = 4
FF_INNER    = N_EMBED * FF_MULT             # 128
SCALE       = DIM_HEAD ** -0.5
LN_EPS      = 1e-5
SQRT2       = math.sqrt(2.0)

VEC_ROWS_PER_LAYER = 7    # attn_ln_g, attn_ln_b, bo, ff_ln_g, ff_ln_b, b2, b1
VEC_LANES          = 128  # >= max(N_EMBED, FF_INNER)


# ---------------- fused kernel --------------------------------------------------------
def _layernorm(x, g, b):
    mean = jnp.mean(x, axis=-1, keepdims=True)
    var = jnp.mean((x - mean) ** 2, axis=-1, keepdims=True)
    xn = (x - mean) * jax.lax.rsqrt(var + LN_EPS)
    return xn * g[None, :] + b[None, :]


def fused_bert_kernel(tok_ref, temb_ref, pemb_ref, vecs_ref,
                      wqkv_ref, wo_ref, w1_ref, w2_ref,
                      out_ref, hv_scratch, *, seq_len):
    """Whole forward pass in one kernel.

    tok_ref  : (BS, 1)  int32 token ids
    temb_ref : (VOCAB_PAD, D) f32 token embedding table (zero-padded vocab)
    pemb_ref : (BS, D) f32 positional embedding, already tiled over batch
    vecs_ref : (ROWS, 128) f32 packed LN gammas/betas + biases
    wqkv_ref : (L, D, 3*INNER) bf16 fused Q|K|V weights
    wo_ref   : (L, INNER, D)   bf16
    w1_ref   : (L, D, FF_INNER) bf16
    w2_ref   : (L, FF_INNER, D) bf16
    out_ref  : (BS, D) f32
    hv_scratch : (BS, INNER) f32 scratch for per-head attention outputs
    """
    bs = tok_ref.shape[0]
    d = temb_ref.shape[1]
    vocab_pad = temb_ref.shape[0]
    n_layer = wqkv_ref.shape[0]

    # --- embedding: one-hot matmul gather + (pre-tiled) positional add ----------------
    tok = tok_ref[...]                                                    # (bs, 1) int32
    iota_v = jax.lax.broadcasted_iota(jnp.int32, (bs, vocab_pad), 1)
    onehot = (jnp.broadcast_to(tok, (bs, vocab_pad)) == iota_v).astype(jnp.float32)
    x = jnp.dot(onehot, temb_ref[...], preferred_element_type=jnp.float32)  # (bs, d)
    x = x + pemb_ref[...]

    # --- block-diagonal additive attention bias built in-kernel ----------------------
    ri = jax.lax.broadcasted_iota(jnp.int32, (bs, bs), 0)
    ci = jax.lax.broadcasted_iota(jnp.int32, (bs, bs), 1)
    if (seq_len & (seq_len - 1)) == 0:                     # power-of-two seq len: shift
        sh = seq_len.bit_length() - 1
        rb = jax.lax.shift_right_logical(ri, sh)
        cb = jax.lax.shift_right_logical(ci, sh)
    else:
        rb = ri // seq_len
        cb = ci // seq_len
    bias = jnp.where(rb == cb, 0.0, -1e9).astype(jnp.float32)             # (bs, bs)

    vecs = vecs_ref[...]                                                   # (ROWS, 128)

    for l in range(n_layer):                                               # static unroll
        base = l * VEC_ROWS_PER_LAYER
        aln_g = vecs[base + 0, :d]
        aln_b = vecs[base + 1, :d]
        bo    = vecs[base + 2, :d]
        fln_g = vecs[base + 3, :d]
        fln_b = vecs[base + 4, :d]
        b2    = vecs[base + 5, :d]
        b1    = vecs[base + 6, :FF_INNER]

        wqkv = wqkv_ref[l].astype(jnp.float32)             # (d, 3*INNER)
        wo   = wo_ref[l].astype(jnp.float32)               # (INNER, d)
        w1   = w1_ref[l].astype(jnp.float32)               # (d, FF_INNER)
        w2   = w2_ref[l].astype(jnp.float32)               # (FF_INNER, d)

        # ---- pre-norm multi-head self-attention + residual --------------------------
        xn = _layernorm(x, aln_g, aln_b)                                   # (bs, d)
        qkv = jnp.dot(xn, wqkv, preferred_element_type=jnp.float32)        # (bs, 3*INNER)
        for h in range(NUM_HEADS):                                         # static unroll
            lo = h * DIM_HEAD
            qh = qkv[:, lo:lo + DIM_HEAD]                                  # (bs, DH)
            kh = qkv[:, INNER_DIM + lo:INNER_DIM + lo + DIM_HEAD]
            vh = qkv[:, 2 * INNER_DIM + lo:2 * INNER_DIM + lo + DIM_HEAD]
            # q @ k^T without materializing a transpose
            dots = jax.lax.dot_general(
                qh, kh, (((1,), (1,)), ((), ())),
                preferred_element_type=jnp.float32) * SCALE + bias         # (bs, bs)
            dots = dots - jnp.max(dots, axis=-1, keepdims=True)
            e = jnp.exp(dots)
            denom = jnp.sum(e, axis=-1, keepdims=True)
            r = pl.reciprocal(denom, approx=True)                          # EUP slot
            r = r * (2.0 - denom * r)                                      # 1 Newton step
            hv = jnp.dot(e * r, vh, preferred_element_type=jnp.float32)    # (bs, DH)
            hv_scratch[:, lo:lo + DIM_HEAD] = hv                           # lane-offset write
        # single lane-dense output projection (K = INNER)
        x = x + jnp.dot(hv_scratch[...], wo,
                        preferred_element_type=jnp.float32) + bo[None, :]

        # ---- pre-norm feed-forward + residual ----------------------------------------
        xn = _layernorm(x, fln_g, fln_b)
        hid = jnp.dot(xn, w1, preferred_element_type=jnp.float32) + b1[None, :]
        hid = 0.5 * hid * (1.0 + jax.lax.erf(hid / SQRT2))                 # exact GELU
        x = x + jnp.dot(hid, w2, preferred_element_type=jnp.float32) + b2[None, :]

    fbase = n_layer * VEC_ROWS_PER_LAYER
    out_ref[...] = _layernorm(x, vecs[fbase, :d], vecs[fbase + 1, :d])


# ---------------- wrapper --------------------------------------------------------------
def bert_embedder_forward(tokens, params):
    """tokens: (B, S) int32 token ids.  Returns (B, S, N_EMBED) float32 embeddings."""
    B, S = tokens.shape
    BS = B * S
    vocab_pad = ((VOCAB_SIZE + 127) // 128) * 128

    tok2d = tokens.reshape(BS, 1).astype(jnp.int32)

    # zero-pad vocab so the one-hot matmul K dim is lane-aligned (128)
    temb = jnp.zeros((vocab_pad, N_EMBED), jnp.float32).at[:VOCAB_SIZE].set(
        params["token_emb"].astype(jnp.float32))

    # positional embedding batch-tiled wrapper-side (folds into its DMA; no in-kernel concat)
    pemb = jnp.tile(params["pos_emb"][:S].astype(jnp.float32), (B, 1))     # (BS, D)

    # pack every LayerNorm gamma/beta and bias into one (rows, 128) f32 blob
    n_rows = N_LAYER * VEC_ROWS_PER_LAYER + 2
    n_rows_pad = ((n_rows + 7) // 8) * 8
    vecs = jnp.zeros((n_rows_pad, VEC_LANES), jnp.float32)
    for l, ly in enumerate(params["layers"]):
        base = l * VEC_ROWS_PER_LAYER
        vecs = vecs.at[base + 0, :N_EMBED].set(ly["attn_ln_g"])
        vecs = vecs.at[base + 1, :N_EMBED].set(ly["attn_ln_b"])
        vecs = vecs.at[base + 2, :N_EMBED].set(ly["bo"])
        vecs = vecs.at[base + 3, :N_EMBED].set(ly["ff_ln_g"])
        vecs = vecs.at[base + 4, :N_EMBED].set(ly["ff_ln_b"])
        vecs = vecs.at[base + 5, :N_EMBED].set(ly["b2"])
        vecs = vecs.at[base + 6, :FF_INNER].set(ly["b1"])
    fbase = N_LAYER * VEC_ROWS_PER_LAYER
    vecs = vecs.at[fbase + 0, :N_EMBED].set(params["final_ln_g"])
    vecs = vecs.at[fbase + 1, :N_EMBED].set(params["final_ln_b"])

    # fused QKV + per-weight-type blobs stacked over layers; bf16 storage, f32 compute
    wqkv_all = jnp.stack(
        [jnp.concatenate([ly["wq"], ly["wk"], ly["wv"]], axis=1) for ly in params["layers"]]
    ).astype(jnp.bfloat16)                                                 # (L, D, 3*INNER)
    wo_all = jnp.stack([ly["wo"] for ly in params["layers"]]).astype(jnp.bfloat16)  # (L, INNER, D)
    w1_all = jnp.stack([ly["w1"] for ly in params["layers"]]).astype(jnp.bfloat16)  # (L, D, FF_INNER)
    w2_all = jnp.stack([ly["w2"] for ly in params["layers"]]).astype(jnp.bfloat16)  # (L, FF_INNER, D)

    kernel = functools.partial(fused_bert_kernel, seq_len=S)
    flat = [tok2d, temb, pemb, vecs, wqkv_all, wo_all, w1_all, w2_all]     # 8 DMAs total
    in_specs = [pl.BlockSpec(memory_space=pltpu.MemorySpace.VMEM) for _ in flat]

    out = pl.pallas_call(
        kernel,
        out_shape=jax.ShapeDtypeStruct((BS, N_EMBED), jnp.float32),
        in_specs=in_specs,
        out_specs=pl.BlockSpec(memory_space=pltpu.MemorySpace.VMEM),
        scratch_shapes=[pltpu.VMEM((BS, INNER_DIM), jnp.float32)],
        compiler_params=pltpu.CompilerParams(vmem_limit_bytes=32 * 1024 * 1024),
    )(*flat)
    return out.reshape(B, S, N_EMBED)


# ---------------- pure-JAX reference (for correctness sanity check) --------------------
def _ref_ln(x, g, b):
    mean = jnp.mean(x, axis=-1, keepdims=True)
    var = jnp.mean((x - mean) ** 2, axis=-1, keepdims=True)
    return (x - mean) / jnp.sqrt(var + LN_EPS) * g + b


def _q(w):
    # Mirror the kernel's bf16 weight storage so the comparison isolates kernel errors.
    return w.astype(jnp.bfloat16).astype(jnp.float32)


def bert_embedder_reference(tokens, params):
    B, S = tokens.shape
    x = jnp.take(params["token_emb"], tokens, axis=0) + params["pos_emb"][None, :S, :]
    for layer in params["layers"]:
        xn = _ref_ln(x, layer["attn_ln_g"], layer["attn_ln_b"])
        q = xn @ _q(layer["wq"]); k = xn @ _q(layer["wk"]); v = xn @ _q(layer["wv"])
        q = q.reshape(B, S, NUM_HEADS, DIM_HEAD).transpose(0, 2, 1, 3)
        k = k.reshape(B, S, NUM_HEADS, DIM_HEAD).transpose(0, 2, 1, 3)
        v = v.reshape(B, S, NUM_HEADS, DIM_HEAD).transpose(0, 2, 1, 3)
        dots = jnp.einsum("bhid,bhjd->bhij", q, k) * SCALE
        attn = jax.nn.softmax(dots, axis=-1)
        o = jnp.einsum("bhij,bhjd->bhid", attn, v).transpose(0, 2, 1, 3).reshape(B, S, INNER_DIM)
        x = x + (o @ _q(layer["wo"]) + layer["bo"])
        xn = _ref_ln(x, layer["ff_ln_g"], layer["ff_ln_b"])
        h = xn @ _q(layer["w1"]) + layer["b1"]
        h = 0.5 * h * (1.0 + jax.lax.erf(h / SQRT2))
        x = x + (h @ _q(layer["w2"]) + layer["b2"])
    return _ref_ln(x, params["final_ln_g"], params["final_ln_b"])


# ---------------- deterministic parameter init ------------------------------------------
def init_params(key):
    keys = iter(jax.random.split(key, 8 + N_LAYER * 8))

    def nrm(shape, std):
        return (std * jax.random.normal(next(keys), shape)).astype(jnp.float32)

    params = {
        "token_emb": nrm((VOCAB_SIZE, N_EMBED), 1.0),       # nn.Embedding default ~N(0,1)
        "pos_emb":   nrm((MAX_SEQ_LEN, N_EMBED), 0.02),     # AbsolutePositionalEmbedding init
        "final_ln_g": jnp.ones((N_EMBED,), jnp.float32),
        "final_ln_b": jnp.zeros((N_EMBED,), jnp.float32),
        "layers": [],
    }
    for _ in range(N_LAYER):
        layer = {
            "attn_ln_g": jnp.ones((N_EMBED,), jnp.float32),
            "attn_ln_b": jnp.zeros((N_EMBED,), jnp.float32),
            "wq": nrm((N_EMBED, INNER_DIM), 0.05),
            "wk": nrm((N_EMBED, INNER_DIM), 0.05),
            "wv": nrm((N_EMBED, INNER_DIM), 0.05),
            "wo": nrm((INNER_DIM, N_EMBED), 0.05),
            "bo": jnp.zeros((N_EMBED,), jnp.float32),
            "ff_ln_g": jnp.ones((N_EMBED,), jnp.float32),
            "ff_ln_b": jnp.zeros((N_EMBED,), jnp.float32),
            "w1": nrm((N_EMBED, FF_INNER), 0.05),
            "b1": jnp.zeros((FF_INNER,), jnp.float32),
            "w2": nrm((FF_INNER, N_EMBED), 0.05),
            "b2": jnp.zeros((N_EMBED,), jnp.float32),
        }
        params["layers"].append(layer)
    return params


# ---------------- main ------------------------------------------------------------------
if __name__ == "__main__":
    key = jax.random.PRNGKey(0)
    pkey, tkey = jax.random.split(key)
    params = init_params(pkey)

    tokens = jax.random.randint(tkey, (BATCH, MAX_SEQ_LEN), 0, VOCAB_SIZE, dtype=jnp.int32)

    forward = jax.jit(bert_embedder_forward)
    z = jax.block_until_ready(forward(tokens, params))
    assert z.shape == (BATCH, MAX_SEQ_LEN, N_EMBED)

    z_ref = jax.block_until_ready(bert_embedder_reference(tokens, params))
    assert jnp.allclose(z, z_ref, rtol=2e-3, atol=2e-3), "Pallas output mismatch vs reference"

    print("KERNEL_OK")
</pallas_src>

<mosaic_0001>
module attributes {stable_mosaic.version = 11 : i64} {
  func.func @fused_bert_kernel(%arg0: memref<16x1xi32, #tpu.memory_space<vmem>>, %arg1: memref<128x32xf32, #tpu.memory_space<vmem>>, %arg2: memref<16x32xf32, #tpu.memory_space<vmem>>, %arg3: memref<16x128xf32, #tpu.memory_space<vmem>>, %arg4: memref<2x32x1536xbf16, #tpu.memory_space<vmem>>, %arg5: memref<2x512x32xbf16, #tpu.memory_space<vmem>>, %arg6: memref<2x32x128xbf16, #tpu.memory_space<vmem>>, %arg7: memref<2x128x32xbf16, #tpu.memory_space<vmem>>, %arg8: memref<16x32xf32, #tpu.memory_space<vmem>>, %arg9: memref<16x512xf32, #tpu.memory_space<vmem>>) attributes {dimension_semantics = [], scalar_prefetch = 0 : i64, scratch_operands = 1 : i64, tpu.core_type = #tpu.core_type<tc>} {
    %c0 = arith.constant 0 : index
    %c0_0 = arith.constant 0 : index
    %0 = vector.load %arg0[%c0, %c0_0] : memref<16x1xi32, #tpu.memory_space<vmem>>, vector<16x1xi32>
    %1 = tpu.iota {dimensions = array<i32: 1>} : vector<16x128xi32>
    %2 = vector.shape_cast %0 : vector<16x1xi32> to vector<16x1xi32>
    %3 = vector.broadcast %2 : vector<16x1xi32> to vector<16x128xi32>
    %4 = arith.cmpi eq, %3, %1 : vector<16x128xi32>
    %5 = arith.extui %4 : vector<16x128xi1> to vector<16x128xi32>
    %6 = arith.sitofp %5 : vector<16x128xi32> to vector<16x128xf32>
    %c0_1 = arith.constant 0 : index
    %c0_2 = arith.constant 0 : index
    %7 = vector.load %arg1[%c0_1, %c0_2] : memref<128x32xf32, #tpu.memory_space<vmem>>, vector<128x32xf32>
    %cst = arith.constant dense<0.000000e+00> : vector<16x32xf32>
    %8 = tpu.matmul %6, %7, %cst {dimension_numbers = #tpu.dot_dimension_numbers<[1], [0], [0], [1], [0, 0, 1, 1], [], []>} : vector<16x128xf32>, vector<128x32xf32>, vector<16x32xf32> -> vector<16x32xf32>
    %c0_3 = arith.constant 0 : index
    %c0_4 = arith.constant 0 : index
    %9 = vector.load %arg2[%c0_3, %c0_4] : memref<16x32xf32, #tpu.memory_space<vmem>>, vector<16x32xf32>
    %10 = arith.addf %8, %9 : vector<16x32xf32>
    %11 = tpu.iota {dimensions = array<i32: 0>} : vector<16x16xi32>
    %12 = tpu.iota {dimensions = array<i32: 1>} : vector<16x16xi32>
    %c3_i32 = arith.constant 3 : i32
    %13 = vector.broadcast %c3_i32 : i32 to vector<16x16xi32>
    %14 = arith.shrui %11, %13 : vector<16x16xi32>
    %c3_i32_5 = arith.constant 3 : i32
    %15 = vector.broadcast %c3_i32_5 : i32 to vector<16x16xi32>
    %16 = arith.shrui %12, %15 : vector<16x16xi32>
    %17 = arith.cmpi eq, %14, %16 : vector<16x16xi32>
    %cst_6 = arith.constant 0.000000e+00 : f32
    %cst_7 = arith.constant -1.000000e+09 : f32
    %18 = vector.broadcast %cst_6 : f32 to vector<16x16xf32>
    %19 = vector.broadcast %cst_7 : f32 to vector<16x16xf32>
    %20 = arith.select %17, %18, %19 : vector<16x16xi1>, vector<16x16xf32>
    %c0_8 = arith.constant 0 : index
    %c0_9 = arith.constant 0 : index
    %21 = vector.load %arg3[%c0_8, %c0_9] : memref<16x128xf32, #tpu.memory_space<vmem>>, vector<16x128xf32>
    %22 = vector.extract_strided_slice %21 {offsets = [0, 0], sizes = [1, 32], strides = [1, 1]} : vector<16x128xf32> to vector<1x32xf32>
    %23 = vector.shape_cast %22 : vector<1x32xf32> to vector<32xf32>
    %24 = vector.extract_strided_slice %21 {offsets = [1, 0], sizes = [1, 32], strides = [1, 1]} : vector<16x128xf32> to vector<1x32xf32>
    %25 = vector.shape_cast %24 : vector<1x32xf32> to vector<32xf32>
    %26 = vector.extract_strided_slice %21 {offsets = [2, 0], sizes = [1, 32], strides = [1, 1]} : vector<16x128xf32> to vector<1x32xf32>
    %27 = vector.shape_cast %26 : vector<1x32xf32> to vector<32xf32>
    %28 = vector.extract_strided_slice %21 {offsets = [3, 0], sizes = [1, 32], strides = [1, 1]} : vector<16x128xf32> to vector<1x32xf32>
    %29 = vector.shape_cast %28 : vector<1x32xf32> to vector<32xf32>
    %30 = vector.extract_strided_slice %21 {offsets = [4, 0], sizes = [1, 32], strides = [1, 1]} : vector<16x128xf32> to vector<1x32xf32>
    %31 = vector.shape_cast %30 : vector<1x32xf32> to vector<32xf32>
    %32 = vector.extract_strided_slice %21 {offsets = [5, 0], sizes = [1, 32], strides = [1, 1]} : vector<16x128xf32> to vector<1x32xf32>
    %33 = vector.shape_cast %32 : vector<1x32xf32> to vector<32xf32>
    %34 = vector.extract_strided_slice %21 {offsets = [6, 0], sizes = [1, 128], strides = [1, 1]} : vector<16x128xf32> to vector<1x128xf32>
    %35 = vector.shape_cast %34 : vector<1x128xf32> to vector<128xf32>
    %c0_10 = arith.constant 0 : index
    %c0_11 = arith.constant 0 : index
    %c0_12 = arith.constant 0 : index
    %36 = vector.load %arg4[%c0_10, %c0_11, %c0_12] : memref<2x32x1536xbf16, #tpu.memory_space<vmem>>, vector<1x32x1536xbf16>
    %37 = vector.shape_cast %36 : vector<1x32x1536xbf16> to vector<32x1536xbf16>
    %38 = arith.extf %37 : vector<32x1536xbf16> to vector<32x1536xf32>
    %c0_13 = arith.constant 0 : index
    %c0_14 = arith.constant 0 : index
    %c0_15 = arith.constant 0 : index
    %39 = vector.load %arg5[%c0_13, %c0_14, %c0_15] : memref<2x512x32xbf16, #tpu.memory_space<vmem>>, vector<1x512x32xbf16>
    %40 = vector.shape_cast %39 : vector<1x512x32xbf16> to vector<512x32xbf16>
    %41 = arith.extf %40 : vector<512x32xbf16> to vector<512x32xf32>
    %c0_16 = arith.constant 0 : index
    %c0_17 = arith.constant 0 : index
    %c0_18 = arith.constant 0 : index
    %42 = vector.load %arg6[%c0_16, %c0_17, %c0_18] : memref<2x32x128xbf16, #tpu.memory_space<vmem>>, vector<1x32x128xbf16>
    %43 = vector.shape_cast %42 : vector<1x32x128xbf16> to vector<32x128xbf16>
    %44 = arith.extf %43 : vector<32x128xbf16> to vector<32x128xf32>
    %c0_19 = arith.constant 0 : index
    %c0_20 = arith.constant 0 : index
    %c0_21 = arith.constant 0 : index
    %45 = vector.load %arg7[%c0_19, %c0_20, %c0_21] : memref<2x128x32xbf16, #tpu.memory_space<vmem>>, vector<1x128x32xbf16>
    %46 = vector.shape_cast %45 : vector<1x128x32xbf16> to vector<128x32xbf16>
    %47 = arith.extf %46 : vector<128x32xbf16> to vector<128x32xf32>
    %cst_22 = arith.constant dense<0.000000e+00> : vector<16xf32>
    %48 = vector.multi_reduction <add>, %10, %cst_22 [1] : vector<16x32xf32> to vector<16xf32>
    %49 = vector.shape_cast %48 : vector<16xf32> to vector<16x1xf32>
    %cst_23 = arith.constant 3.200000e+01 : f32
    %50 = vector.broadcast %cst_23 : f32 to vector<16x1xf32>
    %51 = arith.divf %49, %50 : vector<16x1xf32>
    %52 = vector.broadcast %51 : vector<16x1xf32> to vector<16x32xf32>
    %53 = arith.subf %10, %52 : vector<16x32xf32>
    %54 = arith.mulf %53, %53 : vector<16x32xf32>
    %cst_24 = arith.constant dense<0.000000e+00> : vector<16xf32>
    %55 = vector.multi_reduction <add>, %54, %cst_24 [1] : vector<16x32xf32> to vector<16xf32>
    %56 = vector.shape_cast %55 : vector<16xf32> to vector<16x1xf32>
    %cst_25 = arith.constant 3.200000e+01 : f32
    %57 = vector.broadcast %cst_25 : f32 to vector<16x1xf32>
    %58 = arith.divf %56, %57 : vector<16x1xf32>
    %59 = vector.broadcast %51 : vector<16x1xf32> to vector<16x32xf32>
    %60 = arith.subf %10, %59 : vector<16x32xf32>
    %cst_26 = arith.constant 9.99999974E-6 : f32
    %61 = vector.broadcast %cst_26 : f32 to vector<16x1xf32>
    %62 = arith.addf %58, %61 : vector<16x1xf32>
    %63 = math.rsqrt %62 : vector<16x1xf32>
    %64 = vector.broadcast %63 : vector<16x1xf32> to vector<16x32xf32>
    %65 = arith.mulf %60, %64 : vector<16x32xf32>
    %66 = vector.shape_cast %23 : vector<32xf32> to vector<1x32xf32>
    %67 = vector.broadcast %66 : vector<1x32xf32> to vector<16x32xf32>
    %68 = arith.mulf %65, %67 : vector<16x32xf32>
    %69 = vector.shape_cast %25 : vector<32xf32> to vector<1x32xf32>
    %70 = vector.broadcast %69 : vector<1x32xf32> to vector<16x32xf32>
    %71 = arith.addf %68, %70 : vector<16x32xf32>
    %cst_27 = arith.constant dense<0.000000e+00> : vector<16x1536xf32>
    %72 = tpu.matmul %71, %38, %cst_27 {dimension_numbers = #tpu.dot_dimension_numbers<[1], [0], [0], [1], [0, 0, 1, 1], [], []>} : vector<16x32xf32>, vector<32x1536xf32>, vector<16x1536xf32> -> vector<16x1536xf32>
    %73 = vector.extract_strided_slice %72 {offsets = [0, 0], sizes = [16, 64], strides = [1, 1]} : vector<16x1536xf32> to vector<16x64xf32>
    %74 = vector.extract_strided_slice %72 {offsets = [0, 512], sizes = [16, 64], strides = [1, 1]} : vector<16x1536xf32> to vector<16x64xf32>
    %75 = vector.extract_strided_slice %72 {offsets = [0, 1024], sizes = [16, 64], strides = [1, 1]} : vector<16x1536xf32> to vector<16x64xf32>
    %cst_28 = arith.constant dense<0.000000e+00> : vector<16x16xf32>
    %76 = tpu.matmul %73, %74, %cst_28 {dimension_numbers = #tpu.dot_dimension_numbers<[1], [1], [0], [0], [0, 0, 1, 0], [], []>} : vector<16x64xf32>, vector<16x64xf32>, vector<16x16xf32> -> vector<16x16xf32>
    %cst_29 = arith.constant 1.250000e-01 : f32
    %77 = vector.broadcast %cst_29 : f32 to vector<16x16xf32>
    %78 = arith.mulf %76, %77 : vector<16x16xf32>
    %79 = arith.addf %78, %20 : vector<16x16xf32>
    %cst_30 = arith.constant dense<0xFF800000> : vector<16xf32>
    %80 = vector.multi_reduction <maximumf>, %79, %cst_30 [1] : vector<16x16xf32> to vector<16xf32>
    %81 = vector.shape_cast %80 : vector<16xf32> to vector<16x1xf32>
    %82 = vector.broadcast %81 : vector<16x1xf32> to vector<16x16xf32>
    %83 = arith.subf %79, %82 : vector<16x16xf32>
    %84 = math.exp %83 : vector<16x16xf32>
    %cst_31 = arith.constant dense<0.000000e+00> : vector<16xf32>
    %85 = vector.multi_reduction <add>, %84, %cst_31 [1] : vector<16x16xf32> to vector<16xf32>
    %86 = vector.shape_cast %85 : vector<16xf32> to vector<16x1xf32>
    %87 = tpu.reciprocal %86 {approx = true} : vector<16x1xf32> -> vector<16x1xf32>
    %88 = arith.mulf %86, %87 : vector<16x1xf32>
    %cst_32 = arith.constant 2.000000e+00 : f32
    %89 = vector.broadcast %cst_32 : f32 to vector<16x1xf32>
    %90 = arith.subf %89, %88 : vector<16x1xf32>
    %91 = arith.mulf %87, %90 : vector<16x1xf32>
    %92 = vector.broadcast %91 : vector<16x1xf32> to vector<16x16xf32>
    %93 = arith.mulf %84, %92 : vector<16x16xf32>
    %cst_33 = arith.constant dense<0.000000e+00> : vector<16x64xf32>
    %94 = tpu.matmul %93, %75, %cst_33 {dimension_numbers = #tpu.dot_dimension_numbers<[1], [0], [0], [1], [0, 0, 1, 1], [], []>} : vector<16x16xf32>, vector<16x64xf32>, vector<16x64xf32> -> vector<16x64xf32>
    %c0_34 = arith.constant 0 : index
    %c0_35 = arith.constant 0 : index
    %95 = vector.load %arg9[%c0_34, %c0_35] : memref<16x512xf32, #tpu.memory_space<vmem>>, vector<16x64xf32>
    tpu.vector_store %arg9[%c0_34, %c0_35], %94 {strides = array<i32>} : memref<16x512xf32, #tpu.memory_space<vmem>>, vector<16x64xf32>,
    %96 = vector.extract_strided_slice %72 {offsets = [0, 64], sizes = [16, 64], strides = [1, 1]} : vector<16x1536xf32> to vector<16x64xf32>
    %97 = vector.extract_strided_slice %72 {offsets = [0, 576], sizes = [16, 64], strides = [1, 1]} : vector<16x1536xf32> to vector<16x64xf32>
    %98 = vector.extract_strided_slice %72 {offsets = [0, 1088], sizes = [16, 64], strides = [1, 1]} : vector<16x1536xf32> to vector<16x64xf32>
    %cst_36 = arith.constant dense<0.000000e+00> : vector<16x16xf32>
    %99 = tpu.matmul %96, %97, %cst_36 {dimension_numbers = #tpu.dot_dimension_numbers<[1], [1], [0], [0], [0, 0, 1, 0], [], []>} : vector<16x64xf32>, vector<16x64xf32>, vector<16x16xf32> -> vector<16x16xf32>
    %cst_37 = arith.constant 1.250000e-01 : f32
    %100 = vector.broadcast %cst_37 : f32 to vector<16x16xf32>
    %101 = arith.mulf %99, %100 : vector<16x16xf32>
    %102 = arith.addf %101, %20 : vector<16x16xf32>
    %cst_38 = arith.constant dense<0xFF800000> : vector<16xf32>
    %103 = vector.multi_reduction <maximumf>, %102, %cst_38 [1] : vector<16x16xf32> to vector<16xf32>
    %104 = vector.shape_cast %103 : vector<16xf32> to vector<16x1xf32>
    %105 = vector.broadcast %104 : vector<16x1xf32> to vector<16x16xf32>
    %106 = arith.subf %102, %105 : vector<16x16xf32>
    %107 = math.exp %106 : vector<16x16xf32>
    %cst_39 = arith.constant dense<0.000000e+00> : vector<16xf32>
    %108 = vector.multi_reduction <add>, %107, %cst_39 [1] : vector<16x16xf32> to vector<16xf32>
    %109 = vector.shape_cast %108 : vector<16xf32> to vector<16x1xf32>
    %110 = tpu.reciprocal %109 {approx = true} : vector<16x1xf32> -> vector<16x1xf32>
    %111 = arith.mulf %109, %110 : vector<16x1xf32>
    %cst_40 = arith.constant 2.000000e+00 : f32
    %112 = vector.broadcast %cst_40 : f32 to vector<16x1xf32>
    %113 = arith.subf %112, %111 : vector<16x1xf32>
    %114 = arith.mulf %110, %113 : vector<16x1xf32>
    %115 = vector.broadcast %114 : vector<16x1xf32> to vector<16x16xf32>
    %116 = arith.mulf %107, %115 : vector<16x16xf32>
    %cst_41 = arith.constant dense<0.000000e+00> : vector<16x64xf32>
    %117 = tpu.matmul %116, %98, %cst_41 {dimension_numbers = #tpu.dot_dimension_numbers<[1], [0], [0], [1], [0, 0, 1, 1], [], []>} : vector<16x16xf32>, vector<16x64xf32>, vector<16x64xf32> -> vector<16x64xf32>
    %c0_42 = arith.constant 0 : index
    %c64 = arith.constant 64 : index
    %118 = vector.load %arg9[%c0_42, %c64] : memref<16x512xf32, #tpu.memory_space<vmem>>, vector<16x64xf32>
    tpu.vector_store %arg9[%c0_42, %c64], %117 {strides = array<i32>} : memref<16x512xf32, #tpu.memory_space<vmem>>, vector<16x64xf32>,
    %119 = vector.extract_strided_slice %72 {offsets = [0, 128], sizes = [16, 64], strides = [1, 1]} : vector<16x1536xf32> to vector<16x64xf32>
    %120 = vector.extract_strided_slice %72 {offsets = [0, 640], sizes = [16, 64], strides = [1, 1]} : vector<16x1536xf32> to vector<16x64xf32>
    %121 = vector.extract_strided_slice %72 {offsets = [0, 1152], sizes = [16, 64], strides = [1, 1]} : vector<16x1536xf32> to vector<16x64xf32>
    %cst_43 = arith.constant dense<0.000000e+00> : vector<16x16xf32>
    %122 = tpu.matmul %119, %120, %cst_43 {dimension_numbers = #tpu.dot_dimension_numbers<[1], [1], [0], [0], [0, 0, 1, 0], [], []>} : vector<16x64xf32>, vector<16x64xf32>, vector<16x16xf32> -> vector<16x16xf32>
    %cst_44 = arith.constant 1.250000e-01 : f32
    %123 = vector.broadcast %cst_44 : f32 to vector<16x16xf32>
    %124 = arith.mulf %122, %123 : vector<16x16xf32>
    %125 = arith.addf %124, %20 : vector<16x16xf32>
    %cst_45 = arith.constant dense<0xFF800000> : vector<16xf32>
    %126 = vector.multi_reduction <maximumf>, %125, %cst_45 [1] : vector<16x16xf32> to vector<16xf32>
    %127 = vector.shape_cast %126 : vector<16xf32> to vector<16x1xf32>
    %128 = vector.broadcast %127 : vector<16x1xf32> to vector<16x16xf32>
    %129 = arith.subf %125, %128 : vector<16x16xf32>
    %130 = math.exp %129 : vector<16x16xf32>
    %cst_46 = arith.constant dense<0.000000e+00> : vector<16xf32>
    %131 = vector.multi_reduction <add>, %130, %cst_46 [1] : vector<16x16xf32> to vector<16xf32>
    %132 = vector.shape_cast %131 : vector<16xf32> to vector<16x1xf32>
    %133 = tpu.reciprocal %132 {approx = true} : vector<16x1xf32> -> vector<16x1xf32>
    %134 = arith.mulf %132, %133 : vector<16x1xf32>
    %cst_47 = arith.constant 2.000000e+00 : f32
    %135 = vector.broadcast %cst_47 : f32 to vector<16x1xf32>
    %136 = arith.subf %135, %134 : vector<16x1xf32>
    %137 = arith.mulf %133, %136 : vector<16x1xf32>
    %138 = vector.broadcast %137 : vector<16x1xf32> to vector<16x16xf32>
    %139 = arith.mulf %130, %138 : vector<16x16xf32>
    %cst_48 = arith.constant dense<0.000000e+00> : vector<16x64xf32>
    %140 = tpu.matmul %139, %121, %cst_48 {dimension_numbers = #tpu.dot_dimension_numbers<[1], [0], [0], [1], [0, 0, 1, 1], [], []>} : vector<16x16xf32>, vector<16x64xf32>, vector<16x64xf32> -> vector<16x64xf32>
    %c0_49 = arith.constant 0 : index
    %c128 = arith.constant 128 : index
    %141 = vector.load %arg9[%c0_49, %c128] : memref<16x512xf32, #tpu.memory_space<vmem>>, vector<16x64xf32>
    tpu.vector_store %arg9[%c0_49, %c128], %140 {strides = array<i32>} : memref<16x512xf32, #tpu.memory_space<vmem>>, vector<16x64xf32>,
    %142 = vector.extract_strided_slice %72 {offsets = [0, 192], sizes = [16, 64], strides = [1, 1]} : vector<16x1536xf32> to vector<16x64xf32>
    %143 = vector.extract_strided_slice %72 {offsets = [0, 704], sizes = [16, 64], strides = [1, 1]} : vector<16x1536xf32> to vector<16x64xf32>
    %144 = vector.extract_strided_slice %72 {offsets = [0, 1216], sizes = [16, 64], strides = [1, 1]} : vector<16x1536xf32> to vector<16x64xf32>
    %cst_50 = arith.constant dense<0.000000e+00> : vector<16x16xf32>
    %145 = tpu.matmul %142, %143, %cst_50 {dimension_numbers = #tpu.dot_dimension_numbers<[1], [1], [0], [0], [0, 0, 1, 0], [], []>} : vector<16x64xf32>, vector<16x64xf32>, vector<16x16xf32> -> vector<16x16xf32>
    %cst_51 = arith.constant 1.250000e-01 : f32
    %146 = vector.broadcast %cst_51 : f32 to vector<16x16xf32>
    %147 = arith.mulf %145, %146 : vector<16x16xf32>
    %148 = arith.addf %147, %20 : vector<16x16xf32>
    %cst_52 = arith.constant dense<0xFF800000> : vector<16xf32>
    %149 = vector.multi_reduction <maximumf>, %148, %cst_52 [1] : vector<16x16xf32> to vector<16xf32>
    %150 = vector.shape_cast %149 : vector<16xf32> to vector<16x1xf32>
    %151 = vector.broadcast %150 : vector<16x1xf32> to vector<16x16xf32>
    %152 = arith.subf %148, %151 : vector<16x16xf32>
    %153 = math.exp %152 : vector<16x16xf32>
    %cst_53 = arith.constant dense<0.000000e+00> : vector<16xf32>
    %154 = vector.multi_reduction <add>, %153, %cst_53 [1] : vector<16x16xf32> to vector<16xf32>
    %155 = vector.shape_cast %154 : vector<16xf32> to vector<16x1xf32>
    %156 = tpu.reciprocal %155 {approx = true} : vector<16x1xf32> -> vector<16x1xf32>
    %157 = arith.mulf %155, %156 : vector<16x1xf32>
    %cst_54 = arith.constant 2.000000e+00 : f32
    %158 = vector.broadcast %cst_54 : f32 to vector<16x1xf32>
    %159 = arith.subf %158, %157 : vector<16x1xf32>
    %160 = arith.mulf %156, %159 : vector<16x1xf32>
    %161 = vector.broadcast %160 : vector<16x1xf32> to vector<16x16xf32>
    %162 = arith.mulf %153, %161 : vector<16x16xf32>
    %cst_55 = arith.constant dense<0.000000e+00> : vector<16x64xf32>
    %163 = tpu.matmul %162, %144, %cst_55 {dimension_numbers = #tpu.dot_dimension_numbers<[1], [0], [0], [1], [0, 0, 1, 1], [], []>} : vector<16x16xf32>, vector<16x64xf32>, vector<16x64xf32> -> vector<16x64xf32>
    %c0_56 = arith.constant 0 : index
    %c192 = arith.constant 192 : index
    %164 = vector.load %arg9[%c0_56, %c192] : memref<16x512xf32, #tpu.memory_space<vmem>>, vector<16x64xf32>
    tpu.vector_store %arg9[%c0_56, %c192], %163 {strides = array<i32>} : memref<16x512xf32, #tpu.memory_space<vmem>>, vector<16x64xf32>,
    %165 = vector.extract_strided_slice %72 {offsets = [0, 256], sizes = [16, 64], strides = [1, 1]} : vector<16x1536xf32> to vector<16x64xf32>
    %166 = vector.extract_strided_slice %72 {offsets = [0, 768], sizes = [16, 64], strides = [1, 1]} : vector<16x1536xf32> to vector<16x64xf32>
    %167 = vector.extract_strided_slice %72 {offsets = [0, 1280], sizes = [16, 64], strides = [1, 1]} : vector<16x1536xf32> to vector<16x64xf32>
    %cst_57 = arith.constant dense<0.000000e+00> : vector<16x16xf32>
    %168 = tpu.matmul %165, %166, %cst_57 {dimension_numbers = #tpu.dot_dimension_numbers<[1], [1], [0], [0], [0, 0, 1, 0], [], []>} : vector<16x64xf32>, vector<16x64xf32>, vector<16x16xf32> -> vector<16x16xf32>
    %cst_58 = arith.constant 1.250000e-01 : f32
    %169 = vector.broadcast %cst_58 : f32 to vector<16x16xf32>
    %170 = arith.mulf %168, %169 : vector<16x16xf32>
    %171 = arith.addf %170, %20 : vector<16x16xf32>
    %cst_59 = arith.constant dense<0xFF800000> : vector<16xf32>
    %172 = vector.multi_reduction <maximumf>, %171, %cst_59 [1] : vector<16x16xf32> to vector<16xf32>
    %173 = vector.shape_cast %172 : vector<16xf32> to vector<16x1xf32>
    %174 = vector.broadcast %173 : vector<16x1xf32> to vector<16x16xf32>
    %175 = arith.subf %171, %174 : vector<16x16xf32>
    %176 = math.exp %175 : vector<16x16xf32>
    %cst_60 = arith.constant dense<0.000000e+00> : vector<16xf32>
    %177 = vector.multi_reduction <add>, %176, %cst_60 [1] : vector<16x16xf32> to vector<16xf32>
    %178 = vector.shape_cast %177 : vector<16xf32> to vector<16x1xf32>
    %179 = tpu.reciprocal %178 {approx = true} : vector<16x1xf32> -> vector<16x1xf32>
    %180 = arith.mulf %178, %179 : vector<16x1xf32>
    %cst_61 = arith.constant 2.000000e+00 : f32
    %181 = vector.broadcast %cst_61 : f32 to vector<16x1xf32>
    %182 = arith.subf %181, %180 : vector<16x1xf32>
    %183 = arith.mulf %179, %182 : vector<16x1xf32>
    %184 = vector.broadcast %183 : vector<16x1xf32> to vector<16x16xf32>
    %185 = arith.mulf %176, %184 : vector<16x16xf32>
    %cst_62 = arith.constant dense<0.000000e+00> : vector<16x64xf32>
    %186 = tpu.matmul %185, %167, %cst_62 {dimension_numbers = #tpu.dot_dimension_numbers<[1], [0], [0], [1], [0, 0, 1, 1], [], []>} : vector<16x16xf32>, vector<16x64xf32>, vector<16x64xf32> -> vector<16x64xf32>
    %c0_63 = arith.constant 0 : index
    %c256 = arith.constant 256 : index
    %187 = vector.load %arg9[%c0_63, %c256] : memref<16x512xf32, #tpu.memory_space<vmem>>, vector<16x64xf32>
    tpu.vector_store %arg9[%c0_63, %c256], %186 {strides = array<i32>} : memref<16x512xf32, #tpu.memory_space<vmem>>, vector<16x64xf32>,
    %188 = vector.extract_strided_slice %72 {offsets = [0, 320], sizes = [16, 64], strides = [1, 1]} : vector<16x1536xf32> to vector<16x64xf32>
    %189 = vector.extract_strided_slice %72 {offsets = [0, 832], sizes = [16, 64], strides = [1, 1]} : vector<16x1536xf32> to vector<16x64xf32>
    %190 = vector.extract_strided_slice %72 {offsets = [0, 1344], sizes = [16, 64], strides = [1, 1]} : vector<16x1536xf32> to vector<16x64xf32>
    %cst_64 = arith.constant dense<0.000000e+00> : vector<16x16xf32>
    %191 = tpu.matmul %188, %189, %cst_64 {dimension_numbers = #tpu.dot_dimension_numbers<[1], [1], [0], [0], [0, 0, 1, 0], [], []>} : vector<16x64xf32>, vector<16x64xf32>, vector<16x16xf32> -> vector<16x16xf32>
    %cst_65 = arith.constant 1.250000e-01 : f32
    %192 = vector.broadcast %cst_65 : f32 to vector<16x16xf32>
    %193 = arith.mulf %191, %192 : vector<16x16xf32>
    %194 = arith.addf %193, %20 : vector<16x16xf32>
    %cst_66 = arith.constant dense<0xFF800000> : vector<16xf32>
    %195 = vector.multi_reduction <maximumf>, %194, %cst_66 [1] : vector<16x16xf32> to vector<16xf32>
    %196 = vector.shape_cast %195 : vector<16xf32> to vector<16x1xf32>
    %197 = vector.broadcast %196 : vector<16x1xf32> to vector<16x16xf32>
    %198 = arith.subf %194, %197 : vector<16x16xf32>
    %199 = math.exp %198 : vector<16x16xf32>
    %cst_67 = arith.constant dense<0.000000e+00> : vector<16xf32>
    %200 = vector.multi_reduction <add>, %199, %cst_67 [1] : vector<16x16xf32> to vector<16xf32>
    %201 = vector.shape_cast %200 : vector<16xf32> to vector<16x1xf32>
    %202 = tpu.reciprocal %201 {approx = true} : vector<16x1xf32> -> vector<16x1xf32>
    %203 = arith.mulf %201, %202 : vector<16x1xf32>
    %cst_68 = arith.constant 2.000000e+00 : f32
    %204 = vector.broadcast %cst_68 : f32 to vector<16x1xf32>
    %205 = arith.subf %204, %203 : vector<16x1xf32>
    %206 = arith.mulf %202, %205 : vector<16x1xf32>
    %207 = vector.broadcast %206 : vector<16x1xf32> to vector<16x16xf32>
    %208 = arith.mulf %199, %207 : vector<16x16xf32>
    %cst_69 = arith.constant dense<0.000000e+00> : vector<16x64xf32>
    %209 = tpu.matmul %208, %190, %cst_69 {dimension_numbers = #tpu.dot_dimension_numbers<[1], [0], [0], [1], [0, 0, 1, 1], [], []>} : vector<16x16xf32>, vector<16x64xf32>, vector<16x64xf32> -> vector<16x64xf32>
    %c0_70 = arith.constant 0 : index
    %c320 = arith.constant 320 : index
    %210 = vector.load %arg9[%c0_70, %c320] : memref<16x512xf32, #tpu.memory_space<vmem>>, vector<16x64xf32>
    tpu.vector_store %arg9[%c0_70, %c320], %209 {strides = array<i32>} : memref<16x512xf32, #tpu.memory_space<vmem>>, vector<16x64xf32>,
    %211 = vector.extract_strided_slice %72 {offsets = [0, 384], sizes = [16, 64], strides = [1, 1]} : vector<16x1536xf32> to vector<16x64xf32>
    %212 = vector.extract_strided_slice %72 {offsets = [0, 896], sizes = [16, 64], strides = [1, 1]} : vector<16x1536xf32> to vector<16x64xf32>
    %213 = vector.extract_strided_slice %72 {offsets = [0, 1408], sizes = [16, 64], strides = [1, 1]} : vector<16x1536xf32> to vector<16x64xf32>
    %cst_71 = arith.constant dense<0.000000e+00> : vector<16x16xf32>
    %214 = tpu.matmul %211, %212, %cst_71 {dimension_numbers = #tpu.dot_dimension_numbers<[1], [1], [0], [0], [0, 0, 1, 0], [], []>} : vector<16x64xf32>, vector<16x64xf32>, vector<16x16xf32> -> vector<16x16xf32>
    %cst_72 = arith.constant 1.250000e-01 : f32
    %215 = vector.broadcast %cst_72 : f32 to vector<16x16xf32>
    %216 = arith.mulf %214, %215 : vector<16x16xf32>
    %217 = arith.addf %216, %20 : vector<16x16xf32>
    %cst_73 = arith.constant dense<0xFF800000> : vector<16xf32>
    %218 = vector.multi_reduction <maximumf>, %217, %cst_73 [1] : vector<16x16xf32> to vector<16xf32>
    %219 = vector.shape_cast %218 : vector<16xf32> to vector<16x1xf32>
    %220 = vector.broadcast %219 : vector<16x1xf32> to vector<16x16xf32>
    %221 = arith.subf %217, %220 : vector<16x16xf32>
    %222 = math.exp %221 : vector<16x16xf32>
    %cst_74 = arith.constant dense<0.000000e+00> : vector<16xf32>
    %223 = vector.multi_reduction <add>, %222, %cst_74 [1] : vector<16x16xf32> to vector<16xf32>
    %224 = vector.shape_cast %223 : vector<16xf32> to vector<16x1xf32>
    %225 = tpu.reciprocal %224 {approx = true} : vector<16x1xf32> -> vector<16x1xf32>
    %226 = arith.mulf %224, %225 : vector<16x1xf32>
    %cst_75 = arith.constant 2.000000e+00 : f32
    %227 = vector.broadcast %cst_75 : f32 to vector<16x1xf32>
    %228 = arith.subf %227, %226 : vector<16x1xf32>
    %229 = arith.mulf %225, %228 : vector<16x1xf32>
    %230 = vector.broadcast %229 : vector<16x1xf32> to vector<16x16xf32>
    %231 = arith.mulf %222, %230 : vector<16x16xf32>
    %cst_76 = arith.constant dense<0.000000e+00> : vector<16x64xf32>
    %232 = tpu.matmul %231, %213, %cst_76 {dimension_numbers = #tpu.dot_dimension_numbers<[1], [0], [0], [1], [0, 0, 1, 1], [], []>} : vector<16x16xf32>, vector<16x64xf32>, vector<16x64xf32> -> vector<16x64xf32>
    %c0_77 = arith.constant 0 : index
    %c384 = arith.constant 384 : index
    %233 = vector.load %arg9[%c0_77, %c384] : memref<16x512xf32, #tpu.memory_space<vmem>>, vector<16x64xf32>
    tpu.vector_store %arg9[%c0_77, %c384], %232 {strides = array<i32>} : memref<16x512xf32, #tpu.memory_space<vmem>>, vector<16x64xf32>,
    %234 = vector.extract_strided_slice %72 {offsets = [0, 448], sizes = [16, 64], strides = [1, 1]} : vector<16x1536xf32> to vector<16x64xf32>
    %235 = vector.extract_strided_slice %72 {offsets = [0, 960], sizes = [16, 64], strides = [1, 1]} : vector<16x1536xf32> to vector<16x64xf32>
    %236 = vector.extract_strided_slice %72 {offsets = [0, 1472], sizes = [16, 64], strides = [1, 1]} : vector<16x1536xf32> to vector<16x64xf32>
    %cst_78 = arith.constant dense<0.000000e+00> : vector<16x16xf32>
    %237 = tpu.matmul %234, %235, %cst_78 {dimension_numbers = #tpu.dot_dimension_numbers<[1], [1], [0], [0], [0, 0, 1, 0], [], []>} : vector<16x64xf32>, vector<16x64xf32>, vector<16x16xf32> -> vector<16x16xf32>
    %cst_79 = arith.constant 1.250000e-01 : f32
    %238 = vector.broadcast %cst_79 : f32 to vector<16x16xf32>
    %239 = arith.mulf %237, %238 : vector<16x16xf32>
    %240 = arith.addf %239, %20 : vector<16x16xf32>
    %cst_80 = arith.constant dense<0xFF800000> : vector<16xf32>
    %241 = vector.multi_reduction <maximumf>, %240, %cst_80 [1] : vector<16x16xf32> to vector<16xf32>
    %242 = vector.shape_cast %241 : vector<16xf32> to vector<16x1xf32>
    %243 = vector.broadcast %242 : vector<16x1xf32> to vector<16x16xf32>
    %244 = arith.subf %240, %243 : vector<16x16xf32>
    %245 = math.exp %244 : vector<16x16xf32>
    %cst_81 = arith.constant dense<0.000000e+00> : vector<16xf32>
    %246 = vector.multi_reduction <add>, %245, %cst_81 [1] : vector<16x16xf32> to vector<16xf32>
    %247 = vector.shape_cast %246 : vector<16xf32> to vector<16x1xf32>
    %248 = tpu.reciprocal %247 {approx = true} : vector<16x1xf32> -> vector<16x1xf32>
    %249 = arith.mulf %247, %248 : vector<16x1xf32>
    %cst_82 = arith.constant 2.000000e+00 : f32
    %250 = vector.broadcast %cst_82 : f32 to vector<16x1xf32>
    %251 = arith.subf %250, %249 : vector<16x1xf32>
    %252 = arith.mulf %248, %251 : vector<16x1xf32>
    %253 = vector.broadcast %252 : vector<16x1xf32> to vector<16x16xf32>
    %254 = arith.mulf %245, %253 : vector<16x16xf32>
    %cst_83 = arith.constant dense<0.000000e+00> : vector<16x64xf32>
    %255 = tpu.matmul %254, %236, %cst_83 {dimension_numbers = #tpu.dot_dimension_numbers<[1], [0], [0], [1], [0, 0, 1, 1], [], []>} : vector<16x16xf32>, vector<16x64xf32>, vector<16x64xf32> -> vector<16x64xf32>
    %c0_84 = arith.constant 0 : index
    %c448 = arith.constant 448 : index
    %256 = vector.load %arg9[%c0_84, %c448] : memref<16x512xf32, #tpu.memory_space<vmem>>, vector<16x64xf32>
    tpu.vector_store %arg9[%c0_84, %c448], %255 {strides = array<i32>} : memref<16x512xf32, #tpu.memory_space<vmem>>, vector<16x64xf32>,
    %c0_85 = arith.constant 0 : index
    %c0_86 = arith.constant 0 : index
    %257 = vector.load %arg9[%c0_85, %c0_86] : memref<16x512xf32, #tpu.memory_space<vmem>>, vector<16x512xf32>
    %cst_87 = arith.constant dense<0.000000e+00> : vector<16x32xf32>
    %258 = tpu.matmul %257, %41, %cst_87 {dimension_numbers = #tpu.dot_dimension_numbers<[1], [0], [0], [1], [0, 0, 1, 1], [], []>} : vector<16x512xf32>, vector<512x32xf32>, vector<16x32xf32> -> vector<16x32xf32>
    %259 = arith.addf %10, %258 : vector<16x32xf32>
    %260 = vector.shape_cast %27 : vector<32xf32> to vector<1x32xf32>
    %261 = vector.broadcast %260 : vector<1x32xf32> to vector<16x32xf32>
    %262 = arith.addf %259, %261 : vector<16x32xf32>
    %cst_88 = arith.constant dense<0.000000e+00> : vector<16xf32>
    %263 = vector.multi_reduction <add>, %262, %cst_88 [1] : vector<16x32xf32> to vector<16xf32>
    %264 = vector.shape_cast %263 : vector<16xf32> to vector<16x1xf32>
    %cst_89 = arith.constant 3.200000e+01 : f32
    %265 = vector.broadcast %cst_89 : f32 to vector<16x1xf32>
    %266 = arith.divf %264, %265 : vector<16x1xf32>
    %267 = vector.broadcast %266 : vector<16x1xf32> to vector<16x32xf32>
    %268 = arith.subf %262, %267 : vector<16x32xf32>
    %269 = arith.mulf %268, %268 : vector<16x32xf32>
    %cst_90 = arith.constant dense<0.000000e+00> : vector<16xf32>
    %270 = vector.multi_reduction <add>, %269, %cst_90 [1] : vector<16x32xf32> to vector<16xf32>
    %271 = vector.shape_cast %270 : vector<16xf32> to vector<16x1xf32>
    %cst_91 = arith.constant 3.200000e+01 : f32
    %272 = vector.broadcast %cst_91 : f32 to vector<16x1xf32>
    %273 = arith.divf %271, %272 : vector<16x1xf32>
    %274 = vector.broadcast %266 : vector<16x1xf32> to vector<16x32xf32>
    %275 = arith.subf %262, %274 : vector<16x32xf32>
    %cst_92 = arith.constant 9.99999974E-6 : f32
    %276 = vector.broadcast %cst_92 : f32 to vector<16x1xf32>
    %277 = arith.addf %273, %276 : vector<16x1xf32>
    %278 = math.rsqrt %277 : vector<16x1xf32>
    %279 = vector.broadcast %278 : vector<16x1xf32> to vector<16x32xf32>
    %280 = arith.mulf %275, %279 : vector<16x32xf32>
    %281 = vector.shape_cast %29 : vector<32xf32> to vector<1x32xf32>
    %282 = vector.broadcast %281 : vector<1x32xf32> to vector<16x32xf32>
    %283 = arith.mulf %280, %282 : vector<16x32xf32>
    %284 = vector.shape_cast %31 : vector<32xf32> to vector<1x32xf32>
    %285 = vector.broadcast %284 : vector<1x32xf32> to vector<16x32xf32>
    %286 = arith.addf %283, %285 : vector<16x32xf32>
    %cst_93 = arith.constant dense<0.000000e+00> : vector<16x128xf32>
    %287 = tpu.matmul %286, %44, %cst_93 {dimension_numbers = #tpu.dot_dimension_numbers<[1], [0], [0], [1], [0, 0, 1, 1], [], []>} : vector<16x32xf32>, vector<32x128xf32>, vector<16x128xf32> -> vector<16x128xf32>
    %288 = vector.shape_cast %35 : vector<128xf32> to vector<1x128xf32>
    %289 = vector.broadcast %288 : vector<1x128xf32> to vector<16x128xf32>
    %290 = arith.addf %287, %289 : vector<16x128xf32>
    %cst_94 = arith.constant 5.000000e-01 : f32
    %291 = vector.broadcast %cst_94 : f32 to vector<16x128xf32>
    %292 = arith.mulf %291, %290 : vector<16x128xf32>
    %cst_95 = arith.constant 1.41421354 : f32
    %293 = vector.broadcast %cst_95 : f32 to vector<16x128xf32>
    %294 = arith.divf %290, %293 : vector<16x128xf32>
    %295 = math.erf %294 : vector<16x128xf32>
    %cst_96 = arith.constant 1.000000e+00 : f32
    %296 = vector.broadcast %cst_96 : f32 to vector<16x128xf32>
    %297 = arith.addf %296, %295 : vector<16x128xf32>
    %298 = arith.mulf %292, %297 : vector<16x128xf32>
    %cst_97 = arith.constant dense<0.000000e+00> : vector<16x32xf32>
    %299 = tpu.matmul %298, %47, %cst_97 {dimension_numbers = #tpu.dot_dimension_numbers<[1], [0], [0], [1], [0, 0, 1, 1], [], []>} : vector<16x128xf32>, vector<128x32xf32>, vector<16x32xf32> -> vector<16x32xf32>
    %300 = arith.addf %262, %299 : vector<16x32xf32>
    %301 = vector.shape_cast %33 : vector<32xf32> to vector<1x32xf32>
    %302 = vector.broadcast %301 : vector<1x32xf32> to vector<16x32xf32>
    %303 = arith.addf %300, %302 : vector<16x32xf32>
    %304 = vector.extract_strided_slice %21 {offsets = [7, 0], sizes = [1, 32], strides = [1, 1]} : vector<16x128xf32> to vector<1x32xf32>
    %305 = vector.shape_cast %304 : vector<1x32xf32> to vector<32xf32>
    %306 = vector.extract_strided_slice %21 {offsets = [8, 0], sizes = [1, 32], strides = [1, 1]} : vector<16x128xf32> to vector<1x32xf32>
    %307 = vector.shape_cast %306 : vector<1x32xf32> to vector<32xf32>
    %308 = vector.extract_strided_slice %21 {offsets = [9, 0], sizes = [1, 32], strides = [1, 1]} : vector<16x128xf32> to vector<1x32xf32>
    %309 = vector.shape_cast %308 : vector<1x32xf32> to vector<32xf32>
    %310 = vector.extract_strided_slice %21 {offsets = [10, 0], sizes = [1, 32], strides = [1, 1]} : vector<16x128xf32> to vector<1x32xf32>
    %311 = vector.shape_cast %310 : vector<1x32xf32> to vector<32xf32>
    %312 = vector.extract_strided_slice %21 {offsets = [11, 0], sizes = [1, 32], strides = [1, 1]} : vector<16x128xf32> to vector<1x32xf32>
    %313 = vector.shape_cast %312 : vector<1x32xf32> to vector<32xf32>
    %314 = vector.extract_strided_slice %21 {offsets = [12, 0], sizes = [1, 32], strides = [1, 1]} : vector<16x128xf32> to vector<1x32xf32>
    %315 = vector.shape_cast %314 : vector<1x32xf32> to vector<32xf32>
    %316 = vector.extract_strided_slice %21 {offsets = [13, 0], sizes = [1, 128], strides = [1, 1]} : vector<16x128xf32> to vector<1x128xf32>
    %317 = vector.shape_cast %316 : vector<1x128xf32> to vector<128xf32>
    %c1 = arith.constant 1 : index
    %c0_98 = arith.constant 0 : index
    %c0_99 = arith.constant 0 : index
    %318 = vector.load %arg4[%c1, %c0_98, %c0_99] : memref<2x32x1536xbf16, #tpu.memory_space<vmem>>, vector<1x32x1536xbf16>
    %319 = vector.shape_cast %318 : vector<1x32x1536xbf16> to vector<32x1536xbf16>
    %320 = arith.extf %319 : vector<32x1536xbf16> to vector<32x1536xf32>
    %c1_100 = arith.constant 1 : index
    %c0_101 = arith.constant 0 : index
    %c0_102 = arith.constant 0 : index
    %321 = vector.load %arg5[%c1_100, %c0_101, %c0_102] : memref<2x512x32xbf16, #tpu.memory_space<vmem>>, vector<1x512x32xbf16>
    %322 = vector.shape_cast %321 : vector<1x512x32xbf16> to vector<512x32xbf16>
    %323 = arith.extf %322 : vector<512x32xbf16> to vector<512x32xf32>
    %c1_103 = arith.constant 1 : index
    %c0_104 = arith.constant 0 : index
    %c0_105 = arith.constant 0 : index
    %324 = vector.load %arg6[%c1_103, %c0_104, %c0_105] : memref<2x32x128xbf16, #tpu.memory_space<vmem>>, vector<1x32x128xbf16>
    %325 = vector.shape_cast %324 : vector<1x32x128xbf16> to vector<32x128xbf16>
    %326 = arith.extf %325 : vector<32x128xbf16> to vector<32x128xf32>
    %c1_106 = arith.constant 1 : index
    %c0_107 = arith.constant 0 : index
    %c0_108 = arith.constant 0 : index
    %327 = vector.load %arg7[%c1_106, %c0_107, %c0_108] : memref<2x128x32xbf16, #tpu.memory_space<vmem>>, vector<1x128x32xbf16>
    %328 = vector.shape_cast %327 : vector<1x128x32xbf16> to vector<128x32xbf16>
    %329 = arith.extf %328 : vector<128x32xbf16> to vector<128x32xf32>
    %cst_109 = arith.constant dense<0.000000e+00> : vector<16xf32>
    %330 = vector.multi_reduction <add>, %303, %cst_109 [1] : vector<16x32xf32> to vector<16xf32>
    %331 = vector.shape_cast %330 : vector<16xf32> to vector<16x1xf32>
    %cst_110 = arith.constant 3.200000e+01 : f32
    %332 = vector.broadcast %cst_110 : f32 to vector<16x1xf32>
    %333 = arith.divf %331, %332 : vector<16x1xf32>
    %334 = vector.broadcast %333 : vector<16x1xf32> to vector<16x32xf32>
    %335 = arith.subf %303, %334 : vector<16x32xf32>
    %336 = arith.mulf %335, %335 : vector<16x32xf32>
    %cst_111 = arith.constant dense<0.000000e+00> : vector<16xf32>
    %337 = vector.multi_reduction <add>, %336, %cst_111 [1] : vector<16x32xf32> to vector<16xf32>
    %338 = vector.shape_cast %337 : vector<16xf32> to vector<16x1xf32>
    %cst_112 = arith.constant 3.200000e+01 : f32
    %339 = vector.broadcast %cst_112 : f32 to vector<16x1xf32>
    %340 = arith.divf %338, %339 : vector<16x1xf32>
    %341 = vector.broadcast %333 : vector<16x1xf32> to vector<16x32xf32>
    %342 = arith.subf %303, %341 : vector<16x32xf32>
    %cst_113 = arith.constant 9.99999974E-6 : f32
    %343 = vector.broadcast %cst_113 : f32 to vector<16x1xf32>
    %344 = arith.addf %340, %343 : vector<16x1xf32>
    %345 = math.rsqrt %344 : vector<16x1xf32>
    %346 = vector.broadcast %345 : vector<16x1xf32> to vector<16x32xf32>
    %347 = arith.mulf %342, %346 : vector<16x32xf32>
    %348 = vector.shape_cast %305 : vector<32xf32> to vector<1x32xf32>
    %349 = vector.broadcast %348 : vector<1x32xf32> to vector<16x32xf32>
    %350 = arith.mulf %347, %349 : vector<16x32xf32>
    %351 = vector.shape_cast %307 : vector<32xf32> to vector<1x32xf32>
    %352 = vector.broadcast %351 : vector<1x32xf32> to vector<16x32xf32>
    %353 = arith.addf %350, %352 : vector<16x32xf32>
    %cst_114 = arith.constant dense<0.000000e+00> : vector<16x1536xf32>
    %354 = tpu.matmul %353, %320, %cst_114 {dimension_numbers = #tpu.dot_dimension_numbers<[1], [0], [0], [1], [0, 0, 1, 1], [], []>} : vector<16x32xf32>, vector<32x1536xf32>, vector<16x1536xf32> -> vector<16x1536xf32>
    %355 = vector.extract_strided_slice %354 {offsets = [0, 0], sizes = [16, 64], strides = [1, 1]} : vector<16x1536xf32> to vector<16x64xf32>
    %356 = vector.extract_strided_slice %354 {offsets = [0, 512], sizes = [16, 64], strides = [1, 1]} : vector<16x1536xf32> to vector<16x64xf32>
    %357 = vector.extract_strided_slice %354 {offsets = [0, 1024], sizes = [16, 64], strides = [1, 1]} : vector<16x1536xf32> to vector<16x64xf32>
    %cst_115 = arith.constant dense<0.000000e+00> : vector<16x16xf32>
    %358 = tpu.matmul %355, %356, %cst_115 {dimension_numbers = #tpu.dot_dimension_numbers<[1], [1], [0], [0], [0, 0, 1, 0], [], []>} : vector<16x64xf32>, vector<16x64xf32>, vector<16x16xf32> -> vector<16x16xf32>
    %cst_116 = arith.constant 1.250000e-01 : f32
    %359 = vector.broadcast %cst_116 : f32 to vector<16x16xf32>
    %360 = arith.mulf %358, %359 : vector<16x16xf32>
    %361 = arith.addf %360, %20 : vector<16x16xf32>
    %cst_117 = arith.constant dense<0xFF800000> : vector<16xf32>
    %362 = vector.multi_reduction <maximumf>, %361, %cst_117 [1] : vector<16x16xf32> to vector<16xf32>
    %363 = vector.shape_cast %362 : vector<16xf32> to vector<16x1xf32>
    %364 = vector.broadcast %363 : vector<16x1xf32> to vector<16x16xf32>
    %365 = arith.subf %361, %364 : vector<16x16xf32>
    %366 = math.exp %365 : vector<16x16xf32>
    %cst_118 = arith.constant dense<0.000000e+00> : vector<16xf32>
    %367 = vector.multi_reduction <add>, %366, %cst_118 [1] : vector<16x16xf32> to vector<16xf32>
    %368 = vector.shape_cast %367 : vector<16xf32> to vector<16x1xf32>
    %369 = tpu.reciprocal %368 {approx = true} : vector<16x1xf32> -> vector<16x1xf32>
    %370 = arith.mulf %368, %369 : vector<16x1xf32>
    %cst_119 = arith.constant 2.000000e+00 : f32
    %371 = vector.broadcast %cst_119 : f32 to vector<16x1xf32>
    %372 = arith.subf %371, %370 : vector<16x1xf32>
    %373 = arith.mulf %369, %372 : vector<16x1xf32>
    %374 = vector.broadcast %373 : vector<16x1xf32> to vector<16x16xf32>
    %375 = arith.mulf %366, %374 : vector<16x16xf32>
    %cst_120 = arith.constant dense<0.000000e+00> : vector<16x64xf32>
    %376 = tpu.matmul %375, %357, %cst_120 {dimension_numbers = #tpu.dot_dimension_numbers<[1], [0], [0], [1], [0, 0, 1, 1], [], []>} : vector<16x16xf32>, vector<16x64xf32>, vector<16x64xf32> -> vector<16x64xf32>
    %c0_121 = arith.constant 0 : index
    %c0_122 = arith.constant 0 : index
    %377 = vector.load %arg9[%c0_121, %c0_122] : memref<16x512xf32, #tpu.memory_space<vmem>>, vector<16x64xf32>
    tpu.vector_store %arg9[%c0_121, %c0_122], %376 {strides = array<i32>} : memref<16x512xf32, #tpu.memory_space<vmem>>, vector<16x64xf32>,
    %378 = vector.extract_strided_slice %354 {offsets = [0, 64], sizes = [16, 64], strides = [1, 1]} : vector<16x1536xf32> to vector<16x64xf32>
    %379 = vector.extract_strided_slice %354 {offsets = [0, 576], sizes = [16, 64], strides = [1, 1]} : vector<16x1536xf32> to vector<16x64xf32>
    %380 = vector.extract_strided_slice %354 {offsets = [0, 1088], sizes = [16, 64], strides = [1, 1]} : vector<16x1536xf32> to vector<16x64xf32>
    %cst_123 = arith.constant dense<0.000000e+00> : vector<16x16xf32>
    %381 = tpu.matmul %378, %379, %cst_123 {dimension_numbers = #tpu.dot_dimension_numbers<[1], [1], [0], [0], [0, 0, 1, 0], [], []>} : vector<16x64xf32>, vector<16x64xf32>, vector<16x16xf32> -> vector<16x16xf32>
    %cst_124 = arith.constant 1.250000e-01 : f32
    %382 = vector.broadcast %cst_124 : f32 to vector<16x16xf32>
    %383 = arith.mulf %381, %382 : vector<16x16xf32>
    %384 = arith.addf %383, %20 : vector<16x16xf32>
    %cst_125 = arith.constant dense<0xFF800000> : vector<16xf32>
    %385 = vector.multi_reduction <maximumf>, %384, %cst_125 [1] : vector<16x16xf32> to vector<16xf32>
    %386 = vector.shape_cast %385 : vector<16xf32> to vector<16x1xf32>
    %387 = vector.broadcast %386 : vector<16x1xf32> to vector<16x16xf32>
    %388 = arith.subf %384, %387 : vector<16x16xf32>
    %389 = math.exp %388 : vector<16x16xf32>
    %cst_126 = arith.constant dense<0.000000e+00> : vector<16xf32>
    %390 = vector.multi_reduction <add>, %389, %cst_126 [1] : vector<16x16xf32> to vector<16xf32>
    %391 = vector.shape_cast %390 : vector<16xf32> to vector<16x1xf32>
    %392 = tpu.reciprocal %391 {approx = true} : vector<16x1xf32> -> vector<16x1xf32>
    %393 = arith.mulf %391, %392 : vector<16x1xf32>
    %cst_127 = arith.constant 2.000000e+00 : f32
    %394 = vector.broadcast %cst_127 : f32 to vector<16x1xf32>
    %395 = arith.subf %394, %393 : vector<16x1xf32>
    %396 = arith.mulf %392, %395 : vector<16x1xf32>
    %397 = vector.broadcast %396 : vector<16x1xf32> to vector<16x16xf32>
    %398 = arith.mulf %389, %397 : vector<16x16xf32>
    %cst_128 = arith.constant dense<0.000000e+00> : vector<16x64xf32>
    %399 = tpu.matmul %398, %380, %cst_128 {dimension_numbers = #tpu.dot_dimension_numbers<[1], [0], [0], [1], [0, 0, 1, 1], [], []>} : vector<16x16xf32>, vector<16x64xf32>, vector<16x64xf32> -> vector<16x64xf32>
    %c0_129 = arith.constant 0 : index
    %c64_130 = arith.constant 64 : index
    %400 = vector.load %arg9[%c0_129, %c64_130] : memref<16x512xf32, #tpu.memory_space<vmem>>, vector<16x64xf32>
    tpu.vector_store %arg9[%c0_129, %c64_130], %399 {strides = array<i32>} : memref<16x512xf32, #tpu.memory_space<vmem>>, vector<16x64xf32>,
    %401 = vector.extract_strided_slice %354 {offsets = [0, 128], sizes = [16, 64], strides = [1, 1]} : vector<16x1536xf32> to vector<16x64xf32>
    %402 = vector.extract_strided_slice %354 {offsets = [0, 640], sizes = [16, 64], strides = [1, 1]} : vector<16x1536xf32> to vector<16x64xf32>
    %403 = vector.extract_strided_slice %354 {offsets = [0, 1152], sizes = [16, 64], strides = [1, 1]} : vector<16x1536xf32> to vector<16x64xf32>
    %cst_131 = arith.constant dense<0.000000e+00> : vector<16x16xf32>
    %404 = tpu.matmul %401, %402, %cst_131 {dimension_numbers = #tpu.dot_dimension_numbers<[1], [1], [0], [0], [0, 0, 1, 0], [], []>} : vector<16x64xf32>, vector<16x64xf32>, vector<16x16xf32> -> vector<16x16xf32>
    %cst_132 = arith.constant 1.250000e-01 : f32
    %405 = vector.broadcast %cst_132 : f32 to vector<16x16xf32>
    %406 = arith.mulf %404, %405 : vector<16x16xf32>
    %407 = arith.addf %406, %20 : vector<16x16xf32>
    %cst_133 = arith.constant dense<0xFF800000> : vector<16xf32>
    %408 = vector.multi_reduction <maximumf>, %407, %cst_133 [1] : vector<16x16xf32> to vector<16xf32>
    %409 = vector.shape_cast %408 : vector<16xf32> to vector<16x1xf32>
    %410 = vector.broadcast %409 : vector<16x1xf32> to vector<16x16xf32>
    %411 = arith.subf %407, %410 : vector<16x16xf32>
    %412 = math.exp %411 : vector<16x16xf32>
    %cst_134 = arith.constant dense<0.000000e+00> : vector<16xf32>
    %413 = vector.multi_reduction <add>, %412, %cst_134 [1] : vector<16x16xf32> to vector<16xf32>
    %414 = vector.shape_cast %413 : vector<16xf32> to vector<16x1xf32>
    %415 = tpu.reciprocal %414 {approx = true} : vector<16x1xf32> -> vector<16x1xf32>
    %416 = arith.mulf %414, %415 : vector<16x1xf32>
    %cst_135 = arith.constant 2.000000e+00 : f32
    %417 = vector.broadcast %cst_135 : f32 to vector<16x1xf32>
    %418 = arith.subf %417, %416 : vector<16x1xf32>
    %419 = arith.mulf %415, %418 : vector<16x1xf32>
    %420 = vector.broadcast %419 : vector<16x1xf32> to vector<16x16xf32>
    %421 = arith.mulf %412, %420 : vector<16x16xf32>
    %cst_136 = arith.constant dense<0.000000e+00> : vector<16x64xf32>
    %422 = tpu.matmul %421, %403, %cst_136 {dimension_numbers = #tpu.dot_dimension_numbers<[1], [0], [0], [1], [0, 0, 1, 1], [], []>} : vector<16x16xf32>, vector<16x64xf32>, vector<16x64xf32> -> vector<16x64xf32>
    %c0_137 = arith.constant 0 : index
    %c128_138 = arith.constant 128 : index
    %423 = vector.load %arg9[%c0_137, %c128_138] : memref<16x512xf32, #tpu.memory_space<vmem>>, vector<16x64xf32>
    tpu.vector_store %arg9[%c0_137, %c128_138], %422 {strides = array<i32>} : memref<16x512xf32, #tpu.memory_space<vmem>>, vector<16x64xf32>,
    %424 = vector.extract_strided_slice %354 {offsets = [0, 192], sizes = [16, 64], strides = [1, 1]} : vector<16x1536xf32> to vector<16x64xf32>
    %425 = vector.extract_strided_slice %354 {offsets = [0, 704], sizes = [16, 64], strides = [1, 1]} : vector<16x1536xf32> to vector<16x64xf32>
    %426 = vector.extract_strided_slice %354 {offsets = [0, 1216], sizes = [16, 64], strides = [1, 1]} : vector<16x1536xf32> to vector<16x64xf32>
    %cst_139 = arith.constant dense<0.000000e+00> : vector<16x16xf32>
    %427 = tpu.matmul %424, %425, %cst_139 {dimension_numbers = #tpu.dot_dimension_numbers<[1], [1], [0], [0], [0, 0, 1, 0], [], []>} : vector<16x64xf32>, vector<16x64xf32>, vector<16x16xf32> -> vector<16x16xf32>
    %cst_140 = arith.constant 1.250000e-01 : f32
    %428 = vector.broadcast %cst_140 : f32 to vector<16x16xf32>
    %429 = arith.mulf %427, %428 : vector<16x16xf32>
    %430 = arith.addf %429, %20 : vector<16x16xf32>
    %cst_141 = arith.constant dense<0xFF800000> : vector<16xf32>
    %431 = vector.multi_reduction <maximumf>, %430, %cst_141 [1] : vector<16x16xf32> to vector<16xf32>
    %432 = vector.shape_cast %431 : vector<16xf32> to vector<16x1xf32>
    %433 = vector.broadcast %432 : vector<16x1xf32> to vector<16x16xf32>
    %434 = arith.subf %430, %433 : vector<16x16xf32>
    %435 = math.exp %434 : vector<16x16xf32>
    %cst_142 = arith.constant dense<0.000000e+00> : vector<16xf32>
    %436 = vector.multi_reduction <add>, %435, %cst_142 [1] : vector<16x16xf32> to vector<16xf32>
    %437 = vector.shape_cast %436 : vector<16xf32> to vector<16x1xf32>
    %438 = tpu.reciprocal %437 {approx = true} : vector<16x1xf32> -> vector<16x1xf32>
    %439 = arith.mulf %437, %438 : vector<16x1xf32>
    %cst_143 = arith.constant 2.000000e+00 : f32
    %440 = vector.broadcast %cst_143 : f32 to vector<16x1xf32>
    %441 = arith.subf %440, %439 : vector<16x1xf32>
    %442 = arith.mulf %438, %441 : vector<16x1xf32>
    %443 = vector.broadcast %442 : vector<16x1xf32> to vector<16x16xf32>
    %444 = arith.mulf %435, %443 : vector<16x16xf32>
    %cst_144 = arith.constant dense<0.000000e+00> : vector<16x64xf32>
    %445 = tpu.matmul %444, %426, %cst_144 {dimension_numbers = #tpu.dot_dimension_numbers<[1], [0], [0], [1], [0, 0, 1, 1], [], []>} : vector<16x16xf32>, vector<16x64xf32>, vector<16x64xf32> -> vector<16x64xf32>
    %c0_145 = arith.constant 0 : index
    %c192_146 = arith.constant 192 : index
    %446 = vector.load %arg9[%c0_145, %c192_146] : memref<16x512xf32, #tpu.memory_space<vmem>>, vector<16x64xf32>
    tpu.vector_store %arg9[%c0_145, %c192_146], %445 {strides = array<i32>} : memref<16x512xf32, #tpu.memory_space<vmem>>, vector<16x64xf32>,
    %447 = vector.extract_strided_slice %354 {offsets = [0, 256], sizes = [16, 64], strides = [1, 1]} : vector<16x1536xf32> to vector<16x64xf32>
    %448 = vector.extract_strided_slice %354 {offsets = [0, 768], sizes = [16, 64], strides = [1, 1]} : vector<16x1536xf32> to vector<16x64xf32>
    %449 = vector.extract_strided_slice %354 {offsets = [0, 1280], sizes = [16, 64], strides = [1, 1]} : vector<16x1536xf32> to vector<16x64xf32>
    %cst_147 = arith.constant dense<0.000000e+00> : vector<16x16xf32>
    %450 = tpu.matmul %447, %448, %cst_147 {dimension_numbers = #tpu.dot_dimension_numbers<[1], [1], [0], [0], [0, 0, 1, 0], [], []>} : vector<16x64xf32>, vector<16x64xf32>, vector<16x16xf32> -> vector<16x16xf32>
    %cst_148 = arith.constant 1.250000e-01 : f32
    %451 = vector.broadcast %cst_148 : f32 to vector<16x16xf32>
    %452 = arith.mulf %450, %451 : vector<16x16xf32>
    %453 = arith.addf %452, %20 : vector<16x16xf32>
    %cst_149 = arith.constant dense<0xFF800000> : vector<16xf32>
    %454 = vector.multi_reduction <maximumf>, %453, %cst_149 [1] : vector<16x16xf32> to vector<16xf32>
    %455 = vector.shape_cast %454 : vector<16xf32> to vector<16x1xf32>
    %456 = vector.broadcast %455 : vector<16x1xf32> to vector<16x16xf32>
    %457 = arith.subf %453, %456 : vector<16x16xf32>
    %458 = math.exp %457 : vector<16x16xf32>
    %cst_150 = arith.constant dense<0.000000e+00> : vector<16xf32>
    %459 = vector.multi_reduction <add>, %458, %cst_150 [1] : vector<16x16xf32> to vector<16xf32>
    %460 = vector.shape_cast %459 : vector<16xf32> to vector<16x1xf32>
    %461 = tpu.reciprocal %460 {approx = true} : vector<16x1xf32> -> vector<16x1xf32>
    %462 = arith.mulf %460, %461 : vector<16x1xf32>
    %cst_151 = arith.constant 2.000000e+00 : f32
    %463 = vector.broadcast %cst_151 : f32 to vector<16x1xf32>
    %464 = arith.subf %463, %462 : vector<16x1xf32>
    %465 = arith.mulf %461, %464 : vector<16x1xf32>
    %466 = vector.broadcast %465 : vector<16x1xf32> to vector<16x16xf32>
    %467 = arith.mulf %458, %466 : vector<16x16xf32>
    %cst_152 = arith.constant dense<0.000000e+00> : vector<16x64xf32>
    %468 = tpu.matmul %467, %449, %cst_152 {dimension_numbers = #tpu.dot_dimension_numbers<[1], [0], [0], [1], [0, 0, 1, 1], [], []>} : vector<16x16xf32>, vector<16x64xf32>, vector<16x64xf32> -> vector<16x64xf32>
    %c0_153 = arith.constant 0 : index
    %c256_154 = arith.constant 256 : index
    %469 = vector.load %arg9[%c0_153, %c256_154] : memref<16x512xf32, #tpu.memory_space<vmem>>, vector<16x64xf32>
    tpu.vector_store %arg9[%c0_153, %c256_154], %468 {strides = array<i32>} : memref<16x512xf32, #tpu.memory_space<vmem>>, vector<16x64xf32>,
    %470 = vector.extract_strided_slice %354 {offsets = [0, 320], sizes = [16, 64], strides = [1, 1]} : vector<16x1536xf32> to vector<16x64xf32>
    %471 = vector.extract_strided_slice %354 {offsets = [0, 832], sizes = [16, 64], strides = [1, 1]} : vector<16x1536xf32> to vector<16x64xf32>
    %472 = vector.extract_strided_slice %354 {offsets = [0, 1344], sizes = [16, 64], strides = [1, 1]} : vector<16x1536xf32> to vector<16x64xf32>
    %cst_155 = arith.constant dense<0.000000e+00> : vector<16x16xf32>
    %473 = tpu.matmul %470, %471, %cst_155 {dimension_numbers = #tpu.dot_dimension_numbers<[1], [1], [0], [0], [0, 0, 1, 0], [], []>} : vector<16x64xf32>, vector<16x64xf32>, vector<16x16xf32> -> vector<16x16xf32>
    %cst_156 = arith.constant 1.250000e-01 : f32
    %474 = vector.broadcast %cst_156 : f32 to vector<16x16xf32>
    %475 = arith.mulf %473, %474 : vector<16x16xf32>
    %476 = arith.addf %475, %20 : vector<16x16xf32>
    %cst_157 = arith.constant dense<0xFF800000> : vector<16xf32>
    %477 = vector.multi_reduction <maximumf>, %476, %cst_157 [1] : vector<16x16xf32> to vector<16xf32>
    %478 = vector.shape_cast %477 : vector<16xf32> to vector<16x1xf32>
    %479 = vector.broadcast %478 : vector<16x1xf32> to vector<16x16xf32>
    %480 = arith.subf %476, %479 : vector<16x16xf32>
    %481 = math.exp %480 : vector<16x16xf32>
    %cst_158 = arith.constant dense<0.000000e+00> : vector<16xf32>
    %482 = vector.multi_reduction <add>, %481, %cst_158 [1] : vector<16x16xf32> to vector<16xf32>
    %483 = vector.shape_cast %482 : vector<16xf32> to vector<16x1xf32>
    %484 = tpu.reciprocal %483 {approx = true} : vector<16x1xf32> -> vector<16x1xf32>
    %485 = arith.mulf %483, %484 : vector<16x1xf32>
    %cst_159 = arith.constant 2.000000e+00 : f32
    %486 = vector.broadcast %cst_159 : f32 to vector<16x1xf32>
    %487 = arith.subf %486, %485 : vector<16x1xf32>
    %488 = arith.mulf %484, %487 : vector<16x1xf32>
    %489 = vector.broadcast %488 : vector<16x1xf32> to vector<16x16xf32>
    %490 = arith.mulf %481, %489 : vector<16x16xf32>
    %cst_160 = arith.constant dense<0.000000e+00> : vector<16x64xf32>
    %491 = tpu.matmul %490, %472, %cst_160 {dimension_numbers = #tpu.dot_dimension_numbers<[1], [0], [0], [1], [0, 0, 1, 1], [], []>} : vector<16x16xf32>, vector<16x64xf32>, vector<16x64xf32> -> vector<16x64xf32>
    %c0_161 = arith.constant 0 : index
    %c320_162 = arith.constant 320 : index
    %492 = vector.load %arg9[%c0_161, %c320_162] : memref<16x512xf32, #tpu.memory_space<vmem>>, vector<16x64xf32>
    tpu.vector_store %arg9[%c0_161, %c320_162], %491 {strides = array<i32>} : memref<16x512xf32, #tpu.memory_space<vmem>>, vector<16x64xf32>,
    %493 = vector.extract_strided_slice %354 {offsets = [0, 384], sizes = [16, 64], strides = [1, 1]} : vector<16x1536xf32> to vector<16x64xf32>
    %494 = vector.extract_strided_slice %354 {offsets = [0, 896], sizes = [16, 64], strides = [1, 1]} : vector<16x1536xf32> to vector<16x64xf32>
    %495 = vector.extract_strided_slice %354 {offsets = [0, 1408], sizes = [16, 64], strides = [1, 1]} : vector<16x1536xf32> to vector<16x64xf32>
    %cst_163 = arith.constant dense<0.000000e+00> : vector<16x16xf32>
    %496 = tpu.matmul %493, %494, %cst_163 {dimension_numbers = #tpu.dot_dimension_numbers<[1], [1], [0], [0], [0, 0, 1, 0], [], []>} : vector<16x64xf32>, vector<16x64xf32>, vector<16x16xf32> -> vector<16x16xf32>
    %cst_164 = arith.constant 1.250000e-01 : f32
    %497 = vector.broadcast %cst_164 : f32 to vector<16x16xf32>
    %498 = arith.mulf %496, %497 : vector<16x16xf32>
    %499 = arith.addf %498, %20 : vector<16x16xf32>
    %cst_165 = arith.constant dense<0xFF800000> : vector<16xf32>
    %500 = vector.multi_reduction <maximumf>, %499, %cst_165 [1] : vector<16x16xf32> to vector<16xf32>
    %501 = vector.shape_cast %500 : vector<16xf32> to vector<16x1xf32>
    %502 = vector.broadcast %501 : vector<16x1xf32> to vector<16x16xf32>
    %503 = arith.subf %499, %502 : vector<16x16xf32>
    %504 = math.exp %503 : vector<16x16xf32>
    %cst_166 = arith.constant dense<0.000000e+00> : vector<16xf32>
    %505 = vector.multi_reduction <add>, %504, %cst_166 [1] : vector<16x16xf32> to vector<16xf32>
    %506 = vector.shape_cast %505 : vector<16xf32> to vector<16x1xf32>
    %507 = tpu.reciprocal %506 {approx = true} : vector<16x1xf32> -> vector<16x1xf32>
    %508 = arith.mulf %506, %507 : vector<16x1xf32>
    %cst_167 = arith.constant 2.000000e+00 : f32
    %509 = vector.broadcast %cst_167 : f32 to vector<16x1xf32>
    %510 = arith.subf %509, %508 : vector<16x1xf32>
    %511 = arith.mulf %507, %510 : vector<16x1xf32>
    %512 = vector.broadcast %511 : vector<16x1xf32> to vector<16x16xf32>
    %513 = arith.mulf %504, %512 : vector<16x16xf32>
    %cst_168 = arith.constant dense<0.000000e+00> : vector<16x64xf32>
    %514 = tpu.matmul %513, %495, %cst_168 {dimension_numbers = #tpu.dot_dimension_numbers<[1], [0], [0], [1], [0, 0, 1, 1], [], []>} : vector<16x16xf32>, vector<16x64xf32>, vector<16x64xf32> -> vector<16x64xf32>
    %c0_169 = arith.constant 0 : index
    %c384_170 = arith.constant 384 : index
    %515 = vector.load %arg9[%c0_169, %c384_170] : memref<16x512xf32, #tpu.memory_space<vmem>>, vector<16x64xf32>
    tpu.vector_store %arg9[%c0_169, %c384_170], %514 {strides = array<i32>} : memref<16x512xf32, #tpu.memory_space<vmem>>, vector<16x64xf32>,
    %516 = vector.extract_strided_slice %354 {offsets = [0, 448], sizes = [16, 64], strides = [1, 1]} : vector<16x1536xf32> to vector<16x64xf32>
    %517 = vector.extract_strided_slice %354 {offsets = [0, 960], sizes = [16, 64], strides = [1, 1]} : vector<16x1536xf32> to vector<16x64xf32>
    %518 = vector.extract_strided_slice %354 {offsets = [0, 1472], sizes = [16, 64], strides = [1, 1]} : vector<16x1536xf32> to vector<16x64xf32>
    %cst_171 = arith.constant dense<0.000000e+00> : vector<16x16xf32>
    %519 = tpu.matmul %516, %517, %cst_171 {dimension_numbers = #tpu.dot_dimension_numbers<[1], [1], [0], [0], [0, 0, 1, 0], [], []>} : vector<16x64xf32>, vector<16x64xf32>, vector<16x16xf32> -> vector<16x16xf32>
    %cst_172 = arith.constant 1.250000e-01 : f32
    %520 = vector.broadcast %cst_172 : f32 to vector<16x16xf32>
    %521 = arith.mulf %519, %520 : vector<16x16xf32>
    %522 = arith.addf %521, %20 : vector<16x16xf32>
    %cst_173 = arith.constant dense<0xFF800000> : vector<16xf32>
    %523 = vector.multi_reduction <maximumf>, %522, %cst_173 [1] : vector<16x16xf32> to vector<16xf32>
    %524 = vector.shape_cast %523 : vector<16xf32> to vector<16x1xf32>
    %525 = vector.broadcast %524 : vector<16x1xf32> to vector<16x16xf32>
    %526 = arith.subf %522, %525 : vector<16x16xf32>
    %527 = math.exp %526 : vector<16x16xf32>
    %cst_174 = arith.constant dense<0.000000e+00> : vector<16xf32>
    %528 = vector.multi_reduction <add>, %527, %cst_174 [1] : vector<16x16xf32> to vector<16xf32>
    %529 = vector.shape_cast %528 : vector<16xf32> to vector<16x1xf32>
    %530 = tpu.reciprocal %529 {approx = true} : vector<16x1xf32> -> vector<16x1xf32>
    %531 = arith.mulf %529, %530 : vector<16x1xf32>
    %cst_175 = arith.constant 2.000000e+00 : f32
    %532 = vector.broadcast %cst_175 : f32 to vector<16x1xf32>
    %533 = arith.subf %532, %531 : vector<16x1xf32>
    %534 = arith.mulf %530, %533 : vector<16x1xf32>
    %535 = vector.broadcast %534 : vector<16x1xf32> to vector<16x16xf32>
    %536 = arith.mulf %527, %535 : vector<16x16xf32>
    %cst_176 = arith.constant dense<0.000000e+00> : vector<16x64xf32>
    %537 = tpu.matmul %536, %518, %cst_176 {dimension_numbers = #tpu.dot_dimension_numbers<[1], [0], [0], [1], [0, 0, 1, 1], [], []>} : vector<16x16xf32>, vector<16x64xf32>, vector<16x64xf32> -> vector<16x64xf32>
    %c0_177 = arith.constant 0 : index
    %c448_178 = arith.constant 448 : index
    %538 = vector.load %arg9[%c0_177, %c448_178] : memref<16x512xf32, #tpu.memory_space<vmem>>, vector<16x64xf32>
    tpu.vector_store %arg9[%c0_177, %c448_178], %537 {strides = array<i32>} : memref<16x512xf32, #tpu.memory_space<vmem>>, vector<16x64xf32>,
    %c0_179 = arith.constant 0 : index
    %c0_180 = arith.constant 0 : index
    %539 = vector.load %arg9[%c0_179, %c0_180] : memref<16x512xf32, #tpu.memory_space<vmem>>, vector<16x512xf32>
    %cst_181 = arith.constant dense<0.000000e+00> : vector<16x32xf32>
    %540 = tpu.matmul %539, %323, %cst_181 {dimension_numbers = #tpu.dot_dimension_numbers<[1], [0], [0], [1], [0, 0, 1, 1], [], []>} : vector<16x512xf32>, vector<512x32xf32>, vector<16x32xf32> -> vector<16x32xf32>
    %541 = arith.addf %303, %540 : vector<16x32xf32>
    %542 = vector.shape_cast %309 : vector<32xf32> to vector<1x32xf32>
    %543 = vector.broadcast %542 : vector<1x32xf32> to vector<16x32xf32>
    %544 = arith.addf %541, %543 : vector<16x32xf32>
    %cst_182 = arith.constant dense<0.000000e+00> : vector<16xf32>
    %545 = vector.multi_reduction <add>, %544, %cst_182 [1] : vector<16x32xf32> to vector<16xf32>
    %546 = vector.shape_cast %545 : vector<16xf32> to vector<16x1xf32>
    %cst_183 = arith.constant 3.200000e+01 : f32
    %547 = vector.broadcast %cst_183 : f32 to vector<16x1xf32>
    %548 = arith.divf %546, %547 : vector<16x1xf32>
    %549 = vector.broadcast %548 : vector<16x1xf32> to vector<16x32xf32>
    %550 = arith.subf %544, %549 : vector<16x32xf32>
    %551 = arith.mulf %550, %550 : vector<16x32xf32>
    %cst_184 = arith.constant dense<0.000000e+00> : vector<16xf32>
    %552 = vector.multi_reduction <add>, %551, %cst_184 [1] : vector<16x32xf32> to vector<16xf32>
    %553 = vector.shape_cast %552 : vector<16xf32> to vector<16x1xf32>
    %cst_185 = arith.constant 3.200000e+01 : f32
    %554 = vector.broadcast %cst_185 : f32 to vector<16x1xf32>
    %555 = arith.divf %553, %554 : vector<16x1xf32>
    %556 = vector.broadcast %548 : vector<16x1xf32> to vector<16x32xf32>
    %557 = arith.subf %544, %556 : vector<16x32xf32>
    %cst_186 = arith.constant 9.99999974E-6 : f32
    %558 = vector.broadcast %cst_186 : f32 to vector<16x1xf32>
    %559 = arith.addf %555, %558 : vector<16x1xf32>
    %560 = math.rsqrt %559 : vector<16x1xf32>
    %561 = vector.broadcast %560 : vector<16x1xf32> to vector<16x32xf32>
    %562 = arith.mulf %557, %561 : vector<16x32xf32>
    %563 = vector.shape_cast %311 : vector<32xf32> to vector<1x32xf32>
    %564 = vector.broadcast %563 : vector<1x32xf32> to vector<16x32xf32>
    %565 = arith.mulf %562, %564 : vector<16x32xf32>
    %566 = vector.shape_cast %313 : vector<32xf32> to vector<1x32xf32>
    %567 = vector.broadcast %566 : vector<1x32xf32> to vector<16x32xf32>
    %568 = arith.addf %565, %567 : vector<16x32xf32>
    %cst_187 = arith.constant dense<0.000000e+00> : vector<16x128xf32>
    %569 = tpu.matmul %568, %326, %cst_187 {dimension_numbers = #tpu.dot_dimension_numbers<[1], [0], [0], [1], [0, 0, 1, 1], [], []>} : vector<16x32xf32>, vector<32x128xf32>, vector<16x128xf32> -> vector<16x128xf32>
    %570 = vector.shape_cast %317 : vector<128xf32> to vector<1x128xf32>
    %571 = vector.broadcast %570 : vector<1x128xf32> to vector<16x128xf32>
    %572 = arith.addf %569, %571 : vector<16x128xf32>
    %cst_188 = arith.constant 5.000000e-01 : f32
    %573 = vector.broadcast %cst_188 : f32 to vector<16x128xf32>
    %574 = arith.mulf %573, %572 : vector<16x128xf32>
    %cst_189 = arith.constant 1.41421354 : f32
    %575 = vector.broadcast %cst_189 : f32 to vector<16x128xf32>
    %576 = arith.divf %572, %575 : vector<16x128xf32>
    %577 = math.erf %576 : vector<16x128xf32>
    %cst_190 = arith.constant 1.000000e+00 : f32
    %578 = vector.broadcast %cst_190 : f32 to vector<16x128xf32>
    %579 = arith.addf %578, %577 : vector<16x128xf32>
    %580 = arith.mulf %574, %579 : vector<16x128xf32>
    %cst_191 = arith.constant dense<0.000000e+00> : vector<16x32xf32>
    %581 = tpu.matmul %580, %329, %cst_191 {dimension_numbers = #tpu.dot_dimension_numbers<[1], [0], [0], [1], [0, 0, 1, 1], [], []>} : vector<16x128xf32>, vector<128x32xf32>, vector<16x32xf32> -> vector<16x32xf32>
    %582 = arith.addf %544, %581 : vector<16x32xf32>
    %583 = vector.shape_cast %315 : vector<32xf32> to vector<1x32xf32>
    %584 = vector.broadcast %583 : vector<1x32xf32> to vector<16x32xf32>
    %585 = arith.addf %582, %584 : vector<16x32xf32>
    %586 = vector.extract_strided_slice %21 {offsets = [14, 0], sizes = [1, 32], strides = [1, 1]} : vector<16x128xf32> to vector<1x32xf32>
    %587 = vector.shape_cast %586 : vector<1x32xf32> to vector<32xf32>
    %588 = vector.extract_strided_slice %21 {offsets = [15, 0], sizes = [1, 32], strides = [1, 1]} : vector<16x128xf32> to vector<1x32xf32>
    %589 = vector.shape_cast %588 : vector<1x32xf32> to vector<32xf32>
    %cst_192 = arith.constant dense<0.000000e+00> : vector<16xf32>
    %590 = vector.multi_reduction <add>, %585, %cst_192 [1] : vector<16x32xf32> to vector<16xf32>
    %591 = vector.shape_cast %590 : vector<16xf32> to vector<16x1xf32>
    %cst_193 = arith.constant 3.200000e+01 : f32
    %592 = vector.broadcast %cst_193 : f32 to vector<16x1xf32>
    %593 = arith.divf %591, %592 : vector<16x1xf32>
    %594 = vector.broadcast %593 : vector<16x1xf32> to vector<16x32xf32>
    %595 = arith.subf %585, %594 : vector<16x32xf32>
    %596 = arith.mulf %595, %595 : vector<16x32xf32>
    %cst_194 = arith.constant dense<0.000000e+00> : vector<16xf32>
    %597 = vector.multi_reduction <add>, %596, %cst_194 [1] : vector<16x32xf32> to vector<16xf32>
    %598 = vector.shape_cast %597 : vector<16xf32> to vector<16x1xf32>
    %cst_195 = arith.constant 3.200000e+01 : f32
    %599 = vector.broadcast %cst_195 : f32 to vector<16x1xf32>
    %600 = arith.divf %598, %599 : vector<16x1xf32>
    %601 = vector.broadcast %593 : vector<16x1xf32> to vector<16x32xf32>
    %602 = arith.subf %585, %601 : vector<16x32xf32>
    %cst_196 = arith.constant 9.99999974E-6 : f32
    %603 = vector.broadcast %cst_196 : f32 to vector<16x1xf32>
    %604 = arith.addf %600, %603 : vector<16x1xf32>
    %605 = math.rsqrt %604 : vector<16x1xf32>
    %606 = vector.broadcast %605 : vector<16x1xf32> to vector<16x32xf32>
    %607 = arith.mulf %602, %606 : vector<16x32xf32>
    %608 = vector.shape_cast %587 : vector<32xf32> to vector<1x32xf32>
    %609 = vector.broadcast %608 : vector<1x32xf32> to vector<16x32xf32>
    %610 = arith.mulf %607, %609 : vector<16x32xf32>
    %611 = vector.shape_cast %589 : vector<32xf32> to vector<1x32xf32>
    %612 = vector.broadcast %611 : vector<1x32xf32> to vector<16x32xf32>
    %613 = arith.addf %610, %612 : vector<16x32xf32>
    %c0_197 = arith.constant 0 : index
    %c0_198 = arith.constant 0 : index
    %614 = vector.load %arg8[%c0_197, %c0_198] : memref<16x32xf32, #tpu.memory_space<vmem>>, vector<16x32xf32>
    tpu.vector_store %arg8[%c0_197, %c0_198], %613 {strides = array<i32>} : memref<16x32xf32, #tpu.memory_space<vmem>>, vector<16x32xf32>,
    return
  }
}

</mosaic_0001>

<llo_original>
// kernel: bert_embedder_forward.1
$region0: #{bert_embedder_forward.1}
  #allocation0 [shape = 'u32[]', space=smem, size = 0x4, offset = 0x4, fixed_abs, tag = 'smem constant byte address 0x4 - core index']
  #allocation1 [shape = 'u32[144,128]{1,0:T(1,128)}', space=vmem, size = 0x12000, scoped, tag = 'internal scratch']
  #allocation2 [shape = 'f32[16,512]{1,0:T(8,128)}', space=vmem, size = 0x8000, scoped, tag = 'scratch operand']
  %s0 = inlined_call_operand.vmem [shape: s32[16,1], index: 0, kind: input, shape index: {}]
  %s1 = inlined_call_operand.vmem [shape: f32[128,32], index: 1, kind: input, shape index: {}]
  %s2 = inlined_call_operand.vmem [shape: f32[16,32], index: 2, kind: input, shape index: {}]
  %s3 = inlined_call_operand.vmem [shape: f32[16,128], index: 3, kind: input, shape index: {}]
  %s4 = inlined_call_operand.vmem [shape: bf16[2,32,1536], index: 4, kind: input, shape index: {}]
  %s5 = inlined_call_operand.vmem [shape: bf16[2,512,32], index: 5, kind: input, shape index: {}]
  %s6 = inlined_call_operand.vmem [shape: bf16[2,32,128], index: 6, kind: input, shape index: {}]
  %s7 = inlined_call_operand.vmem [shape: bf16[2,128,32], index: 7, kind: input, shape index: {}]
  %s8 = inlined_call_operand.hbm [shape: f32[16,32], index: 8, kind: output, shape index: {}]
  %s9 = sld [smem:[#allocation0]]
  $region42: #{bert_embedder_forward.1} parent=0
    _
  %s11 = ssub.s32 1, %s9
  %s12 = scalar_select 0, %s11, %s9
  $region1: #{bert_embedder_forward.1} parent=0
    #allocation3 [shape = 'u8[8192]{0}', space=vmem, size = 0x2000, scoped, tag = 'output window, operand 0, single buffered']
    #allocation4 [shape = 's32[1]{0}', space=sflag, size = 0x4, scoped, tag = 'scoped memory for bert_embedder_forward.1']
    %13 = vsyncpa [#allocation4], 0
    // Predicated region
    $region2: #{bert_embedder_forward.1} parent=1 // pred_check
      _
    $region3: #{bert_embedder_forward.1} parent=1 // pred_check_branch
      %15 = sbr.rel (0) target = $region5
    $region4: #{bert_embedder_forward.1} parent=1 // pred_region
      _
    $region5: #{bert_embedder_forward.1} parent=1 // pred_fallthru
      _
    // Predicated region
    $region6: #{bert_embedder_forward.1} parent=1 // pred_check
      _
    $region7: #{bert_embedder_forward.1} parent=1 // pred_check_branch
      %17 = sbr.rel (0) target = $region9
    $region8: #{bert_embedder_forward.1} parent=1 // pred_region
      _
    $region9: #{bert_embedder_forward.1} parent=1 // pred_fallthru
      _
    // Predicated region
    $region10: #{bert_embedder_forward.1} parent=1 // pred_check
      _
    $region11: #{bert_embedder_forward.1} parent=1 // pred_check_branch
      %19 = sbr.rel (0) target = $region13
    $region12: #{bert_embedder_forward.1} parent=1 // pred_region
      _
    $region13: #{bert_embedder_forward.1} parent=1 // pred_fallthru
      _
    // Predicated region
    $region14: #{bert_embedder_forward.1} parent=1 // pred_check
      _
    $region15: #{bert_embedder_forward.1} parent=1 // pred_check_branch
      %21 = sbr.rel (0) target = $region17
    $region16: #{bert_embedder_forward.1} parent=1 // pred_region
      _
    $region17: #{bert_embedder_forward.1} parent=1 // pred_fallthru
      _
    // Predicated region
    $region18: #{bert_embedder_forward.1} parent=1 // pred_check
      _
    $region19: #{bert_embedder_forward.1} parent=1 // pred_check_branch
      %23 = sbr.rel (0) target = $region21
    $region20: #{bert_embedder_forward.1} parent=1 // pred_region
      _
    $region21: #{bert_embedder_forward.1} parent=1 // pred_fallthru
      _
    // Predicated region
    $region22: #{bert_embedder_forward.1} parent=1 // pred_check
      _
    $region23: #{bert_embedder_forward.1} parent=1 // pred_check_branch
      %25 = sbr.rel (0) target = $region25
    $region24: #{bert_embedder_forward.1} parent=1 // pred_region
      _
    $region25: #{bert_embedder_forward.1} parent=1 // pred_fallthru
      _
    // Predicated region
    $region26: #{bert_embedder_forward.1} parent=1 // pred_check
      _
    $region27: #{bert_embedder_forward.1} parent=1 // pred_check_branch
      %27 = sbr.rel (0) target = $region29
    $region28: #{bert_embedder_forward.1} parent=1 // pred_region
      _
    $region29: #{bert_embedder_forward.1} parent=1 // pred_fallthru
      _
    // Predicated region
    $region30: #{bert_embedder_forward.1} parent=1 // pred_check
      _
    $region31: #{bert_embedder_forward.1} parent=1 // pred_check_branch
      %29 = sbr.rel (0) target = $region33
    $region32: #{bert_embedder_forward.1} parent=1 // pred_region
      _
    $region33: #{bert_embedder_forward.1} parent=1 // pred_fallthru
      _
    %v30 = vld [vmem:[%s0] sm:$0xff]
    %v31 = vld [vmem:[%s0 + $0x8] sm:$0xff]
    %v32 = vlaneseq
    %v33 = vand.u32 %v32, 127
    %34 = vset.pattern.permute.xlu0 0
    %35 = vperm.xlu0 %34, %v30
    %v36 = vpop.permute.xlu0 %35
    %37 = vset.pattern.permute.xlu0 0
    %38 = vperm.xlu0 %37, %v31
    %v39 = vpop.permute.xlu0 %38
    %vm40 = vcmp.eq.s32.totalorder %v36, %v33
    %vm41 = vcmp.eq.s32.totalorder %v39, %v33
    %v42 = vsel %vm40, 1, 0
    %v43 = vsel %vm41, 1, 0
    %v44 = vcvt.s32.f32 %v42
    %v45 = vcvt.s32.f32 %v43
    %v46 = vld [vmem:[%s1] sm:$0xff]
    %v47 = vld [vmem:[%s1 + $0x8] sm:$0xff]
    %v48 = vld [vmem:[%s1 + $0x10] sm:$0xff]
    %v49 = vld [vmem:[%s1 + $0x18] sm:$0xff]
    %v50 = vld [vmem:[%s1 + $0x20] sm:$0xff]
    %v51 = vld [vmem:[%s1 + $0x28] sm:$0xff]
    %v52 = vld [vmem:[%s1 + $0x30] sm:$0xff]
    %v53 = vld [vmem:[%s1 + $0x38] sm:$0xff]
    %v54 = vld [vmem:[%s1 + $0x40] sm:$0xff]
    %v55 = vld [vmem:[%s1 + $0x48] sm:$0xff]
    %v56 = vld [vmem:[%s1 + $0x50] sm:$0xff]
    %v57 = vld [vmem:[%s1 + $0x58] sm:$0xff]
    %v58 = vld [vmem:[%s1 + $0x60] sm:$0xff]
    %v59 = vld [vmem:[%s1 + $0x68] sm:$0xff]
    %v60 = vld [vmem:[%s1 + $0x70] sm:$0xff]
    %v61 = vld [vmem:[%s1 + $0x78] sm:$0xff]
    %v62 = vld [vmem:[%s2] sm:$0xff]
    %v63 = vld [vmem:[%s2 + $0x8] sm:$0xff]
    %64 = vmatprep.subr.mxu0 0.0
    %65 = vmatpush1.msra.mxu0 %v46
    %66 = vmatprep.subr.mxu0 0.0
    %67 = vmatpush1.msra.mxu0 %v47
    %68 = vmatprep.subr.mxu0 0.0
    %69 = vmatpush1.msra.mxu0 %v48
    %70 = vmatprep.subr.mxu0 0.0
    %71 = vmatpush1.msra.mxu0 %v49
    %72 = vmatprep.subr.mxu0 0.0
    %73 = vmatpush1.msra.mxu0 %v50
    %74 = vmatprep.subr.mxu0 0.0
    %75 = vmatpush1.msra.mxu0 %v51
    %76 = vmatprep.subr.mxu0 0.0
    %77 = vmatpush1.msra.mxu0 %v52
    %78 = vmatprep.subr.mxu0 0.0
    %79 = vmatpush1.msra.mxu0 %v53
    %80 = vmatprep.subr.mxu0 0.0
    %81 = vmatpush1.msra.mxu0 %v54
    %82 = vmatprep.subr.mxu0 0.0
    %83 = vmatpush1.msra.mxu0 %v55
    %84 = vmatprep.subr.mxu0 0.0
    %85 = vmatpush1.msra.mxu0 %v56
    %86 = vmatprep.subr.mxu0 0.0
    %87 = vmatpush1.msra.mxu0 %v57
    %88 = vmatprep.subr.mxu0 0.0
    %89 = vmatpush1.msra.mxu0 %v58
    %90 = vmatprep.subr.mxu0 0.0
    %91 = vmatpush1.msra.mxu0 %v59
    %92 = vmatprep.subr.mxu0 0.0
    %93 = vmatpush1.msra.mxu0 %v60
    %94 = vmatprep.subr.mxu0 0.0
    %95 = vmatpush1.msra.mxu0 %v61
    %96 = vmatprep.subr.mxu0 0.0
    %97 = vmatpush1.msra.mxu0 0.0
    %98 = vmatprep.subr.mxu0 0.0
    %99 = vmatpush1.msra.mxu0 0.0
    %100 = vmatprep.subr.mxu0 0.0
    %101 = vmatpush1.msra.mxu0 0.0
    %102 = vmatprep.subr.mxu0 0.0
    %103 = vmatpush1.msra.mxu0 0.0
    %104 = vmatprep.subr.mxu0 0.0
    %105 = vmatpush1.msra.mxu0 0.0
    %106 = vmatprep.subr.mxu0 0.0
    %107 = vmatpush1.msra.mxu0 0.0
    %108 = vmatprep.subr.mxu0 0.0
    %109 = vmatpush1.msra.mxu0 0.0
    %110 = vmatprep.subr.mxu0 0.0
    %111 = vmatpush1.msra.mxu0 0.0
    %112 = vmatprep.subr.mxu0 0.0
    %113 = vmatpush1.msra.mxu0 0.0
    %114 = vmatprep.subr.mxu0 0.0
    %115 = vmatpush1.msra.mxu0 0.0
    %116 = vmatprep.subr.mxu0 0.0
    %117 = vmatpush1.msra.mxu0 0.0
    %118 = vmatprep.subr.mxu0 0.0
    %119 = vmatpush1.msra.mxu0 0.0
    %120 = vmatprep.subr.mxu0 0.0
    %121 = vmatpush1.msra.mxu0 0.0
    %122 = vmatprep.subr.mxu0 0.0
    %123 = vmatpush1.msra.mxu0 0.0
    %124 = vmatprep.subr.mxu0 0.0
    %125 = vmatpush1.msra.mxu0 0.0
    %126 = vmatprep.subr.mxu0 0.0
    %127 = vmatpush1.msra.mxu0 0.0
    %128 = vmatprep.mubr.f32.mxu0 0.0
    %129 = vmatmul.mubr.f32.gmra.mrb[0].mxu0 %v44
    %v130 = vpop.f32.mrb[0].mxu0
    %v131 = vadd.f32 %v62, %v130
    %v132 = vpop.f32.mrb[0].mxu0
    %133 = vmatprep.mubr.f32.mxu0 0.0
    %134 = vmatmul.mubr.f32.gmra.mrb[0].mxu0 %v45
    %v135 = vpop.f32.mrb[0].mxu0
    %v136 = vadd.f32 %v63, %v135
    %v137 = vpop.f32.mrb[0].mxu0
    %138 = vdwg.mxu0
    %v139 = vlaneseq
    %v140 = vshrl.u32 %v139, 7
    %v141 = vadd.s32 %v140, 8
    %v142 = vshrl.u32 %v140, 3
    %v143 = vshrl.u32 %v141, 3
    %v144 = vshrl.u32 %v33, 3
    %vm145 = vcmp.eq.s32.totalorder %v142, %v144
    %vm146 = vcmp.eq.s32.totalorder %v143, %v144
    %v147 = vsel %vm145, 0.0, -1e+09
    %v148 = vsel %vm146, 0.0, -1e+09
    %v149 = vld [vmem:[%s3] sm:$0xff]
    %v150 = vld [vmem:[%s3 + $0x8] sm:$0xff]
    %v151 = vld [vmem:[%s4] sm:$0xff]
    %v152 = vld [vmem:[%s4 + $0x8] sm:$0xff]
    %v153 = vld [vmem:[%s4 + $0x10] sm:$0xff]
    %v154 = vld [vmem:[%s4 + $0x18] sm:$0xff]
    %v155 = vld [vmem:[%s4 + $0x20] sm:$0xff]
    %v156 = vld [vmem:[%s4 + $0x28] sm:$0xff]
    %v157 = vld [vmem:[%s4 + $0x30] sm:$0xff]
    %v158 = vld [vmem:[%s4 + $0x38] sm:$0xff]
    %v159 = vld [vmem:[%s4 + $0x40] sm:$0xff]
    %v160 = vld [vmem:[%s4 + $0x48] sm:$0xff]
    %v161 = vld [vmem:[%s4 + $0x50] sm:$0xff]
    %v162 = vld [vmem:[%s4 + $0x58] sm:$0xff]
    %v163 = vld [vmem:[%s4 + $0x60] sm:$0xff]
    %v164 = vld [vmem:[%s4 + $0x68] sm:$0xff]
    %v165 = vld [vmem:[%s4 + $0x70] sm:$0xff]
    %v166 = vld [vmem:[%s4 + $0x78] sm:$0xff]
    %v167 = vld [vmem:[%s4 + $0x80] sm:$0xff]
    %v168 = vld [vmem:[%s4 + $0x88] sm:$0xff]
    %v169 = vld [vmem:[%s4 + $0x90] sm:$0xff]
    %v170 = vld [vmem:[%s4 + $0x98] sm:$0xff]
    %v171 = vld [vmem:[%s4 + $0xa0] sm:$0xff]
    %v172 = vld [vmem:[%s4 + $0xa8] sm:$0xff]
    %v173 = vld [vmem:[%s4 + $0xb0] sm:$0xff]
    %v174 = vld [vmem:[%s4 + $0xb8] sm:$0xff]
    %v175 = vunpack.c.l.bf16 %v151
    %v176 = vunpack.c.h.bf16 %v151
    %v177 = vunpack.c.l.bf16 %v152
    %v178 = vunpack.c.h.bf16 %v152
    %v179 = vunpack.c.l.bf16 %v153
    %v180 = vunpack.c.h.bf16 %v153
    %v181 = vunpack.c.l.bf16 %v154
    %v182 = vunpack.c.h.bf16 %v154
    %v183 = vunpack.c.l.bf16 %v155
    %v184 = vunpack.c.h.bf16 %v155
    %v185 = vunpack.c.l.bf16 %v156
    %v186 = vunpack.c.h.bf16 %v156
    %v187 = vunpack.c.l.bf16 %v157
    %v188 = vunpack.c.h.bf16 %v157
    %v189 = vunpack.c.l.bf16 %v158
    %v190 = vunpack.c.h.bf16 %v158
    %v191 = vunpack.c.l.bf16 %v159
    %v192 = vunpack.c.h.bf16 %v159
    %v193 = vunpack.c.l.bf16 %v160
    %v194 = vunpack.c.h.bf16 %v160
    %v195 = vunpack.c.l.bf16 %v161
    %v196 = vunpack.c.h.bf16 %v161
    %v197 = vunpack.c.l.bf16 %v162
    %v198 = vunpack.c.h.bf16 %v162
    %v199 = vunpack.c.l.bf16 %v163
    %v200 = vunpack.c.h.bf16 %v163
    %v201 = vunpack.c.l.bf16 %v164
    %v202 = vunpack.c.h.bf16 %v164
    %v203 = vunpack.c.l.bf16 %v165
    %v204 = vunpack.c.h.bf16 %v165
    %v205 = vunpack.c.l.bf16 %v166
    %v206 = vunpack.c.h.bf16 %v166
    %v207 = vunpack.c.l.bf16 %v167
    %v208 = vunpack.c.h.bf16 %v167
    %v209 = vunpack.c.l.bf16 %v168
    %v210 = vunpack.c.h.bf16 %v168
    %v211 = vunpack.c.l.bf16 %v169
    %v212 = vunpack.c.h.bf16 %v169
    %v213 = vunpack.c.l.bf16 %v170
    %v214 = vunpack.c.h.bf16 %v170
    %v215 = vunpack.c.l.bf16 %v171
    %v216 = vunpack.c.h.bf16 %v171
    %v217 = vunpack.c.l.bf16 %v172
    %v218 = vunpack.c.h.bf16 %v172
    %v219 = vunpack.c.l.bf16 %v173
    %v220 = vunpack.c.h.bf16 %v173
    %v221 = vunpack.c.l.bf16 %v174
    %v222 = vunpack.c.h.bf16 %v174
    %v223 = vld [vmem:[%s5] sm:$0xf]
    %v224 = vld [vmem:[%s5 + $0x4] sm:$0xf]
    %v225 = vld [vmem:[%s5 + $0x8] sm:$0xf]
    %v226 = vld [vmem:[%s5 + $0xc] sm:$0xf]
    %v227 = vld [vmem:[%s5 + $0x10] sm:$0xf]
    %v228 = vld [vmem:[%s5 + $0x14] sm:$0xf]
    %v229 = vld [vmem:[%s5 + $0x18] sm:$0xf]
    %v230 = vld [vmem:[%s5 + $0x1c] sm:$0xf]
    %v231 = vld [vmem:[%s5 + $0x20] sm:$0xf]
    %v232 = vld [vmem:[%s5 + $0x24] sm:$0xf]
    %v233 = vld [vmem:[%s5 + $0x28] sm:$0xf]
    %v234 = vld [vmem:[%s5 + $0x2c] sm:$0xf]
    %v235 = vld [vmem:[%s5 + $0x30] sm:$0xf]
    %v236 = vld [vmem:[%s5 + $0x34] sm:$0xf]
    %v237 = vld [vmem:[%s5 + $0x38] sm:$0xf]
    %v238 = vld [vmem:[%s5 + $0x3c] sm:$0xf]
    %v239 = vld [vmem:[%s5 + $0x40] sm:$0xf]
    %v240 = vld [vmem:[%s5 + $0x44] sm:$0xf]
    %v241 = vld [vmem:[%s5 + $0x48] sm:$0xf]
    %v242 = vld [vmem:[%s5 + $0x4c] sm:$0xf]
    %v243 = vld [vmem:[%s5 + $0x50] sm:$0xf]
    %v244 = vld [vmem:[%s5 + $0x54] sm:$0xf]
    %v245 = vld [vmem:[%s5 + $0x58] sm:$0xf]
    %v246 = vld [vmem:[%s5 + $0x5c] sm:$0xf]
    %v247 = vld [vmem:[%s5 + $0x60] sm:$0xf]
    %v248 = vld [vmem:[%s5 + $0x64] sm:$0xf]
    %v249 = vld [vmem:[%s5 + $0x68] sm:$0xf]
    %v250 = vld [vmem:[%s5 + $0x6c] sm:$0xf]
    %v251 = vld [vmem:[%s5 + $0x70] sm:$0xf]
    %v252 = vld [vmem:[%s5 + $0x74] sm:$0xf]
    %v253 = vld [vmem:[%s5 + $0x78] sm:$0xf]
    %v254 = vld [vmem:[%s5 + $0x7c] sm:$0xf]
    %v255 = vld [vmem:[%s5 + $0x80] sm:$0xf]
    %v256 = vld [vmem:[%s5 + $0x84] sm:$0xf]
    %v257 = vld [vmem:[%s5 + $0x88] sm:$0xf]
    %v258 = vld [vmem:[%s5 + $0x8c] sm:$0xf]
    %v259 = vld [vmem:[%s5 + $0x90] sm:$0xf]
    %v260 = vld [vmem:[%s5 + $0x94] sm:$0xf]
    %v261 = vld [vmem:[%s5 + $0x98] sm:$0xf]
    %v262 = vld [vmem:[%s5 + $0x9c] sm:$0xf]
    %v263 = vld [vmem:[%s5 + $0xa0] sm:$0xf]
    %v264 = vld [vmem:[%s5 + $0xa4] sm:$0xf]
    %v265 = vld [vmem:[%s5 + $0xa8] sm:$0xf]
    %v266 = vld [vmem:[%s5 + $0xac] sm:$0xf]
    %v267 = vld [vmem:[%s5 + $0xb0] sm:$0xf]
    %v268 = vld [vmem:[%s5 + $0xb4] sm:$0xf]
    %v269 = vld [vmem:[%s5 + $0xb8] sm:$0xf]
    %v270 = vld [vmem:[%s5 + $0xbc] sm:$0xf]
    %v271 = vld [vmem:[%s5 + $0xc0] sm:$0xf]
    %v272 = vld [vmem:[%s5 + $0xc4] sm:$0xf]
    %v273 = vld [vmem:[%s5 + $0xc8] sm:$0xf]
    %v274 = vld [vmem:[%s5 + $0xcc] sm:$0xf]
    %v275 = vld [vmem:[%s5 + $0xd0] sm:$0xf]
    %v276 = vld [vmem:[%s5 + $0xd4] sm:$0xf]
    %v277 = vld [vmem:[%s5 + $0xd8] sm:$0xf]
    %v278 = vld [vmem:[%s5 + $0xdc] sm:$0xf]
    %v279 = vld [vmem:[%s5 + $0xe0] sm:$0xf]
    %v280 = vld [vmem:[%s5 + $0xe4] sm:$0xf]
    %v281 = vld [vmem:[%s5 + $0xe8] sm:$0xf]
    %v282 = vld [vmem:[%s5 + $0xec] sm:$0xf]
    %v283 = vld [vmem:[%s5 + $0xf0] sm:$0xf]
    %v284 = vld [vmem:[%s5 + $0xf4] sm:$0xf]
    %v285 = vld [vmem:[%s5 + $0xf8] sm:$0xf]
    %v286 = vld [vmem:[%s5 + $0xfc] sm:$0xf]
    %v287 = vunpack.c.l.bf16 %v223
    %v288 = vunpack.c.l.bf16 %v224
    %v289 = vunpack.c.l.bf16 %v225
    %v290 = vunpack.c.l.bf16 %v226
    %v291 = vunpack.c.l.bf16 %v227
    %v292 = vunpack.c.l.bf16 %v228
    %v293 = vunpack.c.l.bf16 %v229
    %v294 = vunpack.c.l.bf16 %v230
    %v295 = vunpack.c.l.bf16 %v231
    %v296 = vunpack.c.l.bf16 %v232
    %v297 = vunpack.c.l.bf16 %v233
    %v298 = vunpack.c.l.bf16 %v234
    %v299 = vunpack.c.l.bf16 %v235
    %v300 = vunpack.c.l.bf16 %v236
    %v301 = vunpack.c.l.bf16 %v237
    %v302 = vunpack.c.l.bf16 %v238
    %v303 = vunpack.c.l.bf16 %v239
    %v304 = vunpack.c.l.bf16 %v240
    %v305 = vunpack.c.l.bf16 %v241
    %v306 = vunpack.c.l.bf16 %v242
    %v307 = vunpack.c.l.bf16 %v243
    %v308 = vunpack.c.l.bf16 %v244
    %v309 = vunpack.c.l.bf16 %v245
    %v310 = vunpack.c.l.bf16 %v246
    %v311 = vunpack.c.l.bf16 %v247
    %v312 = vunpack.c.l.bf16 %v248
    %v313 = vunpack.c.l.bf16 %v249
    %v314 = vunpack.c.l.bf16 %v250
    %v315 = vunpack.c.l.bf16 %v251
    %v316 = vunpack.c.l.bf16 %v252
    %v317 = vunpack.c.l.bf16 %v253
    %v318 = vunpack.c.l.bf16 %v254
    %v319 = vunpack.c.l.bf16 %v255
    %v320 = vunpack.c.l.bf16 %v256
    %v321 = vunpack.c.l.bf16 %v257
    %v322 = vunpack.c.l.bf16 %v258
    %v323 = vunpack.c.l.bf16 %v259
    %v324 = vunpack.c.l.bf16 %v260
    %v325 = vunpack.c.l.bf16 %v261
    %v326 = vunpack.c.l.bf16 %v262
    %v327 = vunpack.c.l.bf16 %v263
    %v328 = vunpack.c.l.bf16 %v264
    %v329 = vunpack.c.l.bf16 %v265
    %v330 = vunpack.c.l.bf16 %v266
    %v331 = vunpack.c.l.bf16 %v267
    %v332 = vunpack.c.l.bf16 %v268
    %v333 = vunpack.c.l.bf16 %v269
    %v334 = vunpack.c.l.bf16 %v270
    %v335 = vunpack.c.l.bf16 %v271
    %v336 = vunpack.c.l.bf16 %v272
    %v337 = vunpack.c.l.bf16 %v273
    %v338 = vunpack.c.l.bf16 %v274
    %v339 = vunpack.c.l.bf16 %v275
    %v340 = vunpack.c.l.bf16 %v276
    %v341 = vunpack.c.l.bf16 %v277
    %v342 = vunpack.c.l.bf16 %v278
    %v343 = vunpack.c.l.bf16 %v279
    %v344 = vunpack.c.l.bf16 %v280
    %v345 = vunpack.c.l.bf16 %v281
    %v346 = vunpack.c.l.bf16 %v282
    %v347 = vunpack.c.l.bf16 %v283
    %v348 = vunpack.c.l.bf16 %v284
    %v349 = vunpack.c.l.bf16 %v285
    %v350 = vunpack.c.l.bf16 %v286
    %v351 = vld [vmem:[%s6] sm:$0xf]
    %v352 = vld [vmem:[%s6 + $0x4] sm:$0xf]
    %v353 = vld [vmem:[%s6 + $0x8] sm:$0xf]
    %v354 = vld [vmem:[%s6 + $0xc] sm:$0xf]
    %v355 = vunpack.c.l.bf16 %v351
    %v356 = vunpack.c.l.bf16 %v352
    %v357 = vunpack.c.l.bf16 %v353
    %v358 = vunpack.c.l.bf16 %v354
    %v359 = vld [vmem:[%s7] sm:$0xf]
    %v360 = vld [vmem:[%s7 + $0x4] sm:$0xf]
    %v361 = vld [vmem:[%s7 + $0x8] sm:$0xf]
    %v362 = vld [vmem:[%s7 + $0xc] sm:$0xf]
    %v363 = vld [vmem:[%s7 + $0x10] sm:$0xf]
    %v364 = vld [vmem:[%s7 + $0x14] sm:$0xf]
    %v365 = vld [vmem:[%s7 + $0x18] sm:$0xf]
    %v366 = vld [vmem:[%s7 + $0x1c] sm:$0xf]
    %v367 = vld [vmem:[%s7 + $0x20] sm:$0xf]
    %v368 = vld [vmem:[%s7 + $0x24] sm:$0xf]
    %v369 = vld [vmem:[%s7 + $0x28] sm:$0xf]
    %v370 = vld [vmem:[%s7 + $0x2c] sm:$0xf]
    %v371 = vld [vmem:[%s7 + $0x30] sm:$0xf]
    %v372 = vld [vmem:[%s7 + $0x34] sm:$0xf]
    %v373 = vld [vmem:[%s7 + $0x38] sm:$0xf]
    %v374 = vld [vmem:[%s7 + $0x3c] sm:$0xf]
    %v375 = vunpack.c.l.bf16 %v359
    %v376 = vunpack.c.l.bf16 %v360
    %v377 = vunpack.c.l.bf16 %v361
    %v378 = vunpack.c.l.bf16 %v362
    %v379 = vunpack.c.l.bf16 %v363
    %v380 = vunpack.c.l.bf16 %v364
    %v381 = vunpack.c.l.bf16 %v365
    %v382 = vunpack.c.l.bf16 %v366
    %v383 = vunpack.c.l.bf16 %v367
    %v384 = vunpack.c.l.bf16 %v368
    %v385 = vunpack.c.l.bf16 %v369
    %v386 = vunpack.c.l.bf16 %v370
    %v387 = vunpack.c.l.bf16 %v371
    %v388 = vunpack.c.l.bf16 %v372
    %v389 = vunpack.c.l.bf16 %v373
    %v390 = vunpack.c.l.bf16 %v374
    %vm391 = vcmask 261120
    %v392 = vsel %vm391, %v131, 0.0
    %393 = vadd.xlane.f32.xlu0 %v392
    %v394 = vpop.xlane.xlu0 %393
    %v395 = vsel %vm391, %v136, 0.0
    %396 = vadd.xlane.f32.xlu0 %v395
    %v397 = vpop.xlane.xlu0 %396
    %v398 = vrcp.pop 32.0
    %v399 = vmul.f32 %v394, %v398
    %v400 = vmul.f32 %v397, %v398
    %v401 = vsub.f32 %v131, %v399
    %v402 = vsub.f32 %v136, %v400
    %v403 = vmul.f32 %v401, %v401
    %v404 = vmul.f32 %v402, %v402
    %v405 = vsel %vm391, %v403, 0.0
    %406 = vadd.xlane.f32.xlu0 %v405
    %v407 = vpop.xlane.xlu0 %406
    %v408 = vsel %vm391, %v404, 0.0
    %409 = vadd.xlane.f32.xlu0 %v408
    %v410 = vpop.xlane.xlu0 %409
    %v411 = vmul.f32 %v407, %v398
    %v412 = vmul.f32 %v410, %v398
    %v413 = vadd.f32 %v411, 1e-05
    %v414 = vadd.f32 %v412, 1e-05
    %v415 = vrsqrt.pop %v413
    %v416 = vrsqrt.pop %v414
    %v417 = vmul.f32 %v401, %v415
    %v418 = vmul.f32 %v402, %v416
    %v419 = vlaneseq
    %v420 = vshrl.u32 %v419, 7
    %v421 = vsub.s32 0, %v420
    %v422 = vrot.slane %v149, %v421
    %v423 = vmul.f32 %v417, %v422
    %v424 = vmul.f32 %v418, %v422
    %v425 = vlaneseq
    %v426 = vshrl.u32 %v425, 7
    %v427 = vsub.s32 1, %v426
    %v428 = vrot.slane %v149, %v427
    %v429 = vadd.f32 %v423, %v428
    %v430 = vadd.f32 %v424, %v428
    %v432 = vsel %vm391, %v429, 0
    %v435 = vsel %vm391, %v430, 0
    %437 = vmatprep.subr.mxu0 %v176
    %438 = vmatpush1.msra.mxu0 %v175
    %439 = vmatprep.subr.mxu0 %v188
    %440 = vmatpush1.msra.mxu0 %v187
    %441 = vmatprep.subr.mxu0 %v200
    %442 = vmatpush1.msra.mxu0 %v199
    %443 = vmatprep.subr.mxu0 %v212
    %444 = vmatpush1.msra.mxu0 %v211
    %445 = vmatprep.subr.mxu0 0.0
    %446 = vmatpush1.msra.mxu0 0.0
    %447 = vmatprep.subr.mxu0 0.0
    %448 = vmatpush1.msra.mxu0 0.0
    %449 = vmatprep.subr.mxu0 0.0
    %450 = vmatpush1.msra.mxu0 0.0
    %451 = vmatprep.subr.mxu0 0.0
    %452 = vmatpush1.msra.mxu0 0.0
    %453 = vmatprep.subr.mxu0 0.0
    %454 = vmatpush1.msra.mxu0 0.0
    %455 = vmatprep.subr.mxu0 0.0
    %456 = vmatpush1.msra.mxu0 0.0
    %457 = vmatprep.subr.mxu0 0.0
    %458 = vmatpush1.msra.mxu0 0.0
    %459 = vmatprep.subr.mxu0 0.0
    %460 = vmatpush1.msra.mxu0 0.0
    %461 = vmatprep.subr.mxu0 0.0
    %462 = vmatpush1.msra.mxu0 0.0
    %463 = vmatprep.subr.mxu0 0.0
    %464 = vmatpush1.msra.mxu0 0.0
    %465 = vmatprep.subr.mxu0 0.0
    %466 = vmatpush1.msra.mxu0 0.0
    %467 = vmatprep.subr.mxu0 0.0
    %468 = vmatpush1.msra.mxu0 0.0
    %469 = vmatprep.subr.mxu0 0.0
    %470 = vmatpush1.msra.mxu0 0.0
    %471 = vmatprep.subr.mxu0 0.0
    %472 = vmatpush1.msra.mxu0 0.0
    %473 = vmatprep.subr.mxu0 0.0
    %474 = vmatpush1.msra.mxu0 0.0
    %475 = vmatprep.subr.mxu0 0.0
    %476 = vmatpush1.msra.mxu0 0.0
    %477 = vmatprep.subr.mxu0 0.0
    %478 = vmatpush1.msra.mxu0 0.0
    %479 = vmatprep.subr.mxu0 0.0
    %480 = vmatpush1.msra.mxu0 0.0
    %481 = vmatprep.subr.mxu0 0.0
    %482 = vmatpush1.msra.mxu0 0.0
    %483 = vmatprep.subr.mxu0 0.0
    %484 = vmatpush1.msra.mxu0 0.0
    %485 = vmatprep.subr.mxu0 0.0
    %486 = vmatpush1.msra.mxu0 0.0
    %487 = vmatprep.subr.mxu0 0.0
    %488 = vmatpush1.msra.mxu0 0.0
    %489 = vmatprep.subr.mxu0 0.0
    %490 = vmatpush1.msra.mxu0 0.0
    %491 = vmatprep.subr.mxu0 0.0
    %492 = vmatpush1.msra.mxu0 0.0
    %493 = vmatprep.subr.mxu0 0.0
    %494 = vmatpush1.msra.mxu0 0.0
    %495 = vmatprep.subr.mxu0 0.0
    %496 = vmatpush1.msra.mxu0 0.0
    %497 = vmatprep.subr.mxu0 0.0
    %498 = vmatpush1.msra.mxu0 0.0
    %499 = vmatprep.subr.mxu0 0.0
    %500 = vmatpush1.msra.mxu0 0.0
    %501 = vmatprep.mubr.f32.mxu0 0.0
    %502 = vmatmul.mubr.f32.gmra.mrb[0].mxu0 %v432
    %v503 = vpop.f32.mrb[0].mxu0
    %v504 = vadd.f32 0.0, %v503
    %v505 = vpop.f32.mrb[0].mxu0
    %v506 = vadd.f32 0.0, %v505
    %507 = vmatprep.mubr.f32.mxu0 0.0
    %508 = vmatmul.mubr.f32.gmra.mrb[0].mxu0 %v435
    %v509 = vpop.f32.mrb[0].mxu0
    %v510 = vadd.f32 0.0, %v509
    %v511 = vpop.f32.mrb[0].mxu0
    %v512 = vadd.f32 0.0, %v511
    %513 = vdwg.mxu0
    %514 = vmatprep.subr.mxu0 %v178
    %515 = vmatpush1.msra.mxu0 %v177
    %516 = vmatprep.subr.mxu0 %v190
    %517 = vmatpush1.msra.mxu0 %v189
    %518 = vmatprep.subr.mxu0 %v202
    %519 = vmatpush1.msra.mxu0 %v201
    %520 = vmatprep.subr.mxu0 %v214
    %521 = vmatpush1.msra.mxu0 %v213
    %522 = vmatprep.subr.mxu0 0.0
    %523 = vmatpush1.msra.mxu0 0.0
    %524 = vmatprep.subr.mxu0 0.0
    %525 = vmatpush1.msra.mxu0 0.0
    %526 = vmatprep.subr.mxu0 0.0
    %527 = vmatpush1.msra.mxu0 0.0
    %528 = vmatprep.subr.mxu0 0.0
    %529 = vmatpush1.msra.mxu0 0.0
    %530 = vmatprep.subr.mxu0 0.0
    %531 = vmatpush1.msra.mxu0 0.0
    %532 = vmatprep.subr.mxu0 0.0
    %533 = vmatpush1.msra.mxu0 0.0
    %534 = vmatprep.subr.mxu0 0.0
    %535 = vmatpush1.msra.mxu0 0.0
    %536 = vmatprep.subr.mxu0 0.0
    %537 = vmatpush1.msra.mxu0 0.0
    %538 = vmatprep.subr.mxu0 0.0
    %539 = vmatpush1.msra.mxu0 0.0
    %540 = vmatprep.subr.mxu0 0.0
    %541 = vmatpush1.msra.mxu0 0.0
    %542 = vmatprep.subr.mxu0 0.0
    %543 = vmatpush1.msra.mxu0 0.0
    %544 = vmatprep.subr.mxu0 0.0
    %545 = vmatpush1.msra.mxu0 0.0
    %546 = vmatprep.subr.mxu0 0.0
    %547 = vmatpush1.msra.mxu0 0.0
    %548 = vmatprep.subr.mxu0 0.0
    %549 = vmatpush1.msra.mxu0 0.0
    %550 = vmatprep.subr.mxu0 0.0
    %551 = vmatpush1.msra.mxu0 0.0
    %552 = vmatprep.subr.mxu0 0.0
    %553 = vmatpush1.msra.mxu0 0.0
    %554 = vmatprep.subr.mxu0 0.0
    %555 = vmatpush1.msra.mxu0 0.0
    %556 = vmatprep.subr.mxu0 0.0
    %557 = vmatpush1.msra.mxu0 0.0
    %558 = vmatprep.subr.mxu0 0.0
    %559 = vmatpush1.msra.mxu0 0.0
    %560 = vmatprep.subr.mxu0 0.0
    %561 = vmatpush1.msra.mxu0 0.0
    %562 = vmatprep.subr.mxu0 0.0
    %563 = vmatpush1.msra.mxu0 0.0
    %564 = vmatprep.subr.mxu0 0.0
    %565 = vmatpush1.msra.mxu0 0.0
    %566 = vmatprep.subr.mxu0 0.0
    %567 = vmatpush1.msra.mxu0 0.0
    %568 = vmatprep.subr.mxu0 0.0
    %569 = vmatpush1.msra.mxu0 0.0
    %570 = vmatprep.subr.mxu0 0.0
    %571 = vmatpush1.msra.mxu0 0.0
    %572 = vmatprep.subr.mxu0 0.0
    %573 = vmatpush1.msra.mxu0 0.0
    %574 = vmatprep.subr.mxu0 0.0
    %575 = vmatpush1.msra.mxu0 0.0
    %576 = vmatprep.subr.mxu0 0.0
    %577 = vmatpush1.msra.mxu0 0.0
    %578 = vmatprep.mubr.f32.mxu0 0.0
    %579 = vmatmul.mubr.f32.gmra.mrb[0].mxu0 %v432
    %v580 = vpop.f32.mrb[0].mxu0
    %v581 = vadd.f32 0.0, %v580
    %v582 = vpop.f32.mrb[0].mxu0
    %v583 = vadd.f32 0.0, %v582
    %584 = vmatprep.mubr.f32.mxu0 0.0
    %585 = vmatmul.mubr.f32.gmra.mrb[0].mxu0 %v435
    %v586 = vpop.f32.mrb[0].mxu0
    %v587 = vadd.f32 0.0, %v586
    %v588 = vpop.f32.mrb[0].mxu0
    %v589 = vadd.f32 0.0, %v588
    %590 = vdwg.mxu0
    %591 = vmatprep.subr.mxu0 %v180
    %592 = vmatpush1.msra.mxu0 %v179
    %593 = vmatprep.subr.mxu0 %v192
    %594 = vmatpush1.msra.mxu0 %v191
    %595 = vmatprep.subr.mxu0 %v204
    %596 = vmatpush1.msra.mxu0 %v203
    %597 = vmatprep.subr.mxu0 %v216
    %598 = vmatpush1.msra.mxu0 %v215
    %599 = vmatprep.subr.mxu0 0.0
    %600 = vmatpush1.msra.mxu0 0.0
    %601 = vmatprep.subr.mxu0 0.0
    %602 = vmatpush1.msra.mxu0 0.0
    %603 = vmatprep.subr.mxu0 0.0
    %604 = vmatpush1.msra.mxu0 0.0
    %605 = vmatprep.subr.mxu0 0.0
    %606 = vmatpush1.msra.mxu0 0.0
    %607 = vmatprep.subr.mxu0 0.0
    %608 = vmatpush1.msra.mxu0 0.0
    %609 = vmatprep.subr.mxu0 0.0
    %610 = vmatpush1.msra.mxu0 0.0
    %611 = vmatprep.subr.mxu0 0.0
    %612 = vmatpush1.msra.mxu0 0.0
    %613 = vmatprep.subr.mxu0 0.0
    %614 = vmatpush1.msra.mxu0 0.0
    %615 = vmatprep.subr.mxu0 0.0
    %616 = vmatpush1.msra.mxu0 0.0
    %617 = vmatprep.subr.mxu0 0.0
    %618 = vmatpush1.msra.mxu0 0.0
    %619 = vmatprep.subr.mxu0 0.0
    %620 = vmatpush1.msra.mxu0 0.0
    %621 = vmatprep.subr.mxu0 0.0
    %622 = vmatpush1.msra.mxu0 0.0
    %623 = vmatprep.subr.mxu0 0.0
    %624 = vmatpush1.msra.mxu0 0.0
    %625 = vmatprep.subr.mxu0 0.0
    %626 = vmatpush1.msra.mxu0 0.0
    %627 = vmatprep.subr.mxu0 0.0
    %628 = vmatpush1.msra.mxu0 0.0
    %629 = vmatprep.subr.mxu0 0.0
    %630 = vmatpush1.msra.mxu0 0.0
    %631 = vmatprep.subr.mxu0 0.0
    %632 = vmatpush1.msra.mxu0 0.0
    %633 = vmatprep.subr.mxu0 0.0
    %634 = vmatpush1.msra.mxu0 0.0
    %635 = vmatprep.subr.mxu0 0.0
    %636 = vmatpush1.msra.mxu0 0.0
    %637 = vmatprep.subr.mxu0 0.0
    %638 = vmatpush1.msra.mxu0 0.0
    %639 = vmatprep.subr.mxu0 0.0
    %640 = vmatpush1.msra.mxu0 0.0
    %641 = vmatprep.subr.mxu0 0.0
    %642 = vmatpush1.msra.mxu0 0.0
    %643 = vmatprep.subr.mxu0 0.0
    %644 = vmatpush1.msra.mxu0 0.0
    %645 = vmatprep.subr.mxu0 0.0
    %646 = vmatpush1.msra.mxu0 0.0
    %647 = vmatprep.subr.mxu0 0.0
    %648 = vmatpush1.msra.mxu0 0.0
    %649 = vmatprep.subr.mxu0 0.0
    %650 = vmatpush1.msra.mxu0 0.0
    %651 = vmatprep.subr.mxu0 0.0
    %652 = vmatpush1.msra.mxu0 0.0
    %653 = vmatprep.subr.mxu0 0.0
    %654 = vmatpush1.msra.mxu0 0.0
    %655 = vmatprep.mubr.f32.mxu0 0.0
    %656 = vmatmul.mubr.f32.gmra.mrb[0].mxu0 %v432
    %v657 = vpop.f32.mrb[0].mxu0
    %v658 = vadd.f32 0.0, %v657
    %v659 = vpop.f32.mrb[0].mxu0
    %v660 = vadd.f32 0.0, %v659
    %661 = vmatprep.mubr.f32.mxu0 0.0
    %662 = vmatmul.mubr.f32.gmra.mrb[0].mxu0 %v435
    %v663 = vpop.f32.mrb[0].mxu0
    %v664 = vadd.f32 0.0, %v663
    %v665 = vpop.f32.mrb[0].mxu0
    %v666 = vadd.f32 0.0, %v665
    %667 = vdwg.mxu0
    %668 = vmatprep.subr.mxu0 %v182
    %669 = vmatpush1.msra.mxu0 %v181
    %670 = vmatprep.subr.mxu0 %v194
    %671 = vmatpush1.msra.mxu0 %v193
    %672 = vmatprep.subr.mxu0 %v206
    %673 = vmatpush1.msra.mxu0 %v205
    %674 = vmatprep.subr.mxu0 %v218
    %675 = vmatpush1.msra.mxu0 %v217
    %676 = vmatprep.subr.mxu0 0.0
    %677 = vmatpush1.msra.mxu0 0.0
    %678 = vmatprep.subr.mxu0 0.0
    %679 = vmatpush1.msra.mxu0 0.0
    %680 = vmatprep.subr.mxu0 0.0
    %681 = vmatpush1.msra.mxu0 0.0
    %682 = vmatprep.subr.mxu0 0.0
    %683 = vmatpush1.msra.mxu0 0.0
    %684 = vmatprep.subr.mxu0 0.0
    %685 = vmatpush1.msra.mxu0 0.0
    %686 = vmatprep.subr.mxu0 0.0
    %687 = vmatpush1.msra.mxu0 0.0
    %688 = vmatprep.subr.mxu0 0.0
    %689 = vmatpush1.msra.mxu0 0.0
    %690 = vmatprep.subr.mxu0 0.0
    %691 = vmatpush1.msra.mxu0 0.0
    %692 = vmatprep.subr.mxu0 0.0
    %693 = vmatpush1.msra.mxu0 0.0
    %694 = vmatprep.subr.mxu0 0.0
    %695 = vmatpush1.msra.mxu0 0.0
    %696 = vmatprep.subr.mxu0 0.0
    %697 = vmatpush1.msra.mxu0 0.0
    %698 = vmatprep.subr.mxu0 0.0
    %699 = vmatpush1.msra.mxu0 0.0
    %700 = vmatprep.subr.mxu0 0.0
    %701 = vmatpush1.msra.mxu0 0.0
    %702 = vmatprep.subr.mxu0 0.0
    %703 = vmatpush1.msra.mxu0 0.0
    %704 = vmatprep.subr.mxu0 0.0
    %705 = vmatpush1.msra.mxu0 0.0
    %706 = vmatprep.subr.mxu0 0.0
    %707 = vmatpush1.msra.mxu0 0.0
    %708 = vmatprep.subr.mxu0 0.0
    %709 = vmatpush1.msra.mxu0 0.0
    %710 = vmatprep.subr.mxu0 0.0
    %711 = vmatpush1.msra.mxu0 0.0
    %712 = vmatprep.subr.mxu0 0.0
    %713 = vmatpush1.msra.mxu0 0.0
    %714 = vmatprep.subr.mxu0 0.0
    %715 = vmatpush1.msra.mxu0 0.0
    %716 = vmatprep.subr.mxu0 0.0
    %717 = vmatpush1.msra.mxu0 0.0
    %718 = vmatprep.subr.mxu0 0.0
    %719 = vmatpush1.msra.mxu0 0.0
    %720 = vmatprep.subr.mxu0 0.0
    %721 = vmatpush1.msra.mxu0 0.0
    %722 = vmatprep.subr.mxu0 0.0
    %723 = vmatpush1.msra.mxu0 0.0
    %724 = vmatprep.subr.mxu0 0.0
    %725 = vmatpush1.msra.mxu0 0.0
    %726 = vmatprep.subr.mxu0 0.0
    %727 = vmatpush1.msra.mxu0 0.0
    %728 = vmatprep.subr.mxu0 0.0
    %729 = vmatpush1.msra.mxu0 0.0
    %730 = vmatprep.subr.mxu0 0.0
    %731 = vmatpush1.msra.mxu0 0.0
    %732 = vmatprep.mubr.f32.mxu0 0.0
    %733 = vmatmul.mubr.f32.gmra.mrb[0].mxu0 %v432
    %v734 = vpop.f32.mrb[0].mxu0
    %v735 = vadd.f32 0.0, %v734
    %v736 = vpop.f32.mrb[0].mxu0
    %v737 = vadd.f32 0.0, %v736
    %738 = vmatprep.mubr.f32.mxu0 0.0
    %739 = vmatmul.mubr.f32.gmra.mrb[0].mxu0 %v435
    %v740 = vpop.f32.mrb[0].mxu0
    %v741 = vadd.f32 0.0, %v740
    %v742 = vpop.f32.mrb[0].mxu0
    %v743 = vadd.f32 0.0, %v742
    %744 = vdwg.mxu0
    %745 = vmatprep.subr.mxu0 %v184
    %746 = vmatpush1.msra.mxu0 %v183
    %747 = vmatprep.subr.mxu0 %v196
    %748 = vmatpush1.msra.mxu0 %v195
    %749 = vmatprep.subr.mxu0 %v208
    %750 = vmatpush1.msra.mxu0 %v207
    %751 = vmatprep.subr.mxu0 %v220
    %752 = vmatpush1.msra.mxu0 %v219
    %753 = vmatprep.subr.mxu0 0.0
    %754 = vmatpush1.msra.mxu0 0.0
    %755 = vmatprep.subr.mxu0 0.0
    %756 = vmatpush1.msra.mxu0 0.0
    %757 = vmatprep.subr.mxu0 0.0
    %758 = vmatpush1.msra.mxu0 0.0
    %759 = vmatprep.subr.mxu0 0.0
    %760 = vmatpush1.msra.mxu0 0.0
    %761 = vmatprep.subr.mxu0 0.0
    %762 = vmatpush1.msra.mxu0 0.0
    %763 = vmatprep.subr.mxu0 0.0
    %764 = vmatpush1.msra.mxu0 0.0
    %765 = vmatprep.subr.mxu0 0.0
    %766 = vmatpush1.msra.mxu0 0.0
    %767 = vmatprep.subr.mxu0 0.0
    %768 = vmatpush1.msra.mxu0 0.0
    %769 = vmatprep.subr.mxu0 0.0
    %770 = vmatpush1.msra.mxu0 0.0
    %771 = vmatprep.subr.mxu0 0.0
    %772 = vmatpush1.msra.mxu0 0.0
    %773 = vmatprep.subr.mxu0 0.0
    %774 = vmatpush1.msra.mxu0 0.0
    %775 = vmatprep.subr.mxu0 0.0
    %776 = vmatpush1.msra.mxu0 0.0
    %777 = vmatprep.subr.mxu0 0.0
    %778 = vmatpush1.msra.mxu0 0.0
    %779 = vmatprep.subr.mxu0 0.0
    %780 = vmatpush1.msra.mxu0 0.0
    %781 = vmatprep.subr.mxu0 0.0
    %782 = vmatpush1.msra.mxu0 0.0
    %783 = vmatprep.subr.mxu0 0.0
    %784 = vmatpush1.msra.mxu0 0.0
    %785 = vmatprep.subr.mxu0 0.0
    %786 = vmatpush1.msra.mxu0 0.0
    %787 = vmatprep.subr.mxu0 0.0
    %788 = vmatpush1.msra.mxu0 0.0
    %789 = vmatprep.subr.mxu0 0.0
    %790 = vmatpush1.msra.mxu0 0.0
    %791 = vmatprep.subr.mxu0 0.0
    %792 = vmatpush1.msra.mxu0 0.0
    %793 = vmatprep.subr.mxu0 0.0
    %794 = vmatpush1.msra.mxu0 0.0
    %795 = vmatprep.subr.mxu0 0.0
    %796 = vmatpush1.msra.mxu0 0.0
    %797 = vmatprep.subr.mxu0 0.0
    %798 = vmatpush1.msra.mxu0 0.0
    %799 = vmatprep.subr.mxu0 0.0
    %800 = vmatpush1.msra.mxu0 0.0
    %801 = vmatprep.subr.mxu0 0.0
    %802 = vmatpush1.msra.mxu0 0.0
    %803 = vmatprep.subr.mxu0 0.0
    %804 = vmatpush1.msra.mxu0 0.0
    %805 = vmatprep.subr.mxu0 0.0
    %806 = vmatpush1.msra.mxu0 0.0
    %807 = vmatprep.subr.mxu0 0.0
    %808 = vmatpush1.msra.mxu0 0.0
    %809 = vmatprep.mubr.f32.mxu0 0.0
    %810 = vmatmul.mubr.f32.gmra.mrb[0].mxu0 %v432
    %v811 = vpop.f32.mrb[0].mxu0
    %v812 = vadd.f32 0.0, %v811
    %v813 = vpop.f32.mrb[0].mxu0
    %v814 = vadd.f32 0.0, %v813
    %815 = vmatprep.mubr.f32.mxu0 0.0
    %816 = vmatmul.mubr.f32.gmra.mrb[0].mxu0 %v435
    %v817 = vpop.f32.mrb[0].mxu0
    %v818 = vadd.f32 0.0, %v817
    %v819 = vpop.f32.mrb[0].mxu0
    %v820 = vadd.f32 0.0, %v819
    %821 = vdwg.mxu0
    %822 = vmatprep.subr.mxu0 %v186
    %823 = vmatpush1.msra.mxu0 %v185
    %824 = vmatprep.subr.mxu0 %v198
    %825 = vmatpush1.msra.mxu0 %v197
    %826 = vmatprep.subr.mxu0 %v210
    %827 = vmatpush1.msra.mxu0 %v209
    %828 = vmatprep.subr.mxu0 %v222
    %829 = vmatpush1.msra.mxu0 %v221
    %830 = vmatprep.subr.mxu0 0.0
    %831 = vmatpush1.msra.mxu0 0.0
    %832 = vmatprep.subr.mxu0 0.0
    %833 = vmatpush1.msra.mxu0 0.0
    %834 = vmatprep.subr.mxu0 0.0
    %835 = vmatpush1.msra.mxu0 0.0
    %836 = vmatprep.subr.mxu0 0.0
    %837 = vmatpush1.msra.mxu0 0.0
    %838 = vmatprep.subr.mxu0 0.0
    %839 = vmatpush1.msra.mxu0 0.0
    %840 = vmatprep.subr.mxu0 0.0
    %841 = vmatpush1.msra.mxu0 0.0
    %842 = vmatprep.subr.mxu0 0.0
    %843 = vmatpush1.msra.mxu0 0.0
    %844 = vmatprep.subr.mxu0 0.0
    %845 = vmatpush1.msra.mxu0 0.0
    %846 = vmatprep.subr.mxu0 0.0
    %847 = vmatpush1.msra.mxu0 0.0
    %848 = vmatprep.subr.mxu0 0.0
    %849 = vmatpush1.msra.mxu0 0.0
    %850 = vmatprep.subr.mxu0 0.0
    %851 = vmatpush1.msra.mxu0 0.0
    %852 = vmatprep.subr.mxu0 0.0
    %853 = vmatpush1.msra.mxu0 0.0
    %854 = vmatprep.subr.mxu0 0.0
    %855 = vmatpush1.msra.mxu0 0.0
    %856 = vmatprep.subr.mxu0 0.0
    %857 = vmatpush1.msra.mxu0 0.0
    %858 = vmatprep.subr.mxu0 0.0
    %859 = vmatpush1.msra.mxu0 0.0
    %860 = vmatprep.subr.mxu0 0.0
    %861 = vmatpush1.msra.mxu0 0.0
    %862 = vmatprep.subr.mxu0 0.0
    %863 = vmatpush1.msra.mxu0 0.0
    %864 = vmatprep.subr.mxu0 0.0
    %865 = vmatpush1.msra.mxu0 0.0
    %866 = vmatprep.subr.mxu0 0.0
    %867 = vmatpush1.msra.mxu0 0.0
    %868 = vmatprep.subr.mxu0 0.0
    %869 = vmatpush1.msra.mxu0 0.0
    %870 = vmatprep.subr.mxu0 0.0
    %871 = vmatpush1.msra.mxu0 0.0
    %872 = vmatprep.subr.mxu0 0.0
    %873 = vmatpush1.msra.mxu0 0.0
    %874 = vmatprep.subr.mxu0 0.0
    %875 = vmatpush1.msra.mxu0 0.0
    %876 = vmatprep.subr.mxu0 0.0
    %877 = vmatpush1.msra.mxu0 0.0
    %878 = vmatprep.subr.mxu0 0.0
    %879 = vmatpush1.msra.mxu0 0.0
    %880 = vmatprep.subr.mxu0 0.0
    %881 = vmatpush1.msra.mxu0 0.0
    %882 = vmatprep.subr.mxu0 0.0
    %883 = vmatpush1.msra.mxu0 0.0
    %884 = vmatprep.subr.mxu0 0.0
    %885 = vmatpush1.msra.mxu0 0.0
    %886 = vmatprep.mubr.f32.mxu0 0.0
    %887 = vmatmul.mubr.f32.gmra.mrb[0].mxu0 %v432
    %v888 = vpop.f32.mrb[0].mxu0
    %v889 = vadd.f32 0.0, %v888
    %v890 = vpop.f32.mrb[0].mxu0
    %v891 = vadd.f32 0.0, %v890
    %892 = vmatprep.mubr.f32.mxu0 0.0
    %893 = vmatmul.mubr.f32.gmra.mrb[0].mxu0 %v435
    %v894 = vpop.f32.mrb[0].mxu0
    %v895 = vadd.f32 0.0, %v894
    %v896 = vpop.f32.mrb[0].mxu0
    %v897 = vadd.f32 0.0, %v896
    %898 = vdwg.mxu0
    %vm899 = vcmask 523264
    %v901 = vsel %vm899, %v504, 0
    %v904 = vsel %vm899, %v510, 0
    %v907 = vsel %vm899, %v658, 0
    %v910 = vsel %vm899, %v664, 0
    %912 = vmatprep.subr.mxu0 0.0
    %913 = vmatpush1.xpose.msra.mxu0 %v907
    %914 = vmatprep.subr.mxu0 0.0
    %915 = vmatpush1.xpose.msra.mxu0 %v910
    %916 = vmatprep.subr.mxu0 0.0
    %917 = vmatpush1.xpose.msra.mxu0 0.0
    %918 = vmatprep.subr.mxu0 0.0
    %919 = vmatpush1.xpose.msra.mxu0 0.0
    %920 = vmatprep.subr.mxu0 0.0
    %921 = vmatpush1.xpose.msra.mxu0 0.0
    %922 = vmatprep.subr.mxu0 0.0
    %923 = vmatpush1.xpose.msra.mxu0 0.0
    %924 = vmatprep.subr.mxu0 0.0
    %925 = vmatpush1.xpose.msra.mxu0 0.0
    %926 = vmatprep.subr.mxu0 0.0
    %927 = vmatpush1.xpose.msra.mxu0 0.0
    %928 = vmatprep.subr.mxu0 0.0
    %929 = vmatpush1.xpose.msra.mxu0 0.0
    %930 = vmatprep.subr.mxu0 0.0
    %931 = vmatpush1.xpose.msra.mxu0 0.0
    %932 = vmatprep.subr.mxu0 0.0
    %933 = vmatpush1.xpose.msra.mxu0 0.0
    %934 = vmatprep.subr.mxu0 0.0
    %935 = vmatpush1.xpose.msra.mxu0 0.0
    %936 = vmatprep.subr.mxu0 0.0
    %937 = vmatpush1.xpose.msra.mxu0 0.0
    %938 = vmatprep.subr.mxu0 0.0
    %939 = vmatpush1.xpose.msra.mxu0 0.0
    %940 = vmatprep.subr.mxu0 0.0
    %941 = vmatpush1.xpose.msra.mxu0 0.0
    %942 = vmatprep.subr.mxu0 0.0
    %943 = vmatpush1.xpose.msra.mxu0 0.0
    %944 = vmatprep.subr.mxu0 0.0
    %945 = vmatpush1.xpose.msra.mxu0 0.0
    %946 = vmatprep.subr.mxu0 0.0
    %947 = vmatpush1.xpose.msra.mxu0 0.0
    %948 = vmatprep.subr.mxu0 0.0
    %949 = vmatpush1.xpose.msra.mxu0 0.0
    %950 = vmatprep.subr.mxu0 0.0
    %951 = vmatpush1.xpose.msra.mxu0 0.0
    %952 = vmatprep.subr.mxu0 0.0
    %953 = vmatpush1.xpose.msra.mxu0 0.0
    %954 = vmatprep.subr.mxu0 0.0
    %955 = vmatpush1.xpose.msra.mxu0 0.0
    %956 = vmatprep.subr.mxu0 0.0
    %957 = vmatpush1.xpose.msra.mxu0 0.0
    %958 = vmatprep.subr.mxu0 0.0
    %959 = vmatpush1.xpose.msra.mxu0 0.0
    %960 = vmatprep.subr.mxu0 0.0
    %961 = vmatpush1.xpose.msra.mxu0 0.0
    %962 = vmatprep.subr.mxu0 0.0
    %963 = vmatpush1.xpose.msra.mxu0 0.0
    %964 = vmatprep.subr.mxu0 0.0
    %965 = vmatpush1.xpose.msra.mxu0 0.0
    %966 = vmatprep.subr.mxu0 0.0
    %967 = vmatpush1.xpose.msra.mxu0 0.0
    %968 = vmatprep.subr.mxu0 0.0
    %969 = vmatpush1.xpose.msra.mxu0 0.0
    %970 = vmatprep.subr.mxu0 0.0
    %971 = vmatpush1.xpose.msra.mxu0 0.0
    %972 = vmatprep.subr.mxu0 0.0
    %973 = vmatpush1.xpose.msra.mxu0 0.0
    %974 = vmatprep.subr.mxu0 0.0
    %975 = vmatpush1.xpose.msra.mxu0 0.0
    %976 = vmatprep.mubr.f32.mxu0 0.0
    %977 = vmatmul.mubr.f32.gmra.mrb[0].mxu0 %v901
    %v978 = vpop.f32.mrb[0].mxu0
    %v979 = vadd.f32 0.0, %v978
    %v980 = vpop.f32.mrb[0].mxu0
    %981 = vmatprep.mubr.f32.mxu0 0.0
    %982 = vmatmul.mubr.f32.gmra.mrb[0].mxu0 %v904
    %v983 = vpop.f32.mrb[0].mxu0
    %v984 = vadd.f32 0.0, %v983
    %v985 = vpop.f32.mrb[0].mxu0
    %986 = vdwg.mxu0
    %v987 = vmul.f32 %v979, 0.125
    %v988 = vmul.f32 %v984, 0.125
    %v989 = vadd.f32 %v987, %v147
    %v990 = vadd.f32 %v988, %v148
    %vm991 = vcmask 130048
    %v992 = vsel %vm991, %v989, -inf
    %993 = vmax.xlane.f32.xlu0 %v992
    %v994 = vpop.xlane.xlu0 %993
    %v995 = vsel %vm991, %v990, -inf
    %996 = vmax.xlane.f32.xlu0 %v995
    %v997 = vpop.xlane.xlu0 %996
    %v998 = vsub.f32 %v989, %v994
    %v999 = vsub.f32 %v990, %v997
    %v1000 = vmul.f32 %v998, 1.442695
    %v1001 = vpow.pop %v1000
    %v1002 = vmul.f32 %v999, 1.442695
    %v1003 = vpow.pop %v1002
    %v1004 = vsel %vm991, %v1001, 0.0
    %1005 = vadd.xlane.f32.xlu0 %v1004
    %v1006 = vpop.xlane.xlu0 %1005
    %v1007 = vsel %vm991, %v1003, 0.0
    %1008 = vadd.xlane.f32.xlu0 %v1007
    %v1009 = vpop.xlane.xlu0 %1008
    %v1010 = vrcp.pop %v1006
    %v1011 = vrcp.pop %v1009
    %v1012 = vmul.f32 %v1006, %v1010
    %v1013 = vmul.f32 %v1009, %v1011
    %v1014 = vsub.f32 2.0, %v1012
    %v1015 = vsub.f32 2.0, %v1013
    %v1016 = vmul.f32 %v1010, %v1014
    %v1017 = vmul.f32 %v1011, %v1015
    %v1018 = vmul.f32 %v1001, %v1016
    %v1019 = vmul.f32 %v1003, %v1017
    %v1021 = vsel %vm991, %v1018, 0
    %v1024 = vsel %vm991, %v1019, 0
    %1026 = vmatprep.subr.mxu0 0.0
    %1027 = vmatpush1.msra.mxu0 %v812
    %1028 = vmatprep.subr.mxu0 0.0
    %1029 = vmatpush1.msra.mxu0 %v818
    %1030 = vmatprep.subr.mxu0 0.0
    %1031 = vmatpush1.msra.mxu0 0.0
    %1032 = vmatprep.subr.mxu0 0.0
    %1033 = vmatpush1.msra.mxu0 0.0
    %1034 = vmatprep.subr.mxu0 0.0
    %1035 = vmatpush1.msra.mxu0 0.0
    %1036 = vmatprep.subr.mxu0 0.0
    %1037 = vmatpush1.msra.mxu0 0.0
    %1038 = vmatprep.subr.mxu0 0.0
    %1039 = vmatpush1.msra.mxu0 0.0
    %1040 = vmatprep.subr.mxu0 0.0
    %1041 = vmatpush1.msra.mxu0 0.0
    %1042 = vmatprep.subr.mxu0 0.0
    %1043 = vmatpush1.msra.mxu0 0.0
    %1044 = vmatprep.subr.mxu0 0.0
    %1045 = vmatpush1.msra.mxu0 0.0
    %1046 = vmatprep.subr.mxu0 0.0
    %1047 = vmatpush1.msra.mxu0 0.0
    %1048 = vmatprep.subr.mxu0 0.0
    %1049 = vmatpush1.msra.mxu0 0.0
    %1050 = vmatprep.subr.mxu0 0.0
    %1051 = vmatpush1.msra.mxu0 0.0
    %1052 = vmatprep.subr.mxu0 0.0
    %1053 = vmatpush1.msra.mxu0 0.0
    %1054 = vmatprep.subr.mxu0 0.0
    %1055 = vmatpush1.msra.mxu0 0.0
    %1056 = vmatprep.subr.mxu0 0.0
    %1057 = vmatpush1.msra.mxu0 0.0
    %1058 = vmatprep.subr.mxu0 0.0
    %1059 = vmatpush1.msra.mxu0 0.0
    %1060 = vmatprep.subr.mxu0 0.0
    %1061 = vmatpush1.msra.mxu0 0.0
    %1062 = vmatprep.subr.mxu0 0.0
    %1063 = vmatpush1.msra.mxu0 0.0
    %1064 = vmatprep.subr.mxu0 0.0
    %1065 = vmatpush1.msra.mxu0 0.0
    %1066 = vmatprep.subr.mxu0 0.0
    %1067 = vmatpush1.msra.mxu0 0.0
    %1068 = vmatprep.subr.mxu0 0.0
    %1069 = vmatpush1.msra.mxu0 0.0
    %1070 = vmatprep.subr.mxu0 0.0
    %1071 = vmatpush1.msra.mxu0 0.0
    %1072 = vmatprep.subr.mxu0 0.0
    %1073 = vmatpush1.msra.mxu0 0.0
    %1074 = vmatprep.subr.mxu0 0.0
    %1075 = vmatpush1.msra.mxu0 0.0
    %1076 = vmatprep.subr.mxu0 0.0
    %1077 = vmatpush1.msra.mxu0 0.0
    %1078 = vmatprep.subr.mxu0 0.0
    %1079 = vmatpush1.msra.mxu0 0.0
    %1080 = vmatprep.subr.mxu0 0.0
    %1081 = vmatpush1.msra.mxu0 0.0
    %1082 = vmatprep.subr.mxu0 0.0
    %1083 = vmatpush1.msra.mxu0 0.0
    %1084 = vmatprep.subr.mxu0 0.0
    %1085 = vmatpush1.msra.mxu0 0.0
    %1086 = vmatprep.subr.mxu0 0.0
    %1087 = vmatpush1.msra.mxu0 0.0
    %1088 = vmatprep.subr.mxu0 0.0
    %1089 = vmatpush1.msra.mxu0 0.0
    %1090 = vmatprep.mubr.f32.mxu0 0.0
    %1091 = vmatmul.mubr.f32.gmra.mrb[0].mxu0 %v1021
    %v1092 = vpop.f32.mrb[0].mxu0
    %v1093 = vadd.f32 0.0, %v1092
    %v1094 = vpop.f32.mrb[0].mxu0
    %1095 = vmatprep.mubr.f32.mxu0 0.0
    %1096 = vmatmul.mubr.f32.gmra.mrb[0].mxu0 %v1024
    %v1097 = vpop.f32.mrb[0].mxu0
    %v1098 = vadd.f32 0.0, %v1097
    %v1099 = vpop.f32.mrb[0].mxu0
    %1100 = vdwg.mxu0
    %1101 = vst.msk [vmem:[#allocation2] sm:$0xff] %vm899, %v1093
    %1102 = vst.msk [vmem:[#allocation2 + $0x20] sm:$0xff] %vm899, %v1098
    %1103 = vrot.lane.b32.xlu0 %v504, 64
    %v1104 = vpop.permute.xlu0 %1103
    %1105 = vrot.lane.b32.xlu0 %v510, 64
    %v1106 = vpop.permute.xlu0 %1105
    %1107 = vrot.lane.b32.xlu0 %v658, 64
    %v1108 = vpop.permute.xlu0 %1107
    %1109 = vrot.lane.b32.xlu0 %v664, 64
    %v1110 = vpop.permute.xlu0 %1109
    %v1111 = vsel %vm899, %v1104, 0
    %v1113 = vsel %vm899, %v1106, 0
    %v1115 = vsel %vm899, %v1108, 0
    %v1117 = vsel %vm899, %v1110, 0
    %1119 = vmatprep.subr.mxu0 0.0
    %1120 = vmatpush1.xpose.msra.mxu0 %v1115
    %1121 = vmatprep.subr.mxu0 0.0
    %1122 = vmatpush1.xpose.msra.mxu0 %v1117
    %1123 = vmatprep.subr.mxu0 0.0
    %1124 = vmatpush1.xpose.msra.mxu0 0.0
    %1125 = vmatprep.subr.mxu0 0.0
    %1126 = vmatpush1.xpose.msra.mxu0 0.0
    %1127 = vmatprep.subr.mxu0 0.0
    %1128 = vmatpush1.xpose.msra.mxu0 0.0
    %1129 = vmatprep.subr.mxu0 0.0
    %1130 = vmatpush1.xpose.msra.mxu0 0.0
    %1131 = vmatprep.subr.mxu0 0.0
    %1132 = vmatpush1.xpose.msra.mxu0 0.0
    %1133 = vmatprep.subr.mxu0 0.0
    %1134 = vmatpush1.xpose.msra.mxu0 0.0
    %1135 = vmatprep.subr.mxu0 0.0
    %1136 = vmatpush1.xpose.msra.mxu0 0.0
    %1137 = vmatprep.subr.mxu0 0.0
    %1138 = vmatpush1.xpose.msra.mxu0 0.0
    %1139 = vmatprep.subr.mxu0 0.0
    %1140 = vmatpush1.xpose.msra.mxu0 0.0
    %1141 = vmatprep.subr.mxu0 0.0
    %1142 = vmatpush1.xpose.msra.mxu0 0.0
    %1143 = vmatprep.subr.mxu0 0.0
    %1144 = vmatpush1.xpose.msra.mxu0 0.0
    %1145 = vmatprep.subr.mxu0 0.0
    %1146 = vmatpush1.xpose.msra.mxu0 0.0
    %1147 = vmatprep.subr.mxu0 0.0
    %1148 = vmatpush1.xpose.msra.mxu0 0.0
    %1149 = vmatprep.subr.mxu0 0.0
    %1150 = vmatpush1.xpose.msra.mxu0 0.0
    %1151 = vmatprep.subr.mxu0 0.0
    %1152 = vmatpush1.xpose.msra.mxu0 0.0
    %1153 = vmatprep.subr.mxu0 0.0
    %1154 = vmatpush1.xpose.msra.mxu0 0.0
    %1155 = vmatprep.subr.mxu0 0.0
    %1156 = vmatpush1.xpose.msra.mxu0 0.0
    %1157 = vmatprep.subr.mxu0 0.0
    %1158 = vmatpush1.xpose.msra.mxu0 0.0
    %1159 = vmatprep.subr.mxu0 0.0
    %1160 = vmatpush1.xpose.msra.mxu0 0.0
    %1161 = vmatprep.subr.mxu0 0.0
    %1162 = vmatpush1.xpose.msra.mxu0 0.0
    %1163 = vmatprep.subr.mxu0 0.0
    %1164 = vmatpush1.xpose.msra.mxu0 0.0
    %1165 = vmatprep.subr.mxu0 0.0
    %1166 = vmatpush1.xpose.msra.mxu0 0.0
    %1167 = vmatprep.subr.mxu0 0.0
    %1168 = vmatpush1.xpose.msra.mxu0 0.0
    %1169 = vmatprep.subr.mxu0 0.0
    %1170 = vmatpush1.xpose.msra.mxu0 0.0
    %1171 = vmatprep.subr.mxu0 0.0
    %1172 = vmatpush1.xpose.msra.mxu0 0.0
    %1173 = vmatprep.subr.mxu0 0.0
    %1174 = vmatpush1.xpose.msra.mxu0 0.0
    %1175 = vmatprep.subr.mxu0 0.0
    %1176 = vmatpush1.xpose.msra.mxu0 0.0
    %1177 = vmatprep.subr.mxu0 0.0
    %1178 = vmatpush1.xpose.msra.mxu0 0.0
    %1179 = vmatprep.subr.mxu0 0.0
    %1180 = vmatpush1.xpose.msra.mxu0 0.0
    %1181 = vmatprep.subr.mxu0 0.0
    %1182 = vmatpush1.xpose.msra.mxu0 0.0
    %1183 = vmatprep.mubr.f32.mxu0 0.0
    %1184 = vmatmul.mubr.f32.gmra.mrb[0].mxu0 %v1111
    %v1185 = vpop.f32.mrb[0].mxu0
    %v1186 = vadd.f32 0.0, %v1185
    %v1187 = vpop.f32.mrb[0].mxu0
    %1188 = vmatprep.mubr.f32.mxu0 0.0
    %1189 = vmatmul.mubr.f32.gmra.mrb[0].mxu0 %v1113
    %v1190 = vpop.f32.mrb[0].mxu0
    %v1191 = vadd.f32 0.0, %v1190
    %v1192 = vpop.f32.mrb[0].mxu0
    %1193 = vdwg.mxu0
    %v1194 = vmul.f32 %v1186, 0.125
    %v1195 = vmul.f32 %v1191, 0.125
    %v1196 = vadd.f32 %v1194, %v147
    %v1197 = vadd.f32 %v1195, %v148
    %v1198 = vsel %vm991, %v1196, -inf
    %1199 = vmax.xlane.f32.xlu0 %v1198
    %v1200 = vpop.xlane.xlu0 %1199
    %v1201 = vsel %vm991, %v1197, -inf
    %1202 = vmax.xlane.f32.xlu0 %v1201
    %v1203 = vpop.xlane.xlu0 %1202
    %v1204 = vsub.f32 %v1196, %v1200
    %v1205 = vsub.f32 %v1197, %v1203
    %v1206 = vmul.f32 %v1204, 1.442695
    %v1207 = vpow.pop %v1206
    %v1208 = vmul.f32 %v1205, 1.442695
    %v1209 = vpow.pop %v1208
    %v1210 = vsel %vm991, %v1207, 0.0
    %1211 = vadd.xlane.f32.xlu0 %v1210
    %v1212 = vpop.xlane.xlu0 %1211
    %v1213 = vsel %vm991, %v1209, 0.0
    %1214 = vadd.xlane.f32.xlu0 %v1213
    %v1215 = vpop.xlane.xlu0 %1214
    %v1216 = vrcp.pop %v1212
    %v1217 = vrcp.pop %v1215
    %v1218 = vmul.f32 %v1212, %v1216
    %v1219 = vmul.f32 %v1215, %v1217
    %v1220 = vsub.f32 2.0, %v1218
    %v1221 = vsub.f32 2.0, %v1219
    %v1222 = vmul.f32 %v1216, %v1220
    %v1223 = vmul.f32 %v1217, %v1221
    %v1224 = vmul.f32 %v1207, %v1222
    %v1225 = vmul.f32 %v1209, %v1223
    %1228 = vrot.lane.b32.xlu0 %v812, 64
    %v1229 = vpop.permute.xlu0 %1228
    %1230 = vrot.lane.b32.xlu0 %v818, 64
    %v1231 = vpop.permute.xlu0 %1230
    %v1235 = vsel %vm991, %v1224, 0
    %v1238 = vsel %vm991, %v1225, 0
    %1240 = vmatprep.subr.mxu0 0.0
    %1241 = vmatpush1.msra.mxu0 %v1229
    %1242 = vmatprep.subr.mxu0 0.0
    %1243 = vmatpush1.msra.mxu0 %v1231
    %1244 = vmatprep.subr.mxu0 0.0
    %1245 = vmatpush1.msra.mxu0 0.0
    %1246 = vmatprep.subr.mxu0 0.0
    %1247 = vmatpush1.msra.mxu0 0.0
    %1248 = vmatprep.subr.mxu0 0.0
    %1249 = vmatpush1.msra.mxu0 0.0
    %1250 = vmatprep.subr.mxu0 0.0
    %1251 = vmatpush1.msra.mxu0 0.0
    %1252 = vmatprep.subr.mxu0 0.0
    %1253 = vmatpush1.msra.mxu0 0.0
    %1254 = vmatprep.subr.mxu0 0.0
    %1255 = vmatpush1.msra.mxu0 0.0
    %1256 = vmatprep.subr.mxu0 0.0
    %1257 = vmatpush1.msra.mxu0 0.0
    %1258 = vmatprep.subr.mxu0 0.0
    %1259 = vmatpush1.msra.mxu0 0.0
    %1260 = vmatprep.subr.mxu0 0.0
    %1261 = vmatpush1.msra.mxu0 0.0
    %1262 = vmatprep.subr.mxu0 0.0
    %1263 = vmatpush1.msra.mxu0 0.0
    %1264 = vmatprep.subr.mxu0 0.0
    %1265 = vmatpush1.msra.mxu0 0.0
    %1266 = vmatprep.subr.mxu0 0.0
    %1267 = vmatpush1.msra.mxu0 0.0
    %1268 = vmatprep.subr.mxu0 0.0
    %1269 = vmatpush1.msra.mxu0 0.0
    %1270 = vmatprep.subr.mxu0 0.0
    %1271 = vmatpush1.msra.mxu0 0.0
    %1272 = vmatprep.subr.mxu0 0.0
    %1273 = vmatpush1.msra.mxu0 0.0
    %1274 = vmatprep.subr.mxu0 0.0
    %1275 = vmatpush1.msra.mxu0 0.0
    %1276 = vmatprep.subr.mxu0 0.0
    %1277 = vmatpush1.msra.mxu0 0.0
    %1278 = vmatprep.subr.mxu0 0.0
    %1279 = vmatpush1.msra.mxu0 0.0
    %1280 = vmatprep.subr.mxu0 0.0
    %1281 = vmatpush1.msra.mxu0 0.0
    %1282 = vmatprep.subr.mxu0 0.0
    %1283 = vmatpush1.msra.mxu0 0.0
    %1284 = vmatprep.subr.mxu0 0.0
    %1285 = vmatpush1.msra.mxu0 0.0
    %1286 = vmatprep.subr.mxu0 0.0
    %1287 = vmatpush1.msra.mxu0 0.0
    %1288 = vmatprep.subr.mxu0 0.0
    %1289 = vmatpush1.msra.mxu0 0.0
    %1290 = vmatprep.subr.mxu0 0.0
    %1291 = vmatpush1.msra.mxu0 0.0
    %1292 = vmatprep.subr.mxu0 0.0
    %1293 = vmatpush1.msra.mxu0 0.0
    %1294 = vmatprep.subr.mxu0 0.0
    %1295 = vmatpush1.msra.mxu0 0.0
    %1296 = vmatprep.subr.mxu0 0.0
    %1297 = vmatpush1.msra.mxu0 0.0
    %1298 = vmatprep.subr.mxu0 0.0
    %1299 = vmatpush1.msra.mxu0 0.0
    %1300 = vmatprep.subr.mxu0 0.0
    %1301 = vmatpush1.msra.mxu0 0.0
    %1302 = vmatprep.subr.mxu0 0.0
    %1303 = vmatpush1.msra.mxu0 0.0
    %1304 = vmatprep.mubr.f32.mxu0 0.0
    %1305 = vmatmul.mubr.f32.gmra.mrb[0].mxu0 %v1235
    %v1306 = vpop.f32.mrb[0].mxu0
    %v1307 = vadd.f32 0.0, %v1306
    %v1308 = vpop.f32.mrb[0].mxu0
    %1309 = vmatprep.mubr.f32.mxu0 0.0
    %1310 = vmatmul.mubr.f32.gmra.mrb[0].mxu0 %v1238
    %v1311 = vpop.f32.mrb[0].mxu0
    %v1312 = vadd.f32 0.0, %v1311
    %v1313 = vpop.f32.mrb[0].mxu0
    %1314 = vdwg.mxu0
    %1317 = vrot.lane.b32.xlu0 %v1307, 64
    %v1318 = vpop.permute.xlu0 %1317
    %1319 = vrot.lane.b32.xlu0 %v1312, 64
    %v1320 = vpop.permute.xlu0 %1319
    %vm1323 = vcmask 1048064
    %1324 = vst.msk [vmem:[#allocation2] sm:$0xff] %vm1323, %v1318
    %1325 = vst.msk [vmem:[#allocation2 + $0x20] sm:$0xff] %vm1323, %v1320
    %v1327 = vsel %vm899, %v506, 0
    %v1330 = vsel %vm899, %v512, 0
    %v1333 = vsel %vm899, %v660, 0
    %v1336 = vsel %vm899, %v666, 0
    %1338 = vmatprep.subr.mxu0 0.0
    %1339 = vmatpush1.xpose.msra.mxu0 %v1333
    %1340 = vmatprep.subr.mxu0 0.0
    %1341 = vmatpush1.xpose.msra.mxu0 %v1336
    %1342 = vmatprep.subr.mxu0 0.0
    %1343 = vmatpush1.xpose.msra.mxu0 0.0
    %1344 = vmatprep.subr.mxu0 0.0
    %1345 = vmatpush1.xpose.msra.mxu0 0.0
    %1346 = vmatprep.subr.mxu0 0.0
    %1347 = vmatpush1.xpose.msra.mxu0 0.0
    %1348 = vmatprep.subr.mxu0 0.0
    %1349 = vmatpush1.xpose.msra.mxu0 0.0
    %1350 = vmatprep.subr.mxu0 0.0
    %1351 = vmatpush1.xpose.msra.mxu0 0.0
    %1352 = vmatprep.subr.mxu0 0.0
    %1353 = vmatpush1.xpose.msra.mxu0 0.0
    %1354 = vmatprep.subr.mxu0 0.0
    %1355 = vmatpush1.xpose.msra.mxu0 0.0
    %1356 = vmatprep.subr.mxu0 0.0
    %1357 = vmatpush1.xpose.msra.mxu0 0.0
    %1358 = vmatprep.subr.mxu0 0.0
    %1359 = vmatpush1.xpose.msra.mxu0 0.0
    %1360 = vmatprep.subr.mxu0 0.0
    %1361 = vmatpush1.xpose.msra.mxu0 0.0
    %1362 = vmatprep.subr.mxu0 0.0
    %1363 = vmatpush1.xpose.msra.mxu0 0.0
    %1364 = vmatprep.subr.mxu0 0.0
    %1365 = vmatpush1.xpose.msra.mxu0 0.0
    %1366 = vmatprep.subr.mxu0 0.0
    %1367 = vmatpush1.xpose.msra.mxu0 0.0
    %1368 = vmatprep.subr.mxu0 0.0
    %1369 = vmatpush1.xpose.msra.mxu0 0.0
    %1370 = vmatprep.subr.mxu0 0.0
    %1371 = vmatpush1.xpose.msra.mxu0 0.0
    %1372 = vmatprep.subr.mxu0 0.0
    %1373 = vmatpush1.xpose.msra.mxu0 0.0
    %1374 = vmatprep.subr.mxu0 0.0
    %1375 = vmatpush1.xpose.msra.mxu0 0.0
    %1376 = vmatprep.subr.mxu0 0.0
    %1377 = vmatpush1.xpose.msra.mxu0 0.0
    %1378 = vmatprep.subr.mxu0 0.0
    %1379 = vmatpush1.xpose.msra.mxu0 0.0
    %1380 = vmatprep.subr.mxu0 0.0
    %1381 = vmatpush1.xpose.msra.mxu0 0.0
    %1382 = vmatprep.subr.mxu0 0.0
    %1383 = vmatpush1.xpose.msra.mxu0 0.0
    %1384 = vmatprep.subr.mxu0 0.0
    %1385 = vmatpush1.xpose.msra.mxu0 0.0
    %1386 = vmatprep.subr.mxu0 0.0
    %1387 = vmatpush1.xpose.msra.mxu0 0.0
    %1388 = vmatprep.subr.mxu0 0.0
    %1389 = vmatpush1.xpose.msra.mxu0 0.0
    %1390 = vmatprep.subr.mxu0 0.0
    %1391 = vmatpush1.xpose.msra.mxu0 0.0
    %1392 = vmatprep.subr.mxu0 0.0
    %1393 = vmatpush1.xpose.msra.mxu0 0.0
    %1394 = vmatprep.subr.mxu0 0.0
    %1395 = vmatpush1.xpose.msra.mxu0 0.0
    %1396 = vmatprep.subr.mxu0 0.0
    %1397 = vmatpush1.xpose.msra.mxu0 0.0
    %1398 = vmatprep.subr.mxu0 0.0
    %1399 = vmatpush1.xpose.msra.mxu0 0.0
    %1400 = vmatprep.subr.mxu0 0.0
    %1401 = vmatpush1.xpose.msra.mxu0 0.0
    %1402 = vmatprep.mubr.f32.mxu0 0.0
    %1403 = vmatmul.mubr.f32.gmra.mrb[0].mxu0 %v1327
    %v1404 = vpop.f32.mrb[0].mxu0
    %v1405 = vadd.f32 0.0, %v1404
    %v1406 = vpop.f32.mrb[0].mxu0
    %1407 = vmatprep.mubr.f32.mxu0 0.0
    %1408 = vmatmul.mubr.f32.gmra.mrb[0].mxu0 %v1330
    %v1409 = vpop.f32.mrb[0].mxu0
    %v1410 = vadd.f32 0.0, %v1409
    %v1411 = vpop.f32.mrb[0].mxu0
    %1412 = vdwg.mxu0
    %v1413 = vmul.f32 %v1405, 0.125
    %v1414 = vmul.f32 %v1410, 0.125
    %v1415 = vadd.f32 %v1413, %v147
    %v1416 = vadd.f32 %v1414, %v148
    %v1417 = vsel %vm991, %v1415, -inf
    %1418 = vmax.xlane.f32.xlu0 %v1417
    %v1419 = vpop.xlane.xlu0 %1418
    %v1420 = vsel %vm991, %v1416, -inf
    %1421 = vmax.xlane.f32.xlu0 %v1420
    %v1422 = vpop.xlane.xlu0 %1421
    %v1423 = vsub.f32 %v1415, %v1419
    %v1424 = vsub.f32 %v1416, %v1422
    %v1425 = vmul.f32 %v1423, 1.442695
    %v1426 = vpow.pop %v1425
    %v1427 = vmul.f32 %v1424, 1.442695
    %v1428 = vpow.pop %v1427
    %v1429 = vsel %vm991, %v1426, 0.0
    %1430 = vadd.xlane.f32.xlu0 %v1429
    %v1431 = vpop.xlane.xlu0 %1430
    %v1432 = vsel %vm991, %v1428, 0.0
    %1433 = vadd.xlane.f32.xlu0 %v1432
    %v1434 = vpop.xlane.xlu0 %1433
    %v1435 = vrcp.pop %v1431
    %v1436 = vrcp.pop %v1434
    %v1437 = vmul.f32 %v1431, %v1435
    %v1438 = vmul.f32 %v1434, %v1436
    %v1439 = vsub.f32 2.0, %v1437
    %v1440 = vsub.f32 2.0, %v1438
    %v1441 = vmul.f32 %v1435, %v1439
    %v1442 = vmul.f32 %v1436, %v1440
    %v1443 = vmul.f32 %v1426, %v1441
    %v1444 = vmul.f32 %v1428, %v1442
    %v1446 = vsel %vm991, %v1443, 0
    %v1449 = vsel %vm991, %v1444, 0
    %1451 = vmatprep.subr.mxu0 0.0
    %1452 = vmatpush1.msra.mxu0 %v814
    %1453 = vmatprep.subr.mxu0 0.0
    %1454 = vmatpush1.msra.mxu0 %v820
    %1455 = vmatprep.subr.mxu0 0.0
    %1456 = vmatpush1.msra.mxu0 0.0
    %1457 = vmatprep.subr.mxu0 0.0
    %1458 = vmatpush1.msra.mxu0 0.0
    %1459 = vmatprep.subr.mxu0 0.0
    %1460 = vmatpush1.msra.mxu0 0.0
    %1461 = vmatprep.subr.mxu0 0.0
    %1462 = vmatpush1.msra.mxu0 0.0
    %1463 = vmatprep.subr.mxu0 0.0
    %1464 = vmatpush1.msra.mxu0 0.0
    %1465 = vmatprep.subr.mxu0 0.0
    %1466 = vmatpush1.msra.mxu0 0.0
    %1467 = vmatprep.subr.mxu0 0.0
    %1468 = vmatpush1.msra.mxu0 0.0
    %1469 = vmatprep.subr.mxu0 0.0
    %1470 = vmatpush1.msra.mxu0 0.0
    %1471 = vmatprep.subr.mxu0 0.0
    %1472 = vmatpush1.msra.mxu0 0.0
    %1473 = vmatprep.subr.mxu0 0.0
    %1474 = vmatpush1.msra.mxu0 0.0
    %1475 = vmatprep.subr.mxu0 0.0
    %1476 = vmatpush1.msra.mxu0 0.0
    %1477 = vmatprep.subr.mxu0 0.0
    %1478 = vmatpush1.msra.mxu0 0.0
    %1479 = vmatprep.subr.mxu0 0.0
    %1480 = vmatpush1.msra.mxu0 0.0
    %1481 = vmatprep.subr.mxu0 0.0
    %1482 = vmatpush1.msra.mxu0 0.0
    %1483 = vmatprep.subr.mxu0 0.0
    %1484 = vmatpush1.msra.mxu0 0.0
    %1485 = vmatprep.subr.mxu0 0.0
    %1486 = vmatpush1.msra.mxu0 0.0
    %1487 = vmatprep.subr.mxu0 0.0
    %1488 = vmatpush1.msra.mxu0 0.0
    %1489 = vmatprep.subr.mxu0 0.0
    %1490 = vmatpush1.msra.mxu0 0.0
    %1491 = vmatprep.subr.mxu0 0.0
    %1492 = vmatpush1.msra.mxu0 0.0
    %1493 = vmatprep.subr.mxu0 0.0
    %1494 = vmatpush1.msra.mxu0 0.0
    %1495 = vmatprep.subr.mxu0 0.0
    %1496 = vmatpush1.msra.mxu0 0.0
    %1497 = vmatprep.subr.mxu0 0.0
    %1498 = vmatpush1.msra.mxu0 0.0
    %1499 = vmatprep.subr.mxu0 0.0
    %1500 = vmatpush1.msra.mxu0 0.0
    %1501 = vmatprep.subr.mxu0 0.0
    %1502 = vmatpush1.msra.mxu0 0.0
    %1503 = vmatprep.subr.mxu0 0.0
    %1504 = vmatpush1.msra.mxu0 0.0
    %1505 = vmatprep.subr.mxu0 0.0
    %1506 = vmatpush1.msra.mxu0 0.0
    %1507 = vmatprep.subr.mxu0 0.0
    %1508 = vmatpush1.msra.mxu0 0.0
    %1509 = vmatprep.subr.mxu0 0.0
    %1510 = vmatpush1.msra.mxu0 0.0
    %1511 = vmatprep.subr.mxu0 0.0
    %1512 = vmatpush1.msra.mxu0 0.0
    %1513 = vmatprep.subr.mxu0 0.0
    %1514 = vmatpush1.msra.mxu0 0.0
    %1515 = vmatprep.mubr.f32.mxu0 0.0
    %1516 = vmatmul.mubr.f32.gmra.mrb[0].mxu0 %v1446
    %v1517 = vpop.f32.mrb[0].mxu0
    %v1518 = vadd.f32 0.0, %v1517
    %v1519 = vpop.f32.mrb[0].mxu0
    %1520 = vmatprep.mubr.f32.mxu0 0.0
    %1521 = vmatmul.mubr.f32.gmra.mrb[0].mxu0 %v1449
    %v1522 = vpop.f32.mrb[0].mxu0
    %v1523 = vadd.f32 0.0, %v1522
    %v1524 = vpop.f32.mrb[0].mxu0
    %1525 = vdwg.mxu0
    %1526 = vst.msk [vmem:[#allocation2 + $0x8] sm:$0xff] %vm899, %v1518
    %1527 = vst.msk [vmem:[#allocation2 + $0x28] sm:$0xff] %vm899, %v1523
    %1528 = vrot.lane.b32.xlu0 %v506, 64
    %v1529 = vpop.permute.xlu0 %1528
    %1530 = vrot.lane.b32.xlu0 %v512, 64
    %v1531 = vpop.permute.xlu0 %1530
    %1532 = vrot.lane.b32.xlu0 %v660, 64
    %v1533 = vpop.permute.xlu0 %1532
    %1534 = vrot.lane.b32.xlu0 %v666, 64
    %v1535 = vpop.permute.xlu0 %1534
    %v1536 = vsel %vm899, %v1529, 0
    %v1538 = vsel %vm899, %v1531, 0
    %v1540 = vsel %vm899, %v1533, 0
    %v1542 = vsel %vm899, %v1535, 0
    %1544 = vmatprep.subr.mxu0 0.0
    %1545 = vmatpush1.xpose.msra.mxu0 %v1540
    %1546 = vmatprep.subr.mxu0 0.0
    %1547 = vmatpush1.xpose.msra.mxu0 %v1542
    %1548 = vmatprep.subr.mxu0 0.0
    %1549 = vmatpush1.xpose.msra.mxu0 0.0
    %1550 = vmatprep.subr.mxu0 0.0
    %1551 = vmatpush1.xpose.msra.mxu0 0.0
    %1552 = vmatprep.subr.mxu0 0.0
    %1553 = vmatpush1.xpose.msra.mxu0 0.0
    %1554 = vmatprep.subr.mxu0 0.0
    %1555 = vmatpush1.xpose.msra.mxu0 0.0
    %1556 = vmatprep.subr.mxu0 0.0
    %1557 = vmatpush1.xpose.msra.mxu0 0.0
    %1558 = vmatprep.subr.mxu0 0.0
    %1559 = vmatpush1.xpose.msra.mxu0 0.0
    %1560 = vmatprep.subr.mxu0 0.0
    %1561 = vmatpush1.xpose.msra.mxu0 0.0
    %1562 = vmatprep.subr.mxu0 0.0
    %1563 = vmatpush1.xpose.msra.mxu0 0.0
    %1564 = vmatprep.subr.mxu0 0.0
    %1565 = vmatpush1.xpose.msra.mxu0 0.0
    %1566 = vmatprep.subr.mxu0 0.0
    %1567 = vmatpush1.xpose.msra.mxu0 0.0
    %1568 = vmatprep.subr.mxu0 0.0
    %1569 = vmatpush1.xpose.msra.mxu0 0.0
    %1570 = vmatprep.subr.mxu0 0.0
    %1571 = vmatpush1.xpose.msra.mxu0 0.0
    %1572 = vmatprep.subr.mxu0 0.0
    %1573 = vmatpush1.xpose.msra.mxu0 0.0
    %1574 = vmatprep.subr.mxu0 0.0
    %1575 = vmatpush1.xpose.msra.mxu0 0.0
    %1576 = vmatprep.subr.mxu0 0.0
    %1577 = vmatpush1.xpose.msra.mxu0 0.0
    %1578 = vmatprep.subr.mxu0 0.0
    %1579 = vmatpush1.xpose.msra.mxu0 0.0
    %1580 = vmatprep.subr.mxu0 0.0
    %1581 = vmatpush1.xpose.msra.mxu0 0.0
    %1582 = vmatprep.subr.mxu0 0.0
    %1583 = vmatpush1.xpose.msra.mxu0 0.0
    %1584 = vmatprep.subr.mxu0 0.0
    %1585 = vmatpush1.xpose.msra.mxu0 0.0
    %1586 = vmatprep.subr.mxu0 0.0
    %1587 = vmatpush1.xpose.msra.mxu0 0.0
    %1588 = vmatprep.subr.mxu0 0.0
    %1589 = vmatpush1.xpose.msra.mxu0 0.0
    %1590 = vmatprep.subr.mxu0 0.0
    %1591 = vmatpush1.xpose.msra.mxu0 0.0
    %1592 = vmatprep.subr.mxu0 0.0
    %1593 = vmatpush1.xpose.msra.mxu0 0.0
    %1594 = vmatprep.subr.mxu0 0.0
    %1595 = vmatpush1.xpose.msra.mxu0 0.0
    %1596 = vmatprep.subr.mxu0 0.0
    %1597 = vmatpush1.xpose.msra.mxu0 0.0
    %1598 = vmatprep.subr.mxu0 0.0
    %1599 = vmatpush1.xpose.msra.mxu0 0.0
    %1600 = vmatprep.subr.mxu0 0.0
    %1601 = vmatpush1.xpose.msra.mxu0 0.0
    %1602 = vmatprep.subr.mxu0 0.0
    %1603 = vmatpush1.xpose.msra.mxu0 0.0
    %1604 = vmatprep.subr.mxu0 0.0
    %1605 = vmatpush1.xpose.msra.mxu0 0.0
    %1606 = vmatprep.subr.mxu0 0.0
    %1607 = vmatpush1.xpose.msra.mxu0 0.0
    %1608 = vmatprep.mubr.f32.mxu0 0.0
    %1609 = vmatmul.mubr.f32.gmra.mrb[0].mxu0 %v1536
    %v1610 = vpop.f32.mrb[0].mxu0
    %v1611 = vadd.f32 0.0, %v1610
    %v1612 = vpop.f32.mrb[0].mxu0
    %1613 = vmatprep.mubr.f32.mxu0 0.0
    %1614 = vmatmul.mubr.f32.gmra.mrb[0].mxu0 %v1538
    %v1615 = vpop.f32.mrb[0].mxu0
    %v1616 = vadd.f32 0.0, %v1615
    %v1617 = vpop.f32.mrb[0].mxu0
    %1618 = vdwg.mxu0
    %v1619 = vmul.f32 %v1611, 0.125
    %v1620 = vmul.f32 %v1616, 0.125
    %v1621 = vadd.f32 %v1619, %v147
    %v1622 = vadd.f32 %v1620, %v148
    %v1623 = vsel %vm991, %v1621, -inf
    %1624 = vmax.xlane.f32.xlu0 %v1623
    %v1625 = vpop.xlane.xlu0 %1624
    %v1626 = vsel %vm991, %v1622, -inf
    %1627 = vmax.xlane.f32.xlu0 %v1626
    %v1628 = vpop.xlane.xlu0 %1627
    %v1629 = vsub.f32 %v1621, %v1625
    %v1630 = vsub.f32 %v1622, %v1628
    %v1631 = vmul.f32 %v1629, 1.442695
    %v1632 = vpow.pop %v1631
    %v1633 = vmul.f32 %v1630, 1.442695
    %v1634 = vpow.pop %v1633
    %v1635 = vsel %vm991, %v1632, 0.0
    %1636 = vadd.xlane.f32.xlu0 %v1635
    %v1637 = vpop.xlane.xlu0 %1636
    %v1638 = vsel %vm991, %v1634, 0.0
    %1639 = vadd.xlane.f32.xlu0 %v1638
    %v1640 = vpop.xlane.xlu0 %1639
    %v1641 = vrcp.pop %v1637
    %v1642 = vrcp.pop %v1640
    %v1643 = vmul.f32 %v1637, %v1641
    %v1644 = vmul.f32 %v1640, %v1642
    %v1645 = vsub.f32 2.0, %v1643
    %v1646 = vsub.f32 2.0, %v1644
    %v1647 = vmul.f32 %v1641, %v1645
    %v1648 = vmul.f32 %v1642, %v1646
    %v1649 = vmul.f32 %v1632, %v1647
    %v1650 = vmul.f32 %v1634, %v1648
    %1653 = vrot.lane.b32.xlu0 %v814, 64
    %v1654 = vpop.permute.xlu0 %1653
    %1655 = vrot.lane.b32.xlu0 %v820, 64
    %v1656 = vpop.permute.xlu0 %1655
    %v1660 = vsel %vm991, %v1649, 0
    %v1663 = vsel %vm991, %v1650, 0
    %1665 = vmatprep.subr.mxu0 0.0
    %1666 = vmatpush1.msra.mxu0 %v1654
    %1667 = vmatprep.subr.mxu0 0.0
    %1668 = vmatpush1.msra.mxu0 %v1656
    %1669 = vmatprep.subr.mxu0 0.0
    %1670 = vmatpush1.msra.mxu0 0.0
    %1671 = vmatprep.subr.mxu0 0.0
    %1672 = vmatpush1.msra.mxu0 0.0
    %1673 = vmatprep.subr.mxu0 0.0
    %1674 = vmatpush1.msra.mxu0 0.0
    %1675 = vmatprep.subr.mxu0 0.0
    %1676 = vmatpush1.msra.mxu0 0.0
    %1677 = vmatprep.subr.mxu0 0.0
    %1678 = vmatpush1.msra.mxu0 0.0
    %1679 = vmatprep.subr.mxu0 0.0
    %1680 = vmatpush1.msra.mxu0 0.0
    %1681 = vmatprep.subr.mxu0 0.0
    %1682 = vmatpush1.msra.mxu0 0.0
    %1683 = vmatprep.subr.mxu0 0.0
    %1684 = vmatpush1.msra.mxu0 0.0
    %1685 = vmatprep.subr.mxu0 0.0
    %1686 = vmatpush1.msra.mxu0 0.0
    %1687 = vmatprep.subr.mxu0 0.0
    %1688 = vmatpush1.msra.mxu0 0.0
    %1689 = vmatprep.subr.mxu0 0.0
    %1690 = vmatpush1.msra.mxu0 0.0
    %1691 = vmatprep.subr.mxu0 0.0
    %1692 = vmatpush1.msra.mxu0 0.0
    %1693 = vmatprep.subr.mxu0 0.0
    %1694 = vmatpush1.msra.mxu0 0.0
    %1695 = vmatprep.subr.mxu0 0.0
    %1696 = vmatpush1.msra.mxu0 0.0
    %1697 = vmatprep.subr.mxu0 0.0
    %1698 = vmatpush1.msra.mxu0 0.0
    %1699 = vmatprep.subr.mxu0 0.0
    %1700 = vmatpush1.msra.mxu0 0.0
    %1701 = vmatprep.subr.mxu0 0.0
    %1702 = vmatpush1.msra.mxu0 0.0
    %1703 = vmatprep.subr.mxu0 0.0
    %1704 = vmatpush1.msra.mxu0 0.0
    %1705 = vmatprep.subr.mxu0 0.0
    %1706 = vmatpush1.msra.mxu0 0.0
    %1707 = vmatprep.subr.mxu0 0.0
    %1708 = vmatpush1.msra.mxu0 0.0
    %1709 = vmatprep.subr.mxu0 0.0
    %1710 = vmatpush1.msra.mxu0 0.0
    %1711 = vmatprep.subr.mxu0 0.0
    %1712 = vmatpush1.msra.mxu0 0.0
    %1713 = vmatprep.subr.mxu0 0.0
    %1714 = vmatpush1.msra.mxu0 0.0
    %1715 = vmatprep.subr.mxu0 0.0
    %1716 = vmatpush1.msra.mxu0 0.0
    %1717 = vmatprep.subr.mxu0 0.0
    %1718 = vmatpush1.msra.mxu0 0.0
    %1719 = vmatprep.subr.mxu0 0.0
    %1720 = vmatpush1.msra.mxu0 0.0
    %1721 = vmatprep.subr.mxu0 0.0
    %1722 = vmatpush1.msra.mxu0 0.0
    %1723 = vmatprep.subr.mxu0 0.0
    %1724 = vmatpush1.msra.mxu0 0.0
    %1725 = vmatprep.subr.mxu0 0.0
    %1726 = vmatpush1.msra.mxu0 0.0
    %1727 = vmatprep.subr.mxu0 0.0
    %1728 = vmatpush1.msra.mxu0 0.0
    %1729 = vmatprep.mubr.f32.mxu0 0.0
    %1730 = vmatmul.mubr.f32.gmra.mrb[0].mxu0 %v1660
    %v1731 = vpop.f32.mrb[0].mxu0
    %v1732 = vadd.f32 0.0, %v1731
    %v1733 = vpop.f32.mrb[0].mxu0
    %1734 = vmatprep.mubr.f32.mxu0 0.0
    %1735 = vmatmul.mubr.f32.gmra.mrb[0].mxu0 %v1663
    %v1736 = vpop.f32.mrb[0].mxu0
    %v1737 = vadd.f32 0.0, %v1736
    %v1738 = vpop.f32.mrb[0].mxu0
    %1739 = vdwg.mxu0
    %1742 = vrot.lane.b32.xlu0 %v1732, 64
    %v1743 = vpop.permute.xlu0 %1742
    %1744 = vrot.lane.b32.xlu0 %v1737, 64
    %v1745 = vpop.permute.xlu0 %1744
    %1748 = vst.msk [vmem:[#allocation2 + $0x8] sm:$0xff] %vm1323, %v1743
    %1749 = vst.msk [vmem:[#allocation2 + $0x28] sm:$0xff] %vm1323, %v1745
    %v1751 = vsel %vm899, %v581, 0
    %v1754 = vsel %vm899, %v587, 0
    %v1757 = vsel %vm899, %v735, 0
    %v1760 = vsel %vm899, %v741, 0
    %1762 = vmatprep.subr.mxu0 0.0
    %1763 = vmatpush1.xpose.msra.mxu0 %v1757
    %1764 = vmatprep.subr.mxu0 0.0
    %1765 = vmatpush1.xpose.msra.mxu0 %v1760
    %1766 = vmatprep.subr.mxu0 0.0
    %1767 = vmatpush1.xpose.msra.mxu0 0.0
    %1768 = vmatprep.subr.mxu0 0.0
    %1769 = vmatpush1.xpose.msra.mxu0 0.0
    %1770 = vmatprep.subr.mxu0 0.0
    %1771 = vmatpush1.xpose.msra.mxu0 0.0
    %1772 = vmatprep.subr.mxu0 0.0
    %1773 = vmatpush1.xpose.msra.mxu0 0.0
    %1774 = vmatprep.subr.mxu0 0.0
    %1775 = vmatpush1.xpose.msra.mxu0 0.0
    %1776 = vmatprep.subr.mxu0 0.0
    %1777 = vmatpush1.xpose.msra.mxu0 0.0
    %1778 = vmatprep.subr.mxu0 0.0
    %1779 = vmatpush1.xpose.msra.mxu0 0.0
    %1780 = vmatprep.subr.mxu0 0.0
    %1781 = vmatpush1.xpose.msra.mxu0 0.0
    %1782 = vmatprep.subr.mxu0 0.0
    %1783 = vmatpush1.xpose.msra.mxu0 0.0
    %1784 = vmatprep.subr.mxu0 0.0
    %1785 = vmatpush1.xpose.msra.mxu0 0.0
    %1786 = vmatprep.subr.mxu0 0.0
    %1787 = vmatpush1.xpose.msra.mxu0 0.0
    %1788 = vmatprep.subr.mxu0 0.0
    %1789 = vmatpush1.xpose.msra.mxu0 0.0
    %1790 = vmatprep.subr.mxu0 0.0
    %1791 = vmatpush1.xpose.msra.mxu0 0.0
    %1792 = vmatprep.subr.mxu0 0.0
    %1793 = vmatpush1.xpose.msra.mxu0 0.0
    %1794 = vmatprep.subr.mxu0 0.0
    %1795 = vmatpush1.xpose.msra.mxu0 0.0
    %1796 = vmatprep.subr.mxu0 0.0
    %1797 = vmatpush1.xpose.msra.mxu0 0.0
    %1798 = vmatprep.subr.mxu0 0.0
    %1799 = vmatpush1.xpose.msra.mxu0 0.0
    %1800 = vmatprep.subr.mxu0 0.0
    %1801 = vmatpush1.xpose.msra.mxu0 0.0
    %1802 = vmatprep.subr.mxu0 0.0
    %1803 = vmatpush1.xpose.msra.mxu0 0.0
    %1804 = vmatprep.subr.mxu0 0.0
    %1805 = vmatpush1.xpose.msra.mxu0 0.0
    %1806 = vmatprep.subr.mxu0 0.0
    %1807 = vmatpush1.xpose.msra.mxu0 0.0
    %1808 = vmatprep.subr.mxu0 0.0
    %1809 = vmatpush1.xpose.msra.mxu0 0.0
    %1810 = vmatprep.subr.mxu0 0.0
    %1811 = vmatpush1.xpose.msra.mxu0 0.0
    %1812 = vmatprep.subr.mxu0 0.0
    %1813 = vmatpush1.xpose.msra.mxu0 0.0
    %1814 = vmatprep.subr.mxu0 0.0
    %1815 = vmatpush1.xpose.msra.mxu0 0.0
    %1816 = vmatprep.subr.mxu0 0.0
    %1817 = vmatpush1.xpose.msra.mxu0 0.0
    %1818 = vmatprep.subr.mxu0 0.0
    %1819 = vmatpush1.xpose.msra.mxu0 0.0
    %1820 = vmatprep.subr.mxu0 0.0
    %1821 = vmatpush1.xpose.msra.mxu0 0.0
    %1822 = vmatprep.subr.mxu0 0.0
    %1823 = vmatpush1.xpose.msra.mxu0 0.0
    %1824 = vmatprep.subr.mxu0 0.0
    %1825 = vmatpush1.xpose.msra.mxu0 0.0
    %1826 = vmatprep.mubr.f32.mxu0 0.0
    %1827 = vmatmul.mubr.f32.gmra.mrb[0].mxu0 %v1751
    %v1828 = vpop.f32.mrb[0].mxu0
    %v1829 = vadd.f32 0.0, %v1828
    %v1830 = vpop.f32.mrb[0].mxu0
    %1831 = vmatprep.mubr.f32.mxu0 0.0
    %1832 = vmatmul.mubr.f32.gmra.mrb[0].mxu0 %v1754
    %v1833 = vpop.f32.mrb[0].mxu0
    %v1834 = vadd.f32 0.0, %v1833
    %v1835 = vpop.f32.mrb[0].mxu0
    %1836 = vdwg.mxu0
    %v1837 = vmul.f32 %v1829, 0.125
    %v1838 = vmul.f32 %v1834, 0.125
    %v1839 = vadd.f32 %v1837, %v147
    %v1840 = vadd.f32 %v1838, %v148
    %v1841 = vsel %vm991, %v1839, -inf
    %1842 = vmax.xlane.f32.xlu0 %v1841
    %v1843 = vpop.xlane.xlu0 %1842
    %v1844 = vsel %vm991, %v1840, -inf
    %1845 = vmax.xlane.f32.xlu0 %v1844
    %v1846 = vpop.xlane.xlu0 %1845
    %v1847 = vsub.f32 %v1839, %v1843
    %v1848 = vsub.f32 %v1840, %v1846
    %v1849 = vmul.f32 %v1847, 1.442695
    %v1850 = vpow.pop %v1849
    %v1851 = vmul.f32 %v1848, 1.442695
    %v1852 = vpow.pop %v1851
    %v1853 = vsel %vm991, %v1850, 0.0
    %1854 = vadd.xlane.f32.xlu0 %v1853
    %v1855 = vpop.xlane.xlu0 %1854
    %v1856 = vsel %vm991, %v1852, 0.0
    %1857 = vadd.xlane.f32.xlu0 %v1856
    %v1858 = vpop.xlane.xlu0 %1857
    %v1859 = vrcp.pop %v1855
    %v1860 = vrcp.pop %v1858
    %v1861 = vmul.f32 %v1855, %v1859
    %v1862 = vmul.f32 %v1858, %v1860
    %v1863 = vsub.f32 2.0, %v1861
    %v1864 = vsub.f32 2.0, %v1862
    %v1865 = vmul.f32 %v1859, %v1863
    %v1866 = vmul.f32 %v1860, %v1864
    %v1867 = vmul.f32 %v1850, %v1865
    %v1868 = vmul.f32 %v1852, %v1866
    %v1870 = vsel %vm991, %v1867, 0
    %v1873 = vsel %vm991, %v1868, 0
    %1875 = vmatprep.subr.mxu0 0.0
    %1876 = vmatpush1.msra.mxu0 %v889
    %1877 = vmatprep.subr.mxu0 0.0
    %1878 = vmatpush1.msra.mxu0 %v895
    %1879 = vmatprep.subr.mxu0 0.0
    %1880 = vmatpush1.msra.mxu0 0.0
    %1881 = vmatprep.subr.mxu0 0.0
    %1882 = vmatpush1.msra.mxu0 0.0
    %1883 = vmatprep.subr.mxu0 0.0
    %1884 = vmatpush1.msra.mxu0 0.0
    %1885 = vmatprep.subr.mxu0 0.0
    %1886 = vmatpush1.msra.mxu0 0.0
    %1887 = vmatprep.subr.mxu0 0.0
    %1888 = vmatpush1.msra.mxu0 0.0
    %1889 = vmatprep.subr.mxu0 0.0
    %1890 = vmatpush1.msra.mxu0 0.0
    %1891 = vmatprep.subr.mxu0 0.0
    %1892 = vmatpush1.msra.mxu0 0.0
    %1893 = vmatprep.subr.mxu0 0.0
    %1894 = vmatpush1.msra.mxu0 0.0
    %1895 = vmatprep.subr.mxu0 0.0
    %1896 = vmatpush1.msra.mxu0 0.0
    %1897 = vmatprep.subr.mxu0 0.0
    %1898 = vmatpush1.msra.mxu0 0.0
    %1899 = vmatprep.subr.mxu0 0.0
    %1900 = vmatpush1.msra.mxu0 0.0
    %1901 = vmatprep.subr.mxu0 0.0
    %1902 = vmatpush1.msra.mxu0 0.0
    %1903 = vmatprep.subr.mxu0 0.0
    %1904 = vmatpush1.msra.mxu0 0.0
    %1905 = vmatprep.subr.mxu0 0.0
    %1906 = vmatpush1.msra.mxu0 0.0
    %1907 = vmatprep.subr.mxu0 0.0
    %1908 = vmatpush1.msra.mxu0 0.0
    %1909 = vmatprep.subr.mxu0 0.0
    %1910 = vmatpush1.msra.mxu0 0.0
    %1911 = vmatprep.subr.mxu0 0.0
    %1912 = vmatpush1.msra.mxu0 0.0
    %1913 = vmatprep.subr.mxu0 0.0
    %1914 = vmatpush1.msra.mxu0 0.0
    %1915 = vmatprep.subr.mxu0 0.0
    %1916 = vmatpush1.msra.mxu0 0.0
    %1917 = vmatprep.subr.mxu0 0.0
    %1918 = vmatpush1.msra.mxu0 0.0
    %1919 = vmatprep.subr.mxu0 0.0
    %1920 = vmatpush1.msra.mxu0 0.0
    %1921 = vmatprep.subr.mxu0 0.0
    %1922 = vmatpush1.msra.mxu0 0.0
    %1923 = vmatprep.subr.mxu0 0.0
    %1924 = vmatpush1.msra.mxu0 0.0
    %1925 = vmatprep.subr.mxu0 0.0
    %1926 = vmatpush1.msra.mxu0 0.0
    %1927 = vmatprep.subr.mxu0 0.0
    %1928 = vmatpush1.msra.mxu0 0.0
    %1929 = vmatprep.subr.mxu0 0.0
    %1930 = vmatpush1.msra.mxu0 0.0
    %1931 = vmatprep.subr.mxu0 0.0
    %1932 = vmatpush1.msra.mxu0 0.0
    %1933 = vmatprep.subr.mxu0 0.0
    %1934 = vmatpush1.msra.mxu0 0.0
    %1935 = vmatprep.subr.mxu0 0.0
    %1936 = vmatpush1.msra.mxu0 0.0
    %1937 = vmatprep.subr.mxu0 0.0
    %1938 = vmatpush1.msra.mxu0 0.0
    %1939 = vmatprep.mubr.f32.mxu0 0.0
    %1940 = vmatmul.mubr.f32.gmra.mrb[0].mxu0 %v1870
    %v1941 = vpop.f32.mrb[0].mxu0
    %v1942 = vadd.f32 0.0, %v1941
    %v1943 = vpop.f32.mrb[0].mxu0
    %1944 = vmatprep.mubr.f32.mxu0 0.0
    %1945 = vmatmul.mubr.f32.gmra.mrb[0].mxu0 %v1873
    %v1946 = vpop.f32.mrb[0].mxu0
    %v1947 = vadd.f32 0.0, %v1946
    %v1948 = vpop.f32.mrb[0].mxu0
    %1949 = vdwg.mxu0
    %1950 = vst.msk [vmem:[#allocation2 + $0x10] sm:$0xff] %vm899, %v1942
    %1951 = vst.msk [vmem:[#allocation2 + $0x30] sm:$0xff] %vm899, %v1947
    %1952 = vrot.lane.b32.xlu0 %v581, 64
    %v1953 = vpop.permute.xlu0 %1952
    %1954 = vrot.lane.b32.xlu0 %v587, 64
    %v1955 = vpop.permute.xlu0 %1954
    %1956 = vrot.lane.b32.xlu0 %v735, 64
    %v1957 = vpop.permute.xlu0 %1956
    %1958 = vrot.lane.b32.xlu0 %v741, 64
    %v1959 = vpop.permute.xlu0 %1958
    %v1960 = vsel %vm899, %v1953, 0
    %v1962 = vsel %vm899, %v1955, 0
    %v1964 = vsel %vm899, %v1957, 0
    %v1966 = vsel %vm899, %v1959, 0
    %1968 = vmatprep.subr.mxu0 0.0
    %1969 = vmatpush1.xpose.msra.mxu0 %v1964
    %1970 = vmatprep.subr.mxu0 0.0
    %1971 = vmatpush1.xpose.msra.mxu0 %v1966
    %1972 = vmatprep.subr.mxu0 0.0
    %1973 = vmatpush1.xpose.msra.mxu0 0.0
    %1974 = vmatprep.subr.mxu0 0.0
    %1975 = vmatpush1.xpose.msra.mxu0 0.0
    %1976 = vmatprep.subr.mxu0 0.0
    %1977 = vmatpush1.xpose.msra.mxu0 0.0
    %1978 = vmatprep.subr.mxu0 0.0
    %1979 = vmatpush1.xpose.msra.mxu0 0.0
    %1980 = vmatprep.subr.mxu0 0.0
    %1981 = vmatpush1.xpose.msra.mxu0 0.0
    %1982 = vmatprep.subr.mxu0 0.0
    %1983 = vmatpush1.xpose.msra.mxu0 0.0
    %1984 = vmatprep.subr.mxu0 0.0
    %1985 = vmatpush1.xpose.msra.mxu0 0.0
    %1986 = vmatprep.subr.mxu0 0.0
    %1987 = vmatpush1.xpose.msra.mxu0 0.0
    %1988 = vmatprep.subr.mxu0 0.0
    %1989 = vmatpush1.xpose.msra.mxu0 0.0
    %1990 = vmatprep.subr.mxu0 0.0
    %1991 = vmatpush1.xpose.msra.mxu0 0.0
    %1992 = vmatprep.subr.mxu0 0.0
    %1993 = vmatpush1.xpose.msra.mxu0 0.0
    %1994 = vmatprep.subr.mxu0 0.0
    %1995 = vmatpush1.xpose.msra.mxu0 0.0
    %1996 = vmatprep.subr.mxu0 0.0
    %1997 = vmatpush1.xpose.msra.mxu0 0.0
    %1998 = vmatprep.subr.mxu0 0.0
    %1999 = vmatpush1.xpose.msra.mxu0 0.0
    %2000 = vmatprep.subr.mxu0 0.0
    %2001 = vmatpush1.xpose.msra.mxu0 0.0
    %2002 = vmatprep.subr.mxu0 0.0
    %2003 = vmatpush1.xpose.msra.mxu0 0.0
    %2004 = vmatprep.subr.mxu0 0.0
    %2005 = vmatpush1.xpose.msra.mxu0 0.0
    %2006 = vmatprep.subr.mxu0 0.0
    %2007 = vmatpush1.xpose.msra.mxu0 0.0
    %2008 = vmatprep.subr.mxu0 0.0
    %2009 = vmatpush1.xpose.msra.mxu0 0.0
    %2010 = vmatprep.subr.mxu0 0.0
    %2011 = vmatpush1.xpose.msra.mxu0 0.0
    %2012 = vmatprep.subr.mxu0 0.0
    %2013 = vmatpush1.xpose.msra.mxu0 0.0
    %2014 = vmatprep.subr.mxu0 0.0
    %2015 = vmatpush1.xpose.msra.mxu0 0.0
    %2016 = vmatprep.subr.mxu0 0.0
    %2017 = vmatpush1.xpose.msra.mxu0 0.0
    %2018 = vmatprep.subr.mxu0 0.0
    %2019 = vmatpush1.xpose.msra.mxu0 0.0
    %2020 = vmatprep.subr.mxu0 0.0
    %2021 = vmatpush1.xpose.msra.mxu0 0.0
    %2022 = vmatprep.subr.mxu0 0.0
    %2023 = vmatpush1.xpose.msra.mxu0 0.0
    %2024 = vmatprep.subr.mxu0 0.0
    %2025 = vmatpush1.xpose.msra.mxu0 0.0
    %2026 = vmatprep.subr.mxu0 0.0
    %2027 = vmatpush1.xpose.msra.mxu0 0.0
    %2028 = vmatprep.subr.mxu0 0.0
    %2029 = vmatpush1.xpose.msra.mxu0 0.0
    %2030 = vmatprep.subr.mxu0 0.0
    %2031 = vmatpush1.xpose.msra.mxu0 0.0
    %2032 = vmatprep.mubr.f32.mxu0 0.0
    %2033 = vmatmul.mubr.f32.gmra.mrb[0].mxu0 %v1960
    %v2034 = vpop.f32.mrb[0].mxu0
    %v2035 = vadd.f32 0.0, %v2034
    %v2036 = vpop.f32.mrb[0].mxu0
    %2037 = vmatprep.mubr.f32.mxu0 0.0
    %2038 = vmatmul.mubr.f32.gmra.mrb[0].mxu0 %v1962
    %v2039 = vpop.f32.mrb[0].mxu0
    %v2040 = vadd.f32 0.0, %v2039
    %v2041 = vpop.f32.mrb[0].mxu0
    %2042 = vdwg.mxu0
    %v2043 = vmul.f32 %v2035, 0.125
    %v2044 = vmul.f32 %v2040, 0.125
    %v2045 = vadd.f32 %v2043, %v147
    %v2046 = vadd.f32 %v2044, %v148
    %v2047 = vsel %vm991, %v2045, -inf
    %2048 = vmax.xlane.f32.xlu0 %v2047
    %v2049 = vpop.xlane.xlu0 %2048
    %v2050 = vsel %vm991, %v2046, -inf
    %2051 = vmax.xlane.f32.xlu0 %v2050
    %v2052 = vpop.xlane.xlu0 %2051
    %v2053 = vsub.f32 %v2045, %v2049
    %v2054 = vsub.f32 %v2046, %v2052
    %v2055 = vmul.f32 %v2053, 1.442695
    %v2056 = vpow.pop %v2055
    %v2057 = vmul.f32 %v2054, 1.442695
    %v2058 = vpow.pop %v2057
    %v2059 = vsel %vm991, %v2056, 0.0
    %2060 = vadd.xlane.f32.xlu0 %v2059
    %v2061 = vpop.xlane.xlu0 %2060
    %v2062 = vsel %vm991, %v2058, 0.0
    %2063 = vadd.xlane.f32.xlu0 %v2062
    %v2064 = vpop.xlane.xlu0 %2063
    %v2065 = vrcp.pop %v2061
    %v2066 = vrcp.pop %v2064
    %v2067 = vmul.f32 %v2061, %v2065
    %v2068 = vmul.f32 %v2064, %v2066
    %v2069 = vsub.f32 2.0, %v2067
    %v2070 = vsub.f32 2.0, %v2068
    %v2071 = vmul.f32 %v2065, %v2069
    %v2072 = vmul.f32 %v2066, %v2070
    %v2073 = vmul.f32 %v2056, %v2071
    %v2074 = vmul.f32 %v2058, %v2072
    %2077 = vrot.lane.b32.xlu0 %v889, 64
    %v2078 = vpop.permute.xlu0 %2077
    %2079 = vrot.lane.b32.xlu0 %v895, 64
    %v2080 = vpop.permute.xlu0 %2079
    %v2084 = vsel %vm991, %v2073, 0
    %v2087 = vsel %vm991, %v2074, 0
    %2089 = vmatprep.subr.mxu0 0.0
    %2090 = vmatpush1.msra.mxu0 %v2078
    %2091 = vmatprep.subr.mxu0 0.0
    %2092 = vmatpush1.msra.mxu0 %v2080
    %2093 = vmatprep.subr.mxu0 0.0
    %2094 = vmatpush1.msra.mxu0 0.0
    %2095 = vmatprep.subr.mxu0 0.0
    %2096 = vmatpush1.msra.mxu0 0.0
    %2097 = vmatprep.subr.mxu0 0.0
    %2098 = vmatpush1.msra.mxu0 0.0
    %2099 = vmatprep.subr.mxu0 0.0
    %2100 = vmatpush1.msra.mxu0 0.0
    %2101 = vmatprep.subr.mxu0 0.0
    %2102 = vmatpush1.msra.mxu0 0.0
    %2103 = vmatprep.subr.mxu0 0.0
    %2104 = vmatpush1.msra.mxu0 0.0
    %2105 = vmatprep.subr.mxu0 0.0
    %2106 = vmatpush1.msra.mxu0 0.0
    %2107 = vmatprep.subr.mxu0 0.0
    %2108 = vmatpush1.msra.mxu0 0.0
    %2109 = vmatprep.subr.mxu0 0.0
    %2110 = vmatpush1.msra.mxu0 0.0
    %2111 = vmatprep.subr.mxu0 0.0
    %2112 = vmatpush1.msra.mxu0 0.0
    %2113 = vmatprep.subr.mxu0 0.0
    %2114 = vmatpush1.msra.mxu0 0.0
    %2115 = vmatprep.subr.mxu0 0.0
    %2116 = vmatpush1.msra.mxu0 0.0
    %2117 = vmatprep.subr.mxu0 0.0
    %2118 = vmatpush1.msra.mxu0 0.0
    %2119 = vmatprep.subr.mxu0 0.0
    %2120 = vmatpush1.msra.mxu0 0.0
    %2121 = vmatprep.subr.mxu0 0.0
    %2122 = vmatpush1.msra.mxu0 0.0
    %2123 = vmatprep.subr.mxu0 0.0
    %2124 = vmatpush1.msra.mxu0 0.0
    %2125 = vmatprep.subr.mxu0 0.0
    %2126 = vmatpush1.msra.mxu0 0.0
    %2127 = vmatprep.subr.mxu0 0.0
    %2128 = vmatpush1.msra.mxu0 0.0
    %2129 = vmatprep.subr.mxu0 0.0
    %2130 = vmatpush1.msra.mxu0 0.0
    %2131 = vmatprep.subr.mxu0 0.0
    %2132 = vmatpush1.msra.mxu0 0.0
    %2133 = vmatprep.subr.mxu0 0.0
    %2134 = vmatpush1.msra.mxu0 0.0
    %2135 = vmatprep.subr.mxu0 0.0
    %2136 = vmatpush1.msra.mxu0 0.0
    %2137 = vmatprep.subr.mxu0 0.0
    %2138 = vmatpush1.msra.mxu0 0.0
    %2139 = vmatprep.subr.mxu0 0.0
    %2140 = vmatpush1.msra.mxu0 0.0
    %2141 = vmatprep.subr.mxu0 0.0
    %2142 = vmatpush1.msra.mxu0 0.0
    %2143 = vmatprep.subr.mxu0 0.0
    %2144 = vmatpush1.msra.mxu0 0.0
    %2145 = vmatprep.subr.mxu0 0.0
    %2146 = vmatpush1.msra.mxu0 0.0
    %2147 = vmatprep.subr.mxu0 0.0
    %2148 = vmatpush1.msra.mxu0 0.0
    %2149 = vmatprep.subr.mxu0 0.0
    %2150 = vmatpush1.msra.mxu0 0.0
    %2151 = vmatprep.subr.mxu0 0.0
    %2152 = vmatpush1.msra.mxu0 0.0
    %2153 = vmatprep.mubr.f32.mxu0 0.0
    %2154 = vmatmul.mubr.f32.gmra.mrb[0].mxu0 %v2084
    %v2155 = vpop.f32.mrb[0].mxu0
    %v2156 = vadd.f32 0.0, %v2155
    %v2157 = vpop.f32.mrb[0].mxu0
    %2158 = vmatprep.mubr.f32.mxu0 0.0
    %2159 = vmatmul.mubr.f32.gmra.mrb[0].mxu0 %v2087
    %v2160 = vpop.f32.mrb[0].mxu0
    %v2161 = vadd.f32 0.0, %v2160
    %v2162 = vpop.f32.mrb[0].mxu0
    %2163 = vdwg.mxu0
    %2166 = vrot.lane.b32.xlu0 %v2156, 64
    %v2167 = vpop.permute.xlu0 %2166
    %2168 = vrot.lane.b32.xlu0 %v2161, 64
    %v2169 = vpop.permute.xlu0 %2168
    %2172 = vst.msk [vmem:[#allocation2 + $0x10] sm:$0xff] %vm1323, %v2167
    %2173 = vst.msk [vmem:[#allocation2 + $0x30] sm:$0xff] %vm1323, %v2169
    %v2175 = vsel %vm899, %v583, 0
    %v2178 = vsel %vm899, %v589, 0
    %v2181 = vsel %vm899, %v737, 0
    %v2184 = vsel %vm899, %v743, 0
    %2186 = vmatprep.subr.mxu0 0.0
    %2187 = vmatpush1.xpose.msra.mxu0 %v2181
    %2188 = vmatprep.subr.mxu0 0.0
    %2189 = vmatpush1.xpose.msra.mxu0 %v2184
    %2190 = vmatprep.subr.mxu0 0.0
    %2191 = vmatpush1.xpose.msra.mxu0 0.0
    %2192 = vmatprep.subr.mxu0 0.0
    %2193 = vmatpush1.xpose.msra.mxu0 0.0
    %2194 = vmatprep.subr.mxu0 0.0
    %2195 = vmatpush1.xpose.msra.mxu0 0.0
    %2196 = vmatprep.subr.mxu0 0.0
    %2197 = vmatpush1.xpose.msra.mxu0 0.0
    %2198 = vmatprep.subr.mxu0 0.0
    %2199 = vmatpush1.xpose.msra.mxu0 0.0
    %2200 = vmatprep.subr.mxu0 0.0
    %2201 = vmatpush1.xpose.msra.mxu0 0.0
    %2202 = vmatprep.subr.mxu0 0.0
    %2203 = vmatpush1.xpose.msra.mxu0 0.0
    %2204 = vmatprep.subr.mxu0 0.0
    %2205 = vmatpush1.xpose.msra.mxu0 0.0
    %2206 = vmatprep.subr.mxu0 0.0
    %2207 = vmatpush1.xpose.msra.mxu0 0.0
    %2208 = vmatprep.subr.mxu0 0.0
    %2209 = vmatpush1.xpose.msra.mxu0 0.0
    %2210 = vmatprep.subr.mxu0 0.0
    %2211 = vmatpush1.xpose.msra.mxu0 0.0
    %2212 = vmatprep.subr.mxu0 0.0
    %2213 = vmatpush1.xpose.msra.mxu0 0.0
    %2214 = vmatprep.subr.mxu0 0.0
    %2215 = vmatpush1.xpose.msra.mxu0 0.0
    %2216 = vmatprep.subr.mxu0 0.0
    %2217 = vmatpush1.xpose.msra.mxu0 0.0
    %2218 = vmatprep.subr.mxu0 0.0
    %2219 = vmatpush1.xpose.msra.mxu0 0.0
    %2220 = vmatprep.subr.mxu0 0.0
    %2221 = vmatpush1.xpose.msra.mxu0 0.0
    %2222 = vmatprep.subr.mxu0 0.0
    %2223 = vmatpush1.xpose.msra.mxu0 0.0
    %2224 = vmatprep.subr.mxu0 0.0
    %2225 = vmatpush1.xpose.msra.mxu0 0.0
    %2226 = vmatprep.subr.mxu0 0.0
    %2227 = vmatpush1.xpose.msra.mxu0 0.0
    %2228 = vmatprep.subr.mxu0 0.0
    %2229 = vmatpush1.xpose.msra.mxu0 0.0
    %2230 = vmatprep.subr.mxu0 0.0
    %2231 = vmatpush1.xpose.msra.mxu0 0.0
    %2232 = vmatprep.subr.mxu0 0.0
    %2233 = vmatpush1.xpose.msra.mxu0 0.0
    %2234 = vmatprep.subr.mxu0 0.0
    %2235 = vmatpush1.xpose.msra.mxu0 0.0
    %2236 = vmatprep.subr.mxu0 0.0
    %2237 = vmatpush1.xpose.msra.mxu0 0.0
    %2238 = vmatprep.subr.mxu0 0.0
    %2239 = vmatpush1.xpose.msra.mxu0 0.0
    %2240 = vmatprep.subr.mxu0 0.0
    %2241 = vmatpush1.xpose.msra.mxu0 0.0
    %2242 = vmatprep.subr.mxu0 0.0
    %2243 = vmatpush1.xpose.msra.mxu0 0.0
    %2244 = vmatprep.subr.mxu0 0.0
    %2245 = vmatpush1.xpose.msra.mxu0 0.0
    %2246 = vmatprep.subr.mxu0 0.0
    %2247 = vmatpush1.xpose.msra.mxu0 0.0
    %2248 = vmatprep.subr.mxu0 0.0
    %2249 = vmatpush1.xpose.msra.mxu0 0.0
    %2250 = vmatprep.mubr.f32.mxu0 0.0
    %2251 = vmatmul.mubr.f32.gmra.mrb[0].mxu0 %v2175
    %v2252 = vpop.f32.mrb[0].mxu0
    %v2253 = vadd.f32 0.0, %v2252
    %v2254 = vpop.f32.mrb[0].mxu0
    %2255 = vmatprep.mubr.f32.mxu0 0.0
    %2256 = vmatmul.mubr.f32.gmra.mrb[0].mxu0 %v2178
    %v2257 = vpop.f32.mrb[0].mxu0
    %v2258 = vadd.f32 0.0, %v2257
    %v2259 = vpop.f32.mrb[0].mxu0
    %2260 = vdwg.mxu0
    %v2261 = vmul.f32 %v2253, 0.125
    %v2262 = vmul.f32 %v2258, 0.125
    %v2263 = vadd.f32 %v2261, %v147
    %v2264 = vadd.f32 %v2262, %v148
    %v2265 = vsel %vm991, %v2263, -inf
    %2266 = vmax.xlane.f32.xlu0 %v2265
    %v2267 = vpop.xlane.xlu0 %2266
    %v2268 = vsel %vm991, %v2264, -inf
    %2269 = vmax.xlane.f32.xlu0 %v2268
    %v2270 = vpop.xlane.xlu0 %2269
    %v2271 = vsub.f32 %v2263, %v2267
    %v2272 = vsub.f32 %v2264, %v2270
    %v2273 = vmul.f32 %v2271, 1.442695
    %v2274 = vpow.pop %v2273
    %v2275 = vmul.f32 %v2272, 1.442695
    %v2276 = vpow.pop %v2275
    %v2277 = vsel %vm991, %v2274, 0.0
    %2278 = vadd.xlane.f32.xlu0 %v2277
    %v2279 = vpop.xlane.xlu0 %2278
    %v2280 = vsel %vm991, %v2276, 0.0
    %2281 = vadd.xlane.f32.xlu0 %v2280
    %v2282 = vpop.xlane.xlu0 %2281
    %v2283 = vrcp.pop %v2279
    %v2284 = vrcp.pop %v2282
    %v2285 = vmul.f32 %v2279, %v2283
    %v2286 = vmul.f32 %v2282, %v2284
    %v2287 = vsub.f32 2.0, %v2285
    %v2288 = vsub.f32 2.0, %v2286
    %v2289 = vmul.f32 %v2283, %v2287
    %v2290 = vmul.f32 %v2284, %v2288
    %v2291 = vmul.f32 %v2274, %v2289
    %v2292 = vmul.f32 %v2276, %v2290
    %v2294 = vsel %vm991, %v2291, 0
    %v2297 = vsel %vm991, %v2292, 0
    %2299 = vmatprep.subr.mxu0 0.0
    %2300 = vmatpush1.msra.mxu0 %v891
    %2301 = vmatprep.subr.mxu0 0.0
    %2302 = vmatpush1.msra.mxu0 %v897
    %2303 = vmatprep.subr.mxu0 0.0
    %2304 = vmatpush1.msra.mxu0 0.0
    %2305 = vmatprep.subr.mxu0 0.0
    %2306 = vmatpush1.msra.mxu0 0.0
    %2307 = vmatprep.subr.mxu0 0.0
    %2308 = vmatpush1.msra.mxu0 0.0
    %2309 = vmatprep.subr.mxu0 0.0
    %2310 = vmatpush1.msra.mxu0 0.0
    %2311 = vmatprep.subr.mxu0 0.0
    %2312 = vmatpush1.msra.mxu0 0.0
    %2313 = vmatprep.subr.mxu0 0.0
    %2314 = vmatpush1.msra.mxu0 0.0
    %2315 = vmatprep.subr.mxu0 0.0
    %2316 = vmatpush1.msra.mxu0 0.0
    %2317 = vmatprep.subr.mxu0 0.0
    %2318 = vmatpush1.msra.mxu0 0.0
    %2319 = vmatprep.subr.mxu0 0.0
    %2320 = vmatpush1.msra.mxu0 0.0
    %2321 = vmatprep.subr.mxu0 0.0
    %2322 = vmatpush1.msra.mxu0 0.0
    %2323 = vmatprep.subr.mxu0 0.0
    %2324 = vmatpush1.msra.mxu0 0.0
    %2325 = vmatprep.subr.mxu0 0.0
    %2326 = vmatpush1.msra.mxu0 0.0
    %2327 = vmatprep.subr.mxu0 0.0
    %2328 = vmatpush1.msra.mxu0 0.0
    %2329 = vmatprep.subr.mxu0 0.0
    %2330 = vmatpush1.msra.mxu0 0.0
    %2331 = vmatprep.subr.mxu0 0.0
    %2332 = vmatpush1.msra.mxu0 0.0
    %2333 = vmatprep.subr.mxu0 0.0
    %2334 = vmatpush1.msra.mxu0 0.0
    %2335 = vmatprep.subr.mxu0 0.0
    %2336 = vmatpush1.msra.mxu0 0.0
    %2337 = vmatprep.subr.mxu0 0.0
    %2338 = vmatpush1.msra.mxu0 0.0
    %2339 = vmatprep.subr.mxu0 0.0
    %2340 = vmatpush1.msra.mxu0 0.0
    %2341 = vmatprep.subr.mxu0 0.0
    %2342 = vmatpush1.msra.mxu0 0.0
    %2343 = vmatprep.subr.mxu0 0.0
    %2344 = vmatpush1.msra.mxu0 0.0
    %2345 = vmatprep.subr.mxu0 0.0
    %2346 = vmatpush1.msra.mxu0 0.0
    %2347 = vmatprep.subr.mxu0 0.0
    %2348 = vmatpush1.msra.mxu0 0.0
    %2349 = vmatprep.subr.mxu0 0.0
    %2350 = vmatpush1.msra.mxu0 0.0
    %2351 = vmatprep.subr.mxu0 0.0
    %2352 = vmatpush1.msra.mxu0 0.0
    %2353 = vmatprep.subr.mxu0 0.0
    %2354 = vmatpush1.msra.mxu0 0.0
    %2355 = vmatprep.subr.mxu0 0.0
    %2356 = vmatpush1.msra.mxu0 0.0
    %2357 = vmatprep.subr.mxu0 0.0
    %2358 = vmatpush1.msra.mxu0 0.0
    %2359 = vmatprep.subr.mxu0 0.0
    %2360 = vmatpush1.msra.mxu0 0.0
    %2361 = vmatprep.subr.mxu0 0.0
    %2362 = vmatpush1.msra.mxu0 0.0
    %2363 = vmatprep.mubr.f32.mxu0 0.0
    %2364 = vmatmul.mubr.f32.gmra.mrb[0].mxu0 %v2294
    %v2365 = vpop.f32.mrb[0].mxu0
    %v2366 = vadd.f32 0.0, %v2365
    %v2367 = vpop.f32.mrb[0].mxu0
    %2368 = vmatprep.mubr.f32.mxu0 0.0
    %2369 = vmatmul.mubr.f32.gmra.mrb[0].mxu0 %v2297
    %v2370 = vpop.f32.mrb[0].mxu0
    %v2371 = vadd.f32 0.0, %v2370
    %v2372 = vpop.f32.mrb[0].mxu0
    %2373 = vdwg.mxu0
    %2374 = vst.msk [vmem:[#allocation2 + $0x18] sm:$0xff] %vm899, %v2366
    %2375 = vst.msk [vmem:[#allocation2 + $0x38] sm:$0xff] %vm899, %v2371
    %2376 = vrot.lane.b32.xlu0 %v583, 64
    %v2377 = vpop.permute.xlu0 %2376
    %2378 = vrot.lane.b32.xlu0 %v589, 64
    %v2379 = vpop.permute.xlu0 %2378
    %2380 = vrot.lane.b32.xlu0 %v737, 64
    %v2381 = vpop.permute.xlu0 %2380
    %2382 = vrot.lane.b32.xlu0 %v743, 64
    %v2383 = vpop.permute.xlu0 %2382
    %v2384 = vsel %vm899, %v2377, 0
    %v2386 = vsel %vm899, %v2379, 0
    %v2388 = vsel %vm899, %v2381, 0
    %v2390 = vsel %vm899, %v2383, 0
    %2392 = vmatprep.subr.mxu0 0.0
    %2393 = vmatpush1.xpose.msra.mxu0 %v2388
    %2394 = vmatprep.subr.mxu0 0.0
    %2395 = vmatpush1.xpose.msra.mxu0 %v2390
    %2396 = vmatprep.subr.mxu0 0.0
    %2397 = vmatpush1.xpose.msra.mxu0 0.0
    %2398 = vmatprep.subr.mxu0 0.0
    %2399 = vmatpush1.xpose.msra.mxu0 0.0
    %2400 = vmatprep.subr.mxu0 0.0
    %2401 = vmatpush1.xpose.msra.mxu0 0.0
    %2402 = vmatprep.subr.mxu0 0.0
    %2403 = vmatpush1.xpose.msra.mxu0 0.0
    %2404 = vmatprep.subr.mxu0 0.0
    %2405 = vmatpush1.xpose.msra.mxu0 0.0
    %2406 = vmatprep.subr.mxu0 0.0
    %2407 = vmatpush1.xpose.msra.mxu0 0.0
    %2408 = vmatprep.subr.mxu0 0.0
    %2409 = vmatpush1.xpose.msra.mxu0 0.0
    %2410 = vmatprep.subr.mxu0 0.0
    %2411 = vmatpush1.xpose.msra.mxu0 0.0
    %2412 = vmatprep.subr.mxu0 0.0
    %2413 = vmatpush1.xpose.msra.mxu0 0.0
    %2414 = vmatprep.subr.mxu0 0.0
    %2415 = vmatpush1.xpose.msra.mxu0 0.0
    %2416 = vmatprep.subr.mxu0 0.0
    %2417 = vmatpush1.xpose.msra.mxu0 0.0
    %2418 = vmatprep.subr.mxu0 0.0
    %2419 = vmatpush1.xpose.msra.mxu0 0.0
    %2420 = vmatprep.subr.mxu0 0.0
    %2421 = vmatpush1.xpose.msra.mxu0 0.0
    %2422 = vmatprep.subr.mxu0 0.0
    %2423 = vmatpush1.xpose.msra.mxu0 0.0
    %2424 = vmatprep.subr.mxu0 0.0
    %2425 = vmatpush1.xpose.msra.mxu0 0.0
    %2426 = vmatprep.subr.mxu0 0.0
    %2427 = vmatpush1.xpose.msra.mxu0 0.0
    %2428 = vmatprep.subr.mxu0 0.0
    %2429 = vmatpush1.xpose.msra.mxu0 0.0
    %2430 = vmatprep.subr.mxu0 0.0
    %2431 = vmatpush1.xpose.msra.mxu0 0.0
    %2432 = vmatprep.subr.mxu0 0.0
    %2433 = vmatpush1.xpose.msra.mxu0 0.0
    %2434 = vmatprep.subr.mxu0 0.0
    %2435 = vmatpush1.xpose.msra.mxu0 0.0
    %2436 = vmatprep.subr.mxu0 0.0
    %2437 = vmatpush1.xpose.msra.mxu0 0.0
    %2438 = vmatprep.subr.mxu0 0.0
    %2439 = vmatpush1.xpose.msra.mxu0 0.0
    %2440 = vmatprep.subr.mxu0 0.0
    %2441 = vmatpush1.xpose.msra.mxu0 0.0
    %2442 = vmatprep.subr.mxu0 0.0
    %2443 = vmatpush1.xpose.msra.mxu0 0.0
    %2444 = vmatprep.subr.mxu0 0.0
    %2445 = vmatpush1.xpose.msra.mxu0 0.0
    %2446 = vmatprep.subr.mxu0 0.0
    %2447 = vmatpush1.xpose.msra.mxu0 0.0
    %2448 = vmatprep.subr.mxu0 0.0
    %2449 = vmatpush1.xpose.msra.mxu0 0.0
    %2450 = vmatprep.subr.mxu0 0.0
    %2451 = vmatpush1.xpose.msra.mxu0 0.0
    %2452 = vmatprep.subr.mxu0 0.0
    %2453 = vmatpush1.xpose.msra.mxu0 0.0
    %2454 = vmatprep.subr.mxu0 0.0
    %2455 = vmatpush1.xpose.msra.mxu0 0.0
    %2456 = vmatprep.mubr.f32.mxu0 0.0
    %2457 = vmatmul.mubr.f32.gmra.mrb[0].mxu0 %v2384
    %v2458 = vpop.f32.mrb[0].mxu0
    %v2459 = vadd.f32 0.0, %v2458
    %v2460 = vpop.f32.mrb[0].mxu0
    %2461 = vmatprep.mubr.f32.mxu0 0.0
    %2462 = vmatmul.mubr.f32.gmra.mrb[0].mxu0 %v2386
    %v2463 = vpop.f32.mrb[0].mxu0
    %v2464 = vadd.f32 0.0, %v2463
    %v2465 = vpop.f32.mrb[0].mxu0
    %2466 = vdwg.mxu0
    %v2467 = vmul.f32 %v2459, 0.125
    %v2468 = vmul.f32 %v2464, 0.125
    %v2469 = vadd.f32 %v2467, %v147
    %v2470 = vadd.f32 %v2468, %v148
    %v2471 = vsel %vm991, %v2469, -inf
    %2472 = vmax.xlane.f32.xlu0 %v2471
    %v2473 = vpop.xlane.xlu0 %2472
    %v2474 = vsel %vm991, %v2470, -inf
    %2475 = vmax.xlane.f32.xlu0 %v2474
    %v2476 = vpop.xlane.xlu0 %2475
    %v2477 = vsub.f32 %v2469, %v2473
    %v2478 = vsub.f32 %v2470, %v2476
    %v2479 = vmul.f32 %v2477, 1.442695
    %v2480 = vpow.pop %v2479
    %v2481 = vmul.f32 %v2478, 1.442695
    %v2482 = vpow.pop %v2481
    %v2483 = vsel %vm991, %v2480, 0.0
    %2484 = vadd.xlane.f32.xlu0 %v2483
    %v2485 = vpop.xlane.xlu0 %2484
    %v2486 = vsel %vm991, %v2482, 0.0
    %2487 = vadd.xlane.f32.xlu0 %v2486
    %v2488 = vpop.xlane.xlu0 %2487
    %v2489 = vrcp.pop %v2485
    %v2490 = vrcp.pop %v2488
    %v2491 = vmul.f32 %v2485, %v2489
    %v2492 = vmul.f32 %v2488, %v2490
    %v2493 = vsub.f32 2.0, %v2491
    %v2494 = vsub.f32 2.0, %v2492
    %v2495 = vmul.f32 %v2489, %v2493
    %v2496 = vmul.f32 %v2490, %v2494
    %v2497 = vmul.f32 %v2480, %v2495
    %v2498 = vmul.f32 %v2482, %v2496
    %2501 = vrot.lane.b32.xlu0 %v891, 64
    %v2502 = vpop.permute.xlu0 %2501
    %2503 = vrot.lane.b32.xlu0 %v897, 64
    %v2504 = vpop.permute.xlu0 %2503
    %v2508 = vsel %vm991, %v2497, 0
    %v2511 = vsel %vm991, %v2498, 0
    %2513 = vmatprep.subr.mxu0 0.0
    %2514 = vmatpush1.msra.mxu0 %v2502
    %2515 = vmatprep.subr.mxu0 0.0
    %2516 = vmatpush1.msra.mxu0 %v2504
    %2517 = vmatprep.subr.mxu0 0.0
    %2518 = vmatpush1.msra.mxu0 0.0
    %2519 = vmatprep.subr.mxu0 0.0
    %2520 = vmatpush1.msra.mxu0 0.0
    %2521 = vmatprep.subr.mxu0 0.0
    %2522 = vmatpush1.msra.mxu0 0.0
    %2523 = vmatprep.subr.mxu0 0.0
    %2524 = vmatpush1.msra.mxu0 0.0
    %2525 = vmatprep.subr.mxu0 0.0
    %2526 = vmatpush1.msra.mxu0 0.0
    %2527 = vmatprep.subr.mxu0 0.0
    %2528 = vmatpush1.msra.mxu0 0.0
    %2529 = vmatprep.subr.mxu0 0.0
    %2530 = vmatpush1.msra.mxu0 0.0
    %2531 = vmatprep.subr.mxu0 0.0
    %2532 = vmatpush1.msra.mxu0 0.0
    %2533 = vmatprep.subr.mxu0 0.0
    %2534 = vmatpush1.msra.mxu0 0.0
    %2535 = vmatprep.subr.mxu0 0.0
    %2536 = vmatpush1.msra.mxu0 0.0
    %2537 = vmatprep.subr.mxu0 0.0
    %2538 = vmatpush1.msra.mxu0 0.0
    %2539 = vmatprep.subr.mxu0 0.0
    %2540 = vmatpush1.msra.mxu0 0.0
    %2541 = vmatprep.subr.mxu0 0.0
    %2542 = vmatpush1.msra.mxu0 0.0
    %2543 = vmatprep.subr.mxu0 0.0
    %2544 = vmatpush1.msra.mxu0 0.0
    %2545 = vmatprep.subr.mxu0 0.0
    %2546 = vmatpush1.msra.mxu0 0.0
    %2547 = vmatprep.subr.mxu0 0.0
    %2548 = vmatpush1.msra.mxu0 0.0
    %2549 = vmatprep.subr.mxu0 0.0
    %2550 = vmatpush1.msra.mxu0 0.0
    %2551 = vmatprep.subr.mxu0 0.0
    %2552 = vmatpush1.msra.mxu0 0.0
    %2553 = vmatprep.subr.mxu0 0.0
    %2554 = vmatpush1.msra.mxu0 0.0
    %2555 = vmatprep.subr.mxu0 0.0
    %2556 = vmatpush1.msra.mxu0 0.0
    %2557 = vmatprep.subr.mxu0 0.0
    %2558 = vmatpush1.msra.mxu0 0.0
    %2559 = vmatprep.subr.mxu0 0.0
    %2560 = vmatpush1.msra.mxu0 0.0
    %2561 = vmatprep.subr.mxu0 0.0
    %2562 = vmatpush1.msra.mxu0 0.0
    %2563 = vmatprep.subr.mxu0 0.0
    %2564 = vmatpush1.msra.mxu0 0.0
    %2565 = vmatprep.subr.mxu0 0.0
    %2566 = vmatpush1.msra.mxu0 0.0
    %2567 = vmatprep.subr.mxu0 0.0
    %2568 = vmatpush1.msra.mxu0 0.0
    %2569 = vmatprep.subr.mxu0 0.0
    %2570 = vmatpush1.msra.mxu0 0.0
    %2571 = vmatprep.subr.mxu0 0.0
    %2572 = vmatpush1.msra.mxu0 0.0
    %2573 = vmatprep.subr.mxu0 0.0
    %2574 = vmatpush1.msra.mxu0 0.0
    %2575 = vmatprep.subr.mxu0 0.0
    %2576 = vmatpush1.msra.mxu0 0.0
    %2577 = vmatprep.mubr.f32.mxu0 0.0
    %2578 = vmatmul.mubr.f32.gmra.mrb[0].mxu0 %v2508
    %v2579 = vpop.f32.mrb[0].mxu0
    %v2580 = vadd.f32 0.0, %v2579
    %v2581 = vpop.f32.mrb[0].mxu0
    %2582 = vmatprep.mubr.f32.mxu0 0.0
    %2583 = vmatmul.mubr.f32.gmra.mrb[0].mxu0 %v2511
    %v2584 = vpop.f32.mrb[0].mxu0
    %v2585 = vadd.f32 0.0, %v2584
    %v2586 = vpop.f32.mrb[0].mxu0
    %2587 = vdwg.mxu0
    %2590 = vrot.lane.b32.xlu0 %v2580, 64
    %v2591 = vpop.permute.xlu0 %2590
    %2592 = vrot.lane.b32.xlu0 %v2585, 64
    %v2593 = vpop.permute.xlu0 %2592
    %2596 = vst.msk [vmem:[#allocation2 + $0x18] sm:$0xff] %vm1323, %v2591
    %2597 = vst.msk [vmem:[#allocation2 + $0x38] sm:$0xff] %vm1323, %v2593
    %v2598 = vld [vmem:[#allocation2] sm:$0xff]
    %v2599 = vld [vmem:[#allocation2 + $0x8] sm:$0xff]
    %v2600 = vld [vmem:[#allocation2 + $0x10] sm:$0xff]
    %v2601 = vld [vmem:[#allocation2 + $0x18] sm:$0xff]
    %v2602 = vld [vmem:[#allocation2 + $0x20] sm:$0xff]
    %v2603 = vld [vmem:[#allocation2 + $0x28] sm:$0xff]
    %v2604 = vld [vmem:[#allocation2 + $0x30] sm:$0xff]
    %v2605 = vld [vmem:[#allocation2 + $0x38] sm:$0xff]
    %2606 = vmatprep.subr.mxu0 0.0
    %2607 = vmatpush1.msra.mxu0 %v287
    %2608 = vmatprep.subr.mxu0 0.0
    %2609 = vmatpush1.msra.mxu0 %v288
    %2610 = vmatprep.subr.mxu0 0.0
    %2611 = vmatpush1.msra.mxu0 %v289
    %2612 = vmatprep.subr.mxu0 0.0
    %2613 = vmatpush1.msra.mxu0 %v290
    %2614 = vmatprep.subr.mxu0 0.0
    %2615 = vmatpush1.msra.mxu0 %v291
    %2616 = vmatprep.subr.mxu0 0.0
    %2617 = vmatpush1.msra.mxu0 %v292
    %2618 = vmatprep.subr.mxu0 0.0
    %2619 = vmatpush1.msra.mxu0 %v293
    %2620 = vmatprep.subr.mxu0 0.0
    %2621 = vmatpush1.msra.mxu0 %v294
    %2622 = vmatprep.subr.mxu0 0.0
    %2623 = vmatpush1.msra.mxu0 %v295
    %2624 = vmatprep.subr.mxu0 0.0
    %2625 = vmatpush1.msra.mxu0 %v296
    %2626 = vmatprep.subr.mxu0 0.0
    %2627 = vmatpush1.msra.mxu0 %v297
    %2628 = vmatprep.subr.mxu0 0.0
    %2629 = vmatpush1.msra.mxu0 %v298
    %2630 = vmatprep.subr.mxu0 0.0
    %2631 = vmatpush1.msra.mxu0 %v299
    %2632 = vmatprep.subr.mxu0 0.0
    %2633 = vmatpush1.msra.mxu0 %v300
    %2634 = vmatprep.subr.mxu0 0.0
    %2635 = vmatpush1.msra.mxu0 %v301
    %2636 = vmatprep.subr.mxu0 0.0
    %2637 = vmatpush1.msra.mxu0 %v302
    %2638 = vmatprep.subr.mxu0 0.0
    %2639 = vmatpush1.msra.mxu0 %v303
    %2640 = vmatprep.subr.mxu0 0.0
    %2641 = vmatpush1.msra.mxu0 %v304
    %2642 = vmatprep.subr.mxu0 0.0
    %2643 = vmatpush1.msra.mxu0 %v305
    %2644 = vmatprep.subr.mxu0 0.0
    %2645 = vmatpush1.msra.mxu0 %v306
    %2646 = vmatprep.subr.mxu0 0.0
    %2647 = vmatpush1.msra.mxu0 %v307
    %2648 = vmatprep.subr.mxu0 0.0
    %2649 = vmatpush1.msra.mxu0 %v308
    %2650 = vmatprep.subr.mxu0 0.0
    %2651 = vmatpush1.msra.mxu0 %v309
    %2652 = vmatprep.subr.mxu0 0.0
    %2653 = vmatpush1.msra.mxu0 %v310
    %2654 = vmatprep.subr.mxu0 0.0
    %2655 = vmatpush1.msra.mxu0 %v311
    %2656 = vmatprep.subr.mxu0 0.0
    %2657 = vmatpush1.msra.mxu0 %v312
    %2658 = vmatprep.subr.mxu0 0.0
    %2659 = vmatpush1.msra.mxu0 %v313
    %2660 = vmatprep.subr.mxu0 0.0
    %2661 = vmatpush1.msra.mxu0 %v314
    %2662 = vmatprep.subr.mxu0 0.0
    %2663 = vmatpush1.msra.mxu0 %v315
    %2664 = vmatprep.subr.mxu0 0.0
    %2665 = vmatpush1.msra.mxu0 %v316
    %2666 = vmatprep.subr.mxu0 0.0
    %2667 = vmatpush1.msra.mxu0 %v317
    %2668 = vmatprep.subr.mxu0 0.0
    %2669 = vmatpush1.msra.mxu0 %v318
    %2670 = vmatprep.mubr.f32.mxu0 %v2599
    %2671 = vmatmul.mubr.f32.gmra.mrb[0].mxu0 %v2598
    %v2672 = vpop.f32.mrb[0].mxu0
    %v2673 = vadd.f32 0.0, %v2672
    %v2674 = vpop.f32.mrb[0].mxu0
    %2675 = vmatprep.mubr.f32.mxu0 %v2603
    %2676 = vmatmul.mubr.f32.gmra.mrb[0].mxu0 %v2602
    %v2677 = vpop.f32.mrb[0].mxu0
    %v2678 = vadd.f32 0.0, %v2677
    %v2679 = vpop.f32.mrb[0].mxu0
    %2680 = vdwg.mxu0
    %2681 = vmatprep.subr.mxu0 0.0
    %2682 = vmatpush1.msra.mxu0 %v319
    %2683 = vmatprep.subr.mxu0 0.0
    %2684 = vmatpush1.msra.mxu0 %v320
    %2685 = vmatprep.subr.mxu0 0.0
    %2686 = vmatpush1.msra.mxu0 %v321
    %2687 = vmatprep.subr.mxu0 0.0
    %2688 = vmatpush1.msra.mxu0 %v322
    %2689 = vmatprep.subr.mxu0 0.0
    %2690 = vmatpush1.msra.mxu0 %v323
    %2691 = vmatprep.subr.mxu0 0.0
    %2692 = vmatpush1.msra.mxu0 %v324
    %2693 = vmatprep.subr.mxu0 0.0
    %2694 = vmatpush1.msra.mxu0 %v325
    %2695 = vmatprep.subr.mxu0 0.0
    %2696 = vmatpush1.msra.mxu0 %v326
    %2697 = vmatprep.subr.mxu0 0.0
    %2698 = vmatpush1.msra.mxu0 %v327
    %2699 = vmatprep.subr.mxu0 0.0
    %2700 = vmatpush1.msra.mxu0 %v328
    %2701 = vmatprep.subr.mxu0 0.0
    %2702 = vmatpush1.msra.mxu0 %v329
    %2703 = vmatprep.subr.mxu0 0.0
    %2704 = vmatpush1.msra.mxu0 %v330
    %2705 = vmatprep.subr.mxu0 0.0
    %2706 = vmatpush1.msra.mxu0 %v331
    %2707 = vmatprep.subr.mxu0 0.0
    %2708 = vmatpush1.msra.mxu0 %v332
    %2709 = vmatprep.subr.mxu0 0.0
    %2710 = vmatpush1.msra.mxu0 %v333
    %2711 = vmatprep.subr.mxu0 0.0
    %2712 = vmatpush1.msra.mxu0 %v334
    %2713 = vmatprep.subr.mxu0 0.0
    %2714 = vmatpush1.msra.mxu0 %v335
    %2715 = vmatprep.subr.mxu0 0.0
    %2716 = vmatpush1.msra.mxu0 %v336
    %2717 = vmatprep.subr.mxu0 0.0
    %2718 = vmatpush1.msra.mxu0 %v337
    %2719 = vmatprep.subr.mxu0 0.0
    %2720 = vmatpush1.msra.mxu0 %v338
    %2721 = vmatprep.subr.mxu0 0.0
    %2722 = vmatpush1.msra.mxu0 %v339
    %2723 = vmatprep.subr.mxu0 0.0
    %2724 = vmatpush1.msra.mxu0 %v340
    %2725 = vmatprep.subr.mxu0 0.0
    %2726 = vmatpush1.msra.mxu0 %v341
    %2727 = vmatprep.subr.mxu0 0.0
    %2728 = vmatpush1.msra.mxu0 %v342
    %2729 = vmatprep.subr.mxu0 0.0
    %2730 = vmatpush1.msra.mxu0 %v343
    %2731 = vmatprep.subr.mxu0 0.0
    %2732 = vmatpush1.msra.mxu0 %v344
    %2733 = vmatprep.subr.mxu0 0.0
    %2734 = vmatpush1.msra.mxu0 %v345
    %2735 = vmatprep.subr.mxu0 0.0
    %2736 = vmatpush1.msra.mxu0 %v346
    %2737 = vmatprep.subr.mxu0 0.0
    %2738 = vmatpush1.msra.mxu0 %v347
    %2739 = vmatprep.subr.mxu0 0.0
    %2740 = vmatpush1.msra.mxu0 %v348
    %2741 = vmatprep.subr.mxu0 0.0
    %2742 = vmatpush1.msra.mxu0 %v349
    %2743 = vmatprep.subr.mxu0 0.0
    %2744 = vmatpush1.msra.mxu0 %v350
    %2745 = vmatprep.mubr.f32.mxu0 %v2601
    %2746 = vmatmul.mubr.f32.gmra.mrb[0].mxu0 %v2600
    %v2747 = vpop.f32.mrb[0].mxu0
    %v2748 = vadd.f32 %v2673, %v2747
    %v2749 = vpop.f32.mrb[0].mxu0
    %2750 = vmatprep.mubr.f32.mxu0 %v2605
    %2751 = vmatmul.mubr.f32.gmra.mrb[0].mxu0 %v2604
    %v2752 = vpop.f32.mrb[0].mxu0
    %v2753 = vadd.f32 %v2678, %v2752
    %v2754 = vpop.f32.mrb[0].mxu0
    %2755 = vdwg.mxu0
    %v2756 = vadd.f32 %v131, %v2748
    %v2757 = vadd.f32 %v136, %v2753
    %v2758 = vlaneseq
    %v2759 = vshrl.u32 %v2758, 7
    %v2760 = vsub.s32 2, %v2759
    %v2761 = vrot.slane %v149, %v2760
    %v2762 = vadd.f32 %v2756, %v2761
    %v2763 = vadd.f32 %v2757, %v2761
    %v2764 = vsel %vm391, %v2762, 0.0
    %2765 = vadd.xlane.f32.xlu0 %v2764
    %v2766 = vpop.xlane.xlu0 %2765
    %v2767 = vsel %vm391, %v2763, 0.0
    %2768 = vadd.xlane.f32.xlu0 %v2767
    %v2769 = vpop.xlane.xlu0 %2768
    %v2770 = vmul.f32 %v2766, %v398
    %v2771 = vmul.f32 %v2769, %v398
    %v2772 = vsub.f32 %v2762, %v2770
    %v2773 = vsub.f32 %v2763, %v2771
    %v2774 = vmul.f32 %v2772, %v2772
    %v2775 = vmul.f32 %v2773, %v2773
    %v2776 = vsel %vm391, %v2774, 0.0
    %2777 = vadd.xlane.f32.xlu0 %v2776
    %v2778 = vpop.xlane.xlu0 %2777
    %v2779 = vsel %vm391, %v2775, 0.0
    %2780 = vadd.xlane.f32.xlu0 %v2779
    %v2781 = vpop.xlane.xlu0 %2780
    %v2782 = vmul.f32 %v2778, %v398
    %v2783 = vmul.f32 %v2781, %v398
    %v2784 = vadd.f32 %v2782, 1e-05
    %v2785 = vadd.f32 %v2783, 1e-05
    %v2786 = vrsqrt.pop %v2784
    %v2787 = vrsqrt.pop %v2785
    %v2788 = vmul.f32 %v2772, %v2786
    %v2789 = vmul.f32 %v2773, %v2787
    %v2790 = vlaneseq
    %v2791 = vshrl.u32 %v2790, 7
    %v2792 = vsub.s32 3, %v2791
    %v2793 = vrot.slane %v149, %v2792
    %v2794 = vmul.f32 %v2788, %v2793
    %v2795 = vmul.f32 %v2789, %v2793
    %v2796 = vlaneseq
    %v2797 = vshrl.u32 %v2796, 7
    %v2798 = vsub.s32 4, %v2797
    %v2799 = vrot.slane %v149, %v2798
    %v2800 = vadd.f32 %v2794, %v2799
    %v2801 = vadd.f32 %v2795, %v2799
    %v2802 = vlaneseq
    %v2803 = vshrl.u32 %v2802, 7
    %v2804 = vsub.s32 6, %v2803
    %v2805 = vrot.slane %v149, %v2804
    %v2807 = vsel %vm391, %v2800, 0
    %v2810 = vsel %vm391, %v2801, 0
    %2812 = vmatprep.subr.mxu0 0.0
    %2813 = vmatpush1.msra.mxu0 %v355
    %2814 = vmatprep.subr.mxu0 0.0
    %2815 = vmatpush1.msra.mxu0 %v356
    %2816 = vmatprep.subr.mxu0 0.0
    %2817 = vmatpush1.msra.mxu0 %v357
    %2818 = vmatprep.subr.mxu0 0.0
    %2819 = vmatpush1.msra.mxu0 %v358
    %2820 = vmatprep.subr.mxu0 0.0
    %2821 = vmatpush1.msra.mxu0 0.0
    %2822 = vmatprep.subr.mxu0 0.0
    %2823 = vmatpush1.msra.mxu0 0.0
    %2824 = vmatprep.subr.mxu0 0.0
    %2825 = vmatpush1.msra.mxu0 0.0
    %2826 = vmatprep.subr.mxu0 0.0
    %2827 = vmatpush1.msra.mxu0 0.0
    %2828 = vmatprep.subr.mxu0 0.0
    %2829 = vmatpush1.msra.mxu0 0.0
    %2830 = vmatprep.subr.mxu0 0.0
    %2831 = vmatpush1.msra.mxu0 0.0
    %2832 = vmatprep.subr.mxu0 0.0
    %2833 = vmatpush1.msra.mxu0 0.0
    %2834 = vmatprep.subr.mxu0 0.0
    %2835 = vmatpush1.msra.mxu0 0.0
    %2836 = vmatprep.subr.mxu0 0.0
    %2837 = vmatpush1.msra.mxu0 0.0
    %2838 = vmatprep.subr.mxu0 0.0
    %2839 = vmatpush1.msra.mxu0 0.0
    %2840 = vmatprep.subr.mxu0 0.0
    %2841 = vmatpush1.msra.mxu0 0.0
    %2842 = vmatprep.subr.mxu0 0.0
    %2843 = vmatpush1.msra.mxu0 0.0
    %2844 = vmatprep.subr.mxu0 0.0
    %2845 = vmatpush1.msra.mxu0 0.0
    %2846 = vmatprep.subr.mxu0 0.0
    %2847 = vmatpush1.msra.mxu0 0.0
    %2848 = vmatprep.subr.mxu0 0.0
    %2849 = vmatpush1.msra.mxu0 0.0
    %2850 = vmatprep.subr.mxu0 0.0
    %2851 = vmatpush1.msra.mxu0 0.0
    %2852 = vmatprep.subr.mxu0 0.0
    %2853 = vmatpush1.msra.mxu0 0.0
    %2854 = vmatprep.subr.mxu0 0.0
    %2855 = vmatpush1.msra.mxu0 0.0
    %2856 = vmatprep.subr.mxu0 0.0
    %2857 = vmatpush1.msra.mxu0 0.0
    %2858 = vmatprep.subr.mxu0 0.0
    %2859 = vmatpush1.msra.mxu0 0.0
    %2860 = vmatprep.subr.mxu0 0.0
    %2861 = vmatpush1.msra.mxu0 0.0
    %2862 = vmatprep.subr.mxu0 0.0
    %2863 = vmatpush1.msra.mxu0 0.0
    %2864 = vmatprep.subr.mxu0 0.0
    %2865 = vmatpush1.msra.mxu0 0.0
    %2866 = vmatprep.subr.mxu0 0.0
    %2867 = vmatpush1.msra.mxu0 0.0
    %2868 = vmatprep.subr.mxu0 0.0
    %2869 = vmatpush1.msra.mxu0 0.0
    %2870 = vmatprep.subr.mxu0 0.0
    %2871 = vmatpush1.msra.mxu0 0.0
    %2872 = vmatprep.subr.mxu0 0.0
    %2873 = vmatpush1.msra.mxu0 0.0
    %2874 = vmatprep.subr.mxu0 0.0
    %2875 = vmatpush1.msra.mxu0 0.0
    %2876 = vmatprep.mubr.f32.mxu0 0.0
    %2877 = vmatmul.mubr.f32.gmra.mrb[0].mxu0 %v2807
    %v2878 = vpop.f32.mrb[0].mxu0
    %v2879 = vadd.f32 %v2805, %v2878
    %v2880 = vpop.f32.mrb[0].mxu0
    %2881 = vmatprep.mubr.f32.mxu0 0.0
    %2882 = vmatmul.mubr.f32.gmra.mrb[0].mxu0 %v2810
    %v2883 = vpop.f32.mrb[0].mxu0
    %v2884 = vadd.f32 %v2805, %v2883
    %v2885 = vpop.f32.mrb[0].mxu0
    %2886 = vdwg.mxu0
    %v2887 = vmul.f32 %v2879, 0.5
    %v2888 = vmul.f32 %v2884, 0.5
    %v2889 = vrcp.pop 1.4142135
    %v2890 = vmul.f32 %v2879, %v2889
    %v2891 = vmul.f32 %v2884, %v2889
    %v2892 = verf.f32.pop %v2890
    %v2893 = verf.f32.pop %v2891
    %v2894 = vadd.f32 %v2892, 1.0
    %v2895 = vadd.f32 %v2893, 1.0
    %v2896 = vmul.f32 %v2887, %v2894
    %v2897 = vmul.f32 %v2888, %v2895
    %2898 = vmatprep.subr.mxu0 0.0
    %2899 = vmatpush1.msra.mxu0 %v375
    %2900 = vmatprep.subr.mxu0 0.0
    %2901 = vmatpush1.msra.mxu0 %v376
    %2902 = vmatprep.subr.mxu0 0.0
    %2903 = vmatpush1.msra.mxu0 %v377
    %2904 = vmatprep.subr.mxu0 0.0
    %2905 = vmatpush1.msra.mxu0 %v378
    %2906 = vmatprep.subr.mxu0 0.0
    %2907 = vmatpush1.msra.mxu0 %v379
    %2908 = vmatprep.subr.mxu0 0.0
    %2909 = vmatpush1.msra.mxu0 %v380
    %2910 = vmatprep.subr.mxu0 0.0
    %2911 = vmatpush1.msra.mxu0 %v381
    %2912 = vmatprep.subr.mxu0 0.0
    %2913 = vmatpush1.msra.mxu0 %v382
    %2914 = vmatprep.subr.mxu0 0.0
    %2915 = vmatpush1.msra.mxu0 %v383
    %2916 = vmatprep.subr.mxu0 0.0
    %2917 = vmatpush1.msra.mxu0 %v384
    %2918 = vmatprep.subr.mxu0 0.0
    %2919 = vmatpush1.msra.mxu0 %v385
    %2920 = vmatprep.subr.mxu0 0.0
    %2921 = vmatpush1.msra.mxu0 %v386
    %2922 = vmatprep.subr.mxu0 0.0
    %2923 = vmatpush1.msra.mxu0 %v387
    %2924 = vmatprep.subr.mxu0 0.0
    %2925 = vmatpush1.msra.mxu0 %v388
    %2926 = vmatprep.subr.mxu0 0.0
    %2927 = vmatpush1.msra.mxu0 %v389
    %2928 = vmatprep.subr.mxu0 0.0
    %2929 = vmatpush1.msra.mxu0 %v390
    %2930 = vmatprep.subr.mxu0 0.0
    %2931 = vmatpush1.msra.mxu0 0.0
    %2932 = vmatprep.subr.mxu0 0.0
    %2933 = vmatpush1.msra.mxu0 0.0
    %2934 = vmatprep.subr.mxu0 0.0
    %2935 = vmatpush1.msra.mxu0 0.0
    %2936 = vmatprep.subr.mxu0 0.0
    %2937 = vmatpush1.msra.mxu0 0.0
    %2938 = vmatprep.subr.mxu0 0.0
    %2939 = vmatpush1.msra.mxu0 0.0
    %2940 = vmatprep.subr.mxu0 0.0
    %2941 = vmatpush1.msra.mxu0 0.0
    %2942 = vmatprep.subr.mxu0 0.0
    %2943 = vmatpush1.msra.mxu0 0.0
    %2944 = vmatprep.subr.mxu0 0.0
    %2945 = vmatpush1.msra.mxu0 0.0
    %2946 = vmatprep.subr.mxu0 0.0
    %2947 = vmatpush1.msra.mxu0 0.0
    %2948 = vmatprep.subr.mxu0 0.0
    %2949 = vmatpush1.msra.mxu0 0.0
    %2950 = vmatprep.subr.mxu0 0.0
    %2951 = vmatpush1.msra.mxu0 0.0
    %2952 = vmatprep.subr.mxu0 0.0
    %2953 = vmatpush1.msra.mxu0 0.0
    %2954 = vmatprep.subr.mxu0 0.0
    %2955 = vmatpush1.msra.mxu0 0.0
    %2956 = vmatprep.subr.mxu0 0.0
    %2957 = vmatpush1.msra.mxu0 0.0
    %2958 = vmatprep.subr.mxu0 0.0
    %2959 = vmatpush1.msra.mxu0 0.0
    %2960 = vmatprep.subr.mxu0 0.0
    %2961 = vmatpush1.msra.mxu0 0.0
    %2962 = vmatprep.mubr.f32.mxu0 0.0
    %2963 = vmatmul.mubr.f32.gmra.mrb[0].mxu0 %v2896
    %v2964 = vpop.f32.mrb[0].mxu0
    %v2965 = vadd.f32 0.0, %v2964
    %v2966 = vpop.f32.mrb[0].mxu0
    %2967 = vmatprep.mubr.f32.mxu0 0.0
    %2968 = vmatmul.mubr.f32.gmra.mrb[0].mxu0 %v2897
    %v2969 = vpop.f32.mrb[0].mxu0
    %v2970 = vadd.f32 0.0, %v2969
    %v2971 = vpop.f32.mrb[0].mxu0
    %2972 = vdwg.mxu0
    %v2973 = vadd.f32 %v2762, %v2965
    %v2974 = vadd.f32 %v2763, %v2970
    %v2975 = vlaneseq
    %v2976 = vshrl.u32 %v2975, 7
    %v2977 = vsub.s32 5, %v2976
    %v2978 = vrot.slane %v149, %v2977
    %v2979 = vadd.f32 %v2973, %v2978
    %v2980 = vadd.f32 %v2974, %v2978
    %s2981 = scalar_lea.vmem %s4, 192
    %v2982 = vld [vmem:[%s2981] sm:$0xff]
    %v2983 = vld [vmem:[%s2981 + $0x8] sm:$0xff]
    %v2984 = vld [vmem:[%s2981 + $0x10] sm:$0xff]
    %v2985 = vld [vmem:[%s2981 + $0x18] sm:$0xff]
    %v2986 = vld [vmem:[%s2981 + $0x20] sm:$0xff]
    %v2987 = vld [vmem:[%s2981 + $0x28] sm:$0xff]
    %v2988 = vld [vmem:[%s2981 + $0x30] sm:$0xff]
    %v2989 = vld [vmem:[%s2981 + $0x38] sm:$0xff]
    %v2990 = vld [vmem:[%s2981 + $0x40] sm:$0xff]
    %v2991 = vld [vmem:[%s2981 + $0x48] sm:$0xff]
    %v2992 = vld [vmem:[%s2981 + $0x50] sm:$0xff]
    %v2993 = vld [vmem:[%s2981 + $0x58] sm:$0xff]
    %v2994 = vld [vmem:[%s2981 + $0x60] sm:$0xff]
    %v2995 = vld [vmem:[%s2981 + $0x68] sm:$0xff]
    %v2996 = vld [vmem:[%s2981 + $0x70] sm:$0xff]
    %v2997 = vld [vmem:[%s2981 + $0x78] sm:$0xff]
    %v2998 = vld [vmem:[%s2981 + $0x80] sm:$0xff]
    %v2999 = vld [vmem:[%s2981 + $0x88] sm:$0xff]
    %v3000 = vld [vmem:[%s2981 + $0x90] sm:$0xff]
    %v3001 = vld [vmem:[%s2981 + $0x98] sm:$0xff]
    %v3002 = vld [vmem:[%s2981 + $0xa0] sm:$0xff]
    %v3003 = vld [vmem:[%s2981 + $0xa8] sm:$0xff]
    %v3004 = vld [vmem:[%s2981 + $0xb0] sm:$0xff]
    %v3005 = vld [vmem:[%s2981 + $0xb8] sm:$0xff]
    %v3006 = vunpack.c.l.bf16 %v2982
    %v3007 = vunpack.c.h.bf16 %v2982
    %v3008 = vunpack.c.l.bf16 %v2983
    %v3009 = vunpack.c.h.bf16 %v2983
    %v3010 = vunpack.c.l.bf16 %v2984
    %v3011 = vunpack.c.h.bf16 %v2984
    %v3012 = vunpack.c.l.bf16 %v2985
    %v3013 = vunpack.c.h.bf16 %v2985
    %v3014 = vunpack.c.l.bf16 %v2986
    %v3015 = vunpack.c.h.bf16 %v2986
    %v3016 = vunpack.c.l.bf16 %v2987
    %v3017 = vunpack.c.h.bf16 %v2987
    %v3018 = vunpack.c.l.bf16 %v2988
    %v3019 = vunpack.c.h.bf16 %v2988
    %v3020 = vunpack.c.l.bf16 %v2989
    %v3021 = vunpack.c.h.bf16 %v2989
    %v3022 = vunpack.c.l.bf16 %v2990
    %v3023 = vunpack.c.h.bf16 %v2990
    %v3024 = vunpack.c.l.bf16 %v2991
    %v3025 = vunpack.c.h.bf16 %v2991
    %v3026 = vunpack.c.l.bf16 %v2992
    %v3027 = vunpack.c.h.bf16 %v2992
    %v3028 = vunpack.c.l.bf16 %v2993
    %v3029 = vunpack.c.h.bf16 %v2993
    %v3030 = vunpack.c.l.bf16 %v2994
    %v3031 = vunpack.c.h.bf16 %v2994
    %v3032 = vunpack.c.l.bf16 %v2995
    %v3033 = vunpack.c.h.bf16 %v2995
    %v3034 = vunpack.c.l.bf16 %v2996
    %v3035 = vunpack.c.h.bf16 %v2996
    %v3036 = vunpack.c.l.bf16 %v2997
    %v3037 = vunpack.c.h.bf16 %v2997
    %v3038 = vunpack.c.l.bf16 %v2998
    %v3039 = vunpack.c.h.bf16 %v2998
    %v3040 = vunpack.c.l.bf16 %v2999
    %v3041 = vunpack.c.h.bf16 %v2999
    %v3042 = vunpack.c.l.bf16 %v3000
    %v3043 = vunpack.c.h.bf16 %v3000
    %v3044 = vunpack.c.l.bf16 %v3001
    %v3045 = vunpack.c.h.bf16 %v3001
    %v3046 = vunpack.c.l.bf16 %v3002
    %v3047 = vunpack.c.h.bf16 %v3002
    %v3048 = vunpack.c.l.bf16 %v3003
    %v3049 = vunpack.c.h.bf16 %v3003
    %v3050 = vunpack.c.l.bf16 %v3004
    %v3051 = vunpack.c.h.bf16 %v3004
    %v3052 = vunpack.c.l.bf16 %v3005
    %v3053 = vunpack.c.h.bf16 %v3005
    %s3054 = scalar_lea.vmem %s5, 256
    %v3055 = vld [vmem:[%s3054] sm:$0xf]
    %v3056 = vld [vmem:[%s3054 + $0x4] sm:$0xf]
    %v3057 = vld [vmem:[%s3054 + $0x8] sm:$0xf]
    %v3058 = vld [vmem:[%s3054 + $0xc] sm:$0xf]
    %v3059 = vld [vmem:[%s3054 + $0x10] sm:$0xf]
    %v3060 = vld [vmem:[%s3054 + $0x14] sm:$0xf]
    %v3061 = vld [vmem:[%s3054 + $0x18] sm:$0xf]
    %v3062 = vld [vmem:[%s3054 + $0x1c] sm:$0xf]
    %v3063 = vld [vmem:[%s3054 + $0x20] sm:$0xf]
    %v3064 = vld [vmem:[%s3054 + $0x24] sm:$0xf]
    %v3065 = vld [vmem:[%s3054 + $0x28] sm:$0xf]
    %v3066 = vld [vmem:[%s3054 + $0x2c] sm:$0xf]
    %v3067 = vld [vmem:[%s3054 + $0x30] sm:$0xf]
    %v3068 = vld [vmem:[%s3054 + $0x34] sm:$0xf]
    %v3069 = vld [vmem:[%s3054 + $0x38] sm:$0xf]
    %v3070 = vld [vmem:[%s3054 + $0x3c] sm:$0xf]
    %v3071 = vld [vmem:[%s3054 + $0x40] sm:$0xf]
    %v3072 = vld [vmem:[%s3054 + $0x44] sm:$0xf]
    %v3073 = vld [vmem:[%s3054 + $0x48] sm:$0xf]
    %v3074 = vld [vmem:[%s3054 + $0x4c] sm:$0xf]
    %v3075 = vld [vmem:[%s3054 + $0x50] sm:$0xf]
    %v3076 = vld [vmem:[%s3054 + $0x54] sm:$0xf]
    %v3077 = vld [vmem:[%s3054 + $0x58] sm:$0xf]
    %v3078 = vld [vmem:[%s3054 + $0x5c] sm:$0xf]
    %v3079 = vld [vmem:[%s3054 + $0x60] sm:$0xf]
    %v3080 = vld [vmem:[%s3054 + $0x64] sm:$0xf]
    %v3081 = vld [vmem:[%s3054 + $0x68] sm:$0xf]
    %v3082 = vld [vmem:[%s3054 + $0x6c] sm:$0xf]
    %v3083 = vld [vmem:[%s3054 + $0x70] sm:$0xf]
    %v3084 = vld [vmem:[%s3054 + $0x74] sm:$0xf]
    %v3085 = vld [vmem:[%s3054 + $0x78] sm:$0xf]
    %v3086 = vld [vmem:[%s3054 + $0x7c] sm:$0xf]
    %v3087 = vld [vmem:[%s3054 + $0x80] sm:$0xf]
    %v3088 = vld [vmem:[%s3054 + $0x84] sm:$0xf]
    %v3089 = vld [vmem:[%s3054 + $0x88] sm:$0xf]
    %v3090 = vld [vmem:[%s3054 + $0x8c] sm:$0xf]
    %v3091 = vld [vmem:[%s3054 + $0x90] sm:$0xf]
    %v3092 = vld [vmem:[%s3054 + $0x94] sm:$0xf]
    %v3093 = vld [vmem:[%s3054 + $0x98] sm:$0xf]
    %v3094 = vld [vmem:[%s3054 + $0x9c] sm:$0xf]
    %v3095 = vld [vmem:[%s3054 + $0xa0] sm:$0xf]
    %v3096 = vld [vmem:[%s3054 + $0xa4] sm:$0xf]
    %v3097 = vld [vmem:[%s3054 + $0xa8] sm:$0xf]
    %v3098 = vld [vmem:[%s3054 + $0xac] sm:$0xf]
    %v3099 = vld [vmem:[%s3054 + $0xb0] sm:$0xf]
    %v3100 = vld [vmem:[%s3054 + $0xb4] sm:$0xf]
    %v3101 = vld [vmem:[%s3054 + $0xb8] sm:$0xf]
    %v3102 = vld [vmem:[%s3054 + $0xbc] sm:$0xf]
    %v3103 = vld [vmem:[%s3054 + $0xc0] sm:$0xf]
    %v3104 = vld [vmem:[%s3054 + $0xc4] sm:$0xf]
    %v3105 = vld [vmem:[%s3054 + $0xc8] sm:$0xf]
    %v3106 = vld [vmem:[%s3054 + $0xcc] sm:$0xf]
    %v3107 = vld [vmem:[%s3054 + $0xd0] sm:$0xf]
    %v3108 = vld [vmem:[%s3054 + $0xd4] sm:$0xf]
    %v3109 = vld [vmem:[%s3054 + $0xd8] sm:$0xf]
    %v3110 = vld [vmem:[%s3054 + $0xdc] sm:$0xf]
    %v3111 = vld [vmem:[%s3054 + $0xe0] sm:$0xf]
    %v3112 = vld [vmem:[%s3054 + $0xe4] sm:$0xf]
    %v3113 = vld [vmem:[%s3054 + $0xe8] sm:$0xf]
    %v3114 = vld [vmem:[%s3054 + $0xec] sm:$0xf]
    %v3115 = vld [vmem:[%s3054 + $0xf0] sm:$0xf]
    %v3116 = vld [vmem:[%s3054 + $0xf4] sm:$0xf]
    %v3117 = vld [vmem:[%s3054 + $0xf8] sm:$0xf]
    %v3118 = vld [vmem:[%s3054 + $0xfc] sm:$0xf]
    %v3119 = vunpack.c.l.bf16 %v3055
    %v3120 = vunpack.c.l.bf16 %v3056
    %v3121 = vunpack.c.l.bf16 %v3057
    %v3122 = vunpack.c.l.bf16 %v3058
    %v3123 = vunpack.c.l.bf16 %v3059
    %v3124 = vunpack.c.l.bf16 %v3060
    %v3125 = vunpack.c.l.bf16 %v3061
    %v3126 = vunpack.c.l.bf16 %v3062
    %v3127 = vunpack.c.l.bf16 %v3063
    %v3128 = vunpack.c.l.bf16 %v3064
    %v3129 = vunpack.c.l.bf16 %v3065
    %v3130 = vunpack.c.l.bf16 %v3066
    %v3131 = vunpack.c.l.bf16 %v3067
    %v3132 = vunpack.c.l.bf16 %v3068
    %v3133 = vunpack.c.l.bf16 %v3069
    %v3134 = vunpack.c.l.bf16 %v3070
    %v3135 = vunpack.c.l.bf16 %v3071
    %v3136 = vunpack.c.l.bf16 %v3072
    %v3137 = vunpack.c.l.bf16 %v3073
    %v3138 = vunpack.c.l.bf16 %v3074
    %v3139 = vunpack.c.l.bf16 %v3075
    %v3140 = vunpack.c.l.bf16 %v3076
    %v3141 = vunpack.c.l.bf16 %v3077
    %v3142 = vunpack.c.l.bf16 %v3078
    %v3143 = vunpack.c.l.bf16 %v3079
    %v3144 = vunpack.c.l.bf16 %v3080
    %v3145 = vunpack.c.l.bf16 %v3081
    %v3146 = vunpack.c.l.bf16 %v3082
    %v3147 = vunpack.c.l.bf16 %v3083
    %v3148 = vunpack.c.l.bf16 %v3084
    %v3149 = vunpack.c.l.bf16 %v3085
    %v3150 = vunpack.c.l.bf16 %v3086
    %v3151 = vunpack.c.l.bf16 %v3087
    %v3152 = vunpack.c.l.bf16 %v3088
    %v3153 = vunpack.c.l.bf16 %v3089
    %v3154 = vunpack.c.l.bf16 %v3090
    %v3155 = vunpack.c.l.bf16 %v3091
    %v3156 = vunpack.c.l.bf16 %v3092
    %v3157 = vunpack.c.l.bf16 %v3093
    %v3158 = vunpack.c.l.bf16 %v3094
    %v3159 = vunpack.c.l.bf16 %v3095
    %v3160 = vunpack.c.l.bf16 %v3096
    %v3161 = vunpack.c.l.bf16 %v3097
    %v3162 = vunpack.c.l.bf16 %v3098
    %v3163 = vunpack.c.l.bf16 %v3099
    %v3164 = vunpack.c.l.bf16 %v3100
    %v3165 = vunpack.c.l.bf16 %v3101
    %v3166 = vunpack.c.l.bf16 %v3102
    %v3167 = vunpack.c.l.bf16 %v3103
    %v3168 = vunpack.c.l.bf16 %v3104
    %v3169 = vunpack.c.l.bf16 %v3105
    %v3170 = vunpack.c.l.bf16 %v3106
    %v3171 = vunpack.c.l.bf16 %v3107
    %v3172 = vunpack.c.l.bf16 %v3108
    %v3173 = vunpack.c.l.bf16 %v3109
    %v3174 = vunpack.c.l.bf16 %v3110
    %v3175 = vunpack.c.l.bf16 %v3111
    %v3176 = vunpack.c.l.bf16 %v3112
    %v3177 = vunpack.c.l.bf16 %v3113
    %v3178 = vunpack.c.l.bf16 %v3114
    %v3179 = vunpack.c.l.bf16 %v3115
    %v3180 = vunpack.c.l.bf16 %v3116
    %v3181 = vunpack.c.l.bf16 %v3117
    %v3182 = vunpack.c.l.bf16 %v3118
    %s3183 = scalar_lea.vmem %s6, 16
    %v3184 = vld [vmem:[%s3183] sm:$0xf]
    %v3185 = vld [vmem:[%s3183 + $0x4] sm:$0xf]
    %v3186 = vld [vmem:[%s3183 + $0x8] sm:$0xf]
    %v3187 = vld [vmem:[%s3183 + $0xc] sm:$0xf]
    %v3188 = vunpack.c.l.bf16 %v3184
    %v3189 = vunpack.c.l.bf16 %v3185
    %v3190 = vunpack.c.l.bf16 %v3186
    %v3191 = vunpack.c.l.bf16 %v3187
    %s3192 = scalar_lea.vmem %s7, 64
    %v3193 = vld [vmem:[%s3192] sm:$0xf]
    %v3194 = vld [vmem:[%s3192 + $0x4] sm:$0xf]
    %v3195 = vld [vmem:[%s3192 + $0x8] sm:$0xf]
    %v3196 = vld [vmem:[%s3192 + $0xc] sm:$0xf]
    %v3197 = vld [vmem:[%s3192 + $0x10] sm:$0xf]
    %v3198 = vld [vmem:[%s3192 + $0x14] sm:$0xf]
    %v3199 = vld [vmem:[%s3192 + $0x18] sm:$0xf]
    %v3200 = vld [vmem:[%s3192 + $0x1c] sm:$0xf]
    %v3201 = vld [vmem:[%s3192 + $0x20] sm:$0xf]
    %v3202 = vld [vmem:[%s3192 + $0x24] sm:$0xf]
    %v3203 = vld [vmem:[%s3192 + $0x28] sm:$0xf]
    %v3204 = vld [vmem:[%s3192 + $0x2c] sm:$0xf]
    %v3205 = vld [vmem:[%s3192 + $0x30] sm:$0xf]
    %v3206 = vld [vmem:[%s3192 + $0x34] sm:$0xf]
    %v3207 = vld [vmem:[%s3192 + $0x38] sm:$0xf]
    %v3208 = vld [vmem:[%s3192 + $0x3c] sm:$0xf]
    %v3209 = vunpack.c.l.bf16 %v3193
    %v3210 = vunpack.c.l.bf16 %v3194
    %v3211 = vunpack.c.l.bf16 %v3195
    %v3212 = vunpack.c.l.bf16 %v3196
    %v3213 = vunpack.c.l.bf16 %v3197
    %v3214 = vunpack.c.l.bf16 %v3198
    %v3215 = vunpack.c.l.bf16 %v3199
    %v3216 = vunpack.c.l.bf16 %v3200
    %v3217 = vunpack.c.l.bf16 %v3201
    %v3218 = vunpack.c.l.bf16 %v3202
    %v3219 = vunpack.c.l.bf16 %v3203
    %v3220 = vunpack.c.l.bf16 %v3204
    %v3221 = vunpack.c.l.bf16 %v3205
    %v3222 = vunpack.c.l.bf16 %v3206
    %v3223 = vunpack.c.l.bf16 %v3207
    %v3224 = vunpack.c.l.bf16 %v3208
    %v3225 = vsel %vm391, %v2979, 0.0
    %3226 = vadd.xlane.f32.xlu0 %v3225
    %v3227 = vpop.xlane.xlu0 %3226
    %v3228 = vsel %vm391, %v2980, 0.0
    %3229 = vadd.xlane.f32.xlu0 %v3228
    %v3230 = vpop.xlane.xlu0 %3229
    %v3231 = vmul.f32 %v3227, %v398
    %v3232 = vmul.f32 %v3230, %v398
    %v3233 = vsub.f32 %v2979, %v3231
    %v3234 = vsub.f32 %v2980, %v3232
    %v3235 = vmul.f32 %v3233, %v3233
    %v3236 = vmul.f32 %v3234, %v3234
    %v3237 = vsel %vm391, %v3235, 0.0
    %3238 = vadd.xlane.f32.xlu0 %v3237
    %v3239 = vpop.xlane.xlu0 %3238
    %v3240 = vsel %vm391, %v3236, 0.0
    %3241 = vadd.xlane.f32.xlu0 %v3240
    %v3242 = vpop.xlane.xlu0 %3241
    %v3243 = vmul.f32 %v3239, %v398
    %v3244 = vmul.f32 %v3242, %v398
    %v3245 = vadd.f32 %v3243, 1e-05
    %v3246 = vadd.f32 %v3244, 1e-05
    %v3247 = vrsqrt.pop %v3245
    %v3248 = vrsqrt.pop %v3246
    %v3249 = vmul.f32 %v3233, %v3247
    %v3250 = vmul.f32 %v3234, %v3248
    %v3251 = vlaneseq
    %v3252 = vshrl.u32 %v3251, 7
    %v3253 = vsub.s32 7, %v3252
    %v3254 = vrot.slane %v149, %v3253
    %v3255 = vmul.f32 %v3249, %v3254
    %v3256 = vmul.f32 %v3250, %v3254
    %v3257 = vlaneseq
    %v3258 = vshrl.u32 %v3257, 7
    %v3259 = vsub.s32 0, %v3258
    %v3260 = vrot.slane %v150, %v3259
    %v3261 = vadd.f32 %v3255, %v3260
    %v3262 = vadd.f32 %v3256, %v3260
    %v3264 = vsel %vm391, %v3261, 0
    %v3267 = vsel %vm391, %v3262, 0
    %3269 = vmatprep.subr.mxu0 %v3007
    %3270 = vmatpush1.msra.mxu0 %v3006
    %3271 = vmatprep.subr.mxu0 %v3019
    %3272 = vmatpush1.msra.mxu0 %v3018
    %3273 = vmatprep.subr.mxu0 %v3031
    %3274 = vmatpush1.msra.mxu0 %v3030
    %3275 = vmatprep.subr.mxu0 %v3043
    %3276 = vmatpush1.msra.mxu0 %v3042
    %3277 = vmatprep.subr.mxu0 0.0
    %3278 = vmatpush1.msra.mxu0 0.0
    %3279 = vmatprep.subr.mxu0 0.0
    %3280 = vmatpush1.msra.mxu0 0.0
    %3281 = vmatprep.subr.mxu0 0.0
    %3282 = vmatpush1.msra.mxu0 0.0
    %3283 = vmatprep.subr.mxu0 0.0
    %3284 = vmatpush1.msra.mxu0 0.0
    %3285 = vmatprep.subr.mxu0 0.0
    %3286 = vmatpush1.msra.mxu0 0.0
    %3287 = vmatprep.subr.mxu0 0.0
    %3288 = vmatpush1.msra.mxu0 0.0
    %3289 = vmatprep.subr.mxu0 0.0
    %3290 = vmatpush1.msra.mxu0 0.0
    %3291 = vmatprep.subr.mxu0 0.0
    %3292 = vmatpush1.msra.mxu0 0.0
    %3293 = vmatprep.subr.mxu0 0.0
    %3294 = vmatpush1.msra.mxu0 0.0
    %3295 = vmatprep.subr.mxu0 0.0
    %3296 = vmatpush1.msra.mxu0 0.0
    %3297 = vmatprep.subr.mxu0 0.0
    %3298 = vmatpush1.msra.mxu0 0.0
    %3299 = vmatprep.subr.mxu0 0.0
    %3300 = vmatpush1.msra.mxu0 0.0
    %3301 = vmatprep.subr.mxu0 0.0
    %3302 = vmatpush1.msra.mxu0 0.0
    %3303 = vmatprep.subr.mxu0 0.0
    %3304 = vmatpush1.msra.mxu0 0.0
    %3305 = vmatprep.subr.mxu0 0.0
    %3306 = vmatpush1.msra.mxu0 0.0
    %3307 = vmatprep.subr.mxu0 0.0
    %3308 = vmatpush1.msra.mxu0 0.0
    %3309 = vmatprep.subr.mxu0 0.0
    %3310 = vmatpush1.msra.mxu0 0.0
    %3311 = vmatprep.subr.mxu0 0.0
    %3312 = vmatpush1.msra.mxu0 0.0
    %3313 = vmatprep.subr.mxu0 0.0
    %3314 = vmatpush1.msra.mxu0 0.0
    %3315 = vmatprep.subr.mxu0 0.0
    %3316 = vmatpush1.msra.mxu0 0.0
    %3317 = vmatprep.subr.mxu0 0.0
    %3318 = vmatpush1.msra.mxu0 0.0
    %3319 = vmatprep.subr.mxu0 0.0
    %3320 = vmatpush1.msra.mxu0 0.0
    %3321 = vmatprep.subr.mxu0 0.0
    %3322 = vmatpush1.msra.mxu0 0.0
    %3323 = vmatprep.subr.mxu0 0.0
    %3324 = vmatpush1.msra.mxu0 0.0
    %3325 = vmatprep.subr.mxu0 0.0
    %3326 = vmatpush1.msra.mxu0 0.0
    %3327 = vmatprep.subr.mxu0 0.0
    %3328 = vmatpush1.msra.mxu0 0.0
    %3329 = vmatprep.subr.mxu0 0.0
    %3330 = vmatpush1.msra.mxu0 0.0
    %3331 = vmatprep.subr.mxu0 0.0
    %3332 = vmatpush1.msra.mxu0 0.0
    %3333 = vmatprep.mubr.f32.mxu0 0.0
    %3334 = vmatmul.mubr.f32.gmra.mrb[0].mxu0 %v3264
    %v3335 = vpop.f32.mrb[0].mxu0
    %v3336 = vadd.f32 0.0, %v3335
    %v3337 = vpop.f32.mrb[0].mxu0
    %v3338 = vadd.f32 0.0, %v3337
    %3339 = vmatprep.mubr.f32.mxu0 0.0
    %3340 = vmatmul.mubr.f32.gmra.mrb[0].mxu0 %v3267
    %v3341 = vpop.f32.mrb[0].mxu0
    %v3342 = vadd.f32 0.0, %v3341
    %v3343 = vpop.f32.mrb[0].mxu0
    %v3344 = vadd.f32 0.0, %v3343
    %3345 = vdwg.mxu0
    %3346 = vmatprep.subr.mxu0 %v3009
    %3347 = vmatpush1.msra.mxu0 %v3008
    %3348 = vmatprep.subr.mxu0 %v3021
    %3349 = vmatpush1.msra.mxu0 %v3020
    %3350 = vmatprep.subr.mxu0 %v3033
    %3351 = vmatpush1.msra.mxu0 %v3032
    %3352 = vmatprep.subr.mxu0 %v3045
    %3353 = vmatpush1.msra.mxu0 %v3044
    %3354 = vmatprep.subr.mxu0 0.0
    %3355 = vmatpush1.msra.mxu0 0.0
    %3356 = vmatprep.subr.mxu0 0.0
    %3357 = vmatpush1.msra.mxu0 0.0
    %3358 = vmatprep.subr.mxu0 0.0
    %3359 = vmatpush1.msra.mxu0 0.0
    %3360 = vmatprep.subr.mxu0 0.0
    %3361 = vmatpush1.msra.mxu0 0.0
    %3362 = vmatprep.subr.mxu0 0.0
    %3363 = vmatpush1.msra.mxu0 0.0
    %3364 = vmatprep.subr.mxu0 0.0
    %3365 = vmatpush1.msra.mxu0 0.0
    %3366 = vmatprep.subr.mxu0 0.0
    %3367 = vmatpush1.msra.mxu0 0.0
    %3368 = vmatprep.subr.mxu0 0.0
    %3369 = vmatpush1.msra.mxu0 0.0
    %3370 = vmatprep.subr.mxu0 0.0
    %3371 = vmatpush1.msra.mxu0 0.0
    %3372 = vmatprep.subr.mxu0 0.0
    %3373 = vmatpush1.msra.mxu0 0.0
    %3374 = vmatprep.subr.mxu0 0.0
    %3375 = vmatpush1.msra.mxu0 0.0
    %3376 = vmatprep.subr.mxu0 0.0
    %3377 = vmatpush1.msra.mxu0 0.0
    %3378 = vmatprep.subr.mxu0 0.0
    %3379 = vmatpush1.msra.mxu0 0.0
    %3380 = vmatprep.subr.mxu0 0.0
    %3381 = vmatpush1.msra.mxu0 0.0
    %3382 = vmatprep.subr.mxu0 0.0
    %3383 = vmatpush1.msra.mxu0 0.0
    %3384 = vmatprep.subr.mxu0 0.0
    %3385 = vmatpush1.msra.mxu0 0.0
    %3386 = vmatprep.subr.mxu0 0.0
    %3387 = vmatpush1.msra.mxu0 0.0
    %3388 = vmatprep.subr.mxu0 0.0
    %3389 = vmatpush1.msra.mxu0 0.0
    %3390 = vmatprep.subr.mxu0 0.0
    %3391 = vmatpush1.msra.mxu0 0.0
    %3392 = vmatprep.subr.mxu0 0.0
    %3393 = vmatpush1.msra.mxu0 0.0
    %3394 = vmatprep.subr.mxu0 0.0
    %3395 = vmatpush1.msra.mxu0 0.0
    %3396 = vmatprep.subr.mxu0 0.0
    %3397 = vmatpush1.msra.mxu0 0.0
    %3398 = vmatprep.subr.mxu0 0.0
    %3399 = vmatpush1.msra.mxu0 0.0
    %3400 = vmatprep.subr.mxu0 0.0
    %3401 = vmatpush1.msra.mxu0 0.0
    %3402 = vmatprep.subr.mxu0 0.0
    %3403 = vmatpush1.msra.mxu0 0.0
    %3404 = vmatprep.subr.mxu0 0.0
    %3405 = vmatpush1.msra.mxu0 0.0
    %3406 = vmatprep.subr.mxu0 0.0
    %3407 = vmatpush1.msra.mxu0 0.0
    %3408 = vmatprep.subr.mxu0 0.0
    %3409 = vmatpush1.msra.mxu0 0.0
    %3410 = vmatprep.mubr.f32.mxu0 0.0
    %3411 = vmatmul.mubr.f32.gmra.mrb[0].mxu0 %v3264
    %v3412 = vpop.f32.mrb[0].mxu0
    %v3413 = vadd.f32 0.0, %v3412
    %v3414 = vpop.f32.mrb[0].mxu0
    %v3415 = vadd.f32 0.0, %v3414
    %3416 = vmatprep.mubr.f32.mxu0 0.0
    %3417 = vmatmul.mubr.f32.gmra.mrb[0].mxu0 %v3267
    %v3418 = vpop.f32.mrb[0].mxu0
    %v3419 = vadd.f32 0.0, %v3418
    %v3420 = vpop.f32.mrb[0].mxu0
    %v3421 = vadd.f32 0.0, %v3420
    %3422 = vdwg.mxu0
    %3423 = vmatprep.subr.mxu0 %v3011
    %3424 = vmatpush1.msra.mxu0 %v3010
    %3425 = vmatprep.subr.mxu0 %v3023
    %3426 = vmatpush1.msra.mxu0 %v3022
    %3427 = vmatprep.subr.mxu0 %v3035
    %3428 = vmatpush1.msra.mxu0 %v3034
    %3429 = vmatprep.subr.mxu0 %v3047
    %3430 = vmatpush1.msra.mxu0 %v3046
    %3431 = vmatprep.subr.mxu0 0.0
    %3432 = vmatpush1.msra.mxu0 0.0
    %3433 = vmatprep.subr.mxu0 0.0
    %3434 = vmatpush1.msra.mxu0 0.0
    %3435 = vmatprep.subr.mxu0 0.0
    %3436 = vmatpush1.msra.mxu0 0.0
    %3437 = vmatprep.subr.mxu0 0.0
    %3438 = vmatpush1.msra.mxu0 0.0
    %3439 = vmatprep.subr.mxu0 0.0
    %3440 = vmatpush1.msra.mxu0 0.0
    %3441 = vmatprep.subr.mxu0 0.0
    %3442 = vmatpush1.msra.mxu0 0.0
    %3443 = vmatprep.subr.mxu0 0.0
    %3444 = vmatpush1.msra.mxu0 0.0
    %3445 = vmatprep.subr.mxu0 0.0
    %3446 = vmatpush1.msra.mxu0 0.0
    %3447 = vmatprep.subr.mxu0 0.0
    %3448 = vmatpush1.msra.mxu0 0.0
    %3449 = vmatprep.subr.mxu0 0.0
    %3450 = vmatpush1.msra.mxu0 0.0
    %3451 = vmatprep.subr.mxu0 0.0
    %3452 = vmatpush1.msra.mxu0 0.0
    %3453 = vmatprep.subr.mxu0 0.0
    %3454 = vmatpush1.msra.mxu0 0.0
    %3455 = vmatprep.subr.mxu0 0.0
    %3456 = vmatpush1.msra.mxu0 0.0
    %3457 = vmatprep.subr.mxu0 0.0
    %3458 = vmatpush1.msra.mxu0 0.0
    %3459 = vmatprep.subr.mxu0 0.0
    %3460 = vmatpush1.msra.mxu0 0.0
    %3461 = vmatprep.subr.mxu0 0.0
    %3462 = vmatpush1.msra.mxu0 0.0
    %3463 = vmatprep.subr.mxu0 0.0
    %3464 = vmatpush1.msra.mxu0 0.0
    %3465 = vmatprep.subr.mxu0 0.0
    %3466 = vmatpush1.msra.mxu0 0.0
    %3467 = vmatprep.subr.mxu0 0.0
    %3468 = vmatpush1.msra.mxu0 0.0
    %3469 = vmatprep.subr.mxu0 0.0
    %3470 = vmatpush1.msra.mxu0 0.0
    %3471 = vmatprep.subr.mxu0 0.0
    %3472 = vmatpush1.msra.mxu0 0.0
    %3473 = vmatprep.subr.mxu0 0.0
    %3474 = vmatpush1.msra.mxu0 0.0
    %3475 = vmatprep.subr.mxu0 0.0
    %3476 = vmatpush1.msra.mxu0 0.0
    %3477 = vmatprep.subr.mxu0 0.0
    %3478 = vmatpush1.msra.mxu0 0.0
    %3479 = vmatprep.subr.mxu0 0.0
    %3480 = vmatpush1.msra.mxu0 0.0
    %3481 = vmatprep.subr.mxu0 0.0
    %3482 = vmatpush1.msra.mxu0 0.0
    %3483 = vmatprep.subr.mxu0 0.0
    %3484 = vmatpush1.msra.mxu0 0.0
    %3485 = vmatprep.subr.mxu0 0.0
    %3486 = vmatpush1.msra.mxu0 0.0
    %3487 = vmatprep.mubr.f32.mxu0 0.0
    %3488 = vmatmul.mubr.f32.gmra.mrb[0].mxu0 %v3264
    %v3489 = vpop.f32.mrb[0].mxu0
    %v3490 = vadd.f32 0.0, %v3489
    %v3491 = vpop.f32.mrb[0].mxu0
    %v3492 = vadd.f32 0.0, %v3491
    %3493 = vmatprep.mubr.f32.mxu0 0.0
    %3494 = vmatmul.mubr.f32.gmra.mrb[0].mxu0 %v3267
    %v3495 = vpop.f32.mrb[0].mxu0
    %v3496 = vadd.f32 0.0, %v3495
    %v3497 = vpop.f32.mrb[0].mxu0
    %v3498 = vadd.f32 0.0, %v3497
    %3499 = vdwg.mxu0
    %3500 = vmatprep.subr.mxu0 %v3013
    %3501 = vmatpush1.msra.mxu0 %v3012
    %3502 = vmatprep.subr.mxu0 %v3025
    %3503 = vmatpush1.msra.mxu0 %v3024
    %3504 = vmatprep.subr.mxu0 %v3037
    %3505 = vmatpush1.msra.mxu0 %v3036
    %3506 = vmatprep.subr.mxu0 %v3049
    %3507 = vmatpush1.msra.mxu0 %v3048
    %3508 = vmatprep.subr.mxu0 0.0
    %3509 = vmatpush1.msra.mxu0 0.0
    %3510 = vmatprep.subr.mxu0 0.0
    %3511 = vmatpush1.msra.mxu0 0.0
    %3512 = vmatprep.subr.mxu0 0.0
    %3513 = vmatpush1.msra.mxu0 0.0
    %3514 = vmatprep.subr.mxu0 0.0
    %3515 = vmatpush1.msra.mxu0 0.0
    %3516 = vmatprep.subr.mxu0 0.0
    %3517 = vmatpush1.msra.mxu0 0.0
    %3518 = vmatprep.subr.mxu0 0.0
    %3519 = vmatpush1.msra.mxu0 0.0
    %3520 = vmatprep.subr.mxu0 0.0
    %3521 = vmatpush1.msra.mxu0 0.0
    %3522 = vmatprep.subr.mxu0 0.0
    %3523 = vmatpush1.msra.mxu0 0.0
    %3524 = vmatprep.subr.mxu0 0.0
    %3525 = vmatpush1.msra.mxu0 0.0
    %3526 = vmatprep.subr.mxu0 0.0
    %3527 = vmatpush1.msra.mxu0 0.0
    %3528 = vmatprep.subr.mxu0 0.0
    %3529 = vmatpush1.msra.mxu0 0.0
    %3530 = vmatprep.subr.mxu0 0.0
    %3531 = vmatpush1.msra.mxu0 0.0
    %3532 = vmatprep.subr.mxu0 0.0
    %3533 = vmatpush1.msra.mxu0 0.0
    %3534 = vmatprep.subr.mxu0 0.0
    %3535 = vmatpush1.msra.mxu0 0.0
    %3536 = vmatprep.subr.mxu0 0.0
    %3537 = vmatpush1.msra.mxu0 0.0
    %3538 = vmatprep.subr.mxu0 0.0
    %3539 = vmatpush1.msra.mxu0 0.0
    %3540 = vmatprep.subr.mxu0 0.0
    %3541 = vmatpush1.msra.mxu0 0.0
    %3542 = vmatprep.subr.mxu0 0.0
    %3543 = vmatpush1.msra.mxu0 0.0
    %3544 = vmatprep.subr.mxu0 0.0
    %3545 = vmatpush1.msra.mxu0 0.0
    %3546 = vmatprep.subr.mxu0 0.0
    %3547 = vmatpush1.msra.mxu0 0.0
    %3548 = vmatprep.subr.mxu0 0.0
    %3549 = vmatpush1.msra.mxu0 0.0
    %3550 = vmatprep.subr.mxu0 0.0
    %3551 = vmatpush1.msra.mxu0 0.0
    %3552 = vmatprep.subr.mxu0 0.0
    %3553 = vmatpush1.msra.mxu0 0.0
    %3554 = vmatprep.subr.mxu0 0.0
    %3555 = vmatpush1.msra.mxu0 0.0
    %3556 = vmatprep.subr.mxu0 0.0
    %3557 = vmatpush1.msra.mxu0 0.0
    %3558 = vmatprep.subr.mxu0 0.0
    %3559 = vmatpush1.msra.mxu0 0.0
    %3560 = vmatprep.subr.mxu0 0.0
    %3561 = vmatpush1.msra.mxu0 0.0
    %3562 = vmatprep.subr.mxu0 0.0
    %3563 = vmatpush1.msra.mxu0 0.0
    %3564 = vmatprep.mubr.f32.mxu0 0.0
    %3565 = vmatmul.mubr.f32.gmra.mrb[0].mxu0 %v3264
    %v3566 = vpop.f32.mrb[0].mxu0
    %v3567 = vadd.f32 0.0, %v3566
    %v3568 = vpop.f32.mrb[0].mxu0
    %v3569 = vadd.f32 0.0, %v3568
    %3570 = vmatprep.mubr.f32.mxu0 0.0
    %3571 = vmatmul.mubr.f32.gmra.mrb[0].mxu0 %v3267
    %v3572 = vpop.f32.mrb[0].mxu0
    %v3573 = vadd.f32 0.0, %v3572
    %v3574 = vpop.f32.mrb[0].mxu0
    %v3575 = vadd.f32 0.0, %v3574
    %3576 = vdwg.mxu0
    %3577 = vmatprep.subr.mxu0 %v3015
    %3578 = vmatpush1.msra.mxu0 %v3014
    %3579 = vmatprep.subr.mxu0 %v3027
    %3580 = vmatpush1.msra.mxu0 %v3026
    %3581 = vmatprep.subr.mxu0 %v3039
    %3582 = vmatpush1.msra.mxu0 %v3038
    %3583 = vmatprep.subr.mxu0 %v3051
    %3584 = vmatpush1.msra.mxu0 %v3050
    %3585 = vmatprep.subr.mxu0 0.0
    %3586 = vmatpush1.msra.mxu0 0.0
    %3587 = vmatprep.subr.mxu0 0.0
    %3588 = vmatpush1.msra.mxu0 0.0
    %3589 = vmatprep.subr.mxu0 0.0
    %3590 = vmatpush1.msra.mxu0 0.0
    %3591 = vmatprep.subr.mxu0 0.0
    %3592 = vmatpush1.msra.mxu0 0.0
    %3593 = vmatprep.subr.mxu0 0.0
    %3594 = vmatpush1.msra.mxu0 0.0
    %3595 = vmatprep.subr.mxu0 0.0
    %3596 = vmatpush1.msra.mxu0 0.0
    %3597 = vmatprep.subr.mxu0 0.0
    %3598 = vmatpush1.msra.mxu0 0.0
    %3599 = vmatprep.subr.mxu0 0.0
    %3600 = vmatpush1.msra.mxu0 0.0
    %3601 = vmatprep.subr.mxu0 0.0
    %3602 = vmatpush1.msra.mxu0 0.0
    %3603 = vmatprep.subr.mxu0 0.0
    %3604 = vmatpush1.msra.mxu0 0.0
    %3605 = vmatprep.subr.mxu0 0.0
    %3606 = vmatpush1.msra.mxu0 0.0
    %3607 = vmatprep.subr.mxu0 0.0
    %3608 = vmatpush1.msra.mxu0 0.0
    %3609 = vmatprep.subr.mxu0 0.0
    %3610 = vmatpush1.msra.mxu0 0.0
    %3611 = vmatprep.subr.mxu0 0.0
    %3612 = vmatpush1.msra.mxu0 0.0
    %3613 = vmatprep.subr.mxu0 0.0
    %3614 = vmatpush1.msra.mxu0 0.0
    %3615 = vmatprep.subr.mxu0 0.0
    %3616 = vmatpush1.msra.mxu0 0.0
    %3617 = vmatprep.subr.mxu0 0.0
    %3618 = vmatpush1.msra.mxu0 0.0
    %3619 = vmatprep.subr.mxu0 0.0
    %3620 = vmatpush1.msra.mxu0 0.0
    %3621 = vmatprep.subr.mxu0 0.0
    %3622 = vmatpush1.msra.mxu0 0.0
    %3623 = vmatprep.subr.mxu0 0.0
    %3624 = vmatpush1.msra.mxu0 0.0
    %3625 = vmatprep.subr.mxu0 0.0
    %3626 = vmatpush1.msra.mxu0 0.0
    %3627 = vmatprep.subr.mxu0 0.0
    %3628 = vmatpush1.msra.mxu0 0.0
    %3629 = vmatprep.subr.mxu0 0.0
    %3630 = vmatpush1.msra.mxu0 0.0
    %3631 = vmatprep.subr.mxu0 0.0
    %3632 = vmatpush1.msra.mxu0 0.0
    %3633 = vmatprep.subr.mxu0 0.0
    %3634 = vmatpush1.msra.mxu0 0.0
    %3635 = vmatprep.subr.mxu0 0.0
    %3636 = vmatpush1.msra.mxu0 0.0
    %3637 = vmatprep.subr.mxu0 0.0
    %3638 = vmatpush1.msra.mxu0 0.0
    %3639 = vmatprep.subr.mxu0 0.0
    %3640 = vmatpush1.msra.mxu0 0.0
    %3641 = vmatprep.mubr.f32.mxu0 0.0
    %3642 = vmatmul.mubr.f32.gmra.mrb[0].mxu0 %v3264
    %v3643 = vpop.f32.mrb[0].mxu0
    %v3644 = vadd.f32 0.0, %v3643
    %v3645 = vpop.f32.mrb[0].mxu0
    %v3646 = vadd.f32 0.0, %v3645
    %3647 = vmatprep.mubr.f32.mxu0 0.0
    %3648 = vmatmul.mubr.f32.gmra.mrb[0].mxu0 %v3267
    %v3649 = vpop.f32.mrb[0].mxu0
    %v3650 = vadd.f32 0.0, %v3649
    %v3651 = vpop.f32.mrb[0].mxu0
    %v3652 = vadd.f32 0.0, %v3651
    %3653 = vdwg.mxu0
    %3654 = vmatprep.subr.mxu0 %v3017
    %3655 = vmatpush1.msra.mxu0 %v3016
    %3656 = vmatprep.subr.mxu0 %v3029
    %3657 = vmatpush1.msra.mxu0 %v3028
    %3658 = vmatprep.subr.mxu0 %v3041
    %3659 = vmatpush1.msra.mxu0 %v3040
    %3660 = vmatprep.subr.mxu0 %v3053
    %3661 = vmatpush1.msra.mxu0 %v3052
    %3662 = vmatprep.subr.mxu0 0.0
    %3663 = vmatpush1.msra.mxu0 0.0
    %3664 = vmatprep.subr.mxu0 0.0
    %3665 = vmatpush1.msra.mxu0 0.0
    %3666 = vmatprep.subr.mxu0 0.0
    %3667 = vmatpush1.msra.mxu0 0.0
    %3668 = vmatprep.subr.mxu0 0.0
    %3669 = vmatpush1.msra.mxu0 0.0
    %3670 = vmatprep.subr.mxu0 0.0
    %3671 = vmatpush1.msra.mxu0 0.0
    %3672 = vmatprep.subr.mxu0 0.0
    %3673 = vmatpush1.msra.mxu0 0.0
    %3674 = vmatprep.subr.mxu0 0.0
    %3675 = vmatpush1.msra.mxu0 0.0
    %3676 = vmatprep.subr.mxu0 0.0
    %3677 = vmatpush1.msra.mxu0 0.0
    %3678 = vmatprep.subr.mxu0 0.0
    %3679 = vmatpush1.msra.mxu0 0.0
    %3680 = vmatprep.subr.mxu0 0.0
    %3681 = vmatpush1.msra.mxu0 0.0
    %3682 = vmatprep.subr.mxu0 0.0
    %3683 = vmatpush1.msra.mxu0 0.0
    %3684 = vmatprep.subr.mxu0 0.0
    %3685 = vmatpush1.msra.mxu0 0.0
    %3686 = vmatprep.subr.mxu0 0.0
    %3687 = vmatpush1.msra.mxu0 0.0
    %3688 = vmatprep.subr.mxu0 0.0
    %3689 = vmatpush1.msra.mxu0 0.0
    %3690 = vmatprep.subr.mxu0 0.0
    %3691 = vmatpush1.msra.mxu0 0.0
    %3692 = vmatprep.subr.mxu0 0.0
    %3693 = vmatpush1.msra.mxu0 0.0
    %3694 = vmatprep.subr.mxu0 0.0
    %3695 = vmatpush1.msra.mxu0 0.0
    %3696 = vmatprep.subr.mxu0 0.0
    %3697 = vmatpush1.msra.mxu0 0.0
    %3698 = vmatprep.subr.mxu0 0.0
    %3699 = vmatpush1.msra.mxu0 0.0
    %3700 = vmatprep.subr.mxu0 0.0
    %3701 = vmatpush1.msra.mxu0 0.0
    %3702 = vmatprep.subr.mxu0 0.0
    %3703 = vmatpush1.msra.mxu0 0.0
    %3704 = vmatprep.subr.mxu0 0.0
    %3705 = vmatpush1.msra.mxu0 0.0
    %3706 = vmatprep.subr.mxu0 0.0
    %3707 = vmatpush1.msra.mxu0 0.0
    %3708 = vmatprep.subr.mxu0 0.0
    %3709 = vmatpush1.msra.mxu0 0.0
    %3710 = vmatprep.subr.mxu0 0.0
    %3711 = vmatpush1.msra.mxu0 0.0
    %3712 = vmatprep.subr.mxu0 0.0
    %3713 = vmatpush1.msra.mxu0 0.0
    %3714 = vmatprep.subr.mxu0 0.0
    %3715 = vmatpush1.msra.mxu0 0.0
    %3716 = vmatprep.subr.mxu0 0.0
    %3717 = vmatpush1.msra.mxu0 0.0
    %3718 = vmatprep.mubr.f32.mxu0 0.0
    %3719 = vmatmul.mubr.f32.gmra.mrb[0].mxu0 %v3264
    %v3720 = vpop.f32.mrb[0].mxu0
    %v3721 = vadd.f32 0.0, %v3720
    %v3722 = vpop.f32.mrb[0].mxu0
    %v3723 = vadd.f32 0.0, %v3722
    %3724 = vmatprep.mubr.f32.mxu0 0.0
    %3725 = vmatmul.mubr.f32.gmra.mrb[0].mxu0 %v3267
    %v3726 = vpop.f32.mrb[0].mxu0
    %v3727 = vadd.f32 0.0, %v3726
    %v3728 = vpop.f32.mrb[0].mxu0
    %v3729 = vadd.f32 0.0, %v3728
    %3730 = vdwg.mxu0
    %v3732 = vsel %vm899, %v3336, 0
    %v3735 = vsel %vm899, %v3342, 0
    %v3738 = vsel %vm899, %v3490, 0
    %v3741 = vsel %vm899, %v3496, 0
    %3743 = vmatprep.subr.mxu0 0.0
    %3744 = vmatpush1.xpose.msra.mxu0 %v3738
    %3745 = vmatprep.subr.mxu0 0.0
    %3746 = vmatpush1.xpose.msra.mxu0 %v3741
    %3747 = vmatprep.subr.mxu0 0.0
    %3748 = vmatpush1.xpose.msra.mxu0 0.0
    %3749 = vmatprep.subr.mxu0 0.0
    %3750 = vmatpush1.xpose.msra.mxu0 0.0
    %3751 = vmatprep.subr.mxu0 0.0
    %3752 = vmatpush1.xpose.msra.mxu0 0.0
    %3753 = vmatprep.subr.mxu0 0.0
    %3754 = vmatpush1.xpose.msra.mxu0 0.0
    %3755 = vmatprep.subr.mxu0 0.0
    %3756 = vmatpush1.xpose.msra.mxu0 0.0
    %3757 = vmatprep.subr.mxu0 0.0
    %3758 = vmatpush1.xpose.msra.mxu0 0.0
    %3759 = vmatprep.subr.mxu0 0.0
    %3760 = vmatpush1.xpose.msra.mxu0 0.0
    %3761 = vmatprep.subr.mxu0 0.0
    %3762 = vmatpush1.xpose.msra.mxu0 0.0
    %3763 = vmatprep.subr.mxu0 0.0
    %3764 = vmatpush1.xpose.msra.mxu0 0.0
    %3765 = vmatprep.subr.mxu0 0.0
    %3766 = vmatpush1.xpose.msra.mxu0 0.0
    %3767 = vmatprep.subr.mxu0 0.0
    %3768 = vmatpush1.xpose.msra.mxu0 0.0
    %3769 = vmatprep.subr.mxu0 0.0
    %3770 = vmatpush1.xpose.msra.mxu0 0.0
    %3771 = vmatprep.subr.mxu0 0.0
    %3772 = vmatpush1.xpose.msra.mxu0 0.0
    %3773 = vmatprep.subr.mxu0 0.0
    %3774 = vmatpush1.xpose.msra.mxu0 0.0
    %3775 = vmatprep.subr.mxu0 0.0
    %3776 = vmatpush1.xpose.msra.mxu0 0.0
    %3777 = vmatprep.subr.mxu0 0.0
    %3778 = vmatpush1.xpose.msra.mxu0 0.0
    %3779 = vmatprep.subr.mxu0 0.0
    %3780 = vmatpush1.xpose.msra.mxu0 0.0
    %3781 = vmatprep.subr.mxu0 0.0
    %3782 = vmatpush1.xpose.msra.mxu0 0.0
    %3783 = vmatprep.subr.mxu0 0.0
    %3784 = vmatpush1.xpose.msra.mxu0 0.0
    %3785 = vmatprep.subr.mxu0 0.0
    %3786 = vmatpush1.xpose.msra.mxu0 0.0
    %3787 = vmatprep.subr.mxu0 0.0
    %3788 = vmatpush1.xpose.msra.mxu0 0.0
    %3789 = vmatprep.subr.mxu0 0.0
    %3790 = vmatpush1.xpose.msra.mxu0 0.0
    %3791 = vmatprep.subr.mxu0 0.0
    %3792 = vmatpush1.xpose.msra.mxu0 0.0
    %3793 = vmatprep.subr.mxu0 0.0
    %3794 = vmatpush1.xpose.msra.mxu0 0.0
    %3795 = vmatprep.subr.mxu0 0.0
    %3796 = vmatpush1.xpose.msra.mxu0 0.0
    %3797 = vmatprep.subr.mxu0 0.0
    %3798 = vmatpush1.xpose.msra.mxu0 0.0
    %3799 = vmatprep.subr.mxu0 0.0
    %3800 = vmatpush1.xpose.msra.mxu0 0.0
    %3801 = vmatprep.subr.mxu0 0.0
    %3802 = vmatpush1.xpose.msra.mxu0 0.0
    %3803 = vmatprep.subr.mxu0 0.0
    %3804 = vmatpush1.xpose.msra.mxu0 0.0
    %3805 = vmatprep.subr.mxu0 0.0
    %3806 = vmatpush1.xpose.msra.mxu0 0.0
    %3807 = vmatprep.mubr.f32.mxu0 0.0
    %3808 = vmatmul.mubr.f32.gmra.mrb[0].mxu0 %v3732
    %v3809 = vpop.f32.mrb[0].mxu0
    %v3810 = vadd.f32 0.0, %v3809
    %v3811 = vpop.f32.mrb[0].mxu0
    %3812 = vmatprep.mubr.f32.mxu0 0.0
    %3813 = vmatmul.mubr.f32.gmra.mrb[0].mxu0 %v3735
    %v3814 = vpop.f32.mrb[0].mxu0
    %v3815 = vadd.f32 0.0, %v3814
    %v3816 = vpop.f32.mrb[0].mxu0
    %3817 = vdwg.mxu0
    %v3818 = vmul.f32 %v3810, 0.125
    %v3819 = vmul.f32 %v3815, 0.125
    %v3820 = vadd.f32 %v3818, %v147
    %v3821 = vadd.f32 %v3819, %v148
    %v3822 = vsel %vm991, %v3820, -inf
    %3823 = vmax.xlane.f32.xlu0 %v3822
    %v3824 = vpop.xlane.xlu0 %3823
    %v3825 = vsel %vm991, %v3821, -inf
    %3826 = vmax.xlane.f32.xlu0 %v3825
    %v3827 = vpop.xlane.xlu0 %3826
    %v3828 = vsub.f32 %v3820, %v3824
    %v3829 = vsub.f32 %v3821, %v3827
    %v3830 = vmul.f32 %v3828, 1.442695
    %v3831 = vpow.pop %v3830
    %v3832 = vmul.f32 %v3829, 1.442695
    %v3833 = vpow.pop %v3832
    %v3834 = vsel %vm991, %v3831, 0.0
    %3835 = vadd.xlane.f32.xlu0 %v3834
    %v3836 = vpop.xlane.xlu0 %3835
    %v3837 = vsel %vm991, %v3833, 0.0
    %3838 = vadd.xlane.f32.xlu0 %v3837
    %v3839 = vpop.xlane.xlu0 %3838
    %v3840 = vrcp.pop %v3836
    %v3841 = vrcp.pop %v3839
    %v3842 = vmul.f32 %v3836, %v3840
    %v3843 = vmul.f32 %v3839, %v3841
    %v3844 = vsub.f32 2.0, %v3842
    %v3845 = vsub.f32 2.0, %v3843
    %v3846 = vmul.f32 %v3840, %v3844
    %v3847 = vmul.f32 %v3841, %v3845
    %v3848 = vmul.f32 %v3831, %v3846
    %v3849 = vmul.f32 %v3833, %v3847
    %v3851 = vsel %vm991, %v3848, 0
    %v3854 = vsel %vm991, %v3849, 0
    %3856 = vmatprep.subr.mxu0 0.0
    %3857 = vmatpush1.msra.mxu0 %v3644
    %3858 = vmatprep.subr.mxu0 0.0
    %3859 = vmatpush1.msra.mxu0 %v3650
    %3860 = vmatprep.subr.mxu0 0.0
    %3861 = vmatpush1.msra.mxu0 0.0
    %3862 = vmatprep.subr.mxu0 0.0
    %3863 = vmatpush1.msra.mxu0 0.0
    %3864 = vmatprep.subr.mxu0 0.0
    %3865 = vmatpush1.msra.mxu0 0.0
    %3866 = vmatprep.subr.mxu0 0.0
    %3867 = vmatpush1.msra.mxu0 0.0
    %3868 = vmatprep.subr.mxu0 0.0
    %3869 = vmatpush1.msra.mxu0 0.0
    %3870 = vmatprep.subr.mxu0 0.0
    %3871 = vmatpush1.msra.mxu0 0.0
    %3872 = vmatprep.subr.mxu0 0.0
    %3873 = vmatpush1.msra.mxu0 0.0
    %3874 = vmatprep.subr.mxu0 0.0
    %3875 = vmatpush1.msra.mxu0 0.0
    %3876 = vmatprep.subr.mxu0 0.0
    %3877 = vmatpush1.msra.mxu0 0.0
    %3878 = vmatprep.subr.mxu0 0.0
    %3879 = vmatpush1.msra.mxu0 0.0
    %3880 = vmatprep.subr.mxu0 0.0
    %3881 = vmatpush1.msra.mxu0 0.0
    %3882 = vmatprep.subr.mxu0 0.0
    %3883 = vmatpush1.msra.mxu0 0.0
    %3884 = vmatprep.subr.mxu0 0.0
    %3885 = vmatpush1.msra.mxu0 0.0
    %3886 = vmatprep.subr.mxu0 0.0
    %3887 = vmatpush1.msra.mxu0 0.0
    %3888 = vmatprep.subr.mxu0 0.0
    %3889 = vmatpush1.msra.mxu0 0.0
    %3890 = vmatprep.subr.mxu0 0.0
    %3891 = vmatpush1.msra.mxu0 0.0
    %3892 = vmatprep.subr.mxu0 0.0
    %3893 = vmatpush1.msra.mxu0 0.0
    %3894 = vmatprep.subr.mxu0 0.0
    %3895 = vmatpush1.msra.mxu0 0.0
    %3896 = vmatprep.subr.mxu0 0.0
    %3897 = vmatpush1.msra.mxu0 0.0
    %3898 = vmatprep.subr.mxu0 0.0
    %3899 = vmatpush1.msra.mxu0 0.0
    %3900 = vmatprep.subr.mxu0 0.0
    %3901 = vmatpush1.msra.mxu0 0.0
    %3902 = vmatprep.subr.mxu0 0.0
    %3903 = vmatpush1.msra.mxu0 0.0
    %3904 = vmatprep.subr.mxu0 0.0
    %3905 = vmatpush1.msra.mxu0 0.0
    %3906 = vmatprep.subr.mxu0 0.0
    %3907 = vmatpush1.msra.mxu0 0.0
    %3908 = vmatprep.subr.mxu0 0.0
    %3909 = vmatpush1.msra.mxu0 0.0
    %3910 = vmatprep.subr.mxu0 0.0
    %3911 = vmatpush1.msra.mxu0 0.0
    %3912 = vmatprep.subr.mxu0 0.0
    %3913 = vmatpush1.msra.mxu0 0.0
    %3914 = vmatprep.subr.mxu0 0.0
    %3915 = vmatpush1.msra.mxu0 0.0
    %3916 = vmatprep.subr.mxu0 0.0
    %3917 = vmatpush1.msra.mxu0 0.0
    %3918 = vmatprep.subr.mxu0 0.0
    %3919 = vmatpush1.msra.mxu0 0.0
    %3920 = vmatprep.mubr.f32.mxu0 0.0
    %3921 = vmatmul.mubr.f32.gmra.mrb[0].mxu0 %v3851
    %v3922 = vpop.f32.mrb[0].mxu0
    %v3923 = vadd.f32 0.0, %v3922
    %v3924 = vpop.f32.mrb[0].mxu0
    %3925 = vmatprep.mubr.f32.mxu0 0.0
    %3926 = vmatmul.mubr.f32.gmra.mrb[0].mxu0 %v3854
    %v3927 = vpop.f32.mrb[0].mxu0
    %v3928 = vadd.f32 0.0, %v3927
    %v3929 = vpop.f32.mrb[0].mxu0
    %3930 = vdwg.mxu0
    %3931 = vst.msk [vmem:[#allocation2] sm:$0xff] %vm899, %v3923
    %3932 = vst.msk [vmem:[#allocation2 + $0x20] sm:$0xff] %vm899, %v3928
    %3933 = vrot.lane.b32.xlu0 %v3336, 64
    %v3934 = vpop.permute.xlu0 %3933
    %3935 = vrot.lane.b32.xlu0 %v3342, 64
    %v3936 = vpop.permute.xlu0 %3935
    %3937 = vrot.lane.b32.xlu0 %v3490, 64
    %v3938 = vpop.permute.xlu0 %3937
    %3939 = vrot.lane.b32.xlu0 %v3496, 64
    %v3940 = vpop.permute.xlu0 %3939
    %v3941 = vsel %vm899, %v3934, 0
    %v3943 = vsel %vm899, %v3936, 0
    %v3945 = vsel %vm899, %v3938, 0
    %v3947 = vsel %vm899, %v3940, 0
    %3949 = vmatprep.subr.mxu0 0.0
    %3950 = vmatpush1.xpose.msra.mxu0 %v3945
    %3951 = vmatprep.subr.mxu0 0.0
    %3952 = vmatpush1.xpose.msra.mxu0 %v3947
    %3953 = vmatprep.subr.mxu0 0.0
    %3954 = vmatpush1.xpose.msra.mxu0 0.0
    %3955 = vmatprep.subr.mxu0 0.0
    %3956 = vmatpush1.xpose.msra.mxu0 0.0
    %3957 = vmatprep.subr.mxu0 0.0
    %3958 = vmatpush1.xpose.msra.mxu0 0.0
    %3959 = vmatprep.subr.mxu0 0.0
    %3960 = vmatpush1.xpose.msra.mxu0 0.0
    %3961 = vmatprep.subr.mxu0 0.0
    %3962 = vmatpush1.xpose.msra.mxu0 0.0
    %3963 = vmatprep.subr.mxu0 0.0
    %3964 = vmatpush1.xpose.msra.mxu0 0.0
    %3965 = vmatprep.subr.mxu0 0.0
    %3966 = vmatpush1.xpose.msra.mxu0 0.0
    %3967 = vmatprep.subr.mxu0 0.0
    %3968 = vmatpush1.xpose.msra.mxu0 0.0
    %3969 = vmatprep.subr.mxu0 0.0
    %3970 = vmatpush1.xpose.msra.mxu0 0.0
    %3971 = vmatprep.subr.mxu0 0.0
    %3972 = vmatpush1.xpose.msra.mxu0 0.0
    %3973 = vmatprep.subr.mxu0 0.0
    %3974 = vmatpush1.xpose.msra.mxu0 0.0
    %3975 = vmatprep.subr.mxu0 0.0
    %3976 = vmatpush1.xpose.msra.mxu0 0.0
    %3977 = vmatprep.subr.mxu0 0.0
    %3978 = vmatpush1.xpose.msra.mxu0 0.0
    %3979 = vmatprep.subr.mxu0 0.0
    %3980 = vmatpush1.xpose.msra.mxu0 0.0
    %3981 = vmatprep.subr.mxu0 0.0
    %3982 = vmatpush1.xpose.msra.mxu0 0.0
    %3983 = vmatprep.subr.mxu0 0.0
    %3984 = vmatpush1.xpose.msra.mxu0 0.0
    %3985 = vmatprep.subr.mxu0 0.0
    %3986 = vmatpush1.xpose.msra.mxu0 0.0
    %3987 = vmatprep.subr.mxu0 0.0
    %3988 = vmatpush1.xpose.msra.mxu0 0.0
    %3989 = vmatprep.subr.mxu0 0.0
    %3990 = vmatpush1.xpose.msra.mxu0 0.0
    %3991 = vmatprep.subr.mxu0 0.0
    %3992 = vmatpush1.xpose.msra.mxu0 0.0
    %3993 = vmatprep.subr.mxu0 0.0
    %3994 = vmatpush1.xpose.msra.mxu0 0.0
    %3995 = vmatprep.subr.mxu0 0.0
    %3996 = vmatpush1.xpose.msra.mxu0 0.0
    %3997 = vmatprep.subr.mxu0 0.0
    %3998 = vmatpush1.xpose.msra.mxu0 0.0
    %3999 = vmatprep.subr.mxu0 0.0
    %4000 = vmatpush1.xpose.msra.mxu0 0.0
    %4001 = vmatprep.subr.mxu0 0.0
    %4002 = vmatpush1.xpose.msra.mxu0 0.0
    %4003 = vmatprep.subr.mxu0 0.0
    %4004 = vmatpush1.xpose.msra.mxu0 0.0
    %4005 = vmatprep.subr.mxu0 0.0
    %4006 = vmatpush1.xpose.msra.mxu0 0.0
    %4007 = vmatprep.subr.mxu0 0.0
    %4008 = vmatpush1.xpose.msra.mxu0 0.0
    %4009 = vmatprep.subr.mxu0 0.0
    %4010 = vmatpush1.xpose.msra.mxu0 0.0
    %4011 = vmatprep.subr.mxu0 0.0
    %4012 = vmatpush1.xpose.msra.mxu0 0.0
    %4013 = vmatprep.mubr.f32.mxu0 0.0
    %4014 = vmatmul.mubr.f32.gmra.mrb[0].mxu0 %v3941
    %v4015 = vpop.f32.mrb[0].mxu0
    %v4016 = vadd.f32 0.0, %v4015
    %v4017 = vpop.f32.mrb[0].mxu0
    %4018 = vmatprep.mubr.f32.mxu0 0.0
    %4019 = vmatmul.mubr.f32.gmra.mrb[0].mxu0 %v3943
    %v4020 = vpop.f32.mrb[0].mxu0
    %v4021 = vadd.f32 0.0, %v4020
    %v4022 = vpop.f32.mrb[0].mxu0
    %4023 = vdwg.mxu0
    %v4024 = vmul.f32 %v4016, 0.125
    %v4025 = vmul.f32 %v4021, 0.125
    %v4026 = vadd.f32 %v4024, %v147
    %v4027 = vadd.f32 %v4025, %v148
    %v4028 = vsel %vm991, %v4026, -inf
    %4029 = vmax.xlane.f32.xlu0 %v4028
    %v4030 = vpop.xlane.xlu0 %4029
    %v4031 = vsel %vm991, %v4027, -inf
    %4032 = vmax.xlane.f32.xlu0 %v4031
    %v4033 = vpop.xlane.xlu0 %4032
    %v4034 = vsub.f32 %v4026, %v4030
    %v4035 = vsub.f32 %v4027, %v4033
    %v4036 = vmul.f32 %v4034, 1.442695
    %v4037 = vpow.pop %v4036
    %v4038 = vmul.f32 %v4035, 1.442695
    %v4039 = vpow.pop %v4038
    %v4040 = vsel %vm991, %v4037, 0.0
    %4041 = vadd.xlane.f32.xlu0 %v4040
    %v4042 = vpop.xlane.xlu0 %4041
    %v4043 = vsel %vm991, %v4039, 0.0
    %4044 = vadd.xlane.f32.xlu0 %v4043
    %v4045 = vpop.xlane.xlu0 %4044
    %v4046 = vrcp.pop %v4042
    %v4047 = vrcp.pop %v4045
    %v4048 = vmul.f32 %v4042, %v4046
    %v4049 = vmul.f32 %v4045, %v4047
    %v4050 = vsub.f32 2.0, %v4048
    %v4051 = vsub.f32 2.0, %v4049
    %v4052 = vmul.f32 %v4046, %v4050
    %v4053 = vmul.f32 %v4047, %v4051
    %v4054 = vmul.f32 %v4037, %v4052
    %v4055 = vmul.f32 %v4039, %v4053
    %4058 = vrot.lane.b32.xlu0 %v3644, 64
    %v4059 = vpop.permute.xlu0 %4058
    %4060 = vrot.lane.b32.xlu0 %v3650, 64
    %v4061 = vpop.permute.xlu0 %4060
    %v4065 = vsel %vm991, %v4054, 0
    %v4068 = vsel %vm991, %v4055, 0
    %4070 = vmatprep.subr.mxu0 0.0
    %4071 = vmatpush1.msra.mxu0 %v4059
    %4072 = vmatprep.subr.mxu0 0.0
    %4073 = vmatpush1.msra.mxu0 %v4061
    %4074 = vmatprep.subr.mxu0 0.0
    %4075 = vmatpush1.msra.mxu0 0.0
    %4076 = vmatprep.subr.mxu0 0.0
    %4077 = vmatpush1.msra.mxu0 0.0
    %4078 = vmatprep.subr.mxu0 0.0
    %4079 = vmatpush1.msra.mxu0 0.0
    %4080 = vmatprep.subr.mxu0 0.0
    %4081 = vmatpush1.msra.mxu0 0.0
    %4082 = vmatprep.subr.mxu0 0.0
    %4083 = vmatpush1.msra.mxu0 0.0
    %4084 = vmatprep.subr.mxu0 0.0
    %4085 = vmatpush1.msra.mxu0 0.0
    %4086 = vmatprep.subr.mxu0 0.0
    %4087 = vmatpush1.msra.mxu0 0.0
    %4088 = vmatprep.subr.mxu0 0.0
    %4089 = vmatpush1.msra.mxu0 0.0
    %4090 = vmatprep.subr.mxu0 0.0
    %4091 = vmatpush1.msra.mxu0 0.0
    %4092 = vmatprep.subr.mxu0 0.0
    %4093 = vmatpush1.msra.mxu0 0.0
    %4094 = vmatprep.subr.mxu0 0.0
    %4095 = vmatpush1.msra.mxu0 0.0
    %4096 = vmatprep.subr.mxu0 0.0
    %4097 = vmatpush1.msra.mxu0 0.0
    %4098 = vmatprep.subr.mxu0 0.0
    %4099 = vmatpush1.msra.mxu0 0.0
    %4100 = vmatprep.subr.mxu0 0.0
    %4101 = vmatpush1.msra.mxu0 0.0
    %4102 = vmatprep.subr.mxu0 0.0
    %4103 = vmatpush1.msra.mxu0 0.0
    %4104 = vmatprep.subr.mxu0 0.0
    %4105 = vmatpush1.msra.mxu0 0.0
    %4106 = vmatprep.subr.mxu0 0.0
    %4107 = vmatpush1.msra.mxu0 0.0
    %4108 = vmatprep.subr.mxu0 0.0
    %4109 = vmatpush1.msra.mxu0 0.0
    %4110 = vmatprep.subr.mxu0 0.0
    %4111 = vmatpush1.msra.mxu0 0.0
    %4112 = vmatprep.subr.mxu0 0.0
    %4113 = vmatpush1.msra.mxu0 0.0
    %4114 = vmatprep.subr.mxu0 0.0
    %4115 = vmatpush1.msra.mxu0 0.0
    %4116 = vmatprep.subr.mxu0 0.0
    %4117 = vmatpush1.msra.mxu0 0.0
    %4118 = vmatprep.subr.mxu0 0.0
    %4119 = vmatpush1.msra.mxu0 0.0
    %4120 = vmatprep.subr.mxu0 0.0
    %4121 = vmatpush1.msra.mxu0 0.0
    %4122 = vmatprep.subr.mxu0 0.0
    %4123 = vmatpush1.msra.mxu0 0.0
    %4124 = vmatprep.subr.mxu0 0.0
    %4125 = vmatpush1.msra.mxu0 0.0
    %4126 = vmatprep.subr.mxu0 0.0
    %4127 = vmatpush1.msra.mxu0 0.0
    %4128 = vmatprep.subr.mxu0 0.0
    %4129 = vmatpush1.msra.mxu0 0.0
    %4130 = vmatprep.subr.mxu0 0.0
    %4131 = vmatpush1.msra.mxu0 0.0
    %4132 = vmatprep.subr.mxu0 0.0
    %4133 = vmatpush1.msra.mxu0 0.0
    %4134 = vmatprep.mubr.f32.mxu0 0.0
    %4135 = vmatmul.mubr.f32.gmra.mrb[0].mxu0 %v4065
    %v4136 = vpop.f32.mrb[0].mxu0
    %v4137 = vadd.f32 0.0, %v4136
    %v4138 = vpop.f32.mrb[0].mxu0
    %4139 = vmatprep.mubr.f32.mxu0 0.0
    %4140 = vmatmul.mubr.f32.gmra.mrb[0].mxu0 %v4068
    %v4141 = vpop.f32.mrb[0].mxu0
    %v4142 = vadd.f32 0.0, %v4141
    %v4143 = vpop.f32.mrb[0].mxu0
    %4144 = vdwg.mxu0
    %4147 = vrot.lane.b32.xlu0 %v4137, 64
    %v4148 = vpop.permute.xlu0 %4147
    %4149 = vrot.lane.b32.xlu0 %v4142, 64
    %v4150 = vpop.permute.xlu0 %4149
    %4153 = vst.msk [vmem:[#allocation2] sm:$0xff] %vm1323, %v4148
    %4154 = vst.msk [vmem:[#allocation2 + $0x20] sm:$0xff] %vm1323, %v4150
    %v4156 = vsel %vm899, %v3338, 0
    %v4159 = vsel %vm899, %v3344, 0
    %v4162 = vsel %vm899, %v3492, 0
    %v4165 = vsel %vm899, %v3498, 0
    %4167 = vmatprep.subr.mxu0 0.0
    %4168 = vmatpush1.xpose.msra.mxu0 %v4162
    %4169 = vmatprep.subr.mxu0 0.0
    %4170 = vmatpush1.xpose.msra.mxu0 %v4165
    %4171 = vmatprep.subr.mxu0 0.0
    %4172 = vmatpush1.xpose.msra.mxu0 0.0
    %4173 = vmatprep.subr.mxu0 0.0
    %4174 = vmatpush1.xpose.msra.mxu0 0.0
    %4175 = vmatprep.subr.mxu0 0.0
    %4176 = vmatpush1.xpose.msra.mxu0 0.0
    %4177 = vmatprep.subr.mxu0 0.0
    %4178 = vmatpush1.xpose.msra.mxu0 0.0
    %4179 = vmatprep.subr.mxu0 0.0
    %4180 = vmatpush1.xpose.msra.mxu0 0.0
    %4181 = vmatprep.subr.mxu0 0.0
    %4182 = vmatpush1.xpose.msra.mxu0 0.0
    %4183 = vmatprep.subr.mxu0 0.0
    %4184 = vmatpush1.xpose.msra.mxu0 0.0
    %4185 = vmatprep.subr.mxu0 0.0
    %4186 = vmatpush1.xpose.msra.mxu0 0.0
    %4187 = vmatprep.subr.mxu0 0.0
    %4188 = vmatpush1.xpose.msra.mxu0 0.0
    %4189 = vmatprep.subr.mxu0 0.0
    %4190 = vmatpush1.xpose.msra.mxu0 0.0
    %4191 = vmatprep.subr.mxu0 0.0
    %4192 = vmatpush1.xpose.msra.mxu0 0.0
    %4193 = vmatprep.subr.mxu0 0.0
    %4194 = vmatpush1.xpose.msra.mxu0 0.0
    %4195 = vmatprep.subr.mxu0 0.0
    %4196 = vmatpush1.xpose.msra.mxu0 0.0
    %4197 = vmatprep.subr.mxu0 0.0
    %4198 = vmatpush1.xpose.msra.mxu0 0.0
    %4199 = vmatprep.subr.mxu0 0.0
    %4200 = vmatpush1.xpose.msra.mxu0 0.0
    %4201 = vmatprep.subr.mxu0 0.0
    %4202 = vmatpush1.xpose.msra.mxu0 0.0
    %4203 = vmatprep.subr.mxu0 0.0
    %4204 = vmatpush1.xpose.msra.mxu0 0.0
    %4205 = vmatprep.subr.mxu0 0.0
    %4206 = vmatpush1.xpose.msra.mxu0 0.0
    %4207 = vmatprep.subr.mxu0 0.0
    %4208 = vmatpush1.xpose.msra.mxu0 0.0
    %4209 = vmatprep.subr.mxu0 0.0
    %4210 = vmatpush1.xpose.msra.mxu0 0.0
    %4211 = vmatprep.subr.mxu0 0.0
    %4212 = vmatpush1.xpose.msra.mxu0 0.0
    %4213 = vmatprep.subr.mxu0 0.0
    %4214 = vmatpush1.xpose.msra.mxu0 0.0
    %4215 = vmatprep.subr.mxu0 0.0
    %4216 = vmatpush1.xpose.msra.mxu0 0.0
    %4217 = vmatprep.subr.mxu0 0.0
    %4218 = vmatpush1.xpose.msra.mxu0 0.0
    %4219 = vmatprep.subr.mxu0 0.0
    %4220 = vmatpush1.xpose.msra.mxu0 0.0
    %4221 = vmatprep.subr.mxu0 0.0
    %4222 = vmatpush1.xpose.msra.mxu0 0.0
    %4223 = vmatprep.subr.mxu0 0.0
    %4224 = vmatpush1.xpose.msra.mxu0 0.0
    %4225 = vmatprep.subr.mxu0 0.0
    %4226 = vmatpush1.xpose.msra.mxu0 0.0
    %4227 = vmatprep.subr.mxu0 0.0
    %4228 = vmatpush1.xpose.msra.mxu0 0.0
    %4229 = vmatprep.subr.mxu0 0.0
    %4230 = vmatpush1.xpose.msra.mxu0 0.0
    %4231 = vmatprep.mubr.f32.mxu0 0.0
    %4232 = vmatmul.mubr.f32.gmra.mrb[0].mxu0 %v4156
    %v4233 = vpop.f32.mrb[0].mxu0
    %v4234 = vadd.f32 0.0, %v4233
    %v4235 = vpop.f32.mrb[0].mxu0
    %4236 = vmatprep.mubr.f32.mxu0 0.0
    %4237 = vmatmul.mubr.f32.gmra.mrb[0].mxu0 %v4159
    %v4238 = vpop.f32.mrb[0].mxu0
    %v4239 = vadd.f32 0.0, %v4238
    %v4240 = vpop.f32.mrb[0].mxu0
    %4241 = vdwg.mxu0
    %v4242 = vmul.f32 %v4234, 0.125
    %v4243 = vmul.f32 %v4239, 0.125
    %v4244 = vadd.f32 %v4242, %v147
    %v4245 = vadd.f32 %v4243, %v148
    %v4246 = vsel %vm991, %v4244, -inf
    %4247 = vmax.xlane.f32.xlu0 %v4246
    %v4248 = vpop.xlane.xlu0 %4247
    %v4249 = vsel %vm991, %v4245, -inf
    %4250 = vmax.xlane.f32.xlu0 %v4249
    %v4251 = vpop.xlane.xlu0 %4250
    %v4252 = vsub.f32 %v4244, %v4248
    %v4253 = vsub.f32 %v4245, %v4251
    %v4254 = vmul.f32 %v4252, 1.442695
    %v4255 = vpow.pop %v4254
    %v4256 = vmul.f32 %v4253, 1.442695
    %v4257 = vpow.pop %v4256
    %v4258 = vsel %vm991, %v4255, 0.0
    %4259 = vadd.xlane.f32.xlu0 %v4258
    %v4260 = vpop.xlane.xlu0 %4259
    %v4261 = vsel %vm991, %v4257, 0.0
    %4262 = vadd.xlane.f32.xlu0 %v4261
    %v4263 = vpop.xlane.xlu0 %4262
    %v4264 = vrcp.pop %v4260
    %v4265 = vrcp.pop %v4263
    %v4266 = vmul.f32 %v4260, %v4264
    %v4267 = vmul.f32 %v4263, %v4265
    %v4268 = vsub.f32 2.0, %v4266
    %v4269 = vsub.f32 2.0, %v4267
    %v4270 = vmul.f32 %v4264, %v4268
    %v4271 = vmul.f32 %v4265, %v4269
    %v4272 = vmul.f32 %v4255, %v4270
    %v4273 = vmul.f32 %v4257, %v4271
    %v4275 = vsel %vm991, %v4272, 0
    %v4278 = vsel %vm991, %v4273, 0
    %4280 = vmatprep.subr.mxu0 0.0
    %4281 = vmatpush1.msra.mxu0 %v3646
    %4282 = vmatprep.subr.mxu0 0.0
    %4283 = vmatpush1.msra.mxu0 %v3652
    %4284 = vmatprep.subr.mxu0 0.0
    %4285 = vmatpush1.msra.mxu0 0.0
    %4286 = vmatprep.subr.mxu0 0.0
    %4287 = vmatpush1.msra.mxu0 0.0
    %4288 = vmatprep.subr.mxu0 0.0
    %4289 = vmatpush1.msra.mxu0 0.0
    %4290 = vmatprep.subr.mxu0 0.0
    %4291 = vmatpush1.msra.mxu0 0.0
    %4292 = vmatprep.subr.mxu0 0.0
    %4293 = vmatpush1.msra.mxu0 0.0
    %4294 = vmatprep.subr.mxu0 0.0
    %4295 = vmatpush1.msra.mxu0 0.0
    %4296 = vmatprep.subr.mxu0 0.0
    %4297 = vmatpush1.msra.mxu0 0.0
    %4298 = vmatprep.subr.mxu0 0.0
    %4299 = vmatpush1.msra.mxu0 0.0
    %4300 = vmatprep.subr.mxu0 0.0
    %4301 = vmatpush1.msra.mxu0 0.0
    %4302 = vmatprep.subr.mxu0 0.0
    %4303 = vmatpush1.msra.mxu0 0.0
    %4304 = vmatprep.subr.mxu0 0.0
    %4305 = vmatpush1.msra.mxu0 0.0
    %4306 = vmatprep.subr.mxu0 0.0
    %4307 = vmatpush1.msra.mxu0 0.0
    %4308 = vmatprep.subr.mxu0 0.0
    %4309 = vmatpush1.msra.mxu0 0.0
    %4310 = vmatprep.subr.mxu0 0.0
    %4311 = vmatpush1.msra.mxu0 0.0
    %4312 = vmatprep.subr.mxu0 0.0
    %4313 = vmatpush1.msra.mxu0 0.0
    %4314 = vmatprep.subr.mxu0 0.0
    %4315 = vmatpush1.msra.mxu0 0.0
    %4316 = vmatprep.subr.mxu0 0.0
    %4317 = vmatpush1.msra.mxu0 0.0
    %4318 = vmatprep.subr.mxu0 0.0
    %4319 = vmatpush1.msra.mxu0 0.0
    %4320 = vmatprep.subr.mxu0 0.0
    %4321 = vmatpush1.msra.mxu0 0.0
    %4322 = vmatprep.subr.mxu0 0.0
    %4323 = vmatpush1.msra.mxu0 0.0
    %4324 = vmatprep.subr.mxu0 0.0
    %4325 = vmatpush1.msra.mxu0 0.0
    %4326 = vmatprep.subr.mxu0 0.0
    %4327 = vmatpush1.msra.mxu0 0.0
    %4328 = vmatprep.subr.mxu0 0.0
    %4329 = vmatpush1.msra.mxu0 0.0
    %4330 = vmatprep.subr.mxu0 0.0
    %4331 = vmatpush1.msra.mxu0 0.0
    %4332 = vmatprep.subr.mxu0 0.0
    %4333 = vmatpush1.msra.mxu0 0.0
    %4334 = vmatprep.subr.mxu0 0.0
    %4335 = vmatpush1.msra.mxu0 0.0
    %4336 = vmatprep.subr.mxu0 0.0
    %4337 = vmatpush1.msra.mxu0 0.0
    %4338 = vmatprep.subr.mxu0 0.0
    %4339 = vmatpush1.msra.mxu0 0.0
    %4340 = vmatprep.subr.mxu0 0.0
    %4341 = vmatpush1.msra.mxu0 0.0
    %4342 = vmatprep.subr.mxu0 0.0
    %4343 = vmatpush1.msra.mxu0 0.0
    %4344 = vmatprep.mubr.f32.mxu0 0.0
    %4345 = vmatmul.mubr.f32.gmra.mrb[0].mxu0 %v4275
    %v4346 = vpop.f32.mrb[0].mxu0
    %v4347 = vadd.f32 0.0, %v4346
    %v4348 = vpop.f32.mrb[0].mxu0
    %4349 = vmatprep.mubr.f32.mxu0 0.0
    %4350 = vmatmul.mubr.f32.gmra.mrb[0].mxu0 %v4278
    %v4351 = vpop.f32.mrb[0].mxu0
    %v4352 = vadd.f32 0.0, %v4351
    %v4353 = vpop.f32.mrb[0].mxu0
    %4354 = vdwg.mxu0
    %4355 = vst.msk [vmem:[#allocation2 + $0x8] sm:$0xff] %vm899, %v4347
    %4356 = vst.msk [vmem:[#allocation2 + $0x28] sm:$0xff] %vm899, %v4352
    %4357 = vrot.lane.b32.xlu0 %v3338, 64
    %v4358 = vpop.permute.xlu0 %4357
    %4359 = vrot.lane.b32.xlu0 %v3344, 64
    %v4360 = vpop.permute.xlu0 %4359
    %4361 = vrot.lane.b32.xlu0 %v3492, 64
    %v4362 = vpop.permute.xlu0 %4361
    %4363 = vrot.lane.b32.xlu0 %v3498, 64
    %v4364 = vpop.permute.xlu0 %4363
    %v4365 = vsel %vm899, %v4358, 0
    %v4367 = vsel %vm899, %v4360, 0
    %v4369 = vsel %vm899, %v4362, 0
    %v4371 = vsel %vm899, %v4364, 0
    %4373 = vmatprep.subr.mxu0 0.0
    %4374 = vmatpush1.xpose.msra.mxu0 %v4369
    %4375 = vmatprep.subr.mxu0 0.0
    %4376 = vmatpush1.xpose.msra.mxu0 %v4371
    %4377 = vmatprep.subr.mxu0 0.0
    %4378 = vmatpush1.xpose.msra.mxu0 0.0
    %4379 = vmatprep.subr.mxu0 0.0
    %4380 = vmatpush1.xpose.msra.mxu0 0.0
    %4381 = vmatprep.subr.mxu0 0.0
    %4382 = vmatpush1.xpose.msra.mxu0 0.0
    %4383 = vmatprep.subr.mxu0 0.0
    %4384 = vmatpush1.xpose.msra.mxu0 0.0
    %4385 = vmatprep.subr.mxu0 0.0
    %4386 = vmatpush1.xpose.msra.mxu0 0.0
    %4387 = vmatprep.subr.mxu0 0.0
    %4388 = vmatpush1.xpose.msra.mxu0 0.0
    %4389 = vmatprep.subr.mxu0 0.0
    %4390 = vmatpush1.xpose.msra.mxu0 0.0
    %4391 = vmatprep.subr.mxu0 0.0
    %4392 = vmatpush1.xpose.msra.mxu0 0.0
    %4393 = vmatprep.subr.mxu0 0.0
    %4394 = vmatpush1.xpose.msra.mxu0 0.0
    %4395 = vmatprep.subr.mxu0 0.0
    %4396 = vmatpush1.xpose.msra.mxu0 0.0
    %4397 = vmatprep.subr.mxu0 0.0
    %4398 = vmatpush1.xpose.msra.mxu0 0.0
    %4399 = vmatprep.subr.mxu0 0.0
    %4400 = vmatpush1.xpose.msra.mxu0 0.0
    %4401 = vmatprep.subr.mxu0 0.0
    %4402 = vmatpush1.xpose.msra.mxu0 0.0
    %4403 = vmatprep.subr.mxu0 0.0
    %4404 = vmatpush1.xpose.msra.mxu0 0.0
    %4405 = vmatprep.subr.mxu0 0.0
    %4406 = vmatpush1.xpose.msra.mxu0 0.0
    %4407 = vmatprep.subr.mxu0 0.0
    %4408 = vmatpush1.xpose.msra.mxu0 0.0
    %4409 = vmatprep.subr.mxu0 0.0
    %4410 = vmatpush1.xpose.msra.mxu0 0.0
    %4411 = vmatprep.subr.mxu0 0.0
    %4412 = vmatpush1.xpose.msra.mxu0 0.0
    %4413 = vmatprep.subr.mxu0 0.0
    %4414 = vmatpush1.xpose.msra.mxu0 0.0
    %4415 = vmatprep.subr.mxu0 0.0
    %4416 = vmatpush1.xpose.msra.mxu0 0.0
    %4417 = vmatprep.subr.mxu0 0.0
    %4418 = vmatpush1.xpose.msra.mxu0 0.0
    %4419 = vmatprep.subr.mxu0 0.0
    %4420 = vmatpush1.xpose.msra.mxu0 0.0
    %4421 = vmatprep.subr.mxu0 0.0
    %4422 = vmatpush1.xpose.msra.mxu0 0.0
    %4423 = vmatprep.subr.mxu0 0.0
    %4424 = vmatpush1.xpose.msra.mxu0 0.0
    %4425 = vmatprep.subr.mxu0 0.0
    %4426 = vmatpush1.xpose.msra.mxu0 0.0
    %4427 = vmatprep.subr.mxu0 0.0
    %4428 = vmatpush1.xpose.msra.mxu0 0.0
    %4429 = vmatprep.subr.mxu0 0.0
    %4430 = vmatpush1.xpose.msra.mxu0 0.0
    %4431 = vmatprep.subr.mxu0 0.0
    %4432 = vmatpush1.xpose.msra.mxu0 0.0
    %4433 = vmatprep.subr.mxu0 0.0
    %4434 = vmatpush1.xpose.msra.mxu0 0.0
    %4435 = vmatprep.subr.mxu0 0.0
    %4436 = vmatpush1.xpose.msra.mxu0 0.0
    %4437 = vmatprep.mubr.f32.mxu0 0.0
    %4438 = vmatmul.mubr.f32.gmra.mrb[0].mxu0 %v4365
    %v4439 = vpop.f32.mrb[0].mxu0
    %v4440 = vadd.f32 0.0, %v4439
    %v4441 = vpop.f32.mrb[0].mxu0
    %4442 = vmatprep.mubr.f32.mxu0 0.0
    %4443 = vmatmul.mubr.f32.gmra.mrb[0].mxu0 %v4367
    %v4444 = vpop.f32.mrb[0].mxu0
    %v4445 = vadd.f32 0.0, %v4444
    %v4446 = vpop.f32.mrb[0].mxu0
    %4447 = vdwg.mxu0
    %v4448 = vmul.f32 %v4440, 0.125
    %v4449 = vmul.f32 %v4445, 0.125
    %v4450 = vadd.f32 %v4448, %v147
    %v4451 = vadd.f32 %v4449, %v148
    %v4452 = vsel %vm991, %v4450, -inf
    %4453 = vmax.xlane.f32.xlu0 %v4452
    %v4454 = vpop.xlane.xlu0 %4453
    %v4455 = vsel %vm991, %v4451, -inf
    %4456 = vmax.xlane.f32.xlu0 %v4455
    %v4457 = vpop.xlane.xlu0 %4456
    %v4458 = vsub.f32 %v4450, %v4454
    %v4459 = vsub.f32 %v4451, %v4457
    %v4460 = vmul.f32 %v4458, 1.442695
    %v4461 = vpow.pop %v4460
    %v4462 = vmul.f32 %v4459, 1.442695
    %v4463 = vpow.pop %v4462
    %v4464 = vsel %vm991, %v4461, 0.0
    %4465 = vadd.xlane.f32.xlu0 %v4464
    %v4466 = vpop.xlane.xlu0 %4465
    %v4467 = vsel %vm991, %v4463, 0.0
    %4468 = vadd.xlane.f32.xlu0 %v4467
    %v4469 = vpop.xlane.xlu0 %4468
    %v4470 = vrcp.pop %v4466
    %v4471 = vrcp.pop %v4469
    %v4472 = vmul.f32 %v4466, %v4470
    %v4473 = vmul.f32 %v4469, %v4471
    %v4474 = vsub.f32 2.0, %v4472
    %v4475 = vsub.f32 2.0, %v4473
    %v4476 = vmul.f32 %v4470, %v4474
    %v4477 = vmul.f32 %v4471, %v4475
    %v4478 = vmul.f32 %v4461, %v4476
    %v4479 = vmul.f32 %v4463, %v4477
    %4482 = vrot.lane.b32.xlu0 %v3646, 64
    %v4483 = vpop.permute.xlu0 %4482
    %4484 = vrot.lane.b32.xlu0 %v3652, 64
    %v4485 = vpop.permute.xlu0 %4484
    %v4489 = vsel %vm991, %v4478, 0
    %v4492 = vsel %vm991, %v4479, 0
    %4494 = vmatprep.subr.mxu0 0.0
    %4495 = vmatpush1.msra.mxu0 %v4483
    %4496 = vmatprep.subr.mxu0 0.0
    %4497 = vmatpush1.msra.mxu0 %v4485
    %4498 = vmatprep.subr.mxu0 0.0
    %4499 = vmatpush1.msra.mxu0 0.0
    %4500 = vmatprep.subr.mxu0 0.0
    %4501 = vmatpush1.msra.mxu0 0.0
    %4502 = vmatprep.subr.mxu0 0.0
    %4503 = vmatpush1.msra.mxu0 0.0
    %4504 = vmatprep.subr.mxu0 0.0
    %4505 = vmatpush1.msra.mxu0 0.0
    %4506 = vmatprep.subr.mxu0 0.0
    %4507 = vmatpush1.msra.mxu0 0.0
    %4508 = vmatprep.subr.mxu0 0.0
    %4509 = vmatpush1.msra.mxu0 0.0
    %4510 = vmatprep.subr.mxu0 0.0
    %4511 = vmatpush1.msra.mxu0 0.0
    %4512 = vmatprep.subr.mxu0 0.0
    %4513 = vmatpush1.msra.mxu0 0.0
    %4514 = vmatprep.subr.mxu0 0.0
    %4515 = vmatpush1.msra.mxu0 0.0
    %4516 = vmatprep.subr.mxu0 0.0
    %4517 = vmatpush1.msra.mxu0 0.0
    %4518 = vmatprep.subr.mxu0 0.0
    %4519 = vmatpush1.msra.mxu0 0.0
    %4520 = vmatprep.subr.mxu0 0.0
    %4521 = vmatpush1.msra.mxu0 0.0
    %4522 = vmatprep.subr.mxu0 0.0
    %4523 = vmatpush1.msra.mxu0 0.0
    %4524 = vmatprep.subr.mxu0 0.0
    %4525 = vmatpush1.msra.mxu0 0.0
    %4526 = vmatprep.subr.mxu0 0.0
    %4527 = vmatpush1.msra.mxu0 0.0
    %4528 = vmatprep.subr.mxu0 0.0
    %4529 = vmatpush1.msra.mxu0 0.0
    %4530 = vmatprep.subr.mxu0 0.0
    %4531 = vmatpush1.msra.mxu0 0.0
    %4532 = vmatprep.subr.mxu0 0.0
    %4533 = vmatpush1.msra.mxu0 0.0
    %4534 = vmatprep.subr.mxu0 0.0
    %4535 = vmatpush1.msra.mxu0 0.0
    %4536 = vmatprep.subr.mxu0 0.0
    %4537 = vmatpush1.msra.mxu0 0.0
    %4538 = vmatprep.subr.mxu0 0.0
    %4539 = vmatpush1.msra.mxu0 0.0
    %4540 = vmatprep.subr.mxu0 0.0
    %4541 = vmatpush1.msra.mxu0 0.0
    %4542 = vmatprep.subr.mxu0 0.0
    %4543 = vmatpush1.msra.mxu0 0.0
    %4544 = vmatprep.subr.mxu0 0.0
    %4545 = vmatpush1.msra.mxu0 0.0
    %4546 = vmatprep.subr.mxu0 0.0
    %4547 = vmatpush1.msra.mxu0 0.0
    %4548 = vmatprep.subr.mxu0 0.0
    %4549 = vmatpush1.msra.mxu0 0.0
    %4550 = vmatprep.subr.mxu0 0.0
    %4551 = vmatpush1.msra.mxu0 0.0
    %4552 = vmatprep.subr.mxu0 0.0
    %4553 = vmatpush1.msra.mxu0 0.0
    %4554 = vmatprep.subr.mxu0 0.0
    %4555 = vmatpush1.msra.mxu0 0.0
    %4556 = vmatprep.subr.mxu0 0.0
    %4557 = vmatpush1.msra.mxu0 0.0
    %4558 = vmatprep.mubr.f32.mxu0 0.0
    %4559 = vmatmul.mubr.f32.gmra.mrb[0].mxu0 %v4489
    %v4560 = vpop.f32.mrb[0].mxu0
    %v4561 = vadd.f32 0.0, %v4560
    %v4562 = vpop.f32.mrb[0].mxu0
    %4563 = vmatprep.mubr.f32.mxu0 0.0
    %4564 = vmatmul.mubr.f32.gmra.mrb[0].mxu0 %v4492
    %v4565 = vpop.f32.mrb[0].mxu0
    %v4566 = vadd.f32 0.0, %v4565
    %v4567 = vpop.f32.mrb[0].mxu0
    %4568 = vdwg.mxu0
    %4571 = vrot.lane.b32.xlu0 %v4561, 64
    %v4572 = vpop.permute.xlu0 %4571
    %4573 = vrot.lane.b32.xlu0 %v4566, 64
    %v4574 = vpop.permute.xlu0 %4573
    %4577 = vst.msk [vmem:[#allocation2 + $0x8] sm:$0xff] %vm1323, %v4572
    %4578 = vst.msk [vmem:[#allocation2 + $0x28] sm:$0xff] %vm1323, %v4574
    %v4580 = vsel %vm899, %v3413, 0
    %v4583 = vsel %vm899, %v3419, 0
    %v4586 = vsel %vm899, %v3567, 0
    %v4589 = vsel %vm899, %v3573, 0
    %4591 = vmatprep.subr.mxu0 0.0
    %4592 = vmatpush1.xpose.msra.mxu0 %v4586
    %4593 = vmatprep.subr.mxu0 0.0
    %4594 = vmatpush1.xpose.msra.mxu0 %v4589
    %4595 = vmatprep.subr.mxu0 0.0
    %4596 = vmatpush1.xpose.msra.mxu0 0.0
    %4597 = vmatprep.subr.mxu0 0.0
    %4598 = vmatpush1.xpose.msra.mxu0 0.0
    %4599 = vmatprep.subr.mxu0 0.0
    %4600 = vmatpush1.xpose.msra.mxu0 0.0
    %4601 = vmatprep.subr.mxu0 0.0
    %4602 = vmatpush1.xpose.msra.mxu0 0.0
    %4603 = vmatprep.subr.mxu0 0.0
    %4604 = vmatpush1.xpose.msra.mxu0 0.0
    %4605 = vmatprep.subr.mxu0 0.0
    %4606 = vmatpush1.xpose.msra.mxu0 0.0
    %4607 = vmatprep.subr.mxu0 0.0
    %4608 = vmatpush1.xpose.msra.mxu0 0.0
    %4609 = vmatprep.subr.mxu0 0.0
    %4610 = vmatpush1.xpose.msra.mxu0 0.0
    %4611 = vmatprep.subr.mxu0 0.0
    %4612 = vmatpush1.xpose.msra.mxu0 0.0
    %4613 = vmatprep.subr.mxu0 0.0
    %4614 = vmatpush1.xpose.msra.mxu0 0.0
    %4615 = vmatprep.subr.mxu0 0.0
    %4616 = vmatpush1.xpose.msra.mxu0 0.0
    %4617 = vmatprep.subr.mxu0 0.0
    %4618 = vmatpush1.xpose.msra.mxu0 0.0
    %4619 = vmatprep.subr.mxu0 0.0
    %4620 = vmatpush1.xpose.msra.mxu0 0.0
    %4621 = vmatprep.subr.mxu0 0.0
    %4622 = vmatpush1.xpose.msra.mxu0 0.0
    %4623 = vmatprep.subr.mxu0 0.0
    %4624 = vmatpush1.xpose.msra.mxu0 0.0
    %4625 = vmatprep.subr.mxu0 0.0
    %4626 = vmatpush1.xpose.msra.mxu0 0.0
    %4627 = vmatprep.subr.mxu0 0.0
    %4628 = vmatpush1.xpose.msra.mxu0 0.0
    %4629 = vmatprep.subr.mxu0 0.0
    %4630 = vmatpush1.xpose.msra.mxu0 0.0
    %4631 = vmatprep.subr.mxu0 0.0
    %4632 = vmatpush1.xpose.msra.mxu0 0.0
    %4633 = vmatprep.subr.mxu0 0.0
    %4634 = vmatpush1.xpose.msra.mxu0 0.0
    %4635 = vmatprep.subr.mxu0 0.0
    %4636 = vmatpush1.xpose.msra.mxu0 0.0
    %4637 = vmatprep.subr.mxu0 0.0
    %4638 = vmatpush1.xpose.msra.mxu0 0.0
    %4639 = vmatprep.subr.mxu0 0.0
    %4640 = vmatpush1.xpose.msra.mxu0 0.0
    %4641 = vmatprep.subr.mxu0 0.0
    %4642 = vmatpush1.xpose.msra.mxu0 0.0
    %4643 = vmatprep.subr.mxu0 0.0
    %4644 = vmatpush1.xpose.msra.mxu0 0.0
    %4645 = vmatprep.subr.mxu0 0.0
    %4646 = vmatpush1.xpose.msra.mxu0 0.0
    %4647 = vmatprep.subr.mxu0 0.0
    %4648 = vmatpush1.xpose.msra.mxu0 0.0
    %4649 = vmatprep.subr.mxu0 0.0
    %4650 = vmatpush1.xpose.msra.mxu0 0.0
    %4651 = vmatprep.subr.mxu0 0.0
    %4652 = vmatpush1.xpose.msra.mxu0 0.0
    %4653 = vmatprep.subr.mxu0 0.0
    %4654 = vmatpush1.xpose.msra.mxu0 0.0
    %4655 = vmatprep.mubr.f32.mxu0 0.0
    %4656 = vmatmul.mubr.f32.gmra.mrb[0].mxu0 %v4580
    %v4657 = vpop.f32.mrb[0].mxu0
    %v4658 = vadd.f32 0.0, %v4657
    %v4659 = vpop.f32.mrb[0].mxu0
    %4660 = vmatprep.mubr.f32.mxu0 0.0
    %4661 = vmatmul.mubr.f32.gmra.mrb[0].mxu0 %v4583
    %v4662 = vpop.f32.mrb[0].mxu0
    %v4663 = vadd.f32 0.0, %v4662
    %v4664 = vpop.f32.mrb[0].mxu0
    %4665 = vdwg.mxu0
    %v4666 = vmul.f32 %v4658, 0.125
    %v4667 = vmul.f32 %v4663, 0.125
    %v4668 = vadd.f32 %v4666, %v147
    %v4669 = vadd.f32 %v4667, %v148
    %v4670 = vsel %vm991, %v4668, -inf
    %4671 = vmax.xlane.f32.xlu0 %v4670
    %v4672 = vpop.xlane.xlu0 %4671
    %v4673 = vsel %vm991, %v4669, -inf
    %4674 = vmax.xlane.f32.xlu0 %v4673
    %v4675 = vpop.xlane.xlu0 %4674
    %v4676 = vsub.f32 %v4668, %v4672
    %v4677 = vsub.f32 %v4669, %v4675
    %v4678 = vmul.f32 %v4676, 1.442695
    %v4679 = vpow.pop %v4678
    %v4680 = vmul.f32 %v4677, 1.442695
    %v4681 = vpow.pop %v4680
    %v4682 = vsel %vm991, %v4679, 0.0
    %4683 = vadd.xlane.f32.xlu0 %v4682
    %v4684 = vpop.xlane.xlu0 %4683
    %v4685 = vsel %vm991, %v4681, 0.0
    %4686 = vadd.xlane.f32.xlu0 %v4685
    %v4687 = vpop.xlane.xlu0 %4686
    %v4688 = vrcp.pop %v4684
    %v4689 = vrcp.pop %v4687
    %v4690 = vmul.f32 %v4684, %v4688
    %v4691 = vmul.f32 %v4687, %v4689
    %v4692 = vsub.f32 2.0, %v4690
    %v4693 = vsub.f32 2.0, %v4691
    %v4694 = vmul.f32 %v4688, %v4692
    %v4695 = vmul.f32 %v4689, %v4693
    %v4696 = vmul.f32 %v4679, %v4694
    %v4697 = vmul.f32 %v4681, %v4695
    %v4699 = vsel %vm991, %v4696, 0
    %v4702 = vsel %vm991, %v4697, 0
    %4704 = vmatprep.subr.mxu0 0.0
    %4705 = vmatpush1.msra.mxu0 %v3721
    %4706 = vmatprep.subr.mxu0 0.0
    %4707 = vmatpush1.msra.mxu0 %v3727
    %4708 = vmatprep.subr.mxu0 0.0
    %4709 = vmatpush1.msra.mxu0 0.0
    %4710 = vmatprep.subr.mxu0 0.0
    %4711 = vmatpush1.msra.mxu0 0.0
    %4712 = vmatprep.subr.mxu0 0.0
    %4713 = vmatpush1.msra.mxu0 0.0
    %4714 = vmatprep.subr.mxu0 0.0
    %4715 = vmatpush1.msra.mxu0 0.0
    %4716 = vmatprep.subr.mxu0 0.0
    %4717 = vmatpush1.msra.mxu0 0.0
    %4718 = vmatprep.subr.mxu0 0.0
    %4719 = vmatpush1.msra.mxu0 0.0
    %4720 = vmatprep.subr.mxu0 0.0
    %4721 = vmatpush1.msra.mxu0 0.0
    %4722 = vmatprep.subr.mxu0 0.0
    %4723 = vmatpush1.msra.mxu0 0.0
    %4724 = vmatprep.subr.mxu0 0.0
    %4725 = vmatpush1.msra.mxu0 0.0
    %4726 = vmatprep.subr.mxu0 0.0
    %4727 = vmatpush1.msra.mxu0 0.0
    %4728 = vmatprep.subr.mxu0 0.0
    %4729 = vmatpush1.msra.mxu0 0.0
    %4730 = vmatprep.subr.mxu0 0.0
    %4731 = vmatpush1.msra.mxu0 0.0
    %4732 = vmatprep.subr.mxu0 0.0
    %4733 = vmatpush1.msra.mxu0 0.0
    %4734 = vmatprep.subr.mxu0 0.0
    %4735 = vmatpush1.msra.mxu0 0.0
    %4736 = vmatprep.subr.mxu0 0.0
    %4737 = vmatpush1.msra.mxu0 0.0
    %4738 = vmatprep.subr.mxu0 0.0
    %4739 = vmatpush1.msra.mxu0 0.0
    %4740 = vmatprep.subr.mxu0 0.0
    %4741 = vmatpush1.msra.mxu0 0.0
    %4742 = vmatprep.subr.mxu0 0.0
    %4743 = vmatpush1.msra.mxu0 0.0
    %4744 = vmatprep.subr.mxu0 0.0
    %4745 = vmatpush1.msra.mxu0 0.0
    %4746 = vmatprep.subr.mxu0 0.0
    %4747 = vmatpush1.msra.mxu0 0.0
    %4748 = vmatprep.subr.mxu0 0.0
    %4749 = vmatpush1.msra.mxu0 0.0
    %4750 = vmatprep.subr.mxu0 0.0
    %4751 = vmatpush1.msra.mxu0 0.0
    %4752 = vmatprep.subr.mxu0 0.0
    %4753 = vmatpush1.msra.mxu0 0.0
    %4754 = vmatprep.subr.mxu0 0.0
    %4755 = vmatpush1.msra.mxu0 0.0
    %4756 = vmatprep.subr.mxu0 0.0
    %4757 = vmatpush1.msra.mxu0 0.0
    %4758 = vmatprep.subr.mxu0 0.0
    %4759 = vmatpush1.msra.mxu0 0.0
    %4760 = vmatprep.subr.mxu0 0.0
    %4761 = vmatpush1.msra.mxu0 0.0
    %4762 = vmatprep.subr.mxu0 0.0
    %4763 = vmatpush1.msra.mxu0 0.0
    %4764 = vmatprep.subr.mxu0 0.0
    %4765 = vmatpush1.msra.mxu0 0.0
    %4766 = vmatprep.subr.mxu0 0.0
    %4767 = vmatpush1.msra.mxu0 0.0
    %4768 = vmatprep.mubr.f32.mxu0 0.0
    %4769 = vmatmul.mubr.f32.gmra.mrb[0].mxu0 %v4699
    %v4770 = vpop.f32.mrb[0].mxu0
    %v4771 = vadd.f32 0.0, %v4770
    %v4772 = vpop.f32.mrb[0].mxu0
    %4773 = vmatprep.mubr.f32.mxu0 0.0
    %4774 = vmatmul.mubr.f32.gmra.mrb[0].mxu0 %v4702
    %v4775 = vpop.f32.mrb[0].mxu0
    %v4776 = vadd.f32 0.0, %v4775
    %v4777 = vpop.f32.mrb[0].mxu0
    %4778 = vdwg.mxu0
    %4779 = vst.msk [vmem:[#allocation2 + $0x10] sm:$0xff] %vm899, %v4771
    %4780 = vst.msk [vmem:[#allocation2 + $0x30] sm:$0xff] %vm899, %v4776
    %4781 = vrot.lane.b32.xlu0 %v3413, 64
    %v4782 = vpop.permute.xlu0 %4781
    %4783 = vrot.lane.b32.xlu0 %v3419, 64
    %v4784 = vpop.permute.xlu0 %4783
    %4785 = vrot.lane.b32.xlu0 %v3567, 64
    %v4786 = vpop.permute.xlu0 %4785
    %4787 = vrot.lane.b32.xlu0 %v3573, 64
    %v4788 = vpop.permute.xlu0 %4787
    %v4789 = vsel %vm899, %v4782, 0
    %v4791 = vsel %vm899, %v4784, 0
    %v4793 = vsel %vm899, %v4786, 0
    %v4795 = vsel %vm899, %v4788, 0
    %4797 = vmatprep.subr.mxu0 0.0
    %4798 = vmatpush1.xpose.msra.mxu0 %v4793
    %4799 = vmatprep.subr.mxu0 0.0
    %4800 = vmatpush1.xpose.msra.mxu0 %v4795
    %4801 = vmatprep.subr.mxu0 0.0
    %4802 = vmatpush1.xpose.msra.mxu0 0.0
    %4803 = vmatprep.subr.mxu0 0.0
    %4804 = vmatpush1.xpose.msra.mxu0 0.0
    %4805 = vmatprep.subr.mxu0 0.0
    %4806 = vmatpush1.xpose.msra.mxu0 0.0
    %4807 = vmatprep.subr.mxu0 0.0
    %4808 = vmatpush1.xpose.msra.mxu0 0.0
    %4809 = vmatprep.subr.mxu0 0.0
    %4810 = vmatpush1.xpose.msra.mxu0 0.0
    %4811 = vmatprep.subr.mxu0 0.0
    %4812 = vmatpush1.xpose.msra.mxu0 0.0
    %4813 = vmatprep.subr.mxu0 0.0
    %4814 = vmatpush1.xpose.msra.mxu0 0.0
    %4815 = vmatprep.subr.mxu0 0.0
    %4816 = vmatpush1.xpose.msra.mxu0 0.0
    %4817 = vmatprep.subr.mxu0 0.0
    %4818 = vmatpush1.xpose.msra.mxu0 0.0
    %4819 = vmatprep.subr.mxu0 0.0
    %4820 = vmatpush1.xpose.msra.mxu0 0.0
    %4821 = vmatprep.subr.mxu0 0.0
    %4822 = vmatpush1.xpose.msra.mxu0 0.0
    %4823 = vmatprep.subr.mxu0 0.0
    %4824 = vmatpush1.xpose.msra.mxu0 0.0
    %4825 = vmatprep.subr.mxu0 0.0
    %4826 = vmatpush1.xpose.msra.mxu0 0.0
    %4827 = vmatprep.subr.mxu0 0.0
    %4828 = vmatpush1.xpose.msra.mxu0 0.0
    %4829 = vmatprep.subr.mxu0 0.0
    %4830 = vmatpush1.xpose.msra.mxu0 0.0
    %4831 = vmatprep.subr.mxu0 0.0
    %4832 = vmatpush1.xpose.msra.mxu0 0.0
    %4833 = vmatprep.subr.mxu0 0.0
    %4834 = vmatpush1.xpose.msra.mxu0 0.0
    %4835 = vmatprep.subr.mxu0 0.0
    %4836 = vmatpush1.xpose.msra.mxu0 0.0
    %4837 = vmatprep.subr.mxu0 0.0
    %4838 = vmatpush1.xpose.msra.mxu0 0.0
    %4839 = vmatprep.subr.mxu0 0.0
    %4840 = vmatpush1.xpose.msra.mxu0 0.0
    %4841 = vmatprep.subr.mxu0 0.0
    %4842 = vmatpush1.xpose.msra.mxu0 0.0
    %4843 = vmatprep.subr.mxu0 0.0
    %4844 = vmatpush1.xpose.msra.mxu0 0.0
    %4845 = vmatprep.subr.mxu0 0.0
    %4846 = vmatpush1.xpose.msra.mxu0 0.0
    %4847 = vmatprep.subr.mxu0 0.0
    %4848 = vmatpush1.xpose.msra.mxu0 0.0
    %4849 = vmatprep.subr.mxu0 0.0
    %4850 = vmatpush1.xpose.msra.mxu0 0.0
    %4851 = vmatprep.subr.mxu0 0.0
    %4852 = vmatpush1.xpose.msra.mxu0 0.0
    %4853 = vmatprep.subr.mxu0 0.0
    %4854 = vmatpush1.xpose.msra.mxu0 0.0
    %4855 = vmatprep.subr.mxu0 0.0
    %4856 = vmatpush1.xpose.msra.mxu0 0.0
    %4857 = vmatprep.subr.mxu0 0.0
    %4858 = vmatpush1.xpose.msra.mxu0 0.0
    %4859 = vmatprep.subr.mxu0 0.0
    %4860 = vmatpush1.xpose.msra.mxu0 0.0
    %4861 = vmatprep.mubr.f32.mxu0 0.0
    %4862 = vmatmul.mubr.f32.gmra.mrb[0].mxu0 %v4789
    %v4863 = vpop.f32.mrb[0].mxu0
    %v4864 = vadd.f32 0.0, %v4863
    %v4865 = vpop.f32.mrb[0].mxu0
    %4866 = vmatprep.mubr.f32.mxu0 0.0
    %4867 = vmatmul.mubr.f32.gmra.mrb[0].mxu0 %v4791
    %v4868 = vpop.f32.mrb[0].mxu0
    %v4869 = vadd.f32 0.0, %v4868
    %v4870 = vpop.f32.mrb[0].mxu0
    %4871 = vdwg.mxu0
    %v4872 = vmul.f32 %v4864, 0.125
    %v4873 = vmul.f32 %v4869, 0.125
    %v4874 = vadd.f32 %v4872, %v147
    %v4875 = vadd.f32 %v4873, %v148
    %v4876 = vsel %vm991, %v4874, -inf
    %4877 = vmax.xlane.f32.xlu0 %v4876
    %v4878 = vpop.xlane.xlu0 %4877
    %v4879 = vsel %vm991, %v4875, -inf
    %4880 = vmax.xlane.f32.xlu0 %v4879
    %v4881 = vpop.xlane.xlu0 %4880
    %v4882 = vsub.f32 %v4874, %v4878
    %v4883 = vsub.f32 %v4875, %v4881
    %v4884 = vmul.f32 %v4882, 1.442695
    %v4885 = vpow.pop %v4884
    %v4886 = vmul.f32 %v4883, 1.442695
    %v4887 = vpow.pop %v4886
    %v4888 = vsel %vm991, %v4885, 0.0
    %4889 = vadd.xlane.f32.xlu0 %v4888
    %v4890 = vpop.xlane.xlu0 %4889
    %v4891 = vsel %vm991, %v4887, 0.0
    %4892 = vadd.xlane.f32.xlu0 %v4891
    %v4893 = vpop.xlane.xlu0 %4892
    %v4894 = vrcp.pop %v4890
    %v4895 = vrcp.pop %v4893
    %v4896 = vmul.f32 %v4890, %v4894
    %v4897 = vmul.f32 %v4893, %v4895
    %v4898 = vsub.f32 2.0, %v4896
    %v4899 = vsub.f32 2.0, %v4897
    %v4900 = vmul.f32 %v4894, %v4898
    %v4901 = vmul.f32 %v4895, %v4899
    %v4902 = vmul.f32 %v4885, %v4900
    %v4903 = vmul.f32 %v4887, %v4901
    %4906 = vrot.lane.b32.xlu0 %v3721, 64
    %v4907 = vpop.permute.xlu0 %4906
    %4908 = vrot.lane.b32.xlu0 %v3727, 64
    %v4909 = vpop.permute.xlu0 %4908
    %v4913 = vsel %vm991, %v4902, 0
    %v4916 = vsel %vm991, %v4903, 0
    %4918 = vmatprep.subr.mxu0 0.0
    %4919 = vmatpush1.msra.mxu0 %v4907
    %4920 = vmatprep.subr.mxu0 0.0
    %4921 = vmatpush1.msra.mxu0 %v4909
    %4922 = vmatprep.subr.mxu0 0.0
    %4923 = vmatpush1.msra.mxu0 0.0
    %4924 = vmatprep.subr.mxu0 0.0
    %4925 = vmatpush1.msra.mxu0 0.0
    %4926 = vmatprep.subr.mxu0 0.0
    %4927 = vmatpush1.msra.mxu0 0.0
    %4928 = vmatprep.subr.mxu0 0.0
    %4929 = vmatpush1.msra.mxu0 0.0
    %4930 = vmatprep.subr.mxu0 0.0
    %4931 = vmatpush1.msra.mxu0 0.0
    %4932 = vmatprep.subr.mxu0 0.0
    %4933 = vmatpush1.msra.mxu0 0.0
    %4934 = vmatprep.subr.mxu0 0.0
    %4935 = vmatpush1.msra.mxu0 0.0
    %4936 = vmatprep.subr.mxu0 0.0
    %4937 = vmatpush1.msra.mxu0 0.0
    %4938 = vmatprep.subr.mxu0 0.0
    %4939 = vmatpush1.msra.mxu0 0.0
    %4940 = vmatprep.subr.mxu0 0.0
    %4941 = vmatpush1.msra.mxu0 0.0
    %4942 = vmatprep.subr.mxu0 0.0
    %4943 = vmatpush1.msra.mxu0 0.0
    %4944 = vmatprep.subr.mxu0 0.0
    %4945 = vmatpush1.msra.mxu0 0.0
    %4946 = vmatprep.subr.mxu0 0.0
    %4947 = vmatpush1.msra.mxu0 0.0
    %4948 = vmatprep.subr.mxu0 0.0
    %4949 = vmatpush1.msra.mxu0 0.0
    %4950 = vmatprep.subr.mxu0 0.0
    %4951 = vmatpush1.msra.mxu0 0.0
    %4952 = vmatprep.subr.mxu0 0.0
    %4953 = vmatpush1.msra.mxu0 0.0
    %4954 = vmatprep.subr.mxu0 0.0
    %4955 = vmatpush1.msra.mxu0 0.0
    %4956 = vmatprep.subr.mxu0 0.0
    %4957 = vmatpush1.msra.mxu0 0.0
    %4958 = vmatprep.subr.mxu0 0.0
    %4959 = vmatpush1.msra.mxu0 0.0
    %4960 = vmatprep.subr.mxu0 0.0
    %4961 = vmatpush1.msra.mxu0 0.0
    %4962 = vmatprep.subr.mxu0 0.0
    %4963 = vmatpush1.msra.mxu0 0.0
    %4964 = vmatprep.subr.mxu0 0.0
    %4965 = vmatpush1.msra.mxu0 0.0
    %4966 = vmatprep.subr.mxu0 0.0
    %4967 = vmatpush1.msra.mxu0 0.0
    %4968 = vmatprep.subr.mxu0 0.0
    %4969 = vmatpush1.msra.mxu0 0.0
    %4970 = vmatprep.subr.mxu0 0.0
    %4971 = vmatpush1.msra.mxu0 0.0
    %4972 = vmatprep.subr.mxu0 0.0
    %4973 = vmatpush1.msra.mxu0 0.0
    %4974 = vmatprep.subr.mxu0 0.0
    %4975 = vmatpush1.msra.mxu0 0.0
    %4976 = vmatprep.subr.mxu0 0.0
    %4977 = vmatpush1.msra.mxu0 0.0
    %4978 = vmatprep.subr.mxu0 0.0
    %4979 = vmatpush1.msra.mxu0 0.0
    %4980 = vmatprep.subr.mxu0 0.0
    %4981 = vmatpush1.msra.mxu0 0.0
    %4982 = vmatprep.mubr.f32.mxu0 0.0
    %4983 = vmatmul.mubr.f32.gmra.mrb[0].mxu0 %v4913
    %v4984 = vpop.f32.mrb[0].mxu0
    %v4985 = vadd.f32 0.0, %v4984
    %v4986 = vpop.f32.mrb[0].mxu0
    %4987 = vmatprep.mubr.f32.mxu0 0.0
    %4988 = vmatmul.mubr.f32.gmra.mrb[0].mxu0 %v4916
    %v4989 = vpop.f32.mrb[0].mxu0
    %v4990 = vadd.f32 0.0, %v4989
    %v4991 = vpop.f32.mrb[0].mxu0
    %4992 = vdwg.mxu0
    %4995 = vrot.lane.b32.xlu0 %v4985, 64
    %v4996 = vpop.permute.xlu0 %4995
    %4997 = vrot.lane.b32.xlu0 %v4990, 64
    %v4998 = vpop.permute.xlu0 %4997
    %5001 = vst.msk [vmem:[#allocation2 + $0x10] sm:$0xff] %vm1323, %v4996
    %5002 = vst.msk [vmem:[#allocation2 + $0x30] sm:$0xff] %vm1323, %v4998
    %v5004 = vsel %vm899, %v3415, 0
    %v5007 = vsel %vm899, %v3421, 0
    %v5010 = vsel %vm899, %v3569, 0
    %v5013 = vsel %vm899, %v3575, 0
    %5015 = vmatprep.subr.mxu0 0.0
    %5016 = vmatpush1.xpose.msra.mxu0 %v5010
    %5017 = vmatprep.subr.mxu0 0.0
    %5018 = vmatpush1.xpose.msra.mxu0 %v5013
    %5019 = vmatprep.subr.mxu0 0.0
    %5020 = vmatpush1.xpose.msra.mxu0 0.0
    %5021 = vmatprep.subr.mxu0 0.0
    %5022 = vmatpush1.xpose.msra.mxu0 0.0
    %5023 = vmatprep.subr.mxu0 0.0
    %5024 = vmatpush1.xpose.msra.mxu0 0.0
    %5025 = vmatprep.subr.mxu0 0.0
    %5026 = vmatpush1.xpose.msra.mxu0 0.0
    %5027 = vmatprep.subr.mxu0 0.0
    %5028 = vmatpush1.xpose.msra.mxu0 0.0
    %5029 = vmatprep.subr.mxu0 0.0
    %5030 = vmatpush1.xpose.msra.mxu0 0.0
    %5031 = vmatprep.subr.mxu0 0.0
    %5032 = vmatpush1.xpose.msra.mxu0 0.0
    %5033 = vmatprep.subr.mxu0 0.0
    %5034 = vmatpush1.xpose.msra.mxu0 0.0
    %5035 = vmatprep.subr.mxu0 0.0
    %5036 = vmatpush1.xpose.msra.mxu0 0.0
    %5037 = vmatprep.subr.mxu0 0.0
    %5038 = vmatpush1.xpose.msra.mxu0 0.0
    %5039 = vmatprep.subr.mxu0 0.0
    %5040 = vmatpush1.xpose.msra.mxu0 0.0
    %5041 = vmatprep.subr.mxu0 0.0
    %5042 = vmatpush1.xpose.msra.mxu0 0.0
    %5043 = vmatprep.subr.mxu0 0.0
    %5044 = vmatpush1.xpose.msra.mxu0 0.0
    %5045 = vmatprep.subr.mxu0 0.0
    %5046 = vmatpush1.xpose.msra.mxu0 0.0
    %5047 = vmatprep.subr.mxu0 0.0
    %5048 = vmatpush1.xpose.msra.mxu0 0.0
    %5049 = vmatprep.subr.mxu0 0.0
    %5050 = vmatpush1.xpose.msra.mxu0 0.0
    %5051 = vmatprep.subr.mxu0 0.0
    %5052 = vmatpush1.xpose.msra.mxu0 0.0
    %5053 = vmatprep.subr.mxu0 0.0
    %5054 = vmatpush1.xpose.msra.mxu0 0.0
    %5055 = vmatprep.subr.mxu0 0.0
    %5056 = vmatpush1.xpose.msra.mxu0 0.0
    %5057 = vmatprep.subr.mxu0 0.0
    %5058 = vmatpush1.xpose.msra.mxu0 0.0
    %5059 = vmatprep.subr.mxu0 0.0
    %5060 = vmatpush1.xpose.msra.mxu0 0.0
    %5061 = vmatprep.subr.mxu0 0.0
    %5062 = vmatpush1.xpose.msra.mxu0 0.0
    %5063 = vmatprep.subr.mxu0 0.0
    %5064 = vmatpush1.xpose.msra.mxu0 0.0
    %5065 = vmatprep.subr.mxu0 0.0
    %5066 = vmatpush1.xpose.msra.mxu0 0.0
    %5067 = vmatprep.subr.mxu0 0.0
    %5068 = vmatpush1.xpose.msra.mxu0 0.0
    %5069 = vmatprep.subr.mxu0 0.0
    %5070 = vmatpush1.xpose.msra.mxu0 0.0
    %5071 = vmatprep.subr.mxu0 0.0
    %5072 = vmatpush1.xpose.msra.mxu0 0.0
    %5073 = vmatprep.subr.mxu0 0.0
    %5074 = vmatpush1.xpose.msra.mxu0 0.0
    %5075 = vmatprep.subr.mxu0 0.0
    %5076 = vmatpush1.xpose.msra.mxu0 0.0
    %5077 = vmatprep.subr.mxu0 0.0
    %5078 = vmatpush1.xpose.msra.mxu0 0.0
    %5079 = vmatprep.mubr.f32.mxu0 0.0
    %5080 = vmatmul.mubr.f32.gmra.mrb[0].mxu0 %v5004
    %v5081 = vpop.f32.mrb[0].mxu0
    %v5082 = vadd.f32 0.0, %v5081
    %v5083 = vpop.f32.mrb[0].mxu0
    %5084 = vmatprep.mubr.f32.mxu0 0.0
    %5085 = vmatmul.mubr.f32.gmra.mrb[0].mxu0 %v5007
    %v5086 = vpop.f32.mrb[0].mxu0
    %v5087 = vadd.f32 0.0, %v5086
    %v5088 = vpop.f32.mrb[0].mxu0
    %5089 = vdwg.mxu0
    %v5090 = vmul.f32 %v5082, 0.125
    %v5091 = vmul.f32 %v5087, 0.125
    %v5092 = vadd.f32 %v5090, %v147
    %v5093 = vadd.f32 %v5091, %v148
    %v5094 = vsel %vm991, %v5092, -inf
    %5095 = vmax.xlane.f32.xlu0 %v5094
    %v5096 = vpop.xlane.xlu0 %5095
    %v5097 = vsel %vm991, %v5093, -inf
    %5098 = vmax.xlane.f32.xlu0 %v5097
    %v5099 = vpop.xlane.xlu0 %5098
    %v5100 = vsub.f32 %v5092, %v5096
    %v5101 = vsub.f32 %v5093, %v5099
    %v5102 = vmul.f32 %v5100, 1.442695
    %v5103 = vpow.pop %v5102
    %v5104 = vmul.f32 %v5101, 1.442695
    %v5105 = vpow.pop %v5104
    %v5106 = vsel %vm991, %v5103, 0.0
    %5107 = vadd.xlane.f32.xlu0 %v5106
    %v5108 = vpop.xlane.xlu0 %5107
    %v5109 = vsel %vm991, %v5105, 0.0
    %5110 = vadd.xlane.f32.xlu0 %v5109
    %v5111 = vpop.xlane.xlu0 %5110
    %v5112 = vrcp.pop %v5108
    %v5113 = vrcp.pop %v5111
    %v5114 = vmul.f32 %v5108, %v5112
    %v5115 = vmul.f32 %v5111, %v5113
    %v5116 = vsub.f32 2.0, %v5114
    %v5117 = vsub.f32 2.0, %v5115
    %v5118 = vmul.f32 %v5112, %v5116
    %v5119 = vmul.f32 %v5113, %v5117
    %v5120 = vmul.f32 %v5103, %v5118
    %v5121 = vmul.f32 %v5105, %v5119
    %v5123 = vsel %vm991, %v5120, 0
    %v5126 = vsel %vm991, %v5121, 0
    %5128 = vmatprep.subr.mxu0 0.0
    %5129 = vmatpush1.msra.mxu0 %v3723
    %5130 = vmatprep.subr.mxu0 0.0
    %5131 = vmatpush1.msra.mxu0 %v3729
    %5132 = vmatprep.subr.mxu0 0.0
    %5133 = vmatpush1.msra.mxu0 0.0
    %5134 = vmatprep.subr.mxu0 0.0
    %5135 = vmatpush1.msra.mxu0 0.0
    %5136 = vmatprep.subr.mxu0 0.0
    %5137 = vmatpush1.msra.mxu0 0.0
    %5138 = vmatprep.subr.mxu0 0.0
    %5139 = vmatpush1.msra.mxu0 0.0
    %5140 = vmatprep.subr.mxu0 0.0
    %5141 = vmatpush1.msra.mxu0 0.0
    %5142 = vmatprep.subr.mxu0 0.0
    %5143 = vmatpush1.msra.mxu0 0.0
    %5144 = vmatprep.subr.mxu0 0.0
    %5145 = vmatpush1.msra.mxu0 0.0
    %5146 = vmatprep.subr.mxu0 0.0
    %5147 = vmatpush1.msra.mxu0 0.0
    %5148 = vmatprep.subr.mxu0 0.0
    %5149 = vmatpush1.msra.mxu0 0.0
    %5150 = vmatprep.subr.mxu0 0.0
    %5151 = vmatpush1.msra.mxu0 0.0
    %5152 = vmatprep.subr.mxu0 0.0
    %5153 = vmatpush1.msra.mxu0 0.0
    %5154 = vmatprep.subr.mxu0 0.0
    %5155 = vmatpush1.msra.mxu0 0.0
    %5156 = vmatprep.subr.mxu0 0.0
    %5157 = vmatpush1.msra.mxu0 0.0
    %5158 = vmatprep.subr.mxu0 0.0
    %5159 = vmatpush1.msra.mxu0 0.0
    %5160 = vmatprep.subr.mxu0 0.0
    %5161 = vmatpush1.msra.mxu0 0.0
    %5162 = vmatprep.subr.mxu0 0.0
    %5163 = vmatpush1.msra.mxu0 0.0
    %5164 = vmatprep.subr.mxu0 0.0
    %5165 = vmatpush1.msra.mxu0 0.0
    %5166 = vmatprep.subr.mxu0 0.0
    %5167 = vmatpush1.msra.mxu0 0.0
    %5168 = vmatprep.subr.mxu0 0.0
    %5169 = vmatpush1.msra.mxu0 0.0
    %5170 = vmatprep.subr.mxu0 0.0
    %5171 = vmatpush1.msra.mxu0 0.0
    %5172 = vmatprep.subr.mxu0 0.0
    %5173 = vmatpush1.msra.mxu0 0.0
    %5174 = vmatprep.subr.mxu0 0.0
    %5175 = vmatpush1.msra.mxu0 0.0
    %5176 = vmatprep.subr.mxu0 0.0
    %5177 = vmatpush1.msra.mxu0 0.0
    %5178 = vmatprep.subr.mxu0 0.0
    %5179 = vmatpush1.msra.mxu0 0.0
    %5180 = vmatprep.subr.mxu0 0.0
    %5181 = vmatpush1.msra.mxu0 0.0
    %5182 = vmatprep.subr.mxu0 0.0
    %5183 = vmatpush1.msra.mxu0 0.0
    %5184 = vmatprep.subr.mxu0 0.0
    %5185 = vmatpush1.msra.mxu0 0.0
    %5186 = vmatprep.subr.mxu0 0.0
    %5187 = vmatpush1.msra.mxu0 0.0
    %5188 = vmatprep.subr.mxu0 0.0
    %5189 = vmatpush1.msra.mxu0 0.0
    %5190 = vmatprep.subr.mxu0 0.0
    %5191 = vmatpush1.msra.mxu0 0.0
    %5192 = vmatprep.mubr.f32.mxu0 0.0
    %5193 = vmatmul.mubr.f32.gmra.mrb[0].mxu0 %v5123
    %v5194 = vpop.f32.mrb[0].mxu0
    %v5195 = vadd.f32 0.0, %v5194
    %v5196 = vpop.f32.mrb[0].mxu0
    %5197 = vmatprep.mubr.f32.mxu0 0.0
    %5198 = vmatmul.mubr.f32.gmra.mrb[0].mxu0 %v5126
    %v5199 = vpop.f32.mrb[0].mxu0
    %v5200 = vadd.f32 0.0, %v5199
    %v5201 = vpop.f32.mrb[0].mxu0
    %5202 = vdwg.mxu0
    %5203 = vst.msk [vmem:[#allocation2 + $0x18] sm:$0xff] %vm899, %v5195
    %5204 = vst.msk [vmem:[#allocation2 + $0x38] sm:$0xff] %vm899, %v5200
    %5205 = vrot.lane.b32.xlu0 %v3415, 64
    %v5206 = vpop.permute.xlu0 %5205
    %5207 = vrot.lane.b32.xlu0 %v3421, 64
    %v5208 = vpop.permute.xlu0 %5207
    %5209 = vrot.lane.b32.xlu0 %v3569, 64
    %v5210 = vpop.permute.xlu0 %5209
    %5211 = vrot.lane.b32.xlu0 %v3575, 64
    %v5212 = vpop.permute.xlu0 %5211
    %v5213 = vsel %vm899, %v5206, 0
    %v5215 = vsel %vm899, %v5208, 0
    %v5217 = vsel %vm899, %v5210, 0
    %v5219 = vsel %vm899, %v5212, 0
    %5221 = vmatprep.subr.mxu0 0.0
    %5222 = vmatpush1.xpose.msra.mxu0 %v5217
    %5223 = vmatprep.subr.mxu0 0.0
    %5224 = vmatpush1.xpose.msra.mxu0 %v5219
    %5225 = vmatprep.subr.mxu0 0.0
    %5226 = vmatpush1.xpose.msra.mxu0 0.0
    %5227 = vmatprep.subr.mxu0 0.0
    %5228 = vmatpush1.xpose.msra.mxu0 0.0
    %5229 = vmatprep.subr.mxu0 0.0
    %5230 = vmatpush1.xpose.msra.mxu0 0.0
    %5231 = vmatprep.subr.mxu0 0.0
    %5232 = vmatpush1.xpose.msra.mxu0 0.0
    %5233 = vmatprep.subr.mxu0 0.0
    %5234 = vmatpush1.xpose.msra.mxu0 0.0
    %5235 = vmatprep.subr.mxu0 0.0
    %5236 = vmatpush1.xpose.msra.mxu0 0.0
    %5237 = vmatprep.subr.mxu0 0.0
    %5238 = vmatpush1.xpose.msra.mxu0 0.0
    %5239 = vmatprep.subr.mxu0 0.0
    %5240 = vmatpush1.xpose.msra.mxu0 0.0
    %5241 = vmatprep.subr.mxu0 0.0
    %5242 = vmatpush1.xpose.msra.mxu0 0.0
    %5243 = vmatprep.subr.mxu0 0.0
    %5244 = vmatpush1.xpose.msra.mxu0 0.0
    %5245 = vmatprep.subr.mxu0 0.0
    %5246 = vmatpush1.xpose.msra.mxu0 0.0
    %5247 = vmatprep.subr.mxu0 0.0
    %5248 = vmatpush1.xpose.msra.mxu0 0.0
    %5249 = vmatprep.subr.mxu0 0.0
    %5250 = vmatpush1.xpose.msra.mxu0 0.0
    %5251 = vmatprep.subr.mxu0 0.0
    %5252 = vmatpush1.xpose.msra.mxu0 0.0
    %5253 = vmatprep.subr.mxu0 0.0
    %5254 = vmatpush1.xpose.msra.mxu0 0.0
    %5255 = vmatprep.subr.mxu0 0.0
    %5256 = vmatpush1.xpose.msra.mxu0 0.0
    %5257 = vmatprep.subr.mxu0 0.0
    %5258 = vmatpush1.xpose.msra.mxu0 0.0
    %5259 = vmatprep.subr.mxu0 0.0
    %5260 = vmatpush1.xpose.msra.mxu0 0.0
    %5261 = vmatprep.subr.mxu0 0.0
    %5262 = vmatpush1.xpose.msra.mxu0 0.0
    %5263 = vmatprep.subr.mxu0 0.0
    %5264 = vmatpush1.xpose.msra.mxu0 0.0
    %5265 = vmatprep.subr.mxu0 0.0
    %5266 = vmatpush1.xpose.msra.mxu0 0.0
    %5267 = vmatprep.subr.mxu0 0.0
    %5268 = vmatpush1.xpose.msra.mxu0 0.0
    %5269 = vmatprep.subr.mxu0 0.0
    %5270 = vmatpush1.xpose.msra.mxu0 0.0
    %5271 = vmatprep.subr.mxu0 0.0
    %5272 = vmatpush1.xpose.msra.mxu0 0.0
    %5273 = vmatprep.subr.mxu0 0.0
    %5274 = vmatpush1.xpose.msra.mxu0 0.0
    %5275 = vmatprep.subr.mxu0 0.0
    %5276 = vmatpush1.xpose.msra.mxu0 0.0
    %5277 = vmatprep.subr.mxu0 0.0
    %5278 = vmatpush1.xpose.msra.mxu0 0.0
    %5279 = vmatprep.subr.mxu0 0.0
    %5280 = vmatpush1.xpose.msra.mxu0 0.0
    %5281 = vmatprep.subr.mxu0 0.0
    %5282 = vmatpush1.xpose.msra.mxu0 0.0
    %5283 = vmatprep.subr.mxu0 0.0
    %5284 = vmatpush1.xpose.msra.mxu0 0.0
    %5285 = vmatprep.mubr.f32.mxu0 0.0
    %5286 = vmatmul.mubr.f32.gmra.mrb[0].mxu0 %v5213
    %v5287 = vpop.f32.mrb[0].mxu0
    %v5288 = vadd.f32 0.0, %v5287
    %v5289 = vpop.f32.mrb[0].mxu0
    %5290 = vmatprep.mubr.f32.mxu0 0.0
    %5291 = vmatmul.mubr.f32.gmra.mrb[0].mxu0 %v5215
    %v5292 = vpop.f32.mrb[0].mxu0
    %v5293 = vadd.f32 0.0, %v5292
    %v5294 = vpop.f32.mrb[0].mxu0
    %5295 = vdwg.mxu0
    %v5296 = vmul.f32 %v5288, 0.125
    %v5297 = vmul.f32 %v5293, 0.125
    %v5298 = vadd.f32 %v5296, %v147
    %v5299 = vadd.f32 %v5297, %v148
    %v5300 = vsel %vm991, %v5298, -inf
    %5301 = vmax.xlane.f32.xlu0 %v5300
    %v5302 = vpop.xlane.xlu0 %5301
    %v5303 = vsel %vm991, %v5299, -inf
    %5304 = vmax.xlane.f32.xlu0 %v5303
    %v5305 = vpop.xlane.xlu0 %5304
    %v5306 = vsub.f32 %v5298, %v5302
    %v5307 = vsub.f32 %v5299, %v5305
    %v5308 = vmul.f32 %v5306, 1.442695
    %v5309 = vpow.pop %v5308
    %v5310 = vmul.f32 %v5307, 1.442695
    %v5311 = vpow.pop %v5310
    %v5312 = vsel %vm991, %v5309, 0.0
    %5313 = vadd.xlane.f32.xlu0 %v5312
    %v5314 = vpop.xlane.xlu0 %5313
    %v5315 = vsel %vm991, %v5311, 0.0
    %5316 = vadd.xlane.f32.xlu0 %v5315
    %v5317 = vpop.xlane.xlu0 %5316
    %v5318 = vrcp.pop %v5314
    %v5319 = vrcp.pop %v5317
    %v5320 = vmul.f32 %v5314, %v5318
    %v5321 = vmul.f32 %v5317, %v5319
    %v5322 = vsub.f32 2.0, %v5320
    %v5323 = vsub.f32 2.0, %v5321
    %v5324 = vmul.f32 %v5318, %v5322
    %v5325 = vmul.f32 %v5319, %v5323
    %v5326 = vmul.f32 %v5309, %v5324
    %v5327 = vmul.f32 %v5311, %v5325
    %5330 = vrot.lane.b32.xlu0 %v3723, 64
    %v5331 = vpop.permute.xlu0 %5330
    %5332 = vrot.lane.b32.xlu0 %v3729, 64
    %v5333 = vpop.permute.xlu0 %5332
    %v5337 = vsel %vm991, %v5326, 0
    %v5340 = vsel %vm991, %v5327, 0
    %5342 = vmatprep.subr.mxu0 0.0
    %5343 = vmatpush1.msra.mxu0 %v5331
    %5344 = vmatprep.subr.mxu0 0.0
    %5345 = vmatpush1.msra.mxu0 %v5333
    %5346 = vmatprep.subr.mxu0 0.0
    %5347 = vmatpush1.msra.mxu0 0.0
    %5348 = vmatprep.subr.mxu0 0.0
    %5349 = vmatpush1.msra.mxu0 0.0
    %5350 = vmatprep.subr.mxu0 0.0
    %5351 = vmatpush1.msra.mxu0 0.0
    %5352 = vmatprep.subr.mxu0 0.0
    %5353 = vmatpush1.msra.mxu0 0.0
    %5354 = vmatprep.subr.mxu0 0.0
    %5355 = vmatpush1.msra.mxu0 0.0
    %5356 = vmatprep.subr.mxu0 0.0
    %5357 = vmatpush1.msra.mxu0 0.0
    %5358 = vmatprep.subr.mxu0 0.0
    %5359 = vmatpush1.msra.mxu0 0.0
    %5360 = vmatprep.subr.mxu0 0.0
    %5361 = vmatpush1.msra.mxu0 0.0
    %5362 = vmatprep.subr.mxu0 0.0
    %5363 = vmatpush1.msra.mxu0 0.0
    %5364 = vmatprep.subr.mxu0 0.0
    %5365 = vmatpush1.msra.mxu0 0.0
    %5366 = vmatprep.subr.mxu0 0.0
    %5367 = vmatpush1.msra.mxu0 0.0
    %5368 = vmatprep.subr.mxu0 0.0
    %5369 = vmatpush1.msra.mxu0 0.0
    %5370 = vmatprep.subr.mxu0 0.0
    %5371 = vmatpush1.msra.mxu0 0.0
    %5372 = vmatprep.subr.mxu0 0.0
    %5373 = vmatpush1.msra.mxu0 0.0
    %5374 = vmatprep.subr.mxu0 0.0
    %5375 = vmatpush1.msra.mxu0 0.0
    %5376 = vmatprep.subr.mxu0 0.0
    %5377 = vmatpush1.msra.mxu0 0.0
    %5378 = vmatprep.subr.mxu0 0.0
    %5379 = vmatpush1.msra.mxu0 0.0
    %5380 = vmatprep.subr.mxu0 0.0
    %5381 = vmatpush1.msra.mxu0 0.0
    %5382 = vmatprep.subr.mxu0 0.0
    %5383 = vmatpush1.msra.mxu0 0.0
    %5384 = vmatprep.subr.mxu0 0.0
    %5385 = vmatpush1.msra.mxu0 0.0
    %5386 = vmatprep.subr.mxu0 0.0
    %5387 = vmatpush1.msra.mxu0 0.0
    %5388 = vmatprep.subr.mxu0 0.0
    %5389 = vmatpush1.msra.mxu0 0.0
    %5390 = vmatprep.subr.mxu0 0.0
    %5391 = vmatpush1.msra.mxu0 0.0
    %5392 = vmatprep.subr.mxu0 0.0
    %5393 = vmatpush1.msra.mxu0 0.0
    %5394 = vmatprep.subr.mxu0 0.0
    %5395 = vmatpush1.msra.mxu0 0.0
    %5396 = vmatprep.subr.mxu0 0.0
    %5397 = vmatpush1.msra.mxu0 0.0
    %5398 = vmatprep.subr.mxu0 0.0
    %5399 = vmatpush1.msra.mxu0 0.0
    %5400 = vmatprep.subr.mxu0 0.0
    %5401 = vmatpush1.msra.mxu0 0.0
    %5402 = vmatprep.subr.mxu0 0.0
    %5403 = vmatpush1.msra.mxu0 0.0
    %5404 = vmatprep.subr.mxu0 0.0
    %5405 = vmatpush1.msra.mxu0 0.0
    %5406 = vmatprep.mubr.f32.mxu0 0.0
    %5407 = vmatmul.mubr.f32.gmra.mrb[0].mxu0 %v5337
    %v5408 = vpop.f32.mrb[0].mxu0
    %v5409 = vadd.f32 0.0, %v5408
    %v5410 = vpop.f32.mrb[0].mxu0
    %5411 = vmatprep.mubr.f32.mxu0 0.0
    %5412 = vmatmul.mubr.f32.gmra.mrb[0].mxu0 %v5340
    %v5413 = vpop.f32.mrb[0].mxu0
    %v5414 = vadd.f32 0.0, %v5413
    %v5415 = vpop.f32.mrb[0].mxu0
    %5416 = vdwg.mxu0
    %5419 = vrot.lane.b32.xlu0 %v5409, 64
    %v5420 = vpop.permute.xlu0 %5419
    %5421 = vrot.lane.b32.xlu0 %v5414, 64
    %v5422 = vpop.permute.xlu0 %5421
    %5425 = vst.msk [vmem:[#allocation2 + $0x18] sm:$0xff] %vm1323, %v5420
    %5426 = vst.msk [vmem:[#allocation2 + $0x38] sm:$0xff] %vm1323, %v5422
    %v5427 = vld [vmem:[#allocation2] sm:$0xff]
    %v5428 = vld [vmem:[#allocation2 + $0x8] sm:$0xff]
    %v5429 = vld [vmem:[#allocation2 + $0x10] sm:$0xff]
    %v5430 = vld [vmem:[#allocation2 + $0x18] sm:$0xff]
    %v5431 = vld [vmem:[#allocation2 + $0x20] sm:$0xff]
    %v5432 = vld [vmem:[#allocation2 + $0x28] sm:$0xff]
    %v5433 = vld [vmem:[#allocation2 + $0x30] sm:$0xff]
    %v5434 = vld [vmem:[#allocation2 + $0x38] sm:$0xff]
    %5435 = vmatprep.subr.mxu0 0.0
    %5436 = vmatpush1.msra.mxu0 %v3119
    %5437 = vmatprep.subr.mxu0 0.0
    %5438 = vmatpush1.msra.mxu0 %v3120
    %5439 = vmatprep.subr.mxu0 0.0
    %5440 = vmatpush1.msra.mxu0 %v3121
    %5441 = vmatprep.subr.mxu0 0.0
    %5442 = vmatpush1.msra.mxu0 %v3122
    %5443 = vmatprep.subr.mxu0 0.0
    %5444 = vmatpush1.msra.mxu0 %v3123
    %5445 = vmatprep.subr.mxu0 0.0
    %5446 = vmatpush1.msra.mxu0 %v3124
    %5447 = vmatprep.subr.mxu0 0.0
    %5448 = vmatpush1.msra.mxu0 %v3125
    %5449 = vmatprep.subr.mxu0 0.0
    %5450 = vmatpush1.msra.mxu0 %v3126
    %5451 = vmatprep.subr.mxu0 0.0
    %5452 = vmatpush1.msra.mxu0 %v3127
    %5453 = vmatprep.subr.mxu0 0.0
    %5454 = vmatpush1.msra.mxu0 %v3128
    %5455 = vmatprep.subr.mxu0 0.0
    %5456 = vmatpush1.msra.mxu0 %v3129
    %5457 = vmatprep.subr.mxu0 0.0
    %5458 = vmatpush1.msra.mxu0 %v3130
    %5459 = vmatprep.subr.mxu0 0.0
    %5460 = vmatpush1.msra.mxu0 %v3131
    %5461 = vmatprep.subr.mxu0 0.0
    %5462 = vmatpush1.msra.mxu0 %v3132
    %5463 = vmatprep.subr.mxu0 0.0
    %5464 = vmatpush1.msra.mxu0 %v3133
    %5465 = vmatprep.subr.mxu0 0.0
    %5466 = vmatpush1.msra.mxu0 %v3134
    %5467 = vmatprep.subr.mxu0 0.0
    %5468 = vmatpush1.msra.mxu0 %v3135
    %5469 = vmatprep.subr.mxu0 0.0
    %5470 = vmatpush1.msra.mxu0 %v3136
    %5471 = vmatprep.subr.mxu0 0.0
    %5472 = vmatpush1.msra.mxu0 %v3137
    %5473 = vmatprep.subr.mxu0 0.0
    %5474 = vmatpush1.msra.mxu0 %v3138
    %5475 = vmatprep.subr.mxu0 0.0
    %5476 = vmatpush1.msra.mxu0 %v3139
    %5477 = vmatprep.subr.mxu0 0.0
    %5478 = vmatpush1.msra.mxu0 %v3140
    %5479 = vmatprep.subr.mxu0 0.0
    %5480 = vmatpush1.msra.mxu0 %v3141
    %5481 = vmatprep.subr.mxu0 0.0
    %5482 = vmatpush1.msra.mxu0 %v3142
    %5483 = vmatprep.subr.mxu0 0.0
    %5484 = vmatpush1.msra.mxu0 %v3143
    %5485 = vmatprep.subr.mxu0 0.0
    %5486 = vmatpush1.msra.mxu0 %v3144
    %5487 = vmatprep.subr.mxu0 0.0
    %5488 = vmatpush1.msra.mxu0 %v3145
    %5489 = vmatprep.subr.mxu0 0.0
    %5490 = vmatpush1.msra.mxu0 %v3146
    %5491 = vmatprep.subr.mxu0 0.0
    %5492 = vmatpush1.msra.mxu0 %v3147
    %5493 = vmatprep.subr.mxu0 0.0
    %5494 = vmatpush1.msra.mxu0 %v3148
    %5495 = vmatprep.subr.mxu0 0.0
    %5496 = vmatpush1.msra.mxu0 %v3149
    %5497 = vmatprep.subr.mxu0 0.0
    %5498 = vmatpush1.msra.mxu0 %v3150
    %5499 = vmatprep.mubr.f32.mxu0 %v5428
    %5500 = vmatmul.mubr.f32.gmra.mrb[0].mxu0 %v5427
    %v5501 = vpop.f32.mrb[0].mxu0
    %v5502 = vadd.f32 0.0, %v5501
    %v5503 = vpop.f32.mrb[0].mxu0
    %5504 = vmatprep.mubr.f32.mxu0 %v5432
    %5505 = vmatmul.mubr.f32.gmra.mrb[0].mxu0 %v5431
    %v5506 = vpop.f32.mrb[0].mxu0
    %v5507 = vadd.f32 0.0, %v5506
    %v5508 = vpop.f32.mrb[0].mxu0
    %5509 = vdwg.mxu0
    %5510 = vmatprep.subr.mxu0 0.0
    %5511 = vmatpush1.msra.mxu0 %v3151
    %5512 = vmatprep.subr.mxu0 0.0
    %5513 = vmatpush1.msra.mxu0 %v3152
    %5514 = vmatprep.subr.mxu0 0.0
    %5515 = vmatpush1.msra.mxu0 %v3153
    %5516 = vmatprep.subr.mxu0 0.0
    %5517 = vmatpush1.msra.mxu0 %v3154
    %5518 = vmatprep.subr.mxu0 0.0
    %5519 = vmatpush1.msra.mxu0 %v3155
    %5520 = vmatprep.subr.mxu0 0.0
    %5521 = vmatpush1.msra.mxu0 %v3156
    %5522 = vmatprep.subr.mxu0 0.0
    %5523 = vmatpush1.msra.mxu0 %v3157
    %5524 = vmatprep.subr.mxu0 0.0
    %5525 = vmatpush1.msra.mxu0 %v3158
    %5526 = vmatprep.subr.mxu0 0.0
    %5527 = vmatpush1.msra.mxu0 %v3159
    %5528 = vmatprep.subr.mxu0 0.0
    %5529 = vmatpush1.msra.mxu0 %v3160
    %5530 = vmatprep.subr.mxu0 0.0
    %5531 = vmatpush1.msra.mxu0 %v3161
    %5532 = vmatprep.subr.mxu0 0.0
    %5533 = vmatpush1.msra.mxu0 %v3162
    %5534 = vmatprep.subr.mxu0 0.0
    %5535 = vmatpush1.msra.mxu0 %v3163
    %5536 = vmatprep.subr.mxu0 0.0
    %5537 = vmatpush1.msra.mxu0 %v3164
    %5538 = vmatprep.subr.mxu0 0.0
    %5539 = vmatpush1.msra.mxu0 %v3165
    %5540 = vmatprep.subr.mxu0 0.0
    %5541 = vmatpush1.msra.mxu0 %v3166
    %5542 = vmatprep.subr.mxu0 0.0
    %5543 = vmatpush1.msra.mxu0 %v3167
    %5544 = vmatprep.subr.mxu0 0.0
    %5545 = vmatpush1.msra.mxu0 %v3168
    %5546 = vmatprep.subr.mxu0 0.0
    %5547 = vmatpush1.msra.mxu0 %v3169
    %5548 = vmatprep.subr.mxu0 0.0
    %5549 = vmatpush1.msra.mxu0 %v3170
    %5550 = vmatprep.subr.mxu0 0.0
    %5551 = vmatpush1.msra.mxu0 %v3171
    %5552 = vmatprep.subr.mxu0 0.0
    %5553 = vmatpush1.msra.mxu0 %v3172
    %5554 = vmatprep.subr.mxu0 0.0
    %5555 = vmatpush1.msra.mxu0 %v3173
    %5556 = vmatprep.subr.mxu0 0.0
    %5557 = vmatpush1.msra.mxu0 %v3174
    %5558 = vmatprep.subr.mxu0 0.0
    %5559 = vmatpush1.msra.mxu0 %v3175
    %5560 = vmatprep.subr.mxu0 0.0
    %5561 = vmatpush1.msra.mxu0 %v3176
    %5562 = vmatprep.subr.mxu0 0.0
    %5563 = vmatpush1.msra.mxu0 %v3177
    %5564 = vmatprep.subr.mxu0 0.0
    %5565 = vmatpush1.msra.mxu0 %v3178
    %5566 = vmatprep.subr.mxu0 0.0
    %5567 = vmatpush1.msra.mxu0 %v3179
    %5568 = vmatprep.subr.mxu0 0.0
    %5569 = vmatpush1.msra.mxu0 %v3180
    %5570 = vmatprep.subr.mxu0 0.0
    %5571 = vmatpush1.msra.mxu0 %v3181
    %5572 = vmatprep.subr.mxu0 0.0
    %5573 = vmatpush1.msra.mxu0 %v3182
    %5574 = vmatprep.mubr.f32.mxu0 %v5430
    %5575 = vmatmul.mubr.f32.gmra.mrb[0].mxu0 %v5429
    %v5576 = vpop.f32.mrb[0].mxu0
    %v5577 = vadd.f32 %v5502, %v5576
    %v5578 = vpop.f32.mrb[0].mxu0
    %5579 = vmatprep.mubr.f32.mxu0 %v5434
    %5580 = vmatmul.mubr.f32.gmra.mrb[0].mxu0 %v5433
    %v5581 = vpop.f32.mrb[0].mxu0
    %v5582 = vadd.f32 %v5507, %v5581
    %v5583 = vpop.f32.mrb[0].mxu0
    %5584 = vdwg.mxu0
    %v5585 = vadd.f32 %v2979, %v5577
    %v5586 = vadd.f32 %v2980, %v5582
    %v5587 = vlaneseq
    %v5588 = vshrl.u32 %v5587, 7
    %v5589 = vsub.s32 1, %v5588
    %v5590 = vrot.slane %v150, %v5589
    %v5591 = vadd.f32 %v5585, %v5590
    %v5592 = vadd.f32 %v5586, %v5590
    %v5593 = vsel %vm391, %v5591, 0.0
    %5594 = vadd.xlane.f32.xlu0 %v5593
    %v5595 = vpop.xlane.xlu0 %5594
    %v5596 = vsel %vm391, %v5592, 0.0
    %5597 = vadd.xlane.f32.xlu0 %v5596
    %v5598 = vpop.xlane.xlu0 %5597
    %v5599 = vmul.f32 %v5595, %v398
    %v5600 = vmul.f32 %v5598, %v398
    %v5601 = vsub.f32 %v5591, %v5599
    %v5602 = vsub.f32 %v5592, %v5600
    %v5603 = vmul.f32 %v5601, %v5601
    %v5604 = vmul.f32 %v5602, %v5602
    %v5605 = vsel %vm391, %v5603, 0.0
    %5606 = vadd.xlane.f32.xlu0 %v5605
    %v5607 = vpop.xlane.xlu0 %5606
    %v5608 = vsel %vm391, %v5604, 0.0
    %5609 = vadd.xlane.f32.xlu0 %v5608
    %v5610 = vpop.xlane.xlu0 %5609
    %v5611 = vmul.f32 %v5607, %v398
    %v5612 = vmul.f32 %v5610, %v398
    %v5613 = vadd.f32 %v5611, 1e-05
    %v5614 = vadd.f32 %v5612, 1e-05
    %v5615 = vrsqrt.pop %v5613
    %v5616 = vrsqrt.pop %v5614
    %v5617 = vmul.f32 %v5601, %v5615
    %v5618 = vmul.f32 %v5602, %v5616
    %v5619 = vlaneseq
    %v5620 = vshrl.u32 %v5619, 7
    %v5621 = vsub.s32 2, %v5620
    %v5622 = vrot.slane %v150, %v5621
    %v5623 = vmul.f32 %v5617, %v5622
    %v5624 = vmul.f32 %v5618, %v5622
    %v5625 = vlaneseq
    %v5626 = vshrl.u32 %v5625, 7
    %v5627 = vsub.s32 3, %v5626
    %v5628 = vrot.slane %v150, %v5627
    %v5629 = vadd.f32 %v5623, %v5628
    %v5630 = vadd.f32 %v5624, %v5628
    %v5631 = vlaneseq
    %v5632 = vshrl.u32 %v5631, 7
    %v5633 = vsub.s32 5, %v5632
    %v5634 = vrot.slane %v150, %v5633
    %v5636 = vsel %vm391, %v5629, 0
    %v5639 = vsel %vm391, %v5630, 0
    %5641 = vmatprep.subr.mxu0 0.0
    %5642 = vmatpush1.msra.mxu0 %v3188
    %5643 = vmatprep.subr.mxu0 0.0
    %5644 = vmatpush1.msra.mxu0 %v3189
    %5645 = vmatprep.subr.mxu0 0.0
    %5646 = vmatpush1.msra.mxu0 %v3190
    %5647 = vmatprep.subr.mxu0 0.0
    %5648 = vmatpush1.msra.mxu0 %v3191
    %5649 = vmatprep.subr.mxu0 0.0
    %5650 = vmatpush1.msra.mxu0 0.0
    %5651 = vmatprep.subr.mxu0 0.0
    %5652 = vmatpush1.msra.mxu0 0.0
    %5653 = vmatprep.subr.mxu0 0.0
    %5654 = vmatpush1.msra.mxu0 0.0
    %5655 = vmatprep.subr.mxu0 0.0
    %5656 = vmatpush1.msra.mxu0 0.0
    %5657 = vmatprep.subr.mxu0 0.0
    %5658 = vmatpush1.msra.mxu0 0.0
    %5659 = vmatprep.subr.mxu0 0.0
    %5660 = vmatpush1.msra.mxu0 0.0
    %5661 = vmatprep.subr.mxu0 0.0
    %5662 = vmatpush1.msra.mxu0 0.0
    %5663 = vmatprep.subr.mxu0 0.0
    %5664 = vmatpush1.msra.mxu0 0.0
    %5665 = vmatprep.subr.mxu0 0.0
    %5666 = vmatpush1.msra.mxu0 0.0
    %5667 = vmatprep.subr.mxu0 0.0
    %5668 = vmatpush1.msra.mxu0 0.0
    %5669 = vmatprep.subr.mxu0 0.0
    %5670 = vmatpush1.msra.mxu0 0.0
    %5671 = vmatprep.subr.mxu0 0.0
    %5672 = vmatpush1.msra.mxu0 0.0
    %5673 = vmatprep.subr.mxu0 0.0
    %5674 = vmatpush1.msra.mxu0 0.0
    %5675 = vmatprep.subr.mxu0 0.0
    %5676 = vmatpush1.msra.mxu0 0.0
    %5677 = vmatprep.subr.mxu0 0.0
    %5678 = vmatpush1.msra.mxu0 0.0
    %5679 = vmatprep.subr.mxu0 0.0
    %5680 = vmatpush1.msra.mxu0 0.0
    %5681 = vmatprep.subr.mxu0 0.0
    %5682 = vmatpush1.msra.mxu0 0.0
    %5683 = vmatprep.subr.mxu0 0.0
    %5684 = vmatpush1.msra.mxu0 0.0
    %5685 = vmatprep.subr.mxu0 0.0
    %5686 = vmatpush1.msra.mxu0 0.0
    %5687 = vmatprep.subr.mxu0 0.0
    %5688 = vmatpush1.msra.mxu0 0.0
    %5689 = vmatprep.subr.mxu0 0.0
    %5690 = vmatpush1.msra.mxu0 0.0
    %5691 = vmatprep.subr.mxu0 0.0
    %5692 = vmatpush1.msra.mxu0 0.0
    %5693 = vmatprep.subr.mxu0 0.0
    %5694 = vmatpush1.msra.mxu0 0.0
    %5695 = vmatprep.subr.mxu0 0.0
    %5696 = vmatpush1.msra.mxu0 0.0
    %5697 = vmatprep.subr.mxu0 0.0
    %5698 = vmatpush1.msra.mxu0 0.0
    %5699 = vmatprep.subr.mxu0 0.0
    %5700 = vmatpush1.msra.mxu0 0.0
    %5701 = vmatprep.subr.mxu0 0.0
    %5702 = vmatpush1.msra.mxu0 0.0
    %5703 = vmatprep.subr.mxu0 0.0
    %5704 = vmatpush1.msra.mxu0 0.0
    %5705 = vmatprep.mubr.f32.mxu0 0.0
    %5706 = vmatmul.mubr.f32.gmra.mrb[0].mxu0 %v5636
    %v5707 = vpop.f32.mrb[0].mxu0
    %v5708 = vadd.f32 %v5634, %v5707
    %v5709 = vpop.f32.mrb[0].mxu0
    %5710 = vmatprep.mubr.f32.mxu0 0.0
    %5711 = vmatmul.mubr.f32.gmra.mrb[0].mxu0 %v5639
    %v5712 = vpop.f32.mrb[0].mxu0
    %v5713 = vadd.f32 %v5634, %v5712
    %v5714 = vpop.f32.mrb[0].mxu0
    %5715 = vdwg.mxu0
    %v5716 = vmul.f32 %v5708, 0.5
    %v5717 = vmul.f32 %v5713, 0.5
    %v5718 = vmul.f32 %v5708, %v2889
    %v5719 = vmul.f32 %v5713, %v2889
    %v5720 = verf.f32.pop %v5718
    %v5721 = verf.f32.pop %v5719
    %v5722 = vadd.f32 %v5720, 1.0
    %v5723 = vadd.f32 %v5721, 1.0
    %v5724 = vmul.f32 %v5716, %v5722
    %v5725 = vmul.f32 %v5717, %v5723
    %5726 = vmatprep.subr.mxu0 0.0
    %5727 = vmatpush1.msra.mxu0 %v3209
    %5728 = vmatprep.subr.mxu0 0.0
    %5729 = vmatpush1.msra.mxu0 %v3210
    %5730 = vmatprep.subr.mxu0 0.0
    %5731 = vmatpush1.msra.mxu0 %v3211
    %5732 = vmatprep.subr.mxu0 0.0
    %5733 = vmatpush1.msra.mxu0 %v3212
    %5734 = vmatprep.subr.mxu0 0.0
    %5735 = vmatpush1.msra.mxu0 %v3213
    %5736 = vmatprep.subr.mxu0 0.0
    %5737 = vmatpush1.msra.mxu0 %v3214
    %5738 = vmatprep.subr.mxu0 0.0
    %5739 = vmatpush1.msra.mxu0 %v3215
    %5740 = vmatprep.subr.mxu0 0.0
    %5741 = vmatpush1.msra.mxu0 %v3216
    %5742 = vmatprep.subr.mxu0 0.0
    %5743 = vmatpush1.msra.mxu0 %v3217
    %5744 = vmatprep.subr.mxu0 0.0
    %5745 = vmatpush1.msra.mxu0 %v3218
    %5746 = vmatprep.subr.mxu0 0.0
    %5747 = vmatpush1.msra.mxu0 %v3219
    %5748 = vmatprep.subr.mxu0 0.0
    %5749 = vmatpush1.msra.mxu0 %v3220
    %5750 = vmatprep.subr.mxu0 0.0
    %5751 = vmatpush1.msra.mxu0 %v3221
    %5752 = vmatprep.subr.mxu0 0.0
    %5753 = vmatpush1.msra.mxu0 %v3222
    %5754 = vmatprep.subr.mxu0 0.0
    %5755 = vmatpush1.msra.mxu0 %v3223
    %5756 = vmatprep.subr.mxu0 0.0
    %5757 = vmatpush1.msra.mxu0 %v3224
    %5758 = vmatprep.subr.mxu0 0.0
    %5759 = vmatpush1.msra.mxu0 0.0
    %5760 = vmatprep.subr.mxu0 0.0
    %5761 = vmatpush1.msra.mxu0 0.0
    %5762 = vmatprep.subr.mxu0 0.0
    %5763 = vmatpush1.msra.mxu0 0.0
    %5764 = vmatprep.subr.mxu0 0.0
    %5765 = vmatpush1.msra.mxu0 0.0
    %5766 = vmatprep.subr.mxu0 0.0
    %5767 = vmatpush1.msra.mxu0 0.0
    %5768 = vmatprep.subr.mxu0 0.0
    %5769 = vmatpush1.msra.mxu0 0.0
    %5770 = vmatprep.subr.mxu0 0.0
    %5771 = vmatpush1.msra.mxu0 0.0
    %5772 = vmatprep.subr.mxu0 0.0
    %5773 = vmatpush1.msra.mxu0 0.0
    %5774 = vmatprep.subr.mxu0 0.0
    %5775 = vmatpush1.msra.mxu0 0.0
    %5776 = vmatprep.subr.mxu0 0.0
    %5777 = vmatpush1.msra.mxu0 0.0
    %5778 = vmatprep.subr.mxu0 0.0
    %5779 = vmatpush1.msra.mxu0 0.0
    %5780 = vmatprep.subr.mxu0 0.0
    %5781 = vmatpush1.msra.mxu0 0.0
    %5782 = vmatprep.subr.mxu0 0.0
    %5783 = vmatpush1.msra.mxu0 0.0
    %5784 = vmatprep.subr.mxu0 0.0
    %5785 = vmatpush1.msra.mxu0 0.0
    %5786 = vmatprep.subr.mxu0 0.0
    %5787 = vmatpush1.msra.mxu0 0.0
    %5788 = vmatprep.subr.mxu0 0.0
    %5789 = vmatpush1.msra.mxu0 0.0
    %5790 = vmatprep.mubr.f32.mxu0 0.0
    %5791 = vmatmul.mubr.f32.gmra.mrb[0].mxu0 %v5724
    %v5792 = vpop.f32.mrb[0].mxu0
    %v5793 = vadd.f32 0.0, %v5792
    %v5794 = vpop.f32.mrb[0].mxu0
    %5795 = vmatprep.mubr.f32.mxu0 0.0
    %5796 = vmatmul.mubr.f32.gmra.mrb[0].mxu0 %v5725
    %v5797 = vpop.f32.mrb[0].mxu0
    %v5798 = vadd.f32 0.0, %v5797
    %v5799 = vpop.f32.mrb[0].mxu0
    %5800 = vdwg.mxu0
    %v5801 = vadd.f32 %v5591, %v5793
    %v5802 = vadd.f32 %v5592, %v5798
    %v5803 = vlaneseq
    %v5804 = vshrl.u32 %v5803, 7
    %v5805 = vsub.s32 4, %v5804
    %v5806 = vrot.slane %v150, %v5805
    %v5807 = vadd.f32 %v5801, %v5806
    %v5808 = vadd.f32 %v5802, %v5806
    %v5809 = vsel %vm391, %v5807, 0.0
    %5810 = vadd.xlane.f32.xlu0 %v5809
    %v5811 = vpop.xlane.xlu0 %5810
    %v5812 = vsel %vm391, %v5808, 0.0
    %5813 = vadd.xlane.f32.xlu0 %v5812
    %v5814 = vpop.xlane.xlu0 %5813
    %v5815 = vmul.f32 %v5811, %v398
    %v5816 = vmul.f32 %v5814, %v398
    %v5817 = vsub.f32 %v5807, %v5815
    %v5818 = vsub.f32 %v5808, %v5816
    %v5819 = vmul.f32 %v5817, %v5817
    %v5820 = vmul.f32 %v5818, %v5818
    %v5821 = vsel %vm391, %v5819, 0.0
    %5822 = vadd.xlane.f32.xlu0 %v5821
    %v5823 = vpop.xlane.xlu0 %5822
    %v5824 = vsel %vm391, %v5820, 0.0
    %5825 = vadd.xlane.f32.xlu0 %v5824
    %v5826 = vpop.xlane.xlu0 %5825
    %v5827 = vmul.f32 %v5823, %v398
    %v5828 = vmul.f32 %v5826, %v398
    %v5829 = vadd.f32 %v5827, 1e-05
    %v5830 = vadd.f32 %v5828, 1e-05
    %v5831 = vrsqrt.pop %v5829
    %v5832 = vrsqrt.pop %v5830
    %v5833 = vmul.f32 %v5817, %v5831
    %v5834 = vmul.f32 %v5818, %v5832
    %v5835 = vlaneseq
    %v5836 = vshrl.u32 %v5835, 7
    %v5837 = vsub.s32 6, %v5836
    %v5838 = vrot.slane %v150, %v5837
    %v5839 = vmul.f32 %v5833, %v5838
    %v5840 = vmul.f32 %v5834, %v5838
    %v5841 = vlaneseq
    %v5842 = vshrl.u32 %v5841, 7
    %v5843 = vsub.s32 7, %v5842
    %v5844 = vrot.slane %v150, %v5843
    %v5845 = vadd.f32 %v5839, %v5844
    %v5846 = vadd.f32 %v5840, %v5844
    %5847 = vst.msk [vmem:[#allocation3] sm:$0xff] %vm391, %v5845
    %5848 = vst.msk [vmem:[#allocation3 + $0x8] sm:$0xff] %vm391, %v5846
    // Predicated region
    $region34: #{bert_embedder_forward.1} parent=1 // pred_check
      _
    $region35: #{bert_embedder_forward.1} parent=1 // pred_check_branch
      %5850 = sbr.rel (0) target = $region37
    $region36: #{bert_embedder_forward.1} parent=1 // pred_region
      %s5852 = ssub.s32 256, 256
      %5853 = vsyncadd [#allocation4], %s5852
      %s5854 = sshll.u32 [#allocation3], 4
      %s5855 = int_to_ptr.vmem [resolvable:$true] %s5854
      %5860 = dma.vmem_to_hbm [thread:$0]  %s5855, 256, %s8, [#allocation4], 128, 128, 8
    $region37: #{bert_embedder_forward.1} parent=1 // pred_fallthru
      _
    // Predicated region
    $region38: #{bert_embedder_forward.1} parent=1 // pred_check
      _
    $region39: #{bert_embedder_forward.1} parent=1 // pred_check_branch
      %5862 = sbr.rel (0) target = $region41
    $region40: #{bert_embedder_forward.1} parent=1 // pred_region
      %5863 = dma.done [#allocation4], 256
    $region41: #{bert_embedder_forward.1} parent=1 // pred_fallthru
      _
    %5864 = vsyncpa [#allocation4], 1

</llo_original>
